<compile_context>
chip_gen: v7x
topology: tpu7x:2x2x1
jax: 0.10.0
libtpu: 0.0.40
codegen_flags: <defaults>
</compile_context>

<pallas_src>
import jax
import jax.numpy as jnp
from jax import lax
from jax.experimental import pallas as pl
from jax.experimental.pallas import tpu as pltpu

INPUT_SIZE = 35
HIDDEN = 6
NUM_LAYERS = 2
HP = 128        # padded per-gate width: one f32 lane-tile per gate
SUBLANE = 8     # f32 sublane tile


def _pad_gate_cols(w):
    """(rows, 4*HIDDEN) -> (rows, 4*HP); gate k occupies lanes [k*HP, k*HP+HIDDEN)."""
    rows = w.shape[0]
    out = jnp.zeros((rows, 4 * HP), jnp.float32)
    for k in range(4):
        out = out.at[:, k * HP:k * HP + HIDDEN].set(w[:, k * HIDDEN:(k + 1) * HIDDEN])
    return out


def _pad_rows(w, rows_pad):
    return jnp.zeros((rows_pad, w.shape[1]), jnp.float32).at[:w.shape[0], :].set(w)


def rnn_forward_pallas(x, kernel_params):
    """x: (T, B, INPUT_SIZE) float32 -> (T, B, 1) float32."""
    T, B, IN = x.shape
    (wih0, whh0, b0, wih1, whh1, b1, wout, bout) = kernel_params

    BP = ((B + SUBLANE - 1) // SUBLANE) * SUBLANE
    # Pad batch to a sublane multiple and flatten time/batch OUTSIDE the kernel so every
    # in-kernel slice is tile-aligned. Padded batch rows never mix with real ones.
    x_flat = jnp.pad(x, ((0, 0), (0, BP - B), (0, 0))).reshape(T * BP, IN)

    def kernel(x_ref, wih0_ref, whh0_ref, b0_ref, wih1_ref, whh1_ref, b1_ref,
               wout_ref, bout_ref, out_ref, h2_hist):
        # ---- Hoisted layer-0 input projection: one (T*BP, IN) @ (IN, 4*HP) matmul. ----
        gx = jnp.dot(x_ref[...], wih0_ref[...],
                     preferred_element_type=jnp.float32) + b0_ref[...]     # (T*BP, 4*HP)

        def act(gates, c):
            # Gate slices are whole 128-lane tiles -> no cross-lane movement.
            i = jax.nn.sigmoid(gates[:, 0 * HP:1 * HP])
            f = jax.nn.sigmoid(gates[:, 1 * HP:2 * HP])
            g = jnp.tanh(gates[:, 2 * HP:3 * HP])
            o = jax.nn.sigmoid(gates[:, 3 * HP:4 * HP])
            c_new = f * c + i * g
            h_new = o * jnp.tanh(c_new)
            return h_new, c_new

        zero = jnp.zeros((BP, HP), jnp.float32)
        h1, c1, h2, c2 = zero, zero, zero, zero

        # Fully-unrolled serial recurrence; only the small recurrent matmuls remain here.
        for t in range(T):
            gx_t = gx[t * BP:(t + 1) * BP, :]                # tile-aligned static slice
            g0 = gx_t + jnp.dot(h1, whh0_ref[...], preferred_element_type=jnp.float32)
            h1, c1 = act(g0, c1)
            g1 = (jnp.dot(h1, wih1_ref[...], preferred_element_type=jnp.float32)
                  + jnp.dot(h2, whh1_ref[...], preferred_element_type=jnp.float32)
                  + b1_ref[...])
            h2, c2 = act(g1, c2)
            h2_hist[pl.ds(t * BP, BP), :] = h2               # tile-aligned scratch store

        # ---- Batched output projection: one (T*BP, HP) @ (HP, 1) matmul, one store. ----
        y = jnp.dot(h2_hist[...], wout_ref[...],
                    preferred_element_type=jnp.float32) + bout_ref[...]
        out_ref[...] = y

    def full_spec(arr):
        zeros = (0,) * arr.ndim
        return pl.BlockSpec(arr.shape, lambda i: zeros)

    ins = (x_flat, wih0, whh0, b0, wih1, whh1, b1, wout, bout)
    out_flat = pl.pallas_call(
        kernel,
        out_shape=jax.ShapeDtypeStruct((T * BP, 1), jnp.float32),
        grid_spec=pltpu.PrefetchScalarGridSpec(
            num_scalar_prefetch=0,
            grid=(1,),                       # single invocation; recurrence lives in-kernel
            in_specs=[full_spec(a) for a in ins],
            out_specs=pl.BlockSpec((T * BP, 1), lambda i: (0, 0)),
            scratch_shapes=[pltpu.VMEM((T * BP, HP), jnp.float32)],
        ),
        compiler_params=pltpu.CompilerParams(
            dimension_semantics=("arbitrary",)),
    )(*ins)

    return out_flat.reshape(T, BP, 1)[:, :B, :]


def make_params(key):
    # Deterministic init, PyTorch-style U(-1/sqrt(H), 1/sqrt(H)).
    k = 1.0 / jnp.sqrt(jnp.float32(HIDDEN))
    keys = jax.random.split(key, 10)

    def u(kk, shape):
        return jax.random.uniform(kk, shape, jnp.float32, -k, k)

    # Layer 0: weight_ih (4H, IN), weight_hh (4H, H), biases (4H,); gate order i,f,g,o.
    wih0 = u(keys[0], (4 * HIDDEN, INPUT_SIZE))
    whh0 = u(keys[1], (4 * HIDDEN, HIDDEN))
    bih0 = u(keys[2], (4 * HIDDEN,))
    bhh0 = u(keys[3], (4 * HIDDEN,))
    # Layer 1.
    wih1 = u(keys[4], (4 * HIDDEN, HIDDEN))
    whh1 = u(keys[5], (4 * HIDDEN, HIDDEN))
    bih1 = u(keys[6], (4 * HIDDEN,))
    bhh1 = u(keys[7], (4 * HIDDEN,))
    # Linear out: (1, H), (1,).
    wout = jax.random.uniform(keys[8], (1, HIDDEN), jnp.float32, -k, k)
    bout = jax.random.uniform(keys[9], (1,), jnp.float32, -k, k)

    # Pre-transpose, fold biases, pad each gate to a 128-lane tile and K dims to 128 rows.
    kernel_params = (
        _pad_gate_cols(wih0.T),                               # (IN,  4*HP)
        _pad_rows(_pad_gate_cols(whh0.T), HP),                # (HP,  4*HP)
        _pad_gate_cols((bih0 + bhh0).reshape(1, 4 * HIDDEN)),  # (1,   4*HP)
        _pad_rows(_pad_gate_cols(wih1.T), HP),                # (HP,  4*HP)
        _pad_rows(_pad_gate_cols(whh1.T), HP),                # (HP,  4*HP)
        _pad_gate_cols((bih1 + bhh1).reshape(1, 4 * HIDDEN)),  # (1,   4*HP)
        _pad_rows(wout.T, HP),                                # (HP,  1)
        bout.reshape(1, 1),                                   # (1,   1)
    )
    raw_params = (wih0, whh0, bih0, bhh0, wih1, whh1, bih1, bhh1, wout, bout)
    return kernel_params, raw_params


def rnn_forward_ref(x, raw_params):
    # Pure-JAX reference matching torch.nn.LSTM(35, 6, 2) + Linear(6, 1).
    (wih0, whh0, bih0, bhh0, wih1, whh1, bih1, bhh1, wout, bout) = raw_params
    T, B, _ = x.shape

    def cell(x_t, h, c, wih, whh, bih, bhh):
        gates = x_t @ wih.T + h @ whh.T + bih + bhh
        i, f, g, o = jnp.split(gates, 4, axis=-1)
        i, f, o = jax.nn.sigmoid(i), jax.nn.sigmoid(f), jax.nn.sigmoid(o)
        g = jnp.tanh(g)
        c_new = f * c + i * g
        h_new = o * jnp.tanh(c_new)
        return h_new, c_new

    def step(carry, x_t):
        h1, c1, h2, c2 = carry
        h1, c1 = cell(x_t, h1, c1, wih0, whh0, bih0, bhh0)
        h2, c2 = cell(h1, h2, c2, wih1, whh1, bih1, bhh1)
        return (h1, c1, h2, c2), h2

    z = jnp.zeros((B, HIDDEN), jnp.float32)
    _, hs = lax.scan(step, (z, z, z, z), x)       # (T, B, H)
    out = hs.reshape(-1, HIDDEN) @ wout.T + bout
    return out.reshape(T, B, 1)


if __name__ == "__main__":
    key = jax.random.PRNGKey(0)
    k_x, k_p = jax.random.split(key)

    T, B = 8, 2
    x = jax.random.normal(k_x, (T, B, INPUT_SIZE), jnp.float32)

    kernel_params, raw_params = make_params(k_p)

    out = rnn_forward_pallas(x, kernel_params)
    out = jax.block_until_ready(out)

    ref = rnn_forward_ref(x, raw_params)
    assert out.shape == (T, B, 1), out.shape
    max_err = float(jnp.max(jnp.abs(out - ref)))
    assert max_err < 1e-4, max_err

    print("KERNEL_OK")
</pallas_src>

<mosaic_0001>
module attributes {stable_mosaic.version = 11 : i64} {
  func.func @kernel(%arg0: i32, %arg1: memref<64x35xf32, #tpu.memory_space<vmem>>, %arg2: memref<35x512xf32, #tpu.memory_space<vmem>>, %arg3: memref<128x512xf32, #tpu.memory_space<vmem>>, %arg4: memref<1x512xf32, #tpu.memory_space<vmem>>, %arg5: memref<128x512xf32, #tpu.memory_space<vmem>>, %arg6: memref<128x512xf32, #tpu.memory_space<vmem>>, %arg7: memref<1x512xf32, #tpu.memory_space<vmem>>, %arg8: memref<128x1xf32, #tpu.memory_space<vmem>>, %arg9: memref<1x1xf32, #tpu.memory_space<vmem>>, %arg10: memref<64x1xf32, #tpu.memory_space<vmem>>, %arg11: memref<64x128xf32, #tpu.memory_space<vmem>>) attributes {dimension_semantics = [#tpu.dimension_semantics<arbitrary>], iteration_bounds = array<i64: 1>, scalar_prefetch = 0 : i64, scratch_operands = 1 : i64, tpu.core_type = #tpu.core_type<tc>, window_params = [{pipeline_mode = #tpu.pipeline_mode<synchronous>, transform_indices = @transform_0, window_bounds = array<i64: 64, 35>}, {pipeline_mode = #tpu.pipeline_mode<synchronous>, transform_indices = @transform_1, window_bounds = array<i64: 35, 512>}, {pipeline_mode = #tpu.pipeline_mode<synchronous>, transform_indices = @transform_2, window_bounds = array<i64: 128, 512>}, {pipeline_mode = #tpu.pipeline_mode<synchronous>, transform_indices = @transform_3, window_bounds = array<i64: 1, 512>}, {pipeline_mode = #tpu.pipeline_mode<synchronous>, transform_indices = @transform_4, window_bounds = array<i64: 128, 512>}, {pipeline_mode = #tpu.pipeline_mode<synchronous>, transform_indices = @transform_5, window_bounds = array<i64: 128, 512>}, {pipeline_mode = #tpu.pipeline_mode<synchronous>, transform_indices = @transform_6, window_bounds = array<i64: 1, 512>}, {pipeline_mode = #tpu.pipeline_mode<synchronous>, transform_indices = @transform_7, window_bounds = array<i64: 128, 1>}, {pipeline_mode = #tpu.pipeline_mode<synchronous>, transform_indices = @transform_8, window_bounds = array<i64: 1, 1>}, {pipeline_mode = #tpu.pipeline_mode<synchronous>, transform_indices = @transform_9, window_bounds = array<i64: 64, 1>}]} {
    %c0 = arith.constant 0 : index
    %c0_0 = arith.constant 0 : index
    %0 = vector.load %arg1[%c0, %c0_0] : memref<64x35xf32, #tpu.memory_space<vmem>>, vector<64x35xf32>
    %c0_1 = arith.constant 0 : index
    %c0_2 = arith.constant 0 : index
    %1 = vector.load %arg2[%c0_1, %c0_2] : memref<35x512xf32, #tpu.memory_space<vmem>>, vector<35x512xf32>
    %cst = arith.constant dense<0.000000e+00> : vector<64x512xf32>
    %2 = tpu.matmul %0, %1, %cst {dimension_numbers = #tpu.dot_dimension_numbers<[1], [0], [0], [1], [0, 0, 1, 1], [], []>} : vector<64x35xf32>, vector<35x512xf32>, vector<64x512xf32> -> vector<64x512xf32>
    %c0_3 = arith.constant 0 : index
    %c0_4 = arith.constant 0 : index
    %3 = vector.load %arg4[%c0_3, %c0_4] : memref<1x512xf32, #tpu.memory_space<vmem>>, vector<1x512xf32>
    %4 = vector.broadcast %3 : vector<1x512xf32> to vector<64x512xf32>
    %5 = arith.addf %2, %4 : vector<64x512xf32>
    %cst_5 = arith.constant 0.000000e+00 : f32
    %6 = vector.broadcast %cst_5 : f32 to vector<8x128xf32>
    %7 = vector.extract_strided_slice %5 {offsets = [0, 0], sizes = [8, 512], strides = [1, 1]} : vector<64x512xf32> to vector<8x512xf32>
    %c0_6 = arith.constant 0 : index
    %c0_7 = arith.constant 0 : index
    %8 = vector.load %arg3[%c0_6, %c0_7] : memref<128x512xf32, #tpu.memory_space<vmem>>, vector<128x512xf32>
    %cst_8 = arith.constant dense<0.000000e+00> : vector<8x512xf32>
    %9 = tpu.matmul %6, %8, %cst_8 {dimension_numbers = #tpu.dot_dimension_numbers<[1], [0], [0], [1], [0, 0, 1, 1], [], []>} : vector<8x128xf32>, vector<128x512xf32>, vector<8x512xf32> -> vector<8x512xf32>
    %10 = arith.addf %7, %9 : vector<8x512xf32>
    %11 = vector.extract_strided_slice %10 {offsets = [0, 0], sizes = [8, 128], strides = [1, 1]} : vector<8x512xf32> to vector<8x128xf32>
    %12 = arith.negf %11 : vector<8x128xf32>
    %13 = math.exp %12 : vector<8x128xf32>
    %cst_9 = arith.constant 1.000000e+00 : f32
    %14 = vector.broadcast %cst_9 : f32 to vector<8x128xf32>
    %15 = arith.addf %14, %13 : vector<8x128xf32>
    %16 = arith.divf %14, %15 : vector<8x128xf32>
    %17 = vector.extract_strided_slice %10 {offsets = [0, 128], sizes = [8, 128], strides = [1, 1]} : vector<8x512xf32> to vector<8x128xf32>
    %18 = arith.negf %17 : vector<8x128xf32>
    %19 = math.exp %18 : vector<8x128xf32>
    %cst_10 = arith.constant 1.000000e+00 : f32
    %20 = vector.broadcast %cst_10 : f32 to vector<8x128xf32>
    %21 = arith.addf %20, %19 : vector<8x128xf32>
    %22 = arith.divf %20, %21 : vector<8x128xf32>
    %23 = vector.extract_strided_slice %10 {offsets = [0, 256], sizes = [8, 128], strides = [1, 1]} : vector<8x512xf32> to vector<8x128xf32>
    %24 = math.tanh %23 : vector<8x128xf32>
    %25 = vector.extract_strided_slice %10 {offsets = [0, 384], sizes = [8, 128], strides = [1, 1]} : vector<8x512xf32> to vector<8x128xf32>
    %26 = arith.negf %25 : vector<8x128xf32>
    %27 = math.exp %26 : vector<8x128xf32>
    %cst_11 = arith.constant 1.000000e+00 : f32
    %28 = vector.broadcast %cst_11 : f32 to vector<8x128xf32>
    %29 = arith.addf %28, %27 : vector<8x128xf32>
    %30 = arith.divf %28, %29 : vector<8x128xf32>
    %31 = arith.mulf %22, %6 : vector<8x128xf32>
    %32 = arith.mulf %16, %24 : vector<8x128xf32>
    %33 = arith.addf %31, %32 : vector<8x128xf32>
    %34 = math.tanh %33 : vector<8x128xf32>
    %35 = arith.mulf %30, %34 : vector<8x128xf32>
    %c0_12 = arith.constant 0 : index
    %c0_13 = arith.constant 0 : index
    %36 = vector.load %arg5[%c0_12, %c0_13] : memref<128x512xf32, #tpu.memory_space<vmem>>, vector<128x512xf32>
    %cst_14 = arith.constant dense<0.000000e+00> : vector<8x512xf32>
    %37 = tpu.matmul %35, %36, %cst_14 {dimension_numbers = #tpu.dot_dimension_numbers<[1], [0], [0], [1], [0, 0, 1, 1], [], []>} : vector<8x128xf32>, vector<128x512xf32>, vector<8x512xf32> -> vector<8x512xf32>
    %c0_15 = arith.constant 0 : index
    %c0_16 = arith.constant 0 : index
    %38 = vector.load %arg6[%c0_15, %c0_16] : memref<128x512xf32, #tpu.memory_space<vmem>>, vector<128x512xf32>
    %cst_17 = arith.constant dense<0.000000e+00> : vector<8x512xf32>
    %39 = tpu.matmul %6, %38, %cst_17 {dimension_numbers = #tpu.dot_dimension_numbers<[1], [0], [0], [1], [0, 0, 1, 1], [], []>} : vector<8x128xf32>, vector<128x512xf32>, vector<8x512xf32> -> vector<8x512xf32>
    %40 = arith.addf %37, %39 : vector<8x512xf32>
    %c0_18 = arith.constant 0 : index
    %c0_19 = arith.constant 0 : index
    %41 = vector.load %arg7[%c0_18, %c0_19] : memref<1x512xf32, #tpu.memory_space<vmem>>, vector<1x512xf32>
    %42 = vector.broadcast %41 : vector<1x512xf32> to vector<8x512xf32>
    %43 = arith.addf %40, %42 : vector<8x512xf32>
    %44 = vector.extract_strided_slice %43 {offsets = [0, 0], sizes = [8, 128], strides = [1, 1]} : vector<8x512xf32> to vector<8x128xf32>
    %45 = arith.negf %44 : vector<8x128xf32>
    %46 = math.exp %45 : vector<8x128xf32>
    %cst_20 = arith.constant 1.000000e+00 : f32
    %47 = vector.broadcast %cst_20 : f32 to vector<8x128xf32>
    %48 = arith.addf %47, %46 : vector<8x128xf32>
    %49 = arith.divf %47, %48 : vector<8x128xf32>
    %50 = vector.extract_strided_slice %43 {offsets = [0, 128], sizes = [8, 128], strides = [1, 1]} : vector<8x512xf32> to vector<8x128xf32>
    %51 = arith.negf %50 : vector<8x128xf32>
    %52 = math.exp %51 : vector<8x128xf32>
    %cst_21 = arith.constant 1.000000e+00 : f32
    %53 = vector.broadcast %cst_21 : f32 to vector<8x128xf32>
    %54 = arith.addf %53, %52 : vector<8x128xf32>
    %55 = arith.divf %53, %54 : vector<8x128xf32>
    %56 = vector.extract_strided_slice %43 {offsets = [0, 256], sizes = [8, 128], strides = [1, 1]} : vector<8x512xf32> to vector<8x128xf32>
    %57 = math.tanh %56 : vector<8x128xf32>
    %58 = vector.extract_strided_slice %43 {offsets = [0, 384], sizes = [8, 128], strides = [1, 1]} : vector<8x512xf32> to vector<8x128xf32>
    %59 = arith.negf %58 : vector<8x128xf32>
    %60 = math.exp %59 : vector<8x128xf32>
    %cst_22 = arith.constant 1.000000e+00 : f32
    %61 = vector.broadcast %cst_22 : f32 to vector<8x128xf32>
    %62 = arith.addf %61, %60 : vector<8x128xf32>
    %63 = arith.divf %61, %62 : vector<8x128xf32>
    %64 = arith.mulf %55, %6 : vector<8x128xf32>
    %65 = arith.mulf %49, %57 : vector<8x128xf32>
    %66 = arith.addf %64, %65 : vector<8x128xf32>
    %67 = math.tanh %66 : vector<8x128xf32>
    %68 = arith.mulf %63, %67 : vector<8x128xf32>
    %c0_23 = arith.constant 0 : index
    %c0_24 = arith.constant 0 : index
    %69 = vector.load %arg11[%c0_23, %c0_24] : memref<64x128xf32, #tpu.memory_space<vmem>>, vector<8x128xf32>
    tpu.vector_store %arg11[%c0_23, %c0_24], %68 {strides = array<i32>} : memref<64x128xf32, #tpu.memory_space<vmem>>, vector<8x128xf32>,
    %70 = vector.extract_strided_slice %5 {offsets = [8, 0], sizes = [8, 512], strides = [1, 1]} : vector<64x512xf32> to vector<8x512xf32>
    %c0_25 = arith.constant 0 : index
    %c0_26 = arith.constant 0 : index
    %71 = vector.load %arg3[%c0_25, %c0_26] : memref<128x512xf32, #tpu.memory_space<vmem>>, vector<128x512xf32>
    %cst_27 = arith.constant dense<0.000000e+00> : vector<8x512xf32>
    %72 = tpu.matmul %35, %71, %cst_27 {dimension_numbers = #tpu.dot_dimension_numbers<[1], [0], [0], [1], [0, 0, 1, 1], [], []>} : vector<8x128xf32>, vector<128x512xf32>, vector<8x512xf32> -> vector<8x512xf32>
    %73 = arith.addf %70, %72 : vector<8x512xf32>
    %74 = vector.extract_strided_slice %73 {offsets = [0, 0], sizes = [8, 128], strides = [1, 1]} : vector<8x512xf32> to vector<8x128xf32>
    %75 = arith.negf %74 : vector<8x128xf32>
    %76 = math.exp %75 : vector<8x128xf32>
    %cst_28 = arith.constant 1.000000e+00 : f32
    %77 = vector.broadcast %cst_28 : f32 to vector<8x128xf32>
    %78 = arith.addf %77, %76 : vector<8x128xf32>
    %79 = arith.divf %77, %78 : vector<8x128xf32>
    %80 = vector.extract_strided_slice %73 {offsets = [0, 128], sizes = [8, 128], strides = [1, 1]} : vector<8x512xf32> to vector<8x128xf32>
    %81 = arith.negf %80 : vector<8x128xf32>
    %82 = math.exp %81 : vector<8x128xf32>
    %cst_29 = arith.constant 1.000000e+00 : f32
    %83 = vector.broadcast %cst_29 : f32 to vector<8x128xf32>
    %84 = arith.addf %83, %82 : vector<8x128xf32>
    %85 = arith.divf %83, %84 : vector<8x128xf32>
    %86 = vector.extract_strided_slice %73 {offsets = [0, 256], sizes = [8, 128], strides = [1, 1]} : vector<8x512xf32> to vector<8x128xf32>
    %87 = math.tanh %86 : vector<8x128xf32>
    %88 = vector.extract_strided_slice %73 {offsets = [0, 384], sizes = [8, 128], strides = [1, 1]} : vector<8x512xf32> to vector<8x128xf32>
    %89 = arith.negf %88 : vector<8x128xf32>
    %90 = math.exp %89 : vector<8x128xf32>
    %cst_30 = arith.constant 1.000000e+00 : f32
    %91 = vector.broadcast %cst_30 : f32 to vector<8x128xf32>
    %92 = arith.addf %91, %90 : vector<8x128xf32>
    %93 = arith.divf %91, %92 : vector<8x128xf32>
    %94 = arith.mulf %85, %33 : vector<8x128xf32>
    %95 = arith.mulf %79, %87 : vector<8x128xf32>
    %96 = arith.addf %94, %95 : vector<8x128xf32>
    %97 = math.tanh %96 : vector<8x128xf32>
    %98 = arith.mulf %93, %97 : vector<8x128xf32>
    %c0_31 = arith.constant 0 : index
    %c0_32 = arith.constant 0 : index
    %99 = vector.load %arg5[%c0_31, %c0_32] : memref<128x512xf32, #tpu.memory_space<vmem>>, vector<128x512xf32>
    %cst_33 = arith.constant dense<0.000000e+00> : vector<8x512xf32>
    %100 = tpu.matmul %98, %99, %cst_33 {dimension_numbers = #tpu.dot_dimension_numbers<[1], [0], [0], [1], [0, 0, 1, 1], [], []>} : vector<8x128xf32>, vector<128x512xf32>, vector<8x512xf32> -> vector<8x512xf32>
    %c0_34 = arith.constant 0 : index
    %c0_35 = arith.constant 0 : index
    %101 = vector.load %arg6[%c0_34, %c0_35] : memref<128x512xf32, #tpu.memory_space<vmem>>, vector<128x512xf32>
    %cst_36 = arith.constant dense<0.000000e+00> : vector<8x512xf32>
    %102 = tpu.matmul %68, %101, %cst_36 {dimension_numbers = #tpu.dot_dimension_numbers<[1], [0], [0], [1], [0, 0, 1, 1], [], []>} : vector<8x128xf32>, vector<128x512xf32>, vector<8x512xf32> -> vector<8x512xf32>
    %103 = arith.addf %100, %102 : vector<8x512xf32>
    %c0_37 = arith.constant 0 : index
    %c0_38 = arith.constant 0 : index
    %104 = vector.load %arg7[%c0_37, %c0_38] : memref<1x512xf32, #tpu.memory_space<vmem>>, vector<1x512xf32>
    %105 = vector.broadcast %104 : vector<1x512xf32> to vector<8x512xf32>
    %106 = arith.addf %103, %105 : vector<8x512xf32>
    %107 = vector.extract_strided_slice %106 {offsets = [0, 0], sizes = [8, 128], strides = [1, 1]} : vector<8x512xf32> to vector<8x128xf32>
    %108 = arith.negf %107 : vector<8x128xf32>
    %109 = math.exp %108 : vector<8x128xf32>
    %cst_39 = arith.constant 1.000000e+00 : f32
    %110 = vector.broadcast %cst_39 : f32 to vector<8x128xf32>
    %111 = arith.addf %110, %109 : vector<8x128xf32>
    %112 = arith.divf %110, %111 : vector<8x128xf32>
    %113 = vector.extract_strided_slice %106 {offsets = [0, 128], sizes = [8, 128], strides = [1, 1]} : vector<8x512xf32> to vector<8x128xf32>
    %114 = arith.negf %113 : vector<8x128xf32>
    %115 = math.exp %114 : vector<8x128xf32>
    %cst_40 = arith.constant 1.000000e+00 : f32
    %116 = vector.broadcast %cst_40 : f32 to vector<8x128xf32>
    %117 = arith.addf %116, %115 : vector<8x128xf32>
    %118 = arith.divf %116, %117 : vector<8x128xf32>
    %119 = vector.extract_strided_slice %106 {offsets = [0, 256], sizes = [8, 128], strides = [1, 1]} : vector<8x512xf32> to vector<8x128xf32>
    %120 = math.tanh %119 : vector<8x128xf32>
    %121 = vector.extract_strided_slice %106 {offsets = [0, 384], sizes = [8, 128], strides = [1, 1]} : vector<8x512xf32> to vector<8x128xf32>
    %122 = arith.negf %121 : vector<8x128xf32>
    %123 = math.exp %122 : vector<8x128xf32>
    %cst_41 = arith.constant 1.000000e+00 : f32
    %124 = vector.broadcast %cst_41 : f32 to vector<8x128xf32>
    %125 = arith.addf %124, %123 : vector<8x128xf32>
    %126 = arith.divf %124, %125 : vector<8x128xf32>
    %127 = arith.mulf %118, %66 : vector<8x128xf32>
    %128 = arith.mulf %112, %120 : vector<8x128xf32>
    %129 = arith.addf %127, %128 : vector<8x128xf32>
    %130 = math.tanh %129 : vector<8x128xf32>
    %131 = arith.mulf %126, %130 : vector<8x128xf32>
    %c8 = arith.constant 8 : index
    %c0_42 = arith.constant 0 : index
    %132 = vector.load %arg11[%c8, %c0_42] : memref<64x128xf32, #tpu.memory_space<vmem>>, vector<8x128xf32>
    tpu.vector_store %arg11[%c8, %c0_42], %131 {strides = array<i32>} : memref<64x128xf32, #tpu.memory_space<vmem>>, vector<8x128xf32>,
    %133 = vector.extract_strided_slice %5 {offsets = [16, 0], sizes = [8, 512], strides = [1, 1]} : vector<64x512xf32> to vector<8x512xf32>
    %c0_43 = arith.constant 0 : index
    %c0_44 = arith.constant 0 : index
    %134 = vector.load %arg3[%c0_43, %c0_44] : memref<128x512xf32, #tpu.memory_space<vmem>>, vector<128x512xf32>
    %cst_45 = arith.constant dense<0.000000e+00> : vector<8x512xf32>
    %135 = tpu.matmul %98, %134, %cst_45 {dimension_numbers = #tpu.dot_dimension_numbers<[1], [0], [0], [1], [0, 0, 1, 1], [], []>} : vector<8x128xf32>, vector<128x512xf32>, vector<8x512xf32> -> vector<8x512xf32>
    %136 = arith.addf %133, %135 : vector<8x512xf32>
    %137 = vector.extract_strided_slice %136 {offsets = [0, 0], sizes = [8, 128], strides = [1, 1]} : vector<8x512xf32> to vector<8x128xf32>
    %138 = arith.negf %137 : vector<8x128xf32>
    %139 = math.exp %138 : vector<8x128xf32>
    %cst_46 = arith.constant 1.000000e+00 : f32
    %140 = vector.broadcast %cst_46 : f32 to vector<8x128xf32>
    %141 = arith.addf %140, %139 : vector<8x128xf32>
    %142 = arith.divf %140, %141 : vector<8x128xf32>
    %143 = vector.extract_strided_slice %136 {offsets = [0, 128], sizes = [8, 128], strides = [1, 1]} : vector<8x512xf32> to vector<8x128xf32>
    %144 = arith.negf %143 : vector<8x128xf32>
    %145 = math.exp %144 : vector<8x128xf32>
    %cst_47 = arith.constant 1.000000e+00 : f32
    %146 = vector.broadcast %cst_47 : f32 to vector<8x128xf32>
    %147 = arith.addf %146, %145 : vector<8x128xf32>
    %148 = arith.divf %146, %147 : vector<8x128xf32>
    %149 = vector.extract_strided_slice %136 {offsets = [0, 256], sizes = [8, 128], strides = [1, 1]} : vector<8x512xf32> to vector<8x128xf32>
    %150 = math.tanh %149 : vector<8x128xf32>
    %151 = vector.extract_strided_slice %136 {offsets = [0, 384], sizes = [8, 128], strides = [1, 1]} : vector<8x512xf32> to vector<8x128xf32>
    %152 = arith.negf %151 : vector<8x128xf32>
    %153 = math.exp %152 : vector<8x128xf32>
    %cst_48 = arith.constant 1.000000e+00 : f32
    %154 = vector.broadcast %cst_48 : f32 to vector<8x128xf32>
    %155 = arith.addf %154, %153 : vector<8x128xf32>
    %156 = arith.divf %154, %155 : vector<8x128xf32>
    %157 = arith.mulf %148, %96 : vector<8x128xf32>
    %158 = arith.mulf %142, %150 : vector<8x128xf32>
    %159 = arith.addf %157, %158 : vector<8x128xf32>
    %160 = math.tanh %159 : vector<8x128xf32>
    %161 = arith.mulf %156, %160 : vector<8x128xf32>
    %c0_49 = arith.constant 0 : index
    %c0_50 = arith.constant 0 : index
    %162 = vector.load %arg5[%c0_49, %c0_50] : memref<128x512xf32, #tpu.memory_space<vmem>>, vector<128x512xf32>
    %cst_51 = arith.constant dense<0.000000e+00> : vector<8x512xf32>
    %163 = tpu.matmul %161, %162, %cst_51 {dimension_numbers = #tpu.dot_dimension_numbers<[1], [0], [0], [1], [0, 0, 1, 1], [], []>} : vector<8x128xf32>, vector<128x512xf32>, vector<8x512xf32> -> vector<8x512xf32>
    %c0_52 = arith.constant 0 : index
    %c0_53 = arith.constant 0 : index
    %164 = vector.load %arg6[%c0_52, %c0_53] : memref<128x512xf32, #tpu.memory_space<vmem>>, vector<128x512xf32>
    %cst_54 = arith.constant dense<0.000000e+00> : vector<8x512xf32>
    %165 = tpu.matmul %131, %164, %cst_54 {dimension_numbers = #tpu.dot_dimension_numbers<[1], [0], [0], [1], [0, 0, 1, 1], [], []>} : vector<8x128xf32>, vector<128x512xf32>, vector<8x512xf32> -> vector<8x512xf32>
    %166 = arith.addf %163, %165 : vector<8x512xf32>
    %c0_55 = arith.constant 0 : index
    %c0_56 = arith.constant 0 : index
    %167 = vector.load %arg7[%c0_55, %c0_56] : memref<1x512xf32, #tpu.memory_space<vmem>>, vector<1x512xf32>
    %168 = vector.broadcast %167 : vector<1x512xf32> to vector<8x512xf32>
    %169 = arith.addf %166, %168 : vector<8x512xf32>
    %170 = vector.extract_strided_slice %169 {offsets = [0, 0], sizes = [8, 128], strides = [1, 1]} : vector<8x512xf32> to vector<8x128xf32>
    %171 = arith.negf %170 : vector<8x128xf32>
    %172 = math.exp %171 : vector<8x128xf32>
    %cst_57 = arith.constant 1.000000e+00 : f32
    %173 = vector.broadcast %cst_57 : f32 to vector<8x128xf32>
    %174 = arith.addf %173, %172 : vector<8x128xf32>
    %175 = arith.divf %173, %174 : vector<8x128xf32>
    %176 = vector.extract_strided_slice %169 {offsets = [0, 128], sizes = [8, 128], strides = [1, 1]} : vector<8x512xf32> to vector<8x128xf32>
    %177 = arith.negf %176 : vector<8x128xf32>
    %178 = math.exp %177 : vector<8x128xf32>
    %cst_58 = arith.constant 1.000000e+00 : f32
    %179 = vector.broadcast %cst_58 : f32 to vector<8x128xf32>
    %180 = arith.addf %179, %178 : vector<8x128xf32>
    %181 = arith.divf %179, %180 : vector<8x128xf32>
    %182 = vector.extract_strided_slice %169 {offsets = [0, 256], sizes = [8, 128], strides = [1, 1]} : vector<8x512xf32> to vector<8x128xf32>
    %183 = math.tanh %182 : vector<8x128xf32>
    %184 = vector.extract_strided_slice %169 {offsets = [0, 384], sizes = [8, 128], strides = [1, 1]} : vector<8x512xf32> to vector<8x128xf32>
    %185 = arith.negf %184 : vector<8x128xf32>
    %186 = math.exp %185 : vector<8x128xf32>
    %cst_59 = arith.constant 1.000000e+00 : f32
    %187 = vector.broadcast %cst_59 : f32 to vector<8x128xf32>
    %188 = arith.addf %187, %186 : vector<8x128xf32>
    %189 = arith.divf %187, %188 : vector<8x128xf32>
    %190 = arith.mulf %181, %129 : vector<8x128xf32>
    %191 = arith.mulf %175, %183 : vector<8x128xf32>
    %192 = arith.addf %190, %191 : vector<8x128xf32>
    %193 = math.tanh %192 : vector<8x128xf32>
    %194 = arith.mulf %189, %193 : vector<8x128xf32>
    %c16 = arith.constant 16 : index
    %c0_60 = arith.constant 0 : index
    %195 = vector.load %arg11[%c16, %c0_60] : memref<64x128xf32, #tpu.memory_space<vmem>>, vector<8x128xf32>
    tpu.vector_store %arg11[%c16, %c0_60], %194 {strides = array<i32>} : memref<64x128xf32, #tpu.memory_space<vmem>>, vector<8x128xf32>,
    %196 = vector.extract_strided_slice %5 {offsets = [24, 0], sizes = [8, 512], strides = [1, 1]} : vector<64x512xf32> to vector<8x512xf32>
    %c0_61 = arith.constant 0 : index
    %c0_62 = arith.constant 0 : index
    %197 = vector.load %arg3[%c0_61, %c0_62] : memref<128x512xf32, #tpu.memory_space<vmem>>, vector<128x512xf32>
    %cst_63 = arith.constant dense<0.000000e+00> : vector<8x512xf32>
    %198 = tpu.matmul %161, %197, %cst_63 {dimension_numbers = #tpu.dot_dimension_numbers<[1], [0], [0], [1], [0, 0, 1, 1], [], []>} : vector<8x128xf32>, vector<128x512xf32>, vector<8x512xf32> -> vector<8x512xf32>
    %199 = arith.addf %196, %198 : vector<8x512xf32>
    %200 = vector.extract_strided_slice %199 {offsets = [0, 0], sizes = [8, 128], strides = [1, 1]} : vector<8x512xf32> to vector<8x128xf32>
    %201 = arith.negf %200 : vector<8x128xf32>
    %202 = math.exp %201 : vector<8x128xf32>
    %cst_64 = arith.constant 1.000000e+00 : f32
    %203 = vector.broadcast %cst_64 : f32 to vector<8x128xf32>
    %204 = arith.addf %203, %202 : vector<8x128xf32>
    %205 = arith.divf %203, %204 : vector<8x128xf32>
    %206 = vector.extract_strided_slice %199 {offsets = [0, 128], sizes = [8, 128], strides = [1, 1]} : vector<8x512xf32> to vector<8x128xf32>
    %207 = arith.negf %206 : vector<8x128xf32>
    %208 = math.exp %207 : vector<8x128xf32>
    %cst_65 = arith.constant 1.000000e+00 : f32
    %209 = vector.broadcast %cst_65 : f32 to vector<8x128xf32>
    %210 = arith.addf %209, %208 : vector<8x128xf32>
    %211 = arith.divf %209, %210 : vector<8x128xf32>
    %212 = vector.extract_strided_slice %199 {offsets = [0, 256], sizes = [8, 128], strides = [1, 1]} : vector<8x512xf32> to vector<8x128xf32>
    %213 = math.tanh %212 : vector<8x128xf32>
    %214 = vector.extract_strided_slice %199 {offsets = [0, 384], sizes = [8, 128], strides = [1, 1]} : vector<8x512xf32> to vector<8x128xf32>
    %215 = arith.negf %214 : vector<8x128xf32>
    %216 = math.exp %215 : vector<8x128xf32>
    %cst_66 = arith.constant 1.000000e+00 : f32
    %217 = vector.broadcast %cst_66 : f32 to vector<8x128xf32>
    %218 = arith.addf %217, %216 : vector<8x128xf32>
    %219 = arith.divf %217, %218 : vector<8x128xf32>
    %220 = arith.mulf %211, %159 : vector<8x128xf32>
    %221 = arith.mulf %205, %213 : vector<8x128xf32>
    %222 = arith.addf %220, %221 : vector<8x128xf32>
    %223 = math.tanh %222 : vector<8x128xf32>
    %224 = arith.mulf %219, %223 : vector<8x128xf32>
    %c0_67 = arith.constant 0 : index
    %c0_68 = arith.constant 0 : index
    %225 = vector.load %arg5[%c0_67, %c0_68] : memref<128x512xf32, #tpu.memory_space<vmem>>, vector<128x512xf32>
    %cst_69 = arith.constant dense<0.000000e+00> : vector<8x512xf32>
    %226 = tpu.matmul %224, %225, %cst_69 {dimension_numbers = #tpu.dot_dimension_numbers<[1], [0], [0], [1], [0, 0, 1, 1], [], []>} : vector<8x128xf32>, vector<128x512xf32>, vector<8x512xf32> -> vector<8x512xf32>
    %c0_70 = arith.constant 0 : index
    %c0_71 = arith.constant 0 : index
    %227 = vector.load %arg6[%c0_70, %c0_71] : memref<128x512xf32, #tpu.memory_space<vmem>>, vector<128x512xf32>
    %cst_72 = arith.constant dense<0.000000e+00> : vector<8x512xf32>
    %228 = tpu.matmul %194, %227, %cst_72 {dimension_numbers = #tpu.dot_dimension_numbers<[1], [0], [0], [1], [0, 0, 1, 1], [], []>} : vector<8x128xf32>, vector<128x512xf32>, vector<8x512xf32> -> vector<8x512xf32>
    %229 = arith.addf %226, %228 : vector<8x512xf32>
    %c0_73 = arith.constant 0 : index
    %c0_74 = arith.constant 0 : index
    %230 = vector.load %arg7[%c0_73, %c0_74] : memref<1x512xf32, #tpu.memory_space<vmem>>, vector<1x512xf32>
    %231 = vector.broadcast %230 : vector<1x512xf32> to vector<8x512xf32>
    %232 = arith.addf %229, %231 : vector<8x512xf32>
    %233 = vector.extract_strided_slice %232 {offsets = [0, 0], sizes = [8, 128], strides = [1, 1]} : vector<8x512xf32> to vector<8x128xf32>
    %234 = arith.negf %233 : vector<8x128xf32>
    %235 = math.exp %234 : vector<8x128xf32>
    %cst_75 = arith.constant 1.000000e+00 : f32
    %236 = vector.broadcast %cst_75 : f32 to vector<8x128xf32>
    %237 = arith.addf %236, %235 : vector<8x128xf32>
    %238 = arith.divf %236, %237 : vector<8x128xf32>
    %239 = vector.extract_strided_slice %232 {offsets = [0, 128], sizes = [8, 128], strides = [1, 1]} : vector<8x512xf32> to vector<8x128xf32>
    %240 = arith.negf %239 : vector<8x128xf32>
    %241 = math.exp %240 : vector<8x128xf32>
    %cst_76 = arith.constant 1.000000e+00 : f32
    %242 = vector.broadcast %cst_76 : f32 to vector<8x128xf32>
    %243 = arith.addf %242, %241 : vector<8x128xf32>
    %244 = arith.divf %242, %243 : vector<8x128xf32>
    %245 = vector.extract_strided_slice %232 {offsets = [0, 256], sizes = [8, 128], strides = [1, 1]} : vector<8x512xf32> to vector<8x128xf32>
    %246 = math.tanh %245 : vector<8x128xf32>
    %247 = vector.extract_strided_slice %232 {offsets = [0, 384], sizes = [8, 128], strides = [1, 1]} : vector<8x512xf32> to vector<8x128xf32>
    %248 = arith.negf %247 : vector<8x128xf32>
    %249 = math.exp %248 : vector<8x128xf32>
    %cst_77 = arith.constant 1.000000e+00 : f32
    %250 = vector.broadcast %cst_77 : f32 to vector<8x128xf32>
    %251 = arith.addf %250, %249 : vector<8x128xf32>
    %252 = arith.divf %250, %251 : vector<8x128xf32>
    %253 = arith.mulf %244, %192 : vector<8x128xf32>
    %254 = arith.mulf %238, %246 : vector<8x128xf32>
    %255 = arith.addf %253, %254 : vector<8x128xf32>
    %256 = math.tanh %255 : vector<8x128xf32>
    %257 = arith.mulf %252, %256 : vector<8x128xf32>
    %c24 = arith.constant 24 : index
    %c0_78 = arith.constant 0 : index
    %258 = vector.load %arg11[%c24, %c0_78] : memref<64x128xf32, #tpu.memory_space<vmem>>, vector<8x128xf32>
    tpu.vector_store %arg11[%c24, %c0_78], %257 {strides = array<i32>} : memref<64x128xf32, #tpu.memory_space<vmem>>, vector<8x128xf32>,
    %259 = vector.extract_strided_slice %5 {offsets = [32, 0], sizes = [8, 512], strides = [1, 1]} : vector<64x512xf32> to vector<8x512xf32>
    %c0_79 = arith.constant 0 : index
    %c0_80 = arith.constant 0 : index
    %260 = vector.load %arg3[%c0_79, %c0_80] : memref<128x512xf32, #tpu.memory_space<vmem>>, vector<128x512xf32>
    %cst_81 = arith.constant dense<0.000000e+00> : vector<8x512xf32>
    %261 = tpu.matmul %224, %260, %cst_81 {dimension_numbers = #tpu.dot_dimension_numbers<[1], [0], [0], [1], [0, 0, 1, 1], [], []>} : vector<8x128xf32>, vector<128x512xf32>, vector<8x512xf32> -> vector<8x512xf32>
    %262 = arith.addf %259, %261 : vector<8x512xf32>
    %263 = vector.extract_strided_slice %262 {offsets = [0, 0], sizes = [8, 128], strides = [1, 1]} : vector<8x512xf32> to vector<8x128xf32>
    %264 = arith.negf %263 : vector<8x128xf32>
    %265 = math.exp %264 : vector<8x128xf32>
    %cst_82 = arith.constant 1.000000e+00 : f32
    %266 = vector.broadcast %cst_82 : f32 to vector<8x128xf32>
    %267 = arith.addf %266, %265 : vector<8x128xf32>
    %268 = arith.divf %266, %267 : vector<8x128xf32>
    %269 = vector.extract_strided_slice %262 {offsets = [0, 128], sizes = [8, 128], strides = [1, 1]} : vector<8x512xf32> to vector<8x128xf32>
    %270 = arith.negf %269 : vector<8x128xf32>
    %271 = math.exp %270 : vector<8x128xf32>
    %cst_83 = arith.constant 1.000000e+00 : f32
    %272 = vector.broadcast %cst_83 : f32 to vector<8x128xf32>
    %273 = arith.addf %272, %271 : vector<8x128xf32>
    %274 = arith.divf %272, %273 : vector<8x128xf32>
    %275 = vector.extract_strided_slice %262 {offsets = [0, 256], sizes = [8, 128], strides = [1, 1]} : vector<8x512xf32> to vector<8x128xf32>
    %276 = math.tanh %275 : vector<8x128xf32>
    %277 = vector.extract_strided_slice %262 {offsets = [0, 384], sizes = [8, 128], strides = [1, 1]} : vector<8x512xf32> to vector<8x128xf32>
    %278 = arith.negf %277 : vector<8x128xf32>
    %279 = math.exp %278 : vector<8x128xf32>
    %cst_84 = arith.constant 1.000000e+00 : f32
    %280 = vector.broadcast %cst_84 : f32 to vector<8x128xf32>
    %281 = arith.addf %280, %279 : vector<8x128xf32>
    %282 = arith.divf %280, %281 : vector<8x128xf32>
    %283 = arith.mulf %274, %222 : vector<8x128xf32>
    %284 = arith.mulf %268, %276 : vector<8x128xf32>
    %285 = arith.addf %283, %284 : vector<8x128xf32>
    %286 = math.tanh %285 : vector<8x128xf32>
    %287 = arith.mulf %282, %286 : vector<8x128xf32>
    %c0_85 = arith.constant 0 : index
    %c0_86 = arith.constant 0 : index
    %288 = vector.load %arg5[%c0_85, %c0_86] : memref<128x512xf32, #tpu.memory_space<vmem>>, vector<128x512xf32>
    %cst_87 = arith.constant dense<0.000000e+00> : vector<8x512xf32>
    %289 = tpu.matmul %287, %288, %cst_87 {dimension_numbers = #tpu.dot_dimension_numbers<[1], [0], [0], [1], [0, 0, 1, 1], [], []>} : vector<8x128xf32>, vector<128x512xf32>, vector<8x512xf32> -> vector<8x512xf32>
    %c0_88 = arith.constant 0 : index
    %c0_89 = arith.constant 0 : index
    %290 = vector.load %arg6[%c0_88, %c0_89] : memref<128x512xf32, #tpu.memory_space<vmem>>, vector<128x512xf32>
    %cst_90 = arith.constant dense<0.000000e+00> : vector<8x512xf32>
    %291 = tpu.matmul %257, %290, %cst_90 {dimension_numbers = #tpu.dot_dimension_numbers<[1], [0], [0], [1], [0, 0, 1, 1], [], []>} : vector<8x128xf32>, vector<128x512xf32>, vector<8x512xf32> -> vector<8x512xf32>
    %292 = arith.addf %289, %291 : vector<8x512xf32>
    %c0_91 = arith.constant 0 : index
    %c0_92 = arith.constant 0 : index
    %293 = vector.load %arg7[%c0_91, %c0_92] : memref<1x512xf32, #tpu.memory_space<vmem>>, vector<1x512xf32>
    %294 = vector.broadcast %293 : vector<1x512xf32> to vector<8x512xf32>
    %295 = arith.addf %292, %294 : vector<8x512xf32>
    %296 = vector.extract_strided_slice %295 {offsets = [0, 0], sizes = [8, 128], strides = [1, 1]} : vector<8x512xf32> to vector<8x128xf32>
    %297 = arith.negf %296 : vector<8x128xf32>
    %298 = math.exp %297 : vector<8x128xf32>
    %cst_93 = arith.constant 1.000000e+00 : f32
    %299 = vector.broadcast %cst_93 : f32 to vector<8x128xf32>
    %300 = arith.addf %299, %298 : vector<8x128xf32>
    %301 = arith.divf %299, %300 : vector<8x128xf32>
    %302 = vector.extract_strided_slice %295 {offsets = [0, 128], sizes = [8, 128], strides = [1, 1]} : vector<8x512xf32> to vector<8x128xf32>
    %303 = arith.negf %302 : vector<8x128xf32>
    %304 = math.exp %303 : vector<8x128xf32>
    %cst_94 = arith.constant 1.000000e+00 : f32
    %305 = vector.broadcast %cst_94 : f32 to vector<8x128xf32>
    %306 = arith.addf %305, %304 : vector<8x128xf32>
    %307 = arith.divf %305, %306 : vector<8x128xf32>
    %308 = vector.extract_strided_slice %295 {offsets = [0, 256], sizes = [8, 128], strides = [1, 1]} : vector<8x512xf32> to vector<8x128xf32>
    %309 = math.tanh %308 : vector<8x128xf32>
    %310 = vector.extract_strided_slice %295 {offsets = [0, 384], sizes = [8, 128], strides = [1, 1]} : vector<8x512xf32> to vector<8x128xf32>
    %311 = arith.negf %310 : vector<8x128xf32>
    %312 = math.exp %311 : vector<8x128xf32>
    %cst_95 = arith.constant 1.000000e+00 : f32
    %313 = vector.broadcast %cst_95 : f32 to vector<8x128xf32>
    %314 = arith.addf %313, %312 : vector<8x128xf32>
    %315 = arith.divf %313, %314 : vector<8x128xf32>
    %316 = arith.mulf %307, %255 : vector<8x128xf32>
    %317 = arith.mulf %301, %309 : vector<8x128xf32>
    %318 = arith.addf %316, %317 : vector<8x128xf32>
    %319 = math.tanh %318 : vector<8x128xf32>
    %320 = arith.mulf %315, %319 : vector<8x128xf32>
    %c32 = arith.constant 32 : index
    %c0_96 = arith.constant 0 : index
    %321 = vector.load %arg11[%c32, %c0_96] : memref<64x128xf32, #tpu.memory_space<vmem>>, vector<8x128xf32>
    tpu.vector_store %arg11[%c32, %c0_96], %320 {strides = array<i32>} : memref<64x128xf32, #tpu.memory_space<vmem>>, vector<8x128xf32>,
    %322 = vector.extract_strided_slice %5 {offsets = [40, 0], sizes = [8, 512], strides = [1, 1]} : vector<64x512xf32> to vector<8x512xf32>
    %c0_97 = arith.constant 0 : index
    %c0_98 = arith.constant 0 : index
    %323 = vector.load %arg3[%c0_97, %c0_98] : memref<128x512xf32, #tpu.memory_space<vmem>>, vector<128x512xf32>
    %cst_99 = arith.constant dense<0.000000e+00> : vector<8x512xf32>
    %324 = tpu.matmul %287, %323, %cst_99 {dimension_numbers = #tpu.dot_dimension_numbers<[1], [0], [0], [1], [0, 0, 1, 1], [], []>} : vector<8x128xf32>, vector<128x512xf32>, vector<8x512xf32> -> vector<8x512xf32>
    %325 = arith.addf %322, %324 : vector<8x512xf32>
    %326 = vector.extract_strided_slice %325 {offsets = [0, 0], sizes = [8, 128], strides = [1, 1]} : vector<8x512xf32> to vector<8x128xf32>
    %327 = arith.negf %326 : vector<8x128xf32>
    %328 = math.exp %327 : vector<8x128xf32>
    %cst_100 = arith.constant 1.000000e+00 : f32
    %329 = vector.broadcast %cst_100 : f32 to vector<8x128xf32>
    %330 = arith.addf %329, %328 : vector<8x128xf32>
    %331 = arith.divf %329, %330 : vector<8x128xf32>
    %332 = vector.extract_strided_slice %325 {offsets = [0, 128], sizes = [8, 128], strides = [1, 1]} : vector<8x512xf32> to vector<8x128xf32>
    %333 = arith.negf %332 : vector<8x128xf32>
    %334 = math.exp %333 : vector<8x128xf32>
    %cst_101 = arith.constant 1.000000e+00 : f32
    %335 = vector.broadcast %cst_101 : f32 to vector<8x128xf32>
    %336 = arith.addf %335, %334 : vector<8x128xf32>
    %337 = arith.divf %335, %336 : vector<8x128xf32>
    %338 = vector.extract_strided_slice %325 {offsets = [0, 256], sizes = [8, 128], strides = [1, 1]} : vector<8x512xf32> to vector<8x128xf32>
    %339 = math.tanh %338 : vector<8x128xf32>
    %340 = vector.extract_strided_slice %325 {offsets = [0, 384], sizes = [8, 128], strides = [1, 1]} : vector<8x512xf32> to vector<8x128xf32>
    %341 = arith.negf %340 : vector<8x128xf32>
    %342 = math.exp %341 : vector<8x128xf32>
    %cst_102 = arith.constant 1.000000e+00 : f32
    %343 = vector.broadcast %cst_102 : f32 to vector<8x128xf32>
    %344 = arith.addf %343, %342 : vector<8x128xf32>
    %345 = arith.divf %343, %344 : vector<8x128xf32>
    %346 = arith.mulf %337, %285 : vector<8x128xf32>
    %347 = arith.mulf %331, %339 : vector<8x128xf32>
    %348 = arith.addf %346, %347 : vector<8x128xf32>
    %349 = math.tanh %348 : vector<8x128xf32>
    %350 = arith.mulf %345, %349 : vector<8x128xf32>
    %c0_103 = arith.constant 0 : index
    %c0_104 = arith.constant 0 : index
    %351 = vector.load %arg5[%c0_103, %c0_104] : memref<128x512xf32, #tpu.memory_space<vmem>>, vector<128x512xf32>
    %cst_105 = arith.constant dense<0.000000e+00> : vector<8x512xf32>
    %352 = tpu.matmul %350, %351, %cst_105 {dimension_numbers = #tpu.dot_dimension_numbers<[1], [0], [0], [1], [0, 0, 1, 1], [], []>} : vector<8x128xf32>, vector<128x512xf32>, vector<8x512xf32> -> vector<8x512xf32>
    %c0_106 = arith.constant 0 : index
    %c0_107 = arith.constant 0 : index
    %353 = vector.load %arg6[%c0_106, %c0_107] : memref<128x512xf32, #tpu.memory_space<vmem>>, vector<128x512xf32>
    %cst_108 = arith.constant dense<0.000000e+00> : vector<8x512xf32>
    %354 = tpu.matmul %320, %353, %cst_108 {dimension_numbers = #tpu.dot_dimension_numbers<[1], [0], [0], [1], [0, 0, 1, 1], [], []>} : vector<8x128xf32>, vector<128x512xf32>, vector<8x512xf32> -> vector<8x512xf32>
    %355 = arith.addf %352, %354 : vector<8x512xf32>
    %c0_109 = arith.constant 0 : index
    %c0_110 = arith.constant 0 : index
    %356 = vector.load %arg7[%c0_109, %c0_110] : memref<1x512xf32, #tpu.memory_space<vmem>>, vector<1x512xf32>
    %357 = vector.broadcast %356 : vector<1x512xf32> to vector<8x512xf32>
    %358 = arith.addf %355, %357 : vector<8x512xf32>
    %359 = vector.extract_strided_slice %358 {offsets = [0, 0], sizes = [8, 128], strides = [1, 1]} : vector<8x512xf32> to vector<8x128xf32>
    %360 = arith.negf %359 : vector<8x128xf32>
    %361 = math.exp %360 : vector<8x128xf32>
    %cst_111 = arith.constant 1.000000e+00 : f32
    %362 = vector.broadcast %cst_111 : f32 to vector<8x128xf32>
    %363 = arith.addf %362, %361 : vector<8x128xf32>
    %364 = arith.divf %362, %363 : vector<8x128xf32>
    %365 = vector.extract_strided_slice %358 {offsets = [0, 128], sizes = [8, 128], strides = [1, 1]} : vector<8x512xf32> to vector<8x128xf32>
    %366 = arith.negf %365 : vector<8x128xf32>
    %367 = math.exp %366 : vector<8x128xf32>
    %cst_112 = arith.constant 1.000000e+00 : f32
    %368 = vector.broadcast %cst_112 : f32 to vector<8x128xf32>
    %369 = arith.addf %368, %367 : vector<8x128xf32>
    %370 = arith.divf %368, %369 : vector<8x128xf32>
    %371 = vector.extract_strided_slice %358 {offsets = [0, 256], sizes = [8, 128], strides = [1, 1]} : vector<8x512xf32> to vector<8x128xf32>
    %372 = math.tanh %371 : vector<8x128xf32>
    %373 = vector.extract_strided_slice %358 {offsets = [0, 384], sizes = [8, 128], strides = [1, 1]} : vector<8x512xf32> to vector<8x128xf32>
    %374 = arith.negf %373 : vector<8x128xf32>
    %375 = math.exp %374 : vector<8x128xf32>
    %cst_113 = arith.constant 1.000000e+00 : f32
    %376 = vector.broadcast %cst_113 : f32 to vector<8x128xf32>
    %377 = arith.addf %376, %375 : vector<8x128xf32>
    %378 = arith.divf %376, %377 : vector<8x128xf32>
    %379 = arith.mulf %370, %318 : vector<8x128xf32>
    %380 = arith.mulf %364, %372 : vector<8x128xf32>
    %381 = arith.addf %379, %380 : vector<8x128xf32>
    %382 = math.tanh %381 : vector<8x128xf32>
    %383 = arith.mulf %378, %382 : vector<8x128xf32>
    %c40 = arith.constant 40 : index
    %c0_114 = arith.constant 0 : index
    %384 = vector.load %arg11[%c40, %c0_114] : memref<64x128xf32, #tpu.memory_space<vmem>>, vector<8x128xf32>
    tpu.vector_store %arg11[%c40, %c0_114], %383 {strides = array<i32>} : memref<64x128xf32, #tpu.memory_space<vmem>>, vector<8x128xf32>,
    %385 = vector.extract_strided_slice %5 {offsets = [48, 0], sizes = [8, 512], strides = [1, 1]} : vector<64x512xf32> to vector<8x512xf32>
    %c0_115 = arith.constant 0 : index
    %c0_116 = arith.constant 0 : index
    %386 = vector.load %arg3[%c0_115, %c0_116] : memref<128x512xf32, #tpu.memory_space<vmem>>, vector<128x512xf32>
    %cst_117 = arith.constant dense<0.000000e+00> : vector<8x512xf32>
    %387 = tpu.matmul %350, %386, %cst_117 {dimension_numbers = #tpu.dot_dimension_numbers<[1], [0], [0], [1], [0, 0, 1, 1], [], []>} : vector<8x128xf32>, vector<128x512xf32>, vector<8x512xf32> -> vector<8x512xf32>
    %388 = arith.addf %385, %387 : vector<8x512xf32>
    %389 = vector.extract_strided_slice %388 {offsets = [0, 0], sizes = [8, 128], strides = [1, 1]} : vector<8x512xf32> to vector<8x128xf32>
    %390 = arith.negf %389 : vector<8x128xf32>
    %391 = math.exp %390 : vector<8x128xf32>
    %cst_118 = arith.constant 1.000000e+00 : f32
    %392 = vector.broadcast %cst_118 : f32 to vector<8x128xf32>
    %393 = arith.addf %392, %391 : vector<8x128xf32>
    %394 = arith.divf %392, %393 : vector<8x128xf32>
    %395 = vector.extract_strided_slice %388 {offsets = [0, 128], sizes = [8, 128], strides = [1, 1]} : vector<8x512xf32> to vector<8x128xf32>
    %396 = arith.negf %395 : vector<8x128xf32>
    %397 = math.exp %396 : vector<8x128xf32>
    %cst_119 = arith.constant 1.000000e+00 : f32
    %398 = vector.broadcast %cst_119 : f32 to vector<8x128xf32>
    %399 = arith.addf %398, %397 : vector<8x128xf32>
    %400 = arith.divf %398, %399 : vector<8x128xf32>
    %401 = vector.extract_strided_slice %388 {offsets = [0, 256], sizes = [8, 128], strides = [1, 1]} : vector<8x512xf32> to vector<8x128xf32>
    %402 = math.tanh %401 : vector<8x128xf32>
    %403 = vector.extract_strided_slice %388 {offsets = [0, 384], sizes = [8, 128], strides = [1, 1]} : vector<8x512xf32> to vector<8x128xf32>
    %404 = arith.negf %403 : vector<8x128xf32>
    %405 = math.exp %404 : vector<8x128xf32>
    %cst_120 = arith.constant 1.000000e+00 : f32
    %406 = vector.broadcast %cst_120 : f32 to vector<8x128xf32>
    %407 = arith.addf %406, %405 : vector<8x128xf32>
    %408 = arith.divf %406, %407 : vector<8x128xf32>
    %409 = arith.mulf %400, %348 : vector<8x128xf32>
    %410 = arith.mulf %394, %402 : vector<8x128xf32>
    %411 = arith.addf %409, %410 : vector<8x128xf32>
    %412 = math.tanh %411 : vector<8x128xf32>
    %413 = arith.mulf %408, %412 : vector<8x128xf32>
    %c0_121 = arith.constant 0 : index
    %c0_122 = arith.constant 0 : index
    %414 = vector.load %arg5[%c0_121, %c0_122] : memref<128x512xf32, #tpu.memory_space<vmem>>, vector<128x512xf32>
    %cst_123 = arith.constant dense<0.000000e+00> : vector<8x512xf32>
    %415 = tpu.matmul %413, %414, %cst_123 {dimension_numbers = #tpu.dot_dimension_numbers<[1], [0], [0], [1], [0, 0, 1, 1], [], []>} : vector<8x128xf32>, vector<128x512xf32>, vector<8x512xf32> -> vector<8x512xf32>
    %c0_124 = arith.constant 0 : index
    %c0_125 = arith.constant 0 : index
    %416 = vector.load %arg6[%c0_124, %c0_125] : memref<128x512xf32, #tpu.memory_space<vmem>>, vector<128x512xf32>
    %cst_126 = arith.constant dense<0.000000e+00> : vector<8x512xf32>
    %417 = tpu.matmul %383, %416, %cst_126 {dimension_numbers = #tpu.dot_dimension_numbers<[1], [0], [0], [1], [0, 0, 1, 1], [], []>} : vector<8x128xf32>, vector<128x512xf32>, vector<8x512xf32> -> vector<8x512xf32>
    %418 = arith.addf %415, %417 : vector<8x512xf32>
    %c0_127 = arith.constant 0 : index
    %c0_128 = arith.constant 0 : index
    %419 = vector.load %arg7[%c0_127, %c0_128] : memref<1x512xf32, #tpu.memory_space<vmem>>, vector<1x512xf32>
    %420 = vector.broadcast %419 : vector<1x512xf32> to vector<8x512xf32>
    %421 = arith.addf %418, %420 : vector<8x512xf32>
    %422 = vector.extract_strided_slice %421 {offsets = [0, 0], sizes = [8, 128], strides = [1, 1]} : vector<8x512xf32> to vector<8x128xf32>
    %423 = arith.negf %422 : vector<8x128xf32>
    %424 = math.exp %423 : vector<8x128xf32>
    %cst_129 = arith.constant 1.000000e+00 : f32
    %425 = vector.broadcast %cst_129 : f32 to vector<8x128xf32>
    %426 = arith.addf %425, %424 : vector<8x128xf32>
    %427 = arith.divf %425, %426 : vector<8x128xf32>
    %428 = vector.extract_strided_slice %421 {offsets = [0, 128], sizes = [8, 128], strides = [1, 1]} : vector<8x512xf32> to vector<8x128xf32>
    %429 = arith.negf %428 : vector<8x128xf32>
    %430 = math.exp %429 : vector<8x128xf32>
    %cst_130 = arith.constant 1.000000e+00 : f32
    %431 = vector.broadcast %cst_130 : f32 to vector<8x128xf32>
    %432 = arith.addf %431, %430 : vector<8x128xf32>
    %433 = arith.divf %431, %432 : vector<8x128xf32>
    %434 = vector.extract_strided_slice %421 {offsets = [0, 256], sizes = [8, 128], strides = [1, 1]} : vector<8x512xf32> to vector<8x128xf32>
    %435 = math.tanh %434 : vector<8x128xf32>
    %436 = vector.extract_strided_slice %421 {offsets = [0, 384], sizes = [8, 128], strides = [1, 1]} : vector<8x512xf32> to vector<8x128xf32>
    %437 = arith.negf %436 : vector<8x128xf32>
    %438 = math.exp %437 : vector<8x128xf32>
    %cst_131 = arith.constant 1.000000e+00 : f32
    %439 = vector.broadcast %cst_131 : f32 to vector<8x128xf32>
    %440 = arith.addf %439, %438 : vector<8x128xf32>
    %441 = arith.divf %439, %440 : vector<8x128xf32>
    %442 = arith.mulf %433, %381 : vector<8x128xf32>
    %443 = arith.mulf %427, %435 : vector<8x128xf32>
    %444 = arith.addf %442, %443 : vector<8x128xf32>
    %445 = math.tanh %444 : vector<8x128xf32>
    %446 = arith.mulf %441, %445 : vector<8x128xf32>
    %c48 = arith.constant 48 : index
    %c0_132 = arith.constant 0 : index
    %447 = vector.load %arg11[%c48, %c0_132] : memref<64x128xf32, #tpu.memory_space<vmem>>, vector<8x128xf32>
    tpu.vector_store %arg11[%c48, %c0_132], %446 {strides = array<i32>} : memref<64x128xf32, #tpu.memory_space<vmem>>, vector<8x128xf32>,
    %448 = vector.extract_strided_slice %5 {offsets = [56, 0], sizes = [8, 512], strides = [1, 1]} : vector<64x512xf32> to vector<8x512xf32>
    %c0_133 = arith.constant 0 : index
    %c0_134 = arith.constant 0 : index
    %449 = vector.load %arg3[%c0_133, %c0_134] : memref<128x512xf32, #tpu.memory_space<vmem>>, vector<128x512xf32>
    %cst_135 = arith.constant dense<0.000000e+00> : vector<8x512xf32>
    %450 = tpu.matmul %413, %449, %cst_135 {dimension_numbers = #tpu.dot_dimension_numbers<[1], [0], [0], [1], [0, 0, 1, 1], [], []>} : vector<8x128xf32>, vector<128x512xf32>, vector<8x512xf32> -> vector<8x512xf32>
    %451 = arith.addf %448, %450 : vector<8x512xf32>
    %452 = vector.extract_strided_slice %451 {offsets = [0, 0], sizes = [8, 128], strides = [1, 1]} : vector<8x512xf32> to vector<8x128xf32>
    %453 = arith.negf %452 : vector<8x128xf32>
    %454 = math.exp %453 : vector<8x128xf32>
    %cst_136 = arith.constant 1.000000e+00 : f32
    %455 = vector.broadcast %cst_136 : f32 to vector<8x128xf32>
    %456 = arith.addf %455, %454 : vector<8x128xf32>
    %457 = arith.divf %455, %456 : vector<8x128xf32>
    %458 = vector.extract_strided_slice %451 {offsets = [0, 128], sizes = [8, 128], strides = [1, 1]} : vector<8x512xf32> to vector<8x128xf32>
    %459 = arith.negf %458 : vector<8x128xf32>
    %460 = math.exp %459 : vector<8x128xf32>
    %cst_137 = arith.constant 1.000000e+00 : f32
    %461 = vector.broadcast %cst_137 : f32 to vector<8x128xf32>
    %462 = arith.addf %461, %460 : vector<8x128xf32>
    %463 = arith.divf %461, %462 : vector<8x128xf32>
    %464 = vector.extract_strided_slice %451 {offsets = [0, 256], sizes = [8, 128], strides = [1, 1]} : vector<8x512xf32> to vector<8x128xf32>
    %465 = math.tanh %464 : vector<8x128xf32>
    %466 = vector.extract_strided_slice %451 {offsets = [0, 384], sizes = [8, 128], strides = [1, 1]} : vector<8x512xf32> to vector<8x128xf32>
    %467 = arith.negf %466 : vector<8x128xf32>
    %468 = math.exp %467 : vector<8x128xf32>
    %cst_138 = arith.constant 1.000000e+00 : f32
    %469 = vector.broadcast %cst_138 : f32 to vector<8x128xf32>
    %470 = arith.addf %469, %468 : vector<8x128xf32>
    %471 = arith.divf %469, %470 : vector<8x128xf32>
    %472 = arith.mulf %463, %411 : vector<8x128xf32>
    %473 = arith.mulf %457, %465 : vector<8x128xf32>
    %474 = arith.addf %472, %473 : vector<8x128xf32>
    %475 = math.tanh %474 : vector<8x128xf32>
    %476 = arith.mulf %471, %475 : vector<8x128xf32>
    %c0_139 = arith.constant 0 : index
    %c0_140 = arith.constant 0 : index
    %477 = vector.load %arg5[%c0_139, %c0_140] : memref<128x512xf32, #tpu.memory_space<vmem>>, vector<128x512xf32>
    %cst_141 = arith.constant dense<0.000000e+00> : vector<8x512xf32>
    %478 = tpu.matmul %476, %477, %cst_141 {dimension_numbers = #tpu.dot_dimension_numbers<[1], [0], [0], [1], [0, 0, 1, 1], [], []>} : vector<8x128xf32>, vector<128x512xf32>, vector<8x512xf32> -> vector<8x512xf32>
    %c0_142 = arith.constant 0 : index
    %c0_143 = arith.constant 0 : index
    %479 = vector.load %arg6[%c0_142, %c0_143] : memref<128x512xf32, #tpu.memory_space<vmem>>, vector<128x512xf32>
    %cst_144 = arith.constant dense<0.000000e+00> : vector<8x512xf32>
    %480 = tpu.matmul %446, %479, %cst_144 {dimension_numbers = #tpu.dot_dimension_numbers<[1], [0], [0], [1], [0, 0, 1, 1], [], []>} : vector<8x128xf32>, vector<128x512xf32>, vector<8x512xf32> -> vector<8x512xf32>
    %481 = arith.addf %478, %480 : vector<8x512xf32>
    %c0_145 = arith.constant 0 : index
    %c0_146 = arith.constant 0 : index
    %482 = vector.load %arg7[%c0_145, %c0_146] : memref<1x512xf32, #tpu.memory_space<vmem>>, vector<1x512xf32>
    %483 = vector.broadcast %482 : vector<1x512xf32> to vector<8x512xf32>
    %484 = arith.addf %481, %483 : vector<8x512xf32>
    %485 = vector.extract_strided_slice %484 {offsets = [0, 0], sizes = [8, 128], strides = [1, 1]} : vector<8x512xf32> to vector<8x128xf32>
    %486 = arith.negf %485 : vector<8x128xf32>
    %487 = math.exp %486 : vector<8x128xf32>
    %cst_147 = arith.constant 1.000000e+00 : f32
    %488 = vector.broadcast %cst_147 : f32 to vector<8x128xf32>
    %489 = arith.addf %488, %487 : vector<8x128xf32>
    %490 = arith.divf %488, %489 : vector<8x128xf32>
    %491 = vector.extract_strided_slice %484 {offsets = [0, 128], sizes = [8, 128], strides = [1, 1]} : vector<8x512xf32> to vector<8x128xf32>
    %492 = arith.negf %491 : vector<8x128xf32>
    %493 = math.exp %492 : vector<8x128xf32>
    %cst_148 = arith.constant 1.000000e+00 : f32
    %494 = vector.broadcast %cst_148 : f32 to vector<8x128xf32>
    %495 = arith.addf %494, %493 : vector<8x128xf32>
    %496 = arith.divf %494, %495 : vector<8x128xf32>
    %497 = vector.extract_strided_slice %484 {offsets = [0, 256], sizes = [8, 128], strides = [1, 1]} : vector<8x512xf32> to vector<8x128xf32>
    %498 = math.tanh %497 : vector<8x128xf32>
    %499 = vector.extract_strided_slice %484 {offsets = [0, 384], sizes = [8, 128], strides = [1, 1]} : vector<8x512xf32> to vector<8x128xf32>
    %500 = arith.negf %499 : vector<8x128xf32>
    %501 = math.exp %500 : vector<8x128xf32>
    %cst_149 = arith.constant 1.000000e+00 : f32
    %502 = vector.broadcast %cst_149 : f32 to vector<8x128xf32>
    %503 = arith.addf %502, %501 : vector<8x128xf32>
    %504 = arith.divf %502, %503 : vector<8x128xf32>
    %505 = arith.mulf %496, %444 : vector<8x128xf32>
    %506 = arith.mulf %490, %498 : vector<8x128xf32>
    %507 = arith.addf %505, %506 : vector<8x128xf32>
    %508 = math.tanh %507 : vector<8x128xf32>
    %509 = arith.mulf %504, %508 : vector<8x128xf32>
    %c56 = arith.constant 56 : index
    %c0_150 = arith.constant 0 : index
    %510 = vector.load %arg11[%c56, %c0_150] : memref<64x128xf32, #tpu.memory_space<vmem>>, vector<8x128xf32>
    tpu.vector_store %arg11[%c56, %c0_150], %509 {strides = array<i32>} : memref<64x128xf32, #tpu.memory_space<vmem>>, vector<8x128xf32>,
    %c0_151 = arith.constant 0 : index
    %c0_152 = arith.constant 0 : index
    %511 = vector.load %arg11[%c0_151, %c0_152] : memref<64x128xf32, #tpu.memory_space<vmem>>, vector<64x128xf32>
    %c0_153 = arith.constant 0 : index
    %c0_154 = arith.constant 0 : index
    %512 = vector.load %arg8[%c0_153, %c0_154] : memref<128x1xf32, #tpu.memory_space<vmem>>, vector<128x1xf32>
    %cst_155 = arith.constant dense<0.000000e+00> : vector<64x1xf32>
    %513 = tpu.matmul %511, %512, %cst_155 {dimension_numbers = #tpu.dot_dimension_numbers<[1], [0], [0], [1], [0, 0, 1, 1], [], []>} : vector<64x128xf32>, vector<128x1xf32>, vector<64x1xf32> -> vector<64x1xf32>
    %c0_156 = arith.constant 0 : index
    %c0_157 = arith.constant 0 : index
    %514 = vector.load %arg9[%c0_156, %c0_157] : memref<1x1xf32, #tpu.memory_space<vmem>>, vector<1x1xf32>
    %515 = vector.broadcast %514 : vector<1x1xf32> to vector<64x1xf32>
    %516 = arith.addf %513, %515 : vector<64x1xf32>
    %c0_158 = arith.constant 0 : index
    %c0_159 = arith.constant 0 : index
    %517 = vector.load %arg10[%c0_158, %c0_159] : memref<64x1xf32, #tpu.memory_space<vmem>>, vector<64x1xf32>
    tpu.vector_store %arg10[%c0_158, %c0_159], %516 {strides = array<i32>} : memref<64x1xf32, #tpu.memory_space<vmem>>, vector<64x1xf32>,
    return
  }
  func.func @transform_0(%arg0: i32) -> (i32, i32) {
    %c0_i32 = arith.constant 0 : i32
    %c0_i32_0 = arith.constant 0 : i32
    %c0_i32_1 = arith.constant 0 : i32
    return %c0_i32, %c0_i32_0 : i32, i32
  }
  func.func @transform_1(%arg0: i32) -> (i32, i32) {
    %c0_i32 = arith.constant 0 : i32
    %c0_i32_0 = arith.constant 0 : i32
    %c0_i32_1 = arith.constant 0 : i32
    return %c0_i32, %c0_i32_0 : i32, i32
  }
  func.func @transform_2(%arg0: i32) -> (i32, i32) {
    %c0_i32 = arith.constant 0 : i32
    %c0_i32_0 = arith.constant 0 : i32
    %c0_i32_1 = arith.constant 0 : i32
    return %c0_i32, %c0_i32_0 : i32, i32
  }
  func.func @transform_3(%arg0: i32) -> (i32, i32) {
    %c0_i32 = arith.constant 0 : i32
    %c0_i32_0 = arith.constant 0 : i32
    %c0_i32_1 = arith.constant 0 : i32
    return %c0_i32, %c0_i32_0 : i32, i32
  }
  func.func @transform_4(%arg0: i32) -> (i32, i32) {
    %c0_i32 = arith.constant 0 : i32
    %c0_i32_0 = arith.constant 0 : i32
    %c0_i32_1 = arith.constant 0 : i32
    return %c0_i32, %c0_i32_0 : i32, i32
  }
  func.func @transform_5(%arg0: i32) -> (i32, i32) {
    %c0_i32 = arith.constant 0 : i32
    %c0_i32_0 = arith.constant 0 : i32
    %c0_i32_1 = arith.constant 0 : i32
    return %c0_i32, %c0_i32_0 : i32, i32
  }
  func.func @transform_6(%arg0: i32) -> (i32, i32) {
    %c0_i32 = arith.constant 0 : i32
    %c0_i32_0 = arith.constant 0 : i32
    %c0_i32_1 = arith.constant 0 : i32
    return %c0_i32, %c0_i32_0 : i32, i32
  }
  func.func @transform_7(%arg0: i32) -> (i32, i32) {
    %c0_i32 = arith.constant 0 : i32
    %c0_i32_0 = arith.constant 0 : i32
    %c0_i32_1 = arith.constant 0 : i32
    return %c0_i32, %c0_i32_0 : i32, i32
  }
  func.func @transform_8(%arg0: i32) -> (i32, i32) {
    %c0_i32 = arith.constant 0 : i32
    %c0_i32_0 = arith.constant 0 : i32
    %c0_i32_1 = arith.constant 0 : i32
    return %c0_i32, %c0_i32_0 : i32, i32
  }
  func.func @transform_9(%arg0: i32) -> (i32, i32) {
    %c0_i32 = arith.constant 0 : i32
    %c0_i32_0 = arith.constant 0 : i32
    %c0_i32_1 = arith.constant 0 : i32
    return %c0_i32, %c0_i32_0 : i32, i32
  }
}

</mosaic_0001>

<llo_original>
// kernel: tpu_custom_call.1
$region0: #{tpu_custom_call.1}
  #allocation0 [shape = 'u32[]', space=smem, size = 0x4, offset = 0x4, fixed_abs, tag = 'smem constant byte address 0x4 - core index']
  #allocation1 [shape = 'u32[144,128]{1,0:T(1,128)}', space=vmem, size = 0x12000, scoped, tag = 'internal scratch']
  #allocation2 [shape = 'f32[64,128]{1,0:T(8,128)}', space=vmem, size = 0x8000, scoped, tag = 'scratch operand']
  #allocation3 [shape = 'f32[1,1]{1,0:T(1,128)S(1)}', space=vmem, size = 0x200, scoped, tag = 'scoped memory for tpu_custom_call.1']
  %s0 = inlined_call_operand.vmem [shape: f32[64,35], index: 0, kind: input, shape index: {}]
  %s1 = inlined_call_operand.vmem [shape: f32[35,512], index: 1, kind: input, shape index: {}]
  %s2 = inlined_call_operand.hbm [shape: f32[128,512], index: 2, kind: input, shape index: {}]
  %s3 = inlined_call_operand.vmem [shape: f32[1,512], index: 3, kind: input, shape index: {}]
  %s4 = inlined_call_operand.hbm [shape: f32[128,512], index: 4, kind: input, shape index: {}]
  %s5 = inlined_call_operand.hbm [shape: f32[128,512], index: 5, kind: input, shape index: {}]
  %s6 = inlined_call_operand.vmem [shape: f32[1,512], index: 6, kind: input, shape index: {}]
  %s7 = inlined_call_operand.vmem [shape: f32[128,1], index: 7, kind: input, shape index: {}]
  %s8 = inlined_call_operand.<no memory space> [shape: f32[1,1], index: 8, kind: input, shape index: {}]
  %s9 = inlined_call_operand.vmem [shape: f32[64,1], index: 9, kind: output, shape index: {}]
  %s10 = sld [smem:[#allocation0]]
  $region58: #{tpu_custom_call.1} parent=0
    _
  %s12 = ssub.s32 1, %s10
  %s13 = scalar_select 0, %s12, %s10
  %v14 = vstv %s8
  %15 = vst [vmem:[#allocation3] sm:$0x1] %v14
  $region1: #{tpu_custom_call.1} parent=0
    #allocation4 [shape = 'u8[262144]{0}', space=vmem, size = 0x40000, scoped, tag = 'input window, operand 2, single buffered']
    #allocation5 [shape = 's32[1]{0}', space=sflag, size = 0x4, scoped, tag = 'scoped memory for tpu_custom_call.1']
    #allocation6 [shape = 'u8[262144]{0}', space=vmem, size = 0x40000, scoped, tag = 'input window, operand 4, single buffered']
    #allocation7 [shape = 's32[1]{0}', space=sflag, size = 0x4, scoped, tag = 'scoped memory for tpu_custom_call.1']
    #allocation8 [shape = 'u8[262144]{0}', space=vmem, size = 0x40000, scoped, tag = 'input window, operand 5, single buffered']
    %16 = vsyncpa [#allocation5], 0
    %17 = vsyncpa [#allocation7], 0
    // Predicated region
    $region2: #{tpu_custom_call.1} parent=1 // pred_check
      _
    $region3: #{tpu_custom_call.1} parent=1 // pred_check_branch
      %19 = sbr.rel (0) target = $region5
    $region4: #{tpu_custom_call.1} parent=1 // pred_region
      _
    $region5: #{tpu_custom_call.1} parent=1 // pred_fallthru
      _
    // Predicated region
    $region6: #{tpu_custom_call.1} parent=1 // pred_check
      _
    $region7: #{tpu_custom_call.1} parent=1 // pred_check_branch
      %21 = sbr.rel (0) target = $region9
    $region8: #{tpu_custom_call.1} parent=1 // pred_region
      _
    $region9: #{tpu_custom_call.1} parent=1 // pred_fallthru
      _
    // Predicated region
    $region10: #{tpu_custom_call.1} parent=1 // pred_check
      _
    $region11: #{tpu_custom_call.1} parent=1 // pred_check_branch
      %23 = sbr.rel (0) target = $region13
    $region12: #{tpu_custom_call.1} parent=1 // pred_region
      %s25 = ssub.s32 8192, 8192
      %26 = vsyncadd [#allocation5], %s25
      %s27 = sshll.u32 [#allocation4], 4
      %s28 = int_to_ptr.vmem [resolvable:$true] %s27
      %33 = dma.hbm_to_vmem [thread:$0]  %s2, 8192, %s28, [#allocation5], 512, 512, 32
    $region13: #{tpu_custom_call.1} parent=1 // pred_fallthru
      _
    // Predicated region
    $region14: #{tpu_custom_call.1} parent=1 // pred_check
      _
    $region15: #{tpu_custom_call.1} parent=1 // pred_check_branch
      %35 = sbr.rel (0) target = $region17
    $region16: #{tpu_custom_call.1} parent=1 // pred_region
      _
    $region17: #{tpu_custom_call.1} parent=1 // pred_fallthru
      _
    // Predicated region
    $region18: #{tpu_custom_call.1} parent=1 // pred_check
      _
    $region19: #{tpu_custom_call.1} parent=1 // pred_check_branch
      %37 = sbr.rel (0) target = $region21
    $region20: #{tpu_custom_call.1} parent=1 // pred_region
      %s39 = ssub.s32 8192, 8192
      %40 = vsyncadd [#allocation7], %s39
      %s41 = sshll.u32 [#allocation6], 4
      %s42 = int_to_ptr.vmem [resolvable:$true] %s41
      %47 = dma.hbm_to_vmem [thread:$0]  %s4, 8192, %s42, [#allocation7], 512, 512, 32
    $region21: #{tpu_custom_call.1} parent=1 // pred_fallthru
      _
    // Predicated region
    $region22: #{tpu_custom_call.1} parent=1 // pred_check
      _
    $region23: #{tpu_custom_call.1} parent=1 // pred_check_branch
      %49 = sbr.rel (0) target = $region25
    $region24: #{tpu_custom_call.1} parent=1 // pred_region
      %s51 = ssub.s32 8192, 8192
      %52 = vsyncadd [#allocation7], %s51
      %s53 = sshll.u32 [#allocation8], 4
      %s54 = int_to_ptr.vmem [resolvable:$true] %s53
      %59 = dma.hbm_to_vmem [thread:$0]  %s5, 8192, %s54, [#allocation7], 512, 512, 32
    $region25: #{tpu_custom_call.1} parent=1 // pred_fallthru
      _
    // Predicated region
    $region26: #{tpu_custom_call.1} parent=1 // pred_check
      _
    $region27: #{tpu_custom_call.1} parent=1 // pred_check_branch
      %61 = sbr.rel (0) target = $region29
    $region28: #{tpu_custom_call.1} parent=1 // pred_region
      _
    $region29: #{tpu_custom_call.1} parent=1 // pred_fallthru
      _
    // Predicated region
    $region30: #{tpu_custom_call.1} parent=1 // pred_check
      _
    $region31: #{tpu_custom_call.1} parent=1 // pred_check_branch
      %63 = sbr.rel (0) target = $region33
    $region32: #{tpu_custom_call.1} parent=1 // pred_region
      _
    $region33: #{tpu_custom_call.1} parent=1 // pred_fallthru
      _
    // Predicated region
    $region34: #{tpu_custom_call.1} parent=1 // pred_check
      _
    $region35: #{tpu_custom_call.1} parent=1 // pred_check_branch
      %65 = sbr.rel (0) target = $region37
    $region36: #{tpu_custom_call.1} parent=1 // pred_region
      _
    $region37: #{tpu_custom_call.1} parent=1 // pred_fallthru
      _
    // Predicated region
    $region38: #{tpu_custom_call.1} parent=1 // pred_check
      _
    $region39: #{tpu_custom_call.1} parent=1 // pred_check_branch
      %67 = sbr.rel (0) target = $region41
    $region40: #{tpu_custom_call.1} parent=1 // pred_region
      %68 = dma.done [#allocation5], 8192
    $region41: #{tpu_custom_call.1} parent=1 // pred_fallthru
      _
    // Predicated region
    $region42: #{tpu_custom_call.1} parent=1 // pred_check
      _
    $region43: #{tpu_custom_call.1} parent=1 // pred_check_branch
      %70 = sbr.rel (0) target = $region45
    $region44: #{tpu_custom_call.1} parent=1 // pred_region
      %71 = dma.done [#allocation7], 8192
    $region45: #{tpu_custom_call.1} parent=1 // pred_fallthru
      _
    // Predicated region
    $region46: #{tpu_custom_call.1} parent=1 // pred_check
      _
    $region47: #{tpu_custom_call.1} parent=1 // pred_check_branch
      %73 = sbr.rel (0) target = $region49
    $region48: #{tpu_custom_call.1} parent=1 // pred_region
      %74 = dma.done [#allocation7], 8192
    $region49: #{tpu_custom_call.1} parent=1 // pred_fallthru
      _
    %v75 = vld [vmem:[%s0] sm:$0xff]
    %v76 = vld [vmem:[%s0 + $0x8] sm:$0xff]
    %v77 = vld [vmem:[%s0 + $0x10] sm:$0xff]
    %v78 = vld [vmem:[%s0 + $0x18] sm:$0xff]
    %v79 = vld [vmem:[%s0 + $0x20] sm:$0xff]
    %v80 = vld [vmem:[%s0 + $0x28] sm:$0xff]
    %v81 = vld [vmem:[%s0 + $0x30] sm:$0xff]
    %v82 = vld [vmem:[%s0 + $0x38] sm:$0xff]
    %v83 = vld [vmem:[%s1] sm:$0xff]
    %v84 = vld [vmem:[%s1 + $0x8] sm:$0xff]
    %v85 = vld [vmem:[%s1 + $0x10] sm:$0xff]
    %v86 = vld [vmem:[%s1 + $0x18] sm:$0xff]
    %v87 = vld [vmem:[%s1 + $0x20] sm:$0xff]
    %v88 = vld [vmem:[%s1 + $0x28] sm:$0xff]
    %v89 = vld [vmem:[%s1 + $0x30] sm:$0xff]
    %v90 = vld [vmem:[%s1 + $0x38] sm:$0xff]
    %v91 = vld [vmem:[%s1 + $0x40] sm:$0xff]
    %v92 = vld [vmem:[%s1 + $0x48] sm:$0xff]
    %v93 = vld [vmem:[%s1 + $0x50] sm:$0xff]
    %v94 = vld [vmem:[%s1 + $0x58] sm:$0xff]
    %v95 = vld [vmem:[%s1 + $0x60] sm:$0xff]
    %v96 = vld [vmem:[%s1 + $0x68] sm:$0xff]
    %v97 = vld [vmem:[%s1 + $0x70] sm:$0xff]
    %v98 = vld [vmem:[%s1 + $0x78] sm:$0xff]
    %v99 = vld [vmem:[%s1 + $0x80] sm:$0x7]
    %v100 = vld [vmem:[%s1 + $0x88] sm:$0x7]
    %v101 = vld [vmem:[%s1 + $0x90] sm:$0x7]
    %v102 = vld [vmem:[%s1 + $0x98] sm:$0x7]
    %v103 = vld [vmem:[%s3] sm:$0xf]
    %v105 = vlaneseq
    %v106 = vshrl.u32 %v105, 7
    %v107 = vsub.s32 0, %v106
    %v108 = vrot.slane %v103, %v107
    %v109 = vlaneseq
    %v110 = vshrl.u32 %v109, 7
    %v111 = vsub.s32 1, %v110
    %v112 = vrot.slane %v103, %v111
    %v113 = vlaneseq
    %v114 = vshrl.u32 %v113, 7
    %v115 = vsub.s32 2, %v114
    %v116 = vrot.slane %v103, %v115
    %v117 = vlaneseq
    %v118 = vshrl.u32 %v117, 7
    %v119 = vsub.s32 3, %v118
    %v120 = vrot.slane %v103, %v119
    %vm125 = vcmask 285696
    %v127 = vsel %vm125, %v75, 0
    %v130 = vsel %vm125, %v76, 0
    %v133 = vsel %vm125, %v77, 0
    %v136 = vsel %vm125, %v78, 0
    %v139 = vsel %vm125, %v79, 0
    %v142 = vsel %vm125, %v80, 0
    %v145 = vsel %vm125, %v81, 0
    %v148 = vsel %vm125, %v82, 0
    %vm150 = vcmask 1042432
    %v152 = vsel %vm150, %v99, 0
    %v155 = vsel %vm150, %v100, 0
    %v158 = vsel %vm150, %v101, 0
    %v161 = vsel %vm150, %v102, 0
    %163 = vmatprep.subr.mxu0 %v84
    %164 = vmatpush1.msra.mxu0 %v83
    %165 = vmatprep.subr.mxu0 %v88
    %166 = vmatpush1.msra.mxu0 %v87
    %167 = vmatprep.subr.mxu0 %v92
    %168 = vmatpush1.msra.mxu0 %v91
    %169 = vmatprep.subr.mxu0 %v96
    %170 = vmatpush1.msra.mxu0 %v95
    %171 = vmatprep.subr.mxu0 %v155
    %172 = vmatpush1.msra.mxu0 %v152
    %173 = vmatprep.subr.mxu0 0.0
    %174 = vmatpush1.msra.mxu0 0.0
    %175 = vmatprep.subr.mxu0 0.0
    %176 = vmatpush1.msra.mxu0 0.0
    %177 = vmatprep.subr.mxu0 0.0
    %178 = vmatpush1.msra.mxu0 0.0
    %179 = vmatprep.subr.mxu0 0.0
    %180 = vmatpush1.msra.mxu0 0.0
    %181 = vmatprep.subr.mxu0 0.0
    %182 = vmatpush1.msra.mxu0 0.0
    %183 = vmatprep.subr.mxu0 0.0
    %184 = vmatpush1.msra.mxu0 0.0
    %185 = vmatprep.subr.mxu0 0.0
    %186 = vmatpush1.msra.mxu0 0.0
    %187 = vmatprep.subr.mxu0 0.0
    %188 = vmatpush1.msra.mxu0 0.0
    %189 = vmatprep.subr.mxu0 0.0
    %190 = vmatpush1.msra.mxu0 0.0
    %191 = vmatprep.subr.mxu0 0.0
    %192 = vmatpush1.msra.mxu0 0.0
    %193 = vmatprep.subr.mxu0 0.0
    %194 = vmatpush1.msra.mxu0 0.0
    %195 = vmatprep.subr.mxu0 0.0
    %196 = vmatpush1.msra.mxu0 0.0
    %197 = vmatprep.subr.mxu0 0.0
    %198 = vmatpush1.msra.mxu0 0.0
    %199 = vmatprep.subr.mxu0 0.0
    %200 = vmatpush1.msra.mxu0 0.0
    %201 = vmatprep.subr.mxu0 0.0
    %202 = vmatpush1.msra.mxu0 0.0
    %203 = vmatprep.subr.mxu0 0.0
    %204 = vmatpush1.msra.mxu0 0.0
    %205 = vmatprep.subr.mxu0 0.0
    %206 = vmatpush1.msra.mxu0 0.0
    %207 = vmatprep.subr.mxu0 0.0
    %208 = vmatpush1.msra.mxu0 0.0
    %209 = vmatprep.subr.mxu0 0.0
    %210 = vmatpush1.msra.mxu0 0.0
    %211 = vmatprep.subr.mxu0 0.0
    %212 = vmatpush1.msra.mxu0 0.0
    %213 = vmatprep.subr.mxu0 0.0
    %214 = vmatpush1.msra.mxu0 0.0
    %215 = vmatprep.subr.mxu0 0.0
    %216 = vmatpush1.msra.mxu0 0.0
    %217 = vmatprep.subr.mxu0 0.0
    %218 = vmatpush1.msra.mxu0 0.0
    %219 = vmatprep.subr.mxu0 0.0
    %220 = vmatpush1.msra.mxu0 0.0
    %221 = vmatprep.subr.mxu0 0.0
    %222 = vmatpush1.msra.mxu0 0.0
    %223 = vmatprep.subr.mxu0 0.0
    %224 = vmatpush1.msra.mxu0 0.0
    %225 = vmatprep.subr.mxu0 0.0
    %226 = vmatpush1.msra.mxu0 0.0
    %227 = vmatprep.mubr.f32.mxu0 0.0
    %228 = vmatmul.mubr.f32.gmra.mrb[0].mxu0 %v127
    %v229 = vpop.f32.mrb[0].mxu0
    %v230 = vadd.f32 %v108, %v229
    %v231 = vpop.f32.mrb[0].mxu0
    %v232 = vadd.f32 %v112, %v231
    %233 = vmatprep.mubr.f32.mxu0 0.0
    %234 = vmatmul.mubr.f32.gmra.mrb[0].mxu0 %v130
    %v235 = vpop.f32.mrb[0].mxu0
    %v236 = vadd.f32 %v108, %v235
    %v237 = vpop.f32.mrb[0].mxu0
    %v238 = vadd.f32 %v112, %v237
    %239 = vmatprep.mubr.f32.mxu0 0.0
    %240 = vmatmul.mubr.f32.gmra.mrb[0].mxu0 %v133
    %v241 = vpop.f32.mrb[0].mxu0
    %v242 = vadd.f32 %v108, %v241
    %v243 = vpop.f32.mrb[0].mxu0
    %v244 = vadd.f32 %v112, %v243
    %245 = vmatprep.mubr.f32.mxu0 0.0
    %246 = vmatmul.mubr.f32.gmra.mrb[0].mxu0 %v136
    %v247 = vpop.f32.mrb[0].mxu0
    %v248 = vadd.f32 %v108, %v247
    %v249 = vpop.f32.mrb[0].mxu0
    %v250 = vadd.f32 %v112, %v249
    %251 = vmatprep.mubr.f32.mxu0 0.0
    %252 = vmatmul.mubr.f32.gmra.mrb[0].mxu0 %v139
    %v253 = vpop.f32.mrb[0].mxu0
    %v254 = vadd.f32 %v108, %v253
    %v255 = vpop.f32.mrb[0].mxu0
    %v256 = vadd.f32 %v112, %v255
    %257 = vmatprep.mubr.f32.mxu0 0.0
    %258 = vmatmul.mubr.f32.gmra.mrb[0].mxu0 %v142
    %v259 = vpop.f32.mrb[0].mxu0
    %v260 = vadd.f32 %v108, %v259
    %v261 = vpop.f32.mrb[0].mxu0
    %v262 = vadd.f32 %v112, %v261
    %263 = vmatprep.mubr.f32.mxu0 0.0
    %264 = vmatmul.mubr.f32.gmra.mrb[0].mxu0 %v145
    %v265 = vpop.f32.mrb[0].mxu0
    %v266 = vadd.f32 %v108, %v265
    %v267 = vpop.f32.mrb[0].mxu0
    %v268 = vadd.f32 %v112, %v267
    %269 = vmatprep.mubr.f32.mxu0 0.0
    %270 = vmatmul.mubr.f32.gmra.mrb[0].mxu0 %v148
    %v271 = vpop.f32.mrb[0].mxu0
    %v272 = vadd.f32 %v108, %v271
    %v273 = vpop.f32.mrb[0].mxu0
    %v274 = vadd.f32 %v112, %v273
    %275 = vdwg.mxu0
    %276 = vmatprep.subr.mxu0 %v86
    %277 = vmatpush1.msra.mxu0 %v85
    %278 = vmatprep.subr.mxu0 %v90
    %279 = vmatpush1.msra.mxu0 %v89
    %280 = vmatprep.subr.mxu0 %v94
    %281 = vmatpush1.msra.mxu0 %v93
    %282 = vmatprep.subr.mxu0 %v98
    %283 = vmatpush1.msra.mxu0 %v97
    %284 = vmatprep.subr.mxu0 %v161
    %285 = vmatpush1.msra.mxu0 %v158
    %286 = vmatprep.subr.mxu0 0.0
    %287 = vmatpush1.msra.mxu0 0.0
    %288 = vmatprep.subr.mxu0 0.0
    %289 = vmatpush1.msra.mxu0 0.0
    %290 = vmatprep.subr.mxu0 0.0
    %291 = vmatpush1.msra.mxu0 0.0
    %292 = vmatprep.subr.mxu0 0.0
    %293 = vmatpush1.msra.mxu0 0.0
    %294 = vmatprep.subr.mxu0 0.0
    %295 = vmatpush1.msra.mxu0 0.0
    %296 = vmatprep.subr.mxu0 0.0
    %297 = vmatpush1.msra.mxu0 0.0
    %298 = vmatprep.subr.mxu0 0.0
    %299 = vmatpush1.msra.mxu0 0.0
    %300 = vmatprep.subr.mxu0 0.0
    %301 = vmatpush1.msra.mxu0 0.0
    %302 = vmatprep.subr.mxu0 0.0
    %303 = vmatpush1.msra.mxu0 0.0
    %304 = vmatprep.subr.mxu0 0.0
    %305 = vmatpush1.msra.mxu0 0.0
    %306 = vmatprep.subr.mxu0 0.0
    %307 = vmatpush1.msra.mxu0 0.0
    %308 = vmatprep.subr.mxu0 0.0
    %309 = vmatpush1.msra.mxu0 0.0
    %310 = vmatprep.subr.mxu0 0.0
    %311 = vmatpush1.msra.mxu0 0.0
    %312 = vmatprep.subr.mxu0 0.0
    %313 = vmatpush1.msra.mxu0 0.0
    %314 = vmatprep.subr.mxu0 0.0
    %315 = vmatpush1.msra.mxu0 0.0
    %316 = vmatprep.subr.mxu0 0.0
    %317 = vmatpush1.msra.mxu0 0.0
    %318 = vmatprep.subr.mxu0 0.0
    %319 = vmatpush1.msra.mxu0 0.0
    %320 = vmatprep.subr.mxu0 0.0
    %321 = vmatpush1.msra.mxu0 0.0
    %322 = vmatprep.subr.mxu0 0.0
    %323 = vmatpush1.msra.mxu0 0.0
    %324 = vmatprep.subr.mxu0 0.0
    %325 = vmatpush1.msra.mxu0 0.0
    %326 = vmatprep.subr.mxu0 0.0
    %327 = vmatpush1.msra.mxu0 0.0
    %328 = vmatprep.subr.mxu0 0.0
    %329 = vmatpush1.msra.mxu0 0.0
    %330 = vmatprep.subr.mxu0 0.0
    %331 = vmatpush1.msra.mxu0 0.0
    %332 = vmatprep.subr.mxu0 0.0
    %333 = vmatpush1.msra.mxu0 0.0
    %334 = vmatprep.subr.mxu0 0.0
    %335 = vmatpush1.msra.mxu0 0.0
    %336 = vmatprep.subr.mxu0 0.0
    %337 = vmatpush1.msra.mxu0 0.0
    %338 = vmatprep.subr.mxu0 0.0
    %339 = vmatpush1.msra.mxu0 0.0
    %340 = vmatprep.mubr.f32.mxu0 0.0
    %341 = vmatmul.mubr.f32.gmra.mrb[0].mxu0 %v127
    %v342 = vpop.f32.mrb[0].mxu0
    %v343 = vadd.f32 %v116, %v342
    %v344 = vpop.f32.mrb[0].mxu0
    %v345 = vadd.f32 %v120, %v344
    %346 = vmatprep.mubr.f32.mxu0 0.0
    %347 = vmatmul.mubr.f32.gmra.mrb[0].mxu0 %v130
    %v348 = vpop.f32.mrb[0].mxu0
    %v349 = vadd.f32 %v116, %v348
    %v350 = vpop.f32.mrb[0].mxu0
    %v351 = vadd.f32 %v120, %v350
    %352 = vmatprep.mubr.f32.mxu0 0.0
    %353 = vmatmul.mubr.f32.gmra.mrb[0].mxu0 %v133
    %v354 = vpop.f32.mrb[0].mxu0
    %v355 = vadd.f32 %v116, %v354
    %v356 = vpop.f32.mrb[0].mxu0
    %v357 = vadd.f32 %v120, %v356
    %358 = vmatprep.mubr.f32.mxu0 0.0
    %359 = vmatmul.mubr.f32.gmra.mrb[0].mxu0 %v136
    %v360 = vpop.f32.mrb[0].mxu0
    %v361 = vadd.f32 %v116, %v360
    %v362 = vpop.f32.mrb[0].mxu0
    %v363 = vadd.f32 %v120, %v362
    %364 = vmatprep.mubr.f32.mxu0 0.0
    %365 = vmatmul.mubr.f32.gmra.mrb[0].mxu0 %v139
    %v366 = vpop.f32.mrb[0].mxu0
    %v367 = vadd.f32 %v116, %v366
    %v368 = vpop.f32.mrb[0].mxu0
    %v369 = vadd.f32 %v120, %v368
    %370 = vmatprep.mubr.f32.mxu0 0.0
    %371 = vmatmul.mubr.f32.gmra.mrb[0].mxu0 %v142
    %v372 = vpop.f32.mrb[0].mxu0
    %v373 = vadd.f32 %v116, %v372
    %v374 = vpop.f32.mrb[0].mxu0
    %v375 = vadd.f32 %v120, %v374
    %376 = vmatprep.mubr.f32.mxu0 0.0
    %377 = vmatmul.mubr.f32.gmra.mrb[0].mxu0 %v145
    %v378 = vpop.f32.mrb[0].mxu0
    %v379 = vadd.f32 %v116, %v378
    %v380 = vpop.f32.mrb[0].mxu0
    %v381 = vadd.f32 %v120, %v380
    %382 = vmatprep.mubr.f32.mxu0 0.0
    %383 = vmatmul.mubr.f32.gmra.mrb[0].mxu0 %v148
    %v384 = vpop.f32.mrb[0].mxu0
    %v385 = vadd.f32 %v116, %v384
    %v386 = vpop.f32.mrb[0].mxu0
    %v387 = vadd.f32 %v120, %v386
    %388 = vdwg.mxu0
    %v389 = vld [vmem:[#allocation4] sm:$0xff]
    %v390 = vld [vmem:[#allocation4 + $0x8] sm:$0xff]
    %v391 = vld [vmem:[#allocation4 + $0x10] sm:$0xff]
    %v392 = vld [vmem:[#allocation4 + $0x18] sm:$0xff]
    %v393 = vld [vmem:[#allocation4 + $0x20] sm:$0xff]
    %v394 = vld [vmem:[#allocation4 + $0x28] sm:$0xff]
    %v395 = vld [vmem:[#allocation4 + $0x30] sm:$0xff]
    %v396 = vld [vmem:[#allocation4 + $0x38] sm:$0xff]
    %v397 = vld [vmem:[#allocation4 + $0x40] sm:$0xff]
    %v398 = vld [vmem:[#allocation4 + $0x48] sm:$0xff]
    %v399 = vld [vmem:[#allocation4 + $0x50] sm:$0xff]
    %v400 = vld [vmem:[#allocation4 + $0x58] sm:$0xff]
    %v401 = vld [vmem:[#allocation4 + $0x60] sm:$0xff]
    %v402 = vld [vmem:[#allocation4 + $0x68] sm:$0xff]
    %v403 = vld [vmem:[#allocation4 + $0x70] sm:$0xff]
    %v404 = vld [vmem:[#allocation4 + $0x78] sm:$0xff]
    %v405 = vld [vmem:[#allocation4 + $0x80] sm:$0xff]
    %v406 = vld [vmem:[#allocation4 + $0x88] sm:$0xff]
    %v407 = vld [vmem:[#allocation4 + $0x90] sm:$0xff]
    %v408 = vld [vmem:[#allocation4 + $0x98] sm:$0xff]
    %v409 = vld [vmem:[#allocation4 + $0xa0] sm:$0xff]
    %v410 = vld [vmem:[#allocation4 + $0xa8] sm:$0xff]
    %v411 = vld [vmem:[#allocation4 + $0xb0] sm:$0xff]
    %v412 = vld [vmem:[#allocation4 + $0xb8] sm:$0xff]
    %v413 = vld [vmem:[#allocation4 + $0xc0] sm:$0xff]
    %v414 = vld [vmem:[#allocation4 + $0xc8] sm:$0xff]
    %v415 = vld [vmem:[#allocation4 + $0xd0] sm:$0xff]
    %v416 = vld [vmem:[#allocation4 + $0xd8] sm:$0xff]
    %v417 = vld [vmem:[#allocation4 + $0xe0] sm:$0xff]
    %v418 = vld [vmem:[#allocation4 + $0xe8] sm:$0xff]
    %v419 = vld [vmem:[#allocation4 + $0xf0] sm:$0xff]
    %v420 = vld [vmem:[#allocation4 + $0xf8] sm:$0xff]
    %v421 = vld [vmem:[#allocation4 + $0x100] sm:$0xff]
    %v422 = vld [vmem:[#allocation4 + $0x108] sm:$0xff]
    %v423 = vld [vmem:[#allocation4 + $0x110] sm:$0xff]
    %v424 = vld [vmem:[#allocation4 + $0x118] sm:$0xff]
    %v425 = vld [vmem:[#allocation4 + $0x120] sm:$0xff]
    %v426 = vld [vmem:[#allocation4 + $0x128] sm:$0xff]
    %v427 = vld [vmem:[#allocation4 + $0x130] sm:$0xff]
    %v428 = vld [vmem:[#allocation4 + $0x138] sm:$0xff]
    %v429 = vld [vmem:[#allocation4 + $0x140] sm:$0xff]
    %v430 = vld [vmem:[#allocation4 + $0x148] sm:$0xff]
    %v431 = vld [vmem:[#allocation4 + $0x150] sm:$0xff]
    %v432 = vld [vmem:[#allocation4 + $0x158] sm:$0xff]
    %v433 = vld [vmem:[#allocation4 + $0x160] sm:$0xff]
    %v434 = vld [vmem:[#allocation4 + $0x168] sm:$0xff]
    %v435 = vld [vmem:[#allocation4 + $0x170] sm:$0xff]
    %v436 = vld [vmem:[#allocation4 + $0x178] sm:$0xff]
    %v437 = vld [vmem:[#allocation4 + $0x180] sm:$0xff]
    %v438 = vld [vmem:[#allocation4 + $0x188] sm:$0xff]
    %v439 = vld [vmem:[#allocation4 + $0x190] sm:$0xff]
    %v440 = vld [vmem:[#allocation4 + $0x198] sm:$0xff]
    %v441 = vld [vmem:[#allocation4 + $0x1a0] sm:$0xff]
    %v442 = vld [vmem:[#allocation4 + $0x1a8] sm:$0xff]
    %v443 = vld [vmem:[#allocation4 + $0x1b0] sm:$0xff]
    %v444 = vld [vmem:[#allocation4 + $0x1b8] sm:$0xff]
    %v445 = vld [vmem:[#allocation4 + $0x1c0] sm:$0xff]
    %v446 = vld [vmem:[#allocation4 + $0x1c8] sm:$0xff]
    %v447 = vld [vmem:[#allocation4 + $0x1d0] sm:$0xff]
    %v448 = vld [vmem:[#allocation4 + $0x1d8] sm:$0xff]
    %v449 = vld [vmem:[#allocation4 + $0x1e0] sm:$0xff]
    %v450 = vld [vmem:[#allocation4 + $0x1e8] sm:$0xff]
    %v451 = vld [vmem:[#allocation4 + $0x1f0] sm:$0xff]
    %v452 = vld [vmem:[#allocation4 + $0x1f8] sm:$0xff]
    %453 = vmatprep.subr.mxu0 %v390
    %454 = vmatpush1.msra.mxu0 %v389
    %455 = vmatprep.subr.mxu0 %v394
    %456 = vmatpush1.msra.mxu0 %v393
    %457 = vmatprep.subr.mxu0 %v398
    %458 = vmatpush1.msra.mxu0 %v397
    %459 = vmatprep.subr.mxu0 %v402
    %460 = vmatpush1.msra.mxu0 %v401
    %461 = vmatprep.subr.mxu0 %v406
    %462 = vmatpush1.msra.mxu0 %v405
    %463 = vmatprep.subr.mxu0 %v410
    %464 = vmatpush1.msra.mxu0 %v409
    %465 = vmatprep.subr.mxu0 %v414
    %466 = vmatpush1.msra.mxu0 %v413
    %467 = vmatprep.subr.mxu0 %v418
    %468 = vmatpush1.msra.mxu0 %v417
    %469 = vmatprep.subr.mxu0 %v422
    %470 = vmatpush1.msra.mxu0 %v421
    %471 = vmatprep.subr.mxu0 %v426
    %472 = vmatpush1.msra.mxu0 %v425
    %473 = vmatprep.subr.mxu0 %v430
    %474 = vmatpush1.msra.mxu0 %v429
    %475 = vmatprep.subr.mxu0 %v434
    %476 = vmatpush1.msra.mxu0 %v433
    %477 = vmatprep.subr.mxu0 %v438
    %478 = vmatpush1.msra.mxu0 %v437
    %479 = vmatprep.subr.mxu0 %v442
    %480 = vmatpush1.msra.mxu0 %v441
    %481 = vmatprep.subr.mxu0 %v446
    %482 = vmatpush1.msra.mxu0 %v445
    %483 = vmatprep.subr.mxu0 %v450
    %484 = vmatpush1.msra.mxu0 %v449
    %485 = vmatprep.subr.mxu0 0.0
    %486 = vmatpush1.msra.mxu0 0.0
    %487 = vmatprep.subr.mxu0 0.0
    %488 = vmatpush1.msra.mxu0 0.0
    %489 = vmatprep.subr.mxu0 0.0
    %490 = vmatpush1.msra.mxu0 0.0
    %491 = vmatprep.subr.mxu0 0.0
    %492 = vmatpush1.msra.mxu0 0.0
    %493 = vmatprep.subr.mxu0 0.0
    %494 = vmatpush1.msra.mxu0 0.0
    %495 = vmatprep.subr.mxu0 0.0
    %496 = vmatpush1.msra.mxu0 0.0
    %497 = vmatprep.subr.mxu0 0.0
    %498 = vmatpush1.msra.mxu0 0.0
    %499 = vmatprep.subr.mxu0 0.0
    %500 = vmatpush1.msra.mxu0 0.0
    %501 = vmatprep.subr.mxu0 0.0
    %502 = vmatpush1.msra.mxu0 0.0
    %503 = vmatprep.subr.mxu0 0.0
    %504 = vmatpush1.msra.mxu0 0.0
    %505 = vmatprep.subr.mxu0 0.0
    %506 = vmatpush1.msra.mxu0 0.0
    %507 = vmatprep.subr.mxu0 0.0
    %508 = vmatpush1.msra.mxu0 0.0
    %509 = vmatprep.subr.mxu0 0.0
    %510 = vmatpush1.msra.mxu0 0.0
    %511 = vmatprep.subr.mxu0 0.0
    %512 = vmatpush1.msra.mxu0 0.0
    %513 = vmatprep.subr.mxu0 0.0
    %514 = vmatpush1.msra.mxu0 0.0
    %515 = vmatprep.subr.mxu0 0.0
    %516 = vmatpush1.msra.mxu0 0.0
    %517 = vmatprep.mubr.f32.mxu0 0.0
    %518 = vmatmul.mubr.f32.gmra.mrb[0].mxu0 0.0
    %v519 = vpop.f32.mrb[0].mxu0
    %v520 = vadd.f32 0.0, %v519
    %v521 = vpop.f32.mrb[0].mxu0
    %v522 = vadd.f32 0.0, %v521
    %523 = vdwg.mxu0
    %524 = vmatprep.subr.mxu0 %v392
    %525 = vmatpush1.msra.mxu0 %v391
    %526 = vmatprep.subr.mxu0 %v396
    %527 = vmatpush1.msra.mxu0 %v395
    %528 = vmatprep.subr.mxu0 %v400
    %529 = vmatpush1.msra.mxu0 %v399
    %530 = vmatprep.subr.mxu0 %v404
    %531 = vmatpush1.msra.mxu0 %v403
    %532 = vmatprep.subr.mxu0 %v408
    %533 = vmatpush1.msra.mxu0 %v407
    %534 = vmatprep.subr.mxu0 %v412
    %535 = vmatpush1.msra.mxu0 %v411
    %536 = vmatprep.subr.mxu0 %v416
    %537 = vmatpush1.msra.mxu0 %v415
    %538 = vmatprep.subr.mxu0 %v420
    %539 = vmatpush1.msra.mxu0 %v419
    %540 = vmatprep.subr.mxu0 %v424
    %541 = vmatpush1.msra.mxu0 %v423
    %542 = vmatprep.subr.mxu0 %v428
    %543 = vmatpush1.msra.mxu0 %v427
    %544 = vmatprep.subr.mxu0 %v432
    %545 = vmatpush1.msra.mxu0 %v431
    %546 = vmatprep.subr.mxu0 %v436
    %547 = vmatpush1.msra.mxu0 %v435
    %548 = vmatprep.subr.mxu0 %v440
    %549 = vmatpush1.msra.mxu0 %v439
    %550 = vmatprep.subr.mxu0 %v444
    %551 = vmatpush1.msra.mxu0 %v443
    %552 = vmatprep.subr.mxu0 %v448
    %553 = vmatpush1.msra.mxu0 %v447
    %554 = vmatprep.subr.mxu0 %v452
    %555 = vmatpush1.msra.mxu0 %v451
    %556 = vmatprep.subr.mxu0 0.0
    %557 = vmatpush1.msra.mxu0 0.0
    %558 = vmatprep.subr.mxu0 0.0
    %559 = vmatpush1.msra.mxu0 0.0
    %560 = vmatprep.subr.mxu0 0.0
    %561 = vmatpush1.msra.mxu0 0.0
    %562 = vmatprep.subr.mxu0 0.0
    %563 = vmatpush1.msra.mxu0 0.0
    %564 = vmatprep.subr.mxu0 0.0
    %565 = vmatpush1.msra.mxu0 0.0
    %566 = vmatprep.subr.mxu0 0.0
    %567 = vmatpush1.msra.mxu0 0.0
    %568 = vmatprep.subr.mxu0 0.0
    %569 = vmatpush1.msra.mxu0 0.0
    %570 = vmatprep.subr.mxu0 0.0
    %571 = vmatpush1.msra.mxu0 0.0
    %572 = vmatprep.subr.mxu0 0.0
    %573 = vmatpush1.msra.mxu0 0.0
    %574 = vmatprep.subr.mxu0 0.0
    %575 = vmatpush1.msra.mxu0 0.0
    %576 = vmatprep.subr.mxu0 0.0
    %577 = vmatpush1.msra.mxu0 0.0
    %578 = vmatprep.subr.mxu0 0.0
    %579 = vmatpush1.msra.mxu0 0.0
    %580 = vmatprep.subr.mxu0 0.0
    %581 = vmatpush1.msra.mxu0 0.0
    %582 = vmatprep.subr.mxu0 0.0
    %583 = vmatpush1.msra.mxu0 0.0
    %584 = vmatprep.subr.mxu0 0.0
    %585 = vmatpush1.msra.mxu0 0.0
    %586 = vmatprep.subr.mxu0 0.0
    %587 = vmatpush1.msra.mxu0 0.0
    %588 = vmatprep.mubr.f32.mxu0 0.0
    %589 = vmatmul.mubr.f32.gmra.mrb[0].mxu0 0.0
    %v590 = vpop.f32.mrb[0].mxu0
    %v591 = vadd.f32 0.0, %v590
    %v592 = vpop.f32.mrb[0].mxu0
    %v593 = vadd.f32 0.0, %v592
    %594 = vdwg.mxu0
    %v595 = vadd.f32 %v230, %v520
    %v596 = vadd.f32 %v232, %v522
    %v597 = vadd.f32 %v343, %v591
    %v598 = vadd.f32 %v345, %v593
    %v599 = vxor.u32 %v595, 2147483648
    %v600 = vmul.f32 %v599, 1.442695
    %v601 = vpow.pop %v600
    %v602 = vadd.f32 %v601, 1.0
    %v603 = vrcp.pop %v602
    %v604 = vmul.f32 1.0, %v603
    %v605 = vxor.u32 %v596, 2147483648
    %v606 = vmul.f32 %v605, 1.442695
    %v607 = vpow.pop %v606
    %v608 = vadd.f32 %v607, 1.0
    %v609 = vrcp.pop %v608
    %v610 = vmul.f32 1.0, %v609
    %v611 = vtanh.pop %v597
    %v612 = vxor.u32 %v598, 2147483648
    %v613 = vmul.f32 %v612, 1.442695
    %v614 = vpow.pop %v613
    %v615 = vadd.f32 %v614, 1.0
    %v616 = vrcp.pop %v615
    %v617 = vmul.f32 1.0, %v616
    %v618 = vmul.f32 %v610, 0.0
    %v619 = vmul.f32 %v604, %v611
    %v620 = vadd.f32 %v618, %v619
    %v621 = vtanh.pop %v620
    %v622 = vmul.f32 %v617, %v621
    %v623 = vld [vmem:[#allocation6] sm:$0xff]
    %v624 = vld [vmem:[#allocation6 + $0x8] sm:$0xff]
    %v625 = vld [vmem:[#allocation6 + $0x10] sm:$0xff]
    %v626 = vld [vmem:[#allocation6 + $0x18] sm:$0xff]
    %v627 = vld [vmem:[#allocation6 + $0x20] sm:$0xff]
    %v628 = vld [vmem:[#allocation6 + $0x28] sm:$0xff]
    %v629 = vld [vmem:[#allocation6 + $0x30] sm:$0xff]
    %v630 = vld [vmem:[#allocation6 + $0x38] sm:$0xff]
    %v631 = vld [vmem:[#allocation6 + $0x40] sm:$0xff]
    %v632 = vld [vmem:[#allocation6 + $0x48] sm:$0xff]
    %v633 = vld [vmem:[#allocation6 + $0x50] sm:$0xff]
    %v634 = vld [vmem:[#allocation6 + $0x58] sm:$0xff]
    %v635 = vld [vmem:[#allocation6 + $0x60] sm:$0xff]
    %v636 = vld [vmem:[#allocation6 + $0x68] sm:$0xff]
    %v637 = vld [vmem:[#allocation6 + $0x70] sm:$0xff]
    %v638 = vld [vmem:[#allocation6 + $0x78] sm:$0xff]
    %v639 = vld [vmem:[#allocation6 + $0x80] sm:$0xff]
    %v640 = vld [vmem:[#allocation6 + $0x88] sm:$0xff]
    %v641 = vld [vmem:[#allocation6 + $0x90] sm:$0xff]
    %v642 = vld [vmem:[#allocation6 + $0x98] sm:$0xff]
    %v643 = vld [vmem:[#allocation6 + $0xa0] sm:$0xff]
    %v644 = vld [vmem:[#allocation6 + $0xa8] sm:$0xff]
    %v645 = vld [vmem:[#allocation6 + $0xb0] sm:$0xff]
    %v646 = vld [vmem:[#allocation6 + $0xb8] sm:$0xff]
    %v647 = vld [vmem:[#allocation6 + $0xc0] sm:$0xff]
    %v648 = vld [vmem:[#allocation6 + $0xc8] sm:$0xff]
    %v649 = vld [vmem:[#allocation6 + $0xd0] sm:$0xff]
    %v650 = vld [vmem:[#allocation6 + $0xd8] sm:$0xff]
    %v651 = vld [vmem:[#allocation6 + $0xe0] sm:$0xff]
    %v652 = vld [vmem:[#allocation6 + $0xe8] sm:$0xff]
    %v653 = vld [vmem:[#allocation6 + $0xf0] sm:$0xff]
    %v654 = vld [vmem:[#allocation6 + $0xf8] sm:$0xff]
    %v655 = vld [vmem:[#allocation6 + $0x100] sm:$0xff]
    %v656 = vld [vmem:[#allocation6 + $0x108] sm:$0xff]
    %v657 = vld [vmem:[#allocation6 + $0x110] sm:$0xff]
    %v658 = vld [vmem:[#allocation6 + $0x118] sm:$0xff]
    %v659 = vld [vmem:[#allocation6 + $0x120] sm:$0xff]
    %v660 = vld [vmem:[#allocation6 + $0x128] sm:$0xff]
    %v661 = vld [vmem:[#allocation6 + $0x130] sm:$0xff]
    %v662 = vld [vmem:[#allocation6 + $0x138] sm:$0xff]
    %v663 = vld [vmem:[#allocation6 + $0x140] sm:$0xff]
    %v664 = vld [vmem:[#allocation6 + $0x148] sm:$0xff]
    %v665 = vld [vmem:[#allocation6 + $0x150] sm:$0xff]
    %v666 = vld [vmem:[#allocation6 + $0x158] sm:$0xff]
    %v667 = vld [vmem:[#allocation6 + $0x160] sm:$0xff]
    %v668 = vld [vmem:[#allocation6 + $0x168] sm:$0xff]
    %v669 = vld [vmem:[#allocation6 + $0x170] sm:$0xff]
    %v670 = vld [vmem:[#allocation6 + $0x178] sm:$0xff]
    %v671 = vld [vmem:[#allocation6 + $0x180] sm:$0xff]
    %v672 = vld [vmem:[#allocation6 + $0x188] sm:$0xff]
    %v673 = vld [vmem:[#allocation6 + $0x190] sm:$0xff]
    %v674 = vld [vmem:[#allocation6 + $0x198] sm:$0xff]
    %v675 = vld [vmem:[#allocation6 + $0x1a0] sm:$0xff]
    %v676 = vld [vmem:[#allocation6 + $0x1a8] sm:$0xff]
    %v677 = vld [vmem:[#allocation6 + $0x1b0] sm:$0xff]
    %v678 = vld [vmem:[#allocation6 + $0x1b8] sm:$0xff]
    %v679 = vld [vmem:[#allocation6 + $0x1c0] sm:$0xff]
    %v680 = vld [vmem:[#allocation6 + $0x1c8] sm:$0xff]
    %v681 = vld [vmem:[#allocation6 + $0x1d0] sm:$0xff]
    %v682 = vld [vmem:[#allocation6 + $0x1d8] sm:$0xff]
    %v683 = vld [vmem:[#allocation6 + $0x1e0] sm:$0xff]
    %v684 = vld [vmem:[#allocation6 + $0x1e8] sm:$0xff]
    %v685 = vld [vmem:[#allocation6 + $0x1f0] sm:$0xff]
    %v686 = vld [vmem:[#allocation6 + $0x1f8] sm:$0xff]
    %v687 = vld [vmem:[#allocation8] sm:$0xff]
    %v688 = vld [vmem:[#allocation8 + $0x8] sm:$0xff]
    %v689 = vld [vmem:[#allocation8 + $0x10] sm:$0xff]
    %v690 = vld [vmem:[#allocation8 + $0x18] sm:$0xff]
    %v691 = vld [vmem:[#allocation8 + $0x20] sm:$0xff]
    %v692 = vld [vmem:[#allocation8 + $0x28] sm:$0xff]
    %v693 = vld [vmem:[#allocation8 + $0x30] sm:$0xff]
    %v694 = vld [vmem:[#allocation8 + $0x38] sm:$0xff]
    %v695 = vld [vmem:[#allocation8 + $0x40] sm:$0xff]
    %v696 = vld [vmem:[#allocation8 + $0x48] sm:$0xff]
    %v697 = vld [vmem:[#allocation8 + $0x50] sm:$0xff]
    %v698 = vld [vmem:[#allocation8 + $0x58] sm:$0xff]
    %v699 = vld [vmem:[#allocation8 + $0x60] sm:$0xff]
    %v700 = vld [vmem:[#allocation8 + $0x68] sm:$0xff]
    %v701 = vld [vmem:[#allocation8 + $0x70] sm:$0xff]
    %v702 = vld [vmem:[#allocation8 + $0x78] sm:$0xff]
    %v703 = vld [vmem:[#allocation8 + $0x80] sm:$0xff]
    %v704 = vld [vmem:[#allocation8 + $0x88] sm:$0xff]
    %v705 = vld [vmem:[#allocation8 + $0x90] sm:$0xff]
    %v706 = vld [vmem:[#allocation8 + $0x98] sm:$0xff]
    %v707 = vld [vmem:[#allocation8 + $0xa0] sm:$0xff]
    %v708 = vld [vmem:[#allocation8 + $0xa8] sm:$0xff]
    %v709 = vld [vmem:[#allocation8 + $0xb0] sm:$0xff]
    %v710 = vld [vmem:[#allocation8 + $0xb8] sm:$0xff]
    %v711 = vld [vmem:[#allocation8 + $0xc0] sm:$0xff]
    %v712 = vld [vmem:[#allocation8 + $0xc8] sm:$0xff]
    %v713 = vld [vmem:[#allocation8 + $0xd0] sm:$0xff]
    %v714 = vld [vmem:[#allocation8 + $0xd8] sm:$0xff]
    %v715 = vld [vmem:[#allocation8 + $0xe0] sm:$0xff]
    %v716 = vld [vmem:[#allocation8 + $0xe8] sm:$0xff]
    %v717 = vld [vmem:[#allocation8 + $0xf0] sm:$0xff]
    %v718 = vld [vmem:[#allocation8 + $0xf8] sm:$0xff]
    %v719 = vld [vmem:[#allocation8 + $0x100] sm:$0xff]
    %v720 = vld [vmem:[#allocation8 + $0x108] sm:$0xff]
    %v721 = vld [vmem:[#allocation8 + $0x110] sm:$0xff]
    %v722 = vld [vmem:[#allocation8 + $0x118] sm:$0xff]
    %v723 = vld [vmem:[#allocation8 + $0x120] sm:$0xff]
    %v724 = vld [vmem:[#allocation8 + $0x128] sm:$0xff]
    %v725 = vld [vmem:[#allocation8 + $0x130] sm:$0xff]
    %v726 = vld [vmem:[#allocation8 + $0x138] sm:$0xff]
    %v727 = vld [vmem:[#allocation8 + $0x140] sm:$0xff]
    %v728 = vld [vmem:[#allocation8 + $0x148] sm:$0xff]
    %v729 = vld [vmem:[#allocation8 + $0x150] sm:$0xff]
    %v730 = vld [vmem:[#allocation8 + $0x158] sm:$0xff]
    %v731 = vld [vmem:[#allocation8 + $0x160] sm:$0xff]
    %v732 = vld [vmem:[#allocation8 + $0x168] sm:$0xff]
    %v733 = vld [vmem:[#allocation8 + $0x170] sm:$0xff]
    %v734 = vld [vmem:[#allocation8 + $0x178] sm:$0xff]
    %v735 = vld [vmem:[#allocation8 + $0x180] sm:$0xff]
    %v736 = vld [vmem:[#allocation8 + $0x188] sm:$0xff]
    %v737 = vld [vmem:[#allocation8 + $0x190] sm:$0xff]
    %v738 = vld [vmem:[#allocation8 + $0x198] sm:$0xff]
    %v739 = vld [vmem:[#allocation8 + $0x1a0] sm:$0xff]
    %v740 = vld [vmem:[#allocation8 + $0x1a8] sm:$0xff]
    %v741 = vld [vmem:[#allocation8 + $0x1b0] sm:$0xff]
    %v742 = vld [vmem:[#allocation8 + $0x1b8] sm:$0xff]
    %v743 = vld [vmem:[#allocation8 + $0x1c0] sm:$0xff]
    %v744 = vld [vmem:[#allocation8 + $0x1c8] sm:$0xff]
    %v745 = vld [vmem:[#allocation8 + $0x1d0] sm:$0xff]
    %v746 = vld [vmem:[#allocation8 + $0x1d8] sm:$0xff]
    %v747 = vld [vmem:[#allocation8 + $0x1e0] sm:$0xff]
    %v748 = vld [vmem:[#allocation8 + $0x1e8] sm:$0xff]
    %v749 = vld [vmem:[#allocation8 + $0x1f0] sm:$0xff]
    %v750 = vld [vmem:[#allocation8 + $0x1f8] sm:$0xff]
    %751 = vmatprep.subr.mxu0 %v688
    %752 = vmatpush1.msra.mxu0 %v687
    %753 = vmatprep.subr.mxu0 %v692
    %754 = vmatpush1.msra.mxu0 %v691
    %755 = vmatprep.subr.mxu0 %v696
    %756 = vmatpush1.msra.mxu0 %v695
    %757 = vmatprep.subr.mxu0 %v700
    %758 = vmatpush1.msra.mxu0 %v699
    %759 = vmatprep.subr.mxu0 %v704
    %760 = vmatpush1.msra.mxu0 %v703
    %761 = vmatprep.subr.mxu0 %v708
    %762 = vmatpush1.msra.mxu0 %v707
    %763 = vmatprep.subr.mxu0 %v712
    %764 = vmatpush1.msra.mxu0 %v711
    %765 = vmatprep.subr.mxu0 %v716
    %766 = vmatpush1.msra.mxu0 %v715
    %767 = vmatprep.subr.mxu0 %v720
    %768 = vmatpush1.msra.mxu0 %v719
    %769 = vmatprep.subr.mxu0 %v724
    %770 = vmatpush1.msra.mxu0 %v723
    %771 = vmatprep.subr.mxu0 %v728
    %772 = vmatpush1.msra.mxu0 %v727
    %773 = vmatprep.subr.mxu0 %v732
    %774 = vmatpush1.msra.mxu0 %v731
    %775 = vmatprep.subr.mxu0 %v736
    %776 = vmatpush1.msra.mxu0 %v735
    %777 = vmatprep.subr.mxu0 %v740
    %778 = vmatpush1.msra.mxu0 %v739
    %779 = vmatprep.subr.mxu0 %v744
    %780 = vmatpush1.msra.mxu0 %v743
    %781 = vmatprep.subr.mxu0 %v748
    %782 = vmatpush1.msra.mxu0 %v747
    %783 = vmatprep.subr.mxu0 0.0
    %784 = vmatpush1.msra.mxu0 0.0
    %785 = vmatprep.subr.mxu0 0.0
    %786 = vmatpush1.msra.mxu0 0.0
    %787 = vmatprep.subr.mxu0 0.0
    %788 = vmatpush1.msra.mxu0 0.0
    %789 = vmatprep.subr.mxu0 0.0
    %790 = vmatpush1.msra.mxu0 0.0
    %791 = vmatprep.subr.mxu0 0.0
    %792 = vmatpush1.msra.mxu0 0.0
    %793 = vmatprep.subr.mxu0 0.0
    %794 = vmatpush1.msra.mxu0 0.0
    %795 = vmatprep.subr.mxu0 0.0
    %796 = vmatpush1.msra.mxu0 0.0
    %797 = vmatprep.subr.mxu0 0.0
    %798 = vmatpush1.msra.mxu0 0.0
    %799 = vmatprep.subr.mxu0 0.0
    %800 = vmatpush1.msra.mxu0 0.0
    %801 = vmatprep.subr.mxu0 0.0
    %802 = vmatpush1.msra.mxu0 0.0
    %803 = vmatprep.subr.mxu0 0.0
    %804 = vmatpush1.msra.mxu0 0.0
    %805 = vmatprep.subr.mxu0 0.0
    %806 = vmatpush1.msra.mxu0 0.0
    %807 = vmatprep.subr.mxu0 0.0
    %808 = vmatpush1.msra.mxu0 0.0
    %809 = vmatprep.subr.mxu0 0.0
    %810 = vmatpush1.msra.mxu0 0.0
    %811 = vmatprep.subr.mxu0 0.0
    %812 = vmatpush1.msra.mxu0 0.0
    %813 = vmatprep.subr.mxu0 0.0
    %814 = vmatpush1.msra.mxu0 0.0
    %815 = vmatprep.mubr.f32.mxu0 0.0
    %816 = vmatmul.mubr.f32.gmra.mrb[0].mxu0 0.0
    %v817 = vpop.f32.mrb[0].mxu0
    %v818 = vadd.f32 0.0, %v817
    %v819 = vpop.f32.mrb[0].mxu0
    %v820 = vadd.f32 0.0, %v819
    %821 = vdwg.mxu0
    %822 = vmatprep.subr.mxu0 %v690
    %823 = vmatpush1.msra.mxu0 %v689
    %824 = vmatprep.subr.mxu0 %v694
    %825 = vmatpush1.msra.mxu0 %v693
    %826 = vmatprep.subr.mxu0 %v698
    %827 = vmatpush1.msra.mxu0 %v697
    %828 = vmatprep.subr.mxu0 %v702
    %829 = vmatpush1.msra.mxu0 %v701
    %830 = vmatprep.subr.mxu0 %v706
    %831 = vmatpush1.msra.mxu0 %v705
    %832 = vmatprep.subr.mxu0 %v710
    %833 = vmatpush1.msra.mxu0 %v709
    %834 = vmatprep.subr.mxu0 %v714
    %835 = vmatpush1.msra.mxu0 %v713
    %836 = vmatprep.subr.mxu0 %v718
    %837 = vmatpush1.msra.mxu0 %v717
    %838 = vmatprep.subr.mxu0 %v722
    %839 = vmatpush1.msra.mxu0 %v721
    %840 = vmatprep.subr.mxu0 %v726
    %841 = vmatpush1.msra.mxu0 %v725
    %842 = vmatprep.subr.mxu0 %v730
    %843 = vmatpush1.msra.mxu0 %v729
    %844 = vmatprep.subr.mxu0 %v734
    %845 = vmatpush1.msra.mxu0 %v733
    %846 = vmatprep.subr.mxu0 %v738
    %847 = vmatpush1.msra.mxu0 %v737
    %848 = vmatprep.subr.mxu0 %v742
    %849 = vmatpush1.msra.mxu0 %v741
    %850 = vmatprep.subr.mxu0 %v746
    %851 = vmatpush1.msra.mxu0 %v745
    %852 = vmatprep.subr.mxu0 %v750
    %853 = vmatpush1.msra.mxu0 %v749
    %854 = vmatprep.subr.mxu0 0.0
    %855 = vmatpush1.msra.mxu0 0.0
    %856 = vmatprep.subr.mxu0 0.0
    %857 = vmatpush1.msra.mxu0 0.0
    %858 = vmatprep.subr.mxu0 0.0
    %859 = vmatpush1.msra.mxu0 0.0
    %860 = vmatprep.subr.mxu0 0.0
    %861 = vmatpush1.msra.mxu0 0.0
    %862 = vmatprep.subr.mxu0 0.0
    %863 = vmatpush1.msra.mxu0 0.0
    %864 = vmatprep.subr.mxu0 0.0
    %865 = vmatpush1.msra.mxu0 0.0
    %866 = vmatprep.subr.mxu0 0.0
    %867 = vmatpush1.msra.mxu0 0.0
    %868 = vmatprep.subr.mxu0 0.0
    %869 = vmatpush1.msra.mxu0 0.0
    %870 = vmatprep.subr.mxu0 0.0
    %871 = vmatpush1.msra.mxu0 0.0
    %872 = vmatprep.subr.mxu0 0.0
    %873 = vmatpush1.msra.mxu0 0.0
    %874 = vmatprep.subr.mxu0 0.0
    %875 = vmatpush1.msra.mxu0 0.0
    %876 = vmatprep.subr.mxu0 0.0
    %877 = vmatpush1.msra.mxu0 0.0
    %878 = vmatprep.subr.mxu0 0.0
    %879 = vmatpush1.msra.mxu0 0.0
    %880 = vmatprep.subr.mxu0 0.0
    %881 = vmatpush1.msra.mxu0 0.0
    %882 = vmatprep.subr.mxu0 0.0
    %883 = vmatpush1.msra.mxu0 0.0
    %884 = vmatprep.subr.mxu0 0.0
    %885 = vmatpush1.msra.mxu0 0.0
    %886 = vmatprep.mubr.f32.mxu0 0.0
    %887 = vmatmul.mubr.f32.gmra.mrb[0].mxu0 0.0
    %v888 = vpop.f32.mrb[0].mxu0
    %v889 = vadd.f32 0.0, %v888
    %v890 = vpop.f32.mrb[0].mxu0
    %v891 = vadd.f32 0.0, %v890
    %892 = vdwg.mxu0
    %893 = vmatprep.subr.mxu0 %v624
    %894 = vmatpush1.msra.mxu0 %v623
    %895 = vmatprep.subr.mxu0 %v628
    %896 = vmatpush1.msra.mxu0 %v627
    %897 = vmatprep.subr.mxu0 %v632
    %898 = vmatpush1.msra.mxu0 %v631
    %899 = vmatprep.subr.mxu0 %v636
    %900 = vmatpush1.msra.mxu0 %v635
    %901 = vmatprep.subr.mxu0 %v640
    %902 = vmatpush1.msra.mxu0 %v639
    %903 = vmatprep.subr.mxu0 %v644
    %904 = vmatpush1.msra.mxu0 %v643
    %905 = vmatprep.subr.mxu0 %v648
    %906 = vmatpush1.msra.mxu0 %v647
    %907 = vmatprep.subr.mxu0 %v652
    %908 = vmatpush1.msra.mxu0 %v651
    %909 = vmatprep.subr.mxu0 %v656
    %910 = vmatpush1.msra.mxu0 %v655
    %911 = vmatprep.subr.mxu0 %v660
    %912 = vmatpush1.msra.mxu0 %v659
    %913 = vmatprep.subr.mxu0 %v664
    %914 = vmatpush1.msra.mxu0 %v663
    %915 = vmatprep.subr.mxu0 %v668
    %916 = vmatpush1.msra.mxu0 %v667
    %917 = vmatprep.subr.mxu0 %v672
    %918 = vmatpush1.msra.mxu0 %v671
    %919 = vmatprep.subr.mxu0 %v676
    %920 = vmatpush1.msra.mxu0 %v675
    %921 = vmatprep.subr.mxu0 %v680
    %922 = vmatpush1.msra.mxu0 %v679
    %923 = vmatprep.subr.mxu0 %v684
    %924 = vmatpush1.msra.mxu0 %v683
    %925 = vmatprep.subr.mxu0 0.0
    %926 = vmatpush1.msra.mxu0 0.0
    %927 = vmatprep.subr.mxu0 0.0
    %928 = vmatpush1.msra.mxu0 0.0
    %929 = vmatprep.subr.mxu0 0.0
    %930 = vmatpush1.msra.mxu0 0.0
    %931 = vmatprep.subr.mxu0 0.0
    %932 = vmatpush1.msra.mxu0 0.0
    %933 = vmatprep.subr.mxu0 0.0
    %934 = vmatpush1.msra.mxu0 0.0
    %935 = vmatprep.subr.mxu0 0.0
    %936 = vmatpush1.msra.mxu0 0.0
    %937 = vmatprep.subr.mxu0 0.0
    %938 = vmatpush1.msra.mxu0 0.0
    %939 = vmatprep.subr.mxu0 0.0
    %940 = vmatpush1.msra.mxu0 0.0
    %941 = vmatprep.subr.mxu0 0.0
    %942 = vmatpush1.msra.mxu0 0.0
    %943 = vmatprep.subr.mxu0 0.0
    %944 = vmatpush1.msra.mxu0 0.0
    %945 = vmatprep.subr.mxu0 0.0
    %946 = vmatpush1.msra.mxu0 0.0
    %947 = vmatprep.subr.mxu0 0.0
    %948 = vmatpush1.msra.mxu0 0.0
    %949 = vmatprep.subr.mxu0 0.0
    %950 = vmatpush1.msra.mxu0 0.0
    %951 = vmatprep.subr.mxu0 0.0
    %952 = vmatpush1.msra.mxu0 0.0
    %953 = vmatprep.subr.mxu0 0.0
    %954 = vmatpush1.msra.mxu0 0.0
    %955 = vmatprep.subr.mxu0 0.0
    %956 = vmatpush1.msra.mxu0 0.0
    %957 = vmatprep.mubr.f32.mxu0 0.0
    %958 = vmatmul.mubr.f32.gmra.mrb[0].mxu0 %v622
    %v959 = vpop.f32.mrb[0].mxu0
    %v960 = vadd.f32 %v818, %v959
    %v961 = vpop.f32.mrb[0].mxu0
    %v962 = vadd.f32 %v820, %v961
    %963 = vdwg.mxu0
    %964 = vmatprep.subr.mxu0 %v626
    %965 = vmatpush1.msra.mxu0 %v625
    %966 = vmatprep.subr.mxu0 %v630
    %967 = vmatpush1.msra.mxu0 %v629
    %968 = vmatprep.subr.mxu0 %v634
    %969 = vmatpush1.msra.mxu0 %v633
    %970 = vmatprep.subr.mxu0 %v638
    %971 = vmatpush1.msra.mxu0 %v637
    %972 = vmatprep.subr.mxu0 %v642
    %973 = vmatpush1.msra.mxu0 %v641
    %974 = vmatprep.subr.mxu0 %v646
    %975 = vmatpush1.msra.mxu0 %v645
    %976 = vmatprep.subr.mxu0 %v650
    %977 = vmatpush1.msra.mxu0 %v649
    %978 = vmatprep.subr.mxu0 %v654
    %979 = vmatpush1.msra.mxu0 %v653
    %980 = vmatprep.subr.mxu0 %v658
    %981 = vmatpush1.msra.mxu0 %v657
    %982 = vmatprep.subr.mxu0 %v662
    %983 = vmatpush1.msra.mxu0 %v661
    %984 = vmatprep.subr.mxu0 %v666
    %985 = vmatpush1.msra.mxu0 %v665
    %986 = vmatprep.subr.mxu0 %v670
    %987 = vmatpush1.msra.mxu0 %v669
    %988 = vmatprep.subr.mxu0 %v674
    %989 = vmatpush1.msra.mxu0 %v673
    %990 = vmatprep.subr.mxu0 %v678
    %991 = vmatpush1.msra.mxu0 %v677
    %992 = vmatprep.subr.mxu0 %v682
    %993 = vmatpush1.msra.mxu0 %v681
    %994 = vmatprep.subr.mxu0 %v686
    %995 = vmatpush1.msra.mxu0 %v685
    %996 = vmatprep.subr.mxu0 0.0
    %997 = vmatpush1.msra.mxu0 0.0
    %998 = vmatprep.subr.mxu0 0.0
    %999 = vmatpush1.msra.mxu0 0.0
    %1000 = vmatprep.subr.mxu0 0.0
    %1001 = vmatpush1.msra.mxu0 0.0
    %1002 = vmatprep.subr.mxu0 0.0
    %1003 = vmatpush1.msra.mxu0 0.0
    %1004 = vmatprep.subr.mxu0 0.0
    %1005 = vmatpush1.msra.mxu0 0.0
    %1006 = vmatprep.subr.mxu0 0.0
    %1007 = vmatpush1.msra.mxu0 0.0
    %1008 = vmatprep.subr.mxu0 0.0
    %1009 = vmatpush1.msra.mxu0 0.0
    %1010 = vmatprep.subr.mxu0 0.0
    %1011 = vmatpush1.msra.mxu0 0.0
    %1012 = vmatprep.subr.mxu0 0.0
    %1013 = vmatpush1.msra.mxu0 0.0
    %1014 = vmatprep.subr.mxu0 0.0
    %1015 = vmatpush1.msra.mxu0 0.0
    %1016 = vmatprep.subr.mxu0 0.0
    %1017 = vmatpush1.msra.mxu0 0.0
    %1018 = vmatprep.subr.mxu0 0.0
    %1019 = vmatpush1.msra.mxu0 0.0
    %1020 = vmatprep.subr.mxu0 0.0
    %1021 = vmatpush1.msra.mxu0 0.0
    %1022 = vmatprep.subr.mxu0 0.0
    %1023 = vmatpush1.msra.mxu0 0.0
    %1024 = vmatprep.subr.mxu0 0.0
    %1025 = vmatpush1.msra.mxu0 0.0
    %1026 = vmatprep.subr.mxu0 0.0
    %1027 = vmatpush1.msra.mxu0 0.0
    %1028 = vmatprep.mubr.f32.mxu0 0.0
    %1029 = vmatmul.mubr.f32.gmra.mrb[0].mxu0 %v622
    %v1030 = vpop.f32.mrb[0].mxu0
    %v1031 = vadd.f32 %v889, %v1030
    %v1032 = vpop.f32.mrb[0].mxu0
    %v1033 = vadd.f32 %v891, %v1032
    %1034 = vdwg.mxu0
    %v1035 = vld [vmem:[%s6] sm:$0xf]
    %v1037 = vlaneseq
    %v1038 = vshrl.u32 %v1037, 7
    %v1039 = vsub.s32 0, %v1038
    %v1040 = vrot.slane %v1035, %v1039
    %v1041 = vlaneseq
    %v1042 = vshrl.u32 %v1041, 7
    %v1043 = vsub.s32 1, %v1042
    %v1044 = vrot.slane %v1035, %v1043
    %v1045 = vlaneseq
    %v1046 = vshrl.u32 %v1045, 7
    %v1047 = vsub.s32 2, %v1046
    %v1048 = vrot.slane %v1035, %v1047
    %v1049 = vlaneseq
    %v1050 = vshrl.u32 %v1049, 7
    %v1051 = vsub.s32 3, %v1050
    %v1052 = vrot.slane %v1035, %v1051
    %v1057 = vadd.f32 %v960, %v1040
    %v1058 = vadd.f32 %v962, %v1044
    %v1059 = vadd.f32 %v1031, %v1048
    %v1060 = vadd.f32 %v1033, %v1052
    %v1061 = vxor.u32 %v1057, 2147483648
    %v1062 = vmul.f32 %v1061, 1.442695
    %v1063 = vpow.pop %v1062
    %v1064 = vadd.f32 %v1063, 1.0
    %v1065 = vrcp.pop %v1064
    %v1066 = vmul.f32 1.0, %v1065
    %v1067 = vxor.u32 %v1058, 2147483648
    %v1068 = vmul.f32 %v1067, 1.442695
    %v1069 = vpow.pop %v1068
    %v1070 = vadd.f32 %v1069, 1.0
    %v1071 = vrcp.pop %v1070
    %v1072 = vmul.f32 1.0, %v1071
    %v1073 = vtanh.pop %v1059
    %v1074 = vxor.u32 %v1060, 2147483648
    %v1075 = vmul.f32 %v1074, 1.442695
    %v1076 = vpow.pop %v1075
    %v1077 = vadd.f32 %v1076, 1.0
    %v1078 = vrcp.pop %v1077
    %v1079 = vmul.f32 1.0, %v1078
    %v1080 = vmul.f32 %v1072, 0.0
    %v1081 = vmul.f32 %v1066, %v1073
    %v1082 = vadd.f32 %v1080, %v1081
    %v1083 = vtanh.pop %v1082
    %v1084 = vmul.f32 %v1079, %v1083
    %1085 = vst [vmem:[#allocation2] sm:$0xff] %v1084
    %v1086 = vld [vmem:[#allocation4] sm:$0xff]
    %v1087 = vld [vmem:[#allocation4 + $0x8] sm:$0xff]
    %v1088 = vld [vmem:[#allocation4 + $0x10] sm:$0xff]
    %v1089 = vld [vmem:[#allocation4 + $0x18] sm:$0xff]
    %v1090 = vld [vmem:[#allocation4 + $0x20] sm:$0xff]
    %v1091 = vld [vmem:[#allocation4 + $0x28] sm:$0xff]
    %v1092 = vld [vmem:[#allocation4 + $0x30] sm:$0xff]
    %v1093 = vld [vmem:[#allocation4 + $0x38] sm:$0xff]
    %v1094 = vld [vmem:[#allocation4 + $0x40] sm:$0xff]
    %v1095 = vld [vmem:[#allocation4 + $0x48] sm:$0xff]
    %v1096 = vld [vmem:[#allocation4 + $0x50] sm:$0xff]
    %v1097 = vld [vmem:[#allocation4 + $0x58] sm:$0xff]
    %v1098 = vld [vmem:[#allocation4 + $0x60] sm:$0xff]
    %v1099 = vld [vmem:[#allocation4 + $0x68] sm:$0xff]
    %v1100 = vld [vmem:[#allocation4 + $0x70] sm:$0xff]
    %v1101 = vld [vmem:[#allocation4 + $0x78] sm:$0xff]
    %v1102 = vld [vmem:[#allocation4 + $0x80] sm:$0xff]
    %v1103 = vld [vmem:[#allocation4 + $0x88] sm:$0xff]
    %v1104 = vld [vmem:[#allocation4 + $0x90] sm:$0xff]
    %v1105 = vld [vmem:[#allocation4 + $0x98] sm:$0xff]
    %v1106 = vld [vmem:[#allocation4 + $0xa0] sm:$0xff]
    %v1107 = vld [vmem:[#allocation4 + $0xa8] sm:$0xff]
    %v1108 = vld [vmem:[#allocation4 + $0xb0] sm:$0xff]
    %v1109 = vld [vmem:[#allocation4 + $0xb8] sm:$0xff]
    %v1110 = vld [vmem:[#allocation4 + $0xc0] sm:$0xff]
    %v1111 = vld [vmem:[#allocation4 + $0xc8] sm:$0xff]
    %v1112 = vld [vmem:[#allocation4 + $0xd0] sm:$0xff]
    %v1113 = vld [vmem:[#allocation4 + $0xd8] sm:$0xff]
    %v1114 = vld [vmem:[#allocation4 + $0xe0] sm:$0xff]
    %v1115 = vld [vmem:[#allocation4 + $0xe8] sm:$0xff]
    %v1116 = vld [vmem:[#allocation4 + $0xf0] sm:$0xff]
    %v1117 = vld [vmem:[#allocation4 + $0xf8] sm:$0xff]
    %v1118 = vld [vmem:[#allocation4 + $0x100] sm:$0xff]
    %v1119 = vld [vmem:[#allocation4 + $0x108] sm:$0xff]
    %v1120 = vld [vmem:[#allocation4 + $0x110] sm:$0xff]
    %v1121 = vld [vmem:[#allocation4 + $0x118] sm:$0xff]
    %v1122 = vld [vmem:[#allocation4 + $0x120] sm:$0xff]
    %v1123 = vld [vmem:[#allocation4 + $0x128] sm:$0xff]
    %v1124 = vld [vmem:[#allocation4 + $0x130] sm:$0xff]
    %v1125 = vld [vmem:[#allocation4 + $0x138] sm:$0xff]
    %v1126 = vld [vmem:[#allocation4 + $0x140] sm:$0xff]
    %v1127 = vld [vmem:[#allocation4 + $0x148] sm:$0xff]
    %v1128 = vld [vmem:[#allocation4 + $0x150] sm:$0xff]
    %v1129 = vld [vmem:[#allocation4 + $0x158] sm:$0xff]
    %v1130 = vld [vmem:[#allocation4 + $0x160] sm:$0xff]
    %v1131 = vld [vmem:[#allocation4 + $0x168] sm:$0xff]
    %v1132 = vld [vmem:[#allocation4 + $0x170] sm:$0xff]
    %v1133 = vld [vmem:[#allocation4 + $0x178] sm:$0xff]
    %v1134 = vld [vmem:[#allocation4 + $0x180] sm:$0xff]
    %v1135 = vld [vmem:[#allocation4 + $0x188] sm:$0xff]
    %v1136 = vld [vmem:[#allocation4 + $0x190] sm:$0xff]
    %v1137 = vld [vmem:[#allocation4 + $0x198] sm:$0xff]
    %v1138 = vld [vmem:[#allocation4 + $0x1a0] sm:$0xff]
    %v1139 = vld [vmem:[#allocation4 + $0x1a8] sm:$0xff]
    %v1140 = vld [vmem:[#allocation4 + $0x1b0] sm:$0xff]
    %v1141 = vld [vmem:[#allocation4 + $0x1b8] sm:$0xff]
    %v1142 = vld [vmem:[#allocation4 + $0x1c0] sm:$0xff]
    %v1143 = vld [vmem:[#allocation4 + $0x1c8] sm:$0xff]
    %v1144 = vld [vmem:[#allocation4 + $0x1d0] sm:$0xff]
    %v1145 = vld [vmem:[#allocation4 + $0x1d8] sm:$0xff]
    %v1146 = vld [vmem:[#allocation4 + $0x1e0] sm:$0xff]
    %v1147 = vld [vmem:[#allocation4 + $0x1e8] sm:$0xff]
    %v1148 = vld [vmem:[#allocation4 + $0x1f0] sm:$0xff]
    %v1149 = vld [vmem:[#allocation4 + $0x1f8] sm:$0xff]
    %1150 = vmatprep.subr.mxu0 %v1087
    %1151 = vmatpush1.msra.mxu0 %v1086
    %1152 = vmatprep.subr.mxu0 %v1091
    %1153 = vmatpush1.msra.mxu0 %v1090
    %1154 = vmatprep.subr.mxu0 %v1095
    %1155 = vmatpush1.msra.mxu0 %v1094
    %1156 = vmatprep.subr.mxu0 %v1099
    %1157 = vmatpush1.msra.mxu0 %v1098
    %1158 = vmatprep.subr.mxu0 %v1103
    %1159 = vmatpush1.msra.mxu0 %v1102
    %1160 = vmatprep.subr.mxu0 %v1107
    %1161 = vmatpush1.msra.mxu0 %v1106
    %1162 = vmatprep.subr.mxu0 %v1111
    %1163 = vmatpush1.msra.mxu0 %v1110
    %1164 = vmatprep.subr.mxu0 %v1115
    %1165 = vmatpush1.msra.mxu0 %v1114
    %1166 = vmatprep.subr.mxu0 %v1119
    %1167 = vmatpush1.msra.mxu0 %v1118
    %1168 = vmatprep.subr.mxu0 %v1123
    %1169 = vmatpush1.msra.mxu0 %v1122
    %1170 = vmatprep.subr.mxu0 %v1127
    %1171 = vmatpush1.msra.mxu0 %v1126
    %1172 = vmatprep.subr.mxu0 %v1131
    %1173 = vmatpush1.msra.mxu0 %v1130
    %1174 = vmatprep.subr.mxu0 %v1135
    %1175 = vmatpush1.msra.mxu0 %v1134
    %1176 = vmatprep.subr.mxu0 %v1139
    %1177 = vmatpush1.msra.mxu0 %v1138
    %1178 = vmatprep.subr.mxu0 %v1143
    %1179 = vmatpush1.msra.mxu0 %v1142
    %1180 = vmatprep.subr.mxu0 %v1147
    %1181 = vmatpush1.msra.mxu0 %v1146
    %1182 = vmatprep.subr.mxu0 0.0
    %1183 = vmatpush1.msra.mxu0 0.0
    %1184 = vmatprep.subr.mxu0 0.0
    %1185 = vmatpush1.msra.mxu0 0.0
    %1186 = vmatprep.subr.mxu0 0.0
    %1187 = vmatpush1.msra.mxu0 0.0
    %1188 = vmatprep.subr.mxu0 0.0
    %1189 = vmatpush1.msra.mxu0 0.0
    %1190 = vmatprep.subr.mxu0 0.0
    %1191 = vmatpush1.msra.mxu0 0.0
    %1192 = vmatprep.subr.mxu0 0.0
    %1193 = vmatpush1.msra.mxu0 0.0
    %1194 = vmatprep.subr.mxu0 0.0
    %1195 = vmatpush1.msra.mxu0 0.0
    %1196 = vmatprep.subr.mxu0 0.0
    %1197 = vmatpush1.msra.mxu0 0.0
    %1198 = vmatprep.subr.mxu0 0.0
    %1199 = vmatpush1.msra.mxu0 0.0
    %1200 = vmatprep.subr.mxu0 0.0
    %1201 = vmatpush1.msra.mxu0 0.0
    %1202 = vmatprep.subr.mxu0 0.0
    %1203 = vmatpush1.msra.mxu0 0.0
    %1204 = vmatprep.subr.mxu0 0.0
    %1205 = vmatpush1.msra.mxu0 0.0
    %1206 = vmatprep.subr.mxu0 0.0
    %1207 = vmatpush1.msra.mxu0 0.0
    %1208 = vmatprep.subr.mxu0 0.0
    %1209 = vmatpush1.msra.mxu0 0.0
    %1210 = vmatprep.subr.mxu0 0.0
    %1211 = vmatpush1.msra.mxu0 0.0
    %1212 = vmatprep.subr.mxu0 0.0
    %1213 = vmatpush1.msra.mxu0 0.0
    %1214 = vmatprep.mubr.f32.mxu0 0.0
    %1215 = vmatmul.mubr.f32.gmra.mrb[0].mxu0 %v622
    %v1216 = vpop.f32.mrb[0].mxu0
    %v1217 = vadd.f32 0.0, %v1216
    %v1218 = vpop.f32.mrb[0].mxu0
    %v1219 = vadd.f32 0.0, %v1218
    %1220 = vdwg.mxu0
    %1221 = vmatprep.subr.mxu0 %v1089
    %1222 = vmatpush1.msra.mxu0 %v1088
    %1223 = vmatprep.subr.mxu0 %v1093
    %1224 = vmatpush1.msra.mxu0 %v1092
    %1225 = vmatprep.subr.mxu0 %v1097
    %1226 = vmatpush1.msra.mxu0 %v1096
    %1227 = vmatprep.subr.mxu0 %v1101
    %1228 = vmatpush1.msra.mxu0 %v1100
    %1229 = vmatprep.subr.mxu0 %v1105
    %1230 = vmatpush1.msra.mxu0 %v1104
    %1231 = vmatprep.subr.mxu0 %v1109
    %1232 = vmatpush1.msra.mxu0 %v1108
    %1233 = vmatprep.subr.mxu0 %v1113
    %1234 = vmatpush1.msra.mxu0 %v1112
    %1235 = vmatprep.subr.mxu0 %v1117
    %1236 = vmatpush1.msra.mxu0 %v1116
    %1237 = vmatprep.subr.mxu0 %v1121
    %1238 = vmatpush1.msra.mxu0 %v1120
    %1239 = vmatprep.subr.mxu0 %v1125
    %1240 = vmatpush1.msra.mxu0 %v1124
    %1241 = vmatprep.subr.mxu0 %v1129
    %1242 = vmatpush1.msra.mxu0 %v1128
    %1243 = vmatprep.subr.mxu0 %v1133
    %1244 = vmatpush1.msra.mxu0 %v1132
    %1245 = vmatprep.subr.mxu0 %v1137
    %1246 = vmatpush1.msra.mxu0 %v1136
    %1247 = vmatprep.subr.mxu0 %v1141
    %1248 = vmatpush1.msra.mxu0 %v1140
    %1249 = vmatprep.subr.mxu0 %v1145
    %1250 = vmatpush1.msra.mxu0 %v1144
    %1251 = vmatprep.subr.mxu0 %v1149
    %1252 = vmatpush1.msra.mxu0 %v1148
    %1253 = vmatprep.subr.mxu0 0.0
    %1254 = vmatpush1.msra.mxu0 0.0
    %1255 = vmatprep.subr.mxu0 0.0
    %1256 = vmatpush1.msra.mxu0 0.0
    %1257 = vmatprep.subr.mxu0 0.0
    %1258 = vmatpush1.msra.mxu0 0.0
    %1259 = vmatprep.subr.mxu0 0.0
    %1260 = vmatpush1.msra.mxu0 0.0
    %1261 = vmatprep.subr.mxu0 0.0
    %1262 = vmatpush1.msra.mxu0 0.0
    %1263 = vmatprep.subr.mxu0 0.0
    %1264 = vmatpush1.msra.mxu0 0.0
    %1265 = vmatprep.subr.mxu0 0.0
    %1266 = vmatpush1.msra.mxu0 0.0
    %1267 = vmatprep.subr.mxu0 0.0
    %1268 = vmatpush1.msra.mxu0 0.0
    %1269 = vmatprep.subr.mxu0 0.0
    %1270 = vmatpush1.msra.mxu0 0.0
    %1271 = vmatprep.subr.mxu0 0.0
    %1272 = vmatpush1.msra.mxu0 0.0
    %1273 = vmatprep.subr.mxu0 0.0
    %1274 = vmatpush1.msra.mxu0 0.0
    %1275 = vmatprep.subr.mxu0 0.0
    %1276 = vmatpush1.msra.mxu0 0.0
    %1277 = vmatprep.subr.mxu0 0.0
    %1278 = vmatpush1.msra.mxu0 0.0
    %1279 = vmatprep.subr.mxu0 0.0
    %1280 = vmatpush1.msra.mxu0 0.0
    %1281 = vmatprep.subr.mxu0 0.0
    %1282 = vmatpush1.msra.mxu0 0.0
    %1283 = vmatprep.subr.mxu0 0.0
    %1284 = vmatpush1.msra.mxu0 0.0
    %1285 = vmatprep.mubr.f32.mxu0 0.0
    %1286 = vmatmul.mubr.f32.gmra.mrb[0].mxu0 %v622
    %v1287 = vpop.f32.mrb[0].mxu0
    %v1288 = vadd.f32 0.0, %v1287
    %v1289 = vpop.f32.mrb[0].mxu0
    %v1290 = vadd.f32 0.0, %v1289
    %1291 = vdwg.mxu0
    %v1292 = vadd.f32 %v236, %v1217
    %v1293 = vadd.f32 %v238, %v1219
    %v1294 = vadd.f32 %v349, %v1288
    %v1295 = vadd.f32 %v351, %v1290
    %v1296 = vxor.u32 %v1292, 2147483648
    %v1297 = vmul.f32 %v1296, 1.442695
    %v1298 = vpow.pop %v1297
    %v1299 = vadd.f32 %v1298, 1.0
    %v1300 = vrcp.pop %v1299
    %v1301 = vmul.f32 1.0, %v1300
    %v1302 = vxor.u32 %v1293, 2147483648
    %v1303 = vmul.f32 %v1302, 1.442695
    %v1304 = vpow.pop %v1303
    %v1305 = vadd.f32 %v1304, 1.0
    %v1306 = vrcp.pop %v1305
    %v1307 = vmul.f32 1.0, %v1306
    %v1308 = vtanh.pop %v1294
    %v1309 = vxor.u32 %v1295, 2147483648
    %v1310 = vmul.f32 %v1309, 1.442695
    %v1311 = vpow.pop %v1310
    %v1312 = vadd.f32 %v1311, 1.0
    %v1313 = vrcp.pop %v1312
    %v1314 = vmul.f32 1.0, %v1313
    %v1315 = vmul.f32 %v1307, %v620
    %v1316 = vmul.f32 %v1301, %v1308
    %v1317 = vadd.f32 %v1315, %v1316
    %v1318 = vtanh.pop %v1317
    %v1319 = vmul.f32 %v1314, %v1318
    %v1320 = vld [vmem:[#allocation6] sm:$0xff]
    %v1321 = vld [vmem:[#allocation6 + $0x8] sm:$0xff]
    %v1322 = vld [vmem:[#allocation6 + $0x10] sm:$0xff]
    %v1323 = vld [vmem:[#allocation6 + $0x18] sm:$0xff]
    %v1324 = vld [vmem:[#allocation6 + $0x20] sm:$0xff]
    %v1325 = vld [vmem:[#allocation6 + $0x28] sm:$0xff]
    %v1326 = vld [vmem:[#allocation6 + $0x30] sm:$0xff]
    %v1327 = vld [vmem:[#allocation6 + $0x38] sm:$0xff]
    %v1328 = vld [vmem:[#allocation6 + $0x40] sm:$0xff]
    %v1329 = vld [vmem:[#allocation6 + $0x48] sm:$0xff]
    %v1330 = vld [vmem:[#allocation6 + $0x50] sm:$0xff]
    %v1331 = vld [vmem:[#allocation6 + $0x58] sm:$0xff]
    %v1332 = vld [vmem:[#allocation6 + $0x60] sm:$0xff]
    %v1333 = vld [vmem:[#allocation6 + $0x68] sm:$0xff]
    %v1334 = vld [vmem:[#allocation6 + $0x70] sm:$0xff]
    %v1335 = vld [vmem:[#allocation6 + $0x78] sm:$0xff]
    %v1336 = vld [vmem:[#allocation6 + $0x80] sm:$0xff]
    %v1337 = vld [vmem:[#allocation6 + $0x88] sm:$0xff]
    %v1338 = vld [vmem:[#allocation6 + $0x90] sm:$0xff]
    %v1339 = vld [vmem:[#allocation6 + $0x98] sm:$0xff]
    %v1340 = vld [vmem:[#allocation6 + $0xa0] sm:$0xff]
    %v1341 = vld [vmem:[#allocation6 + $0xa8] sm:$0xff]
    %v1342 = vld [vmem:[#allocation6 + $0xb0] sm:$0xff]
    %v1343 = vld [vmem:[#allocation6 + $0xb8] sm:$0xff]
    %v1344 = vld [vmem:[#allocation6 + $0xc0] sm:$0xff]
    %v1345 = vld [vmem:[#allocation6 + $0xc8] sm:$0xff]
    %v1346 = vld [vmem:[#allocation6 + $0xd0] sm:$0xff]
    %v1347 = vld [vmem:[#allocation6 + $0xd8] sm:$0xff]
    %v1348 = vld [vmem:[#allocation6 + $0xe0] sm:$0xff]
    %v1349 = vld [vmem:[#allocation6 + $0xe8] sm:$0xff]
    %v1350 = vld [vmem:[#allocation6 + $0xf0] sm:$0xff]
    %v1351 = vld [vmem:[#allocation6 + $0xf8] sm:$0xff]
    %v1352 = vld [vmem:[#allocation6 + $0x100] sm:$0xff]
    %v1353 = vld [vmem:[#allocation6 + $0x108] sm:$0xff]
    %v1354 = vld [vmem:[#allocation6 + $0x110] sm:$0xff]
    %v1355 = vld [vmem:[#allocation6 + $0x118] sm:$0xff]
    %v1356 = vld [vmem:[#allocation6 + $0x120] sm:$0xff]
    %v1357 = vld [vmem:[#allocation6 + $0x128] sm:$0xff]
    %v1358 = vld [vmem:[#allocation6 + $0x130] sm:$0xff]
    %v1359 = vld [vmem:[#allocation6 + $0x138] sm:$0xff]
    %v1360 = vld [vmem:[#allocation6 + $0x140] sm:$0xff]
    %v1361 = vld [vmem:[#allocation6 + $0x148] sm:$0xff]
    %v1362 = vld [vmem:[#allocation6 + $0x150] sm:$0xff]
    %v1363 = vld [vmem:[#allocation6 + $0x158] sm:$0xff]
    %v1364 = vld [vmem:[#allocation6 + $0x160] sm:$0xff]
    %v1365 = vld [vmem:[#allocation6 + $0x168] sm:$0xff]
    %v1366 = vld [vmem:[#allocation6 + $0x170] sm:$0xff]
    %v1367 = vld [vmem:[#allocation6 + $0x178] sm:$0xff]
    %v1368 = vld [vmem:[#allocation6 + $0x180] sm:$0xff]
    %v1369 = vld [vmem:[#allocation6 + $0x188] sm:$0xff]
    %v1370 = vld [vmem:[#allocation6 + $0x190] sm:$0xff]
    %v1371 = vld [vmem:[#allocation6 + $0x198] sm:$0xff]
    %v1372 = vld [vmem:[#allocation6 + $0x1a0] sm:$0xff]
    %v1373 = vld [vmem:[#allocation6 + $0x1a8] sm:$0xff]
    %v1374 = vld [vmem:[#allocation6 + $0x1b0] sm:$0xff]
    %v1375 = vld [vmem:[#allocation6 + $0x1b8] sm:$0xff]
    %v1376 = vld [vmem:[#allocation6 + $0x1c0] sm:$0xff]
    %v1377 = vld [vmem:[#allocation6 + $0x1c8] sm:$0xff]
    %v1378 = vld [vmem:[#allocation6 + $0x1d0] sm:$0xff]
    %v1379 = vld [vmem:[#allocation6 + $0x1d8] sm:$0xff]
    %v1380 = vld [vmem:[#allocation6 + $0x1e0] sm:$0xff]
    %v1381 = vld [vmem:[#allocation6 + $0x1e8] sm:$0xff]
    %v1382 = vld [vmem:[#allocation6 + $0x1f0] sm:$0xff]
    %v1383 = vld [vmem:[#allocation6 + $0x1f8] sm:$0xff]
    %v1384 = vld [vmem:[#allocation8] sm:$0xff]
    %v1385 = vld [vmem:[#allocation8 + $0x8] sm:$0xff]
    %v1386 = vld [vmem:[#allocation8 + $0x10] sm:$0xff]
    %v1387 = vld [vmem:[#allocation8 + $0x18] sm:$0xff]
    %v1388 = vld [vmem:[#allocation8 + $0x20] sm:$0xff]
    %v1389 = vld [vmem:[#allocation8 + $0x28] sm:$0xff]
    %v1390 = vld [vmem:[#allocation8 + $0x30] sm:$0xff]
    %v1391 = vld [vmem:[#allocation8 + $0x38] sm:$0xff]
    %v1392 = vld [vmem:[#allocation8 + $0x40] sm:$0xff]
    %v1393 = vld [vmem:[#allocation8 + $0x48] sm:$0xff]
    %v1394 = vld [vmem:[#allocation8 + $0x50] sm:$0xff]
    %v1395 = vld [vmem:[#allocation8 + $0x58] sm:$0xff]
    %v1396 = vld [vmem:[#allocation8 + $0x60] sm:$0xff]
    %v1397 = vld [vmem:[#allocation8 + $0x68] sm:$0xff]
    %v1398 = vld [vmem:[#allocation8 + $0x70] sm:$0xff]
    %v1399 = vld [vmem:[#allocation8 + $0x78] sm:$0xff]
    %v1400 = vld [vmem:[#allocation8 + $0x80] sm:$0xff]
    %v1401 = vld [vmem:[#allocation8 + $0x88] sm:$0xff]
    %v1402 = vld [vmem:[#allocation8 + $0x90] sm:$0xff]
    %v1403 = vld [vmem:[#allocation8 + $0x98] sm:$0xff]
    %v1404 = vld [vmem:[#allocation8 + $0xa0] sm:$0xff]
    %v1405 = vld [vmem:[#allocation8 + $0xa8] sm:$0xff]
    %v1406 = vld [vmem:[#allocation8 + $0xb0] sm:$0xff]
    %v1407 = vld [vmem:[#allocation8 + $0xb8] sm:$0xff]
    %v1408 = vld [vmem:[#allocation8 + $0xc0] sm:$0xff]
    %v1409 = vld [vmem:[#allocation8 + $0xc8] sm:$0xff]
    %v1410 = vld [vmem:[#allocation8 + $0xd0] sm:$0xff]
    %v1411 = vld [vmem:[#allocation8 + $0xd8] sm:$0xff]
    %v1412 = vld [vmem:[#allocation8 + $0xe0] sm:$0xff]
    %v1413 = vld [vmem:[#allocation8 + $0xe8] sm:$0xff]
    %v1414 = vld [vmem:[#allocation8 + $0xf0] sm:$0xff]
    %v1415 = vld [vmem:[#allocation8 + $0xf8] sm:$0xff]
    %v1416 = vld [vmem:[#allocation8 + $0x100] sm:$0xff]
    %v1417 = vld [vmem:[#allocation8 + $0x108] sm:$0xff]
    %v1418 = vld [vmem:[#allocation8 + $0x110] sm:$0xff]
    %v1419 = vld [vmem:[#allocation8 + $0x118] sm:$0xff]
    %v1420 = vld [vmem:[#allocation8 + $0x120] sm:$0xff]
    %v1421 = vld [vmem:[#allocation8 + $0x128] sm:$0xff]
    %v1422 = vld [vmem:[#allocation8 + $0x130] sm:$0xff]
    %v1423 = vld [vmem:[#allocation8 + $0x138] sm:$0xff]
    %v1424 = vld [vmem:[#allocation8 + $0x140] sm:$0xff]
    %v1425 = vld [vmem:[#allocation8 + $0x148] sm:$0xff]
    %v1426 = vld [vmem:[#allocation8 + $0x150] sm:$0xff]
    %v1427 = vld [vmem:[#allocation8 + $0x158] sm:$0xff]
    %v1428 = vld [vmem:[#allocation8 + $0x160] sm:$0xff]
    %v1429 = vld [vmem:[#allocation8 + $0x168] sm:$0xff]
    %v1430 = vld [vmem:[#allocation8 + $0x170] sm:$0xff]
    %v1431 = vld [vmem:[#allocation8 + $0x178] sm:$0xff]
    %v1432 = vld [vmem:[#allocation8 + $0x180] sm:$0xff]
    %v1433 = vld [vmem:[#allocation8 + $0x188] sm:$0xff]
    %v1434 = vld [vmem:[#allocation8 + $0x190] sm:$0xff]
    %v1435 = vld [vmem:[#allocation8 + $0x198] sm:$0xff]
    %v1436 = vld [vmem:[#allocation8 + $0x1a0] sm:$0xff]
    %v1437 = vld [vmem:[#allocation8 + $0x1a8] sm:$0xff]
    %v1438 = vld [vmem:[#allocation8 + $0x1b0] sm:$0xff]
    %v1439 = vld [vmem:[#allocation8 + $0x1b8] sm:$0xff]
    %v1440 = vld [vmem:[#allocation8 + $0x1c0] sm:$0xff]
    %v1441 = vld [vmem:[#allocation8 + $0x1c8] sm:$0xff]
    %v1442 = vld [vmem:[#allocation8 + $0x1d0] sm:$0xff]
    %v1443 = vld [vmem:[#allocation8 + $0x1d8] sm:$0xff]
    %v1444 = vld [vmem:[#allocation8 + $0x1e0] sm:$0xff]
    %v1445 = vld [vmem:[#allocation8 + $0x1e8] sm:$0xff]
    %v1446 = vld [vmem:[#allocation8 + $0x1f0] sm:$0xff]
    %v1447 = vld [vmem:[#allocation8 + $0x1f8] sm:$0xff]
    %1448 = vmatprep.subr.mxu0 %v1385
    %1449 = vmatpush1.msra.mxu0 %v1384
    %1450 = vmatprep.subr.mxu0 %v1389
    %1451 = vmatpush1.msra.mxu0 %v1388
    %1452 = vmatprep.subr.mxu0 %v1393
    %1453 = vmatpush1.msra.mxu0 %v1392
    %1454 = vmatprep.subr.mxu0 %v1397
    %1455 = vmatpush1.msra.mxu0 %v1396
    %1456 = vmatprep.subr.mxu0 %v1401
    %1457 = vmatpush1.msra.mxu0 %v1400
    %1458 = vmatprep.subr.mxu0 %v1405
    %1459 = vmatpush1.msra.mxu0 %v1404
    %1460 = vmatprep.subr.mxu0 %v1409
    %1461 = vmatpush1.msra.mxu0 %v1408
    %1462 = vmatprep.subr.mxu0 %v1413
    %1463 = vmatpush1.msra.mxu0 %v1412
    %1464 = vmatprep.subr.mxu0 %v1417
    %1465 = vmatpush1.msra.mxu0 %v1416
    %1466 = vmatprep.subr.mxu0 %v1421
    %1467 = vmatpush1.msra.mxu0 %v1420
    %1468 = vmatprep.subr.mxu0 %v1425
    %1469 = vmatpush1.msra.mxu0 %v1424
    %1470 = vmatprep.subr.mxu0 %v1429
    %1471 = vmatpush1.msra.mxu0 %v1428
    %1472 = vmatprep.subr.mxu0 %v1433
    %1473 = vmatpush1.msra.mxu0 %v1432
    %1474 = vmatprep.subr.mxu0 %v1437
    %1475 = vmatpush1.msra.mxu0 %v1436
    %1476 = vmatprep.subr.mxu0 %v1441
    %1477 = vmatpush1.msra.mxu0 %v1440
    %1478 = vmatprep.subr.mxu0 %v1445
    %1479 = vmatpush1.msra.mxu0 %v1444
    %1480 = vmatprep.subr.mxu0 0.0
    %1481 = vmatpush1.msra.mxu0 0.0
    %1482 = vmatprep.subr.mxu0 0.0
    %1483 = vmatpush1.msra.mxu0 0.0
    %1484 = vmatprep.subr.mxu0 0.0
    %1485 = vmatpush1.msra.mxu0 0.0
    %1486 = vmatprep.subr.mxu0 0.0
    %1487 = vmatpush1.msra.mxu0 0.0
    %1488 = vmatprep.subr.mxu0 0.0
    %1489 = vmatpush1.msra.mxu0 0.0
    %1490 = vmatprep.subr.mxu0 0.0
    %1491 = vmatpush1.msra.mxu0 0.0
    %1492 = vmatprep.subr.mxu0 0.0
    %1493 = vmatpush1.msra.mxu0 0.0
    %1494 = vmatprep.subr.mxu0 0.0
    %1495 = vmatpush1.msra.mxu0 0.0
    %1496 = vmatprep.subr.mxu0 0.0
    %1497 = vmatpush1.msra.mxu0 0.0
    %1498 = vmatprep.subr.mxu0 0.0
    %1499 = vmatpush1.msra.mxu0 0.0
    %1500 = vmatprep.subr.mxu0 0.0
    %1501 = vmatpush1.msra.mxu0 0.0
    %1502 = vmatprep.subr.mxu0 0.0
    %1503 = vmatpush1.msra.mxu0 0.0
    %1504 = vmatprep.subr.mxu0 0.0
    %1505 = vmatpush1.msra.mxu0 0.0
    %1506 = vmatprep.subr.mxu0 0.0
    %1507 = vmatpush1.msra.mxu0 0.0
    %1508 = vmatprep.subr.mxu0 0.0
    %1509 = vmatpush1.msra.mxu0 0.0
    %1510 = vmatprep.subr.mxu0 0.0
    %1511 = vmatpush1.msra.mxu0 0.0
    %1512 = vmatprep.mubr.f32.mxu0 0.0
    %1513 = vmatmul.mubr.f32.gmra.mrb[0].mxu0 %v1084
    %v1514 = vpop.f32.mrb[0].mxu0
    %v1515 = vadd.f32 0.0, %v1514
    %v1516 = vpop.f32.mrb[0].mxu0
    %v1517 = vadd.f32 0.0, %v1516
    %1518 = vdwg.mxu0
    %1519 = vmatprep.subr.mxu0 %v1387
    %1520 = vmatpush1.msra.mxu0 %v1386
    %1521 = vmatprep.subr.mxu0 %v1391
    %1522 = vmatpush1.msra.mxu0 %v1390
    %1523 = vmatprep.subr.mxu0 %v1395
    %1524 = vmatpush1.msra.mxu0 %v1394
    %1525 = vmatprep.subr.mxu0 %v1399
    %1526 = vmatpush1.msra.mxu0 %v1398
    %1527 = vmatprep.subr.mxu0 %v1403
    %1528 = vmatpush1.msra.mxu0 %v1402
    %1529 = vmatprep.subr.mxu0 %v1407
    %1530 = vmatpush1.msra.mxu0 %v1406
    %1531 = vmatprep.subr.mxu0 %v1411
    %1532 = vmatpush1.msra.mxu0 %v1410
    %1533 = vmatprep.subr.mxu0 %v1415
    %1534 = vmatpush1.msra.mxu0 %v1414
    %1535 = vmatprep.subr.mxu0 %v1419
    %1536 = vmatpush1.msra.mxu0 %v1418
    %1537 = vmatprep.subr.mxu0 %v1423
    %1538 = vmatpush1.msra.mxu0 %v1422
    %1539 = vmatprep.subr.mxu0 %v1427
    %1540 = vmatpush1.msra.mxu0 %v1426
    %1541 = vmatprep.subr.mxu0 %v1431
    %1542 = vmatpush1.msra.mxu0 %v1430
    %1543 = vmatprep.subr.mxu0 %v1435
    %1544 = vmatpush1.msra.mxu0 %v1434
    %1545 = vmatprep.subr.mxu0 %v1439
    %1546 = vmatpush1.msra.mxu0 %v1438
    %1547 = vmatprep.subr.mxu0 %v1443
    %1548 = vmatpush1.msra.mxu0 %v1442
    %1549 = vmatprep.subr.mxu0 %v1447
    %1550 = vmatpush1.msra.mxu0 %v1446
    %1551 = vmatprep.subr.mxu0 0.0
    %1552 = vmatpush1.msra.mxu0 0.0
    %1553 = vmatprep.subr.mxu0 0.0
    %1554 = vmatpush1.msra.mxu0 0.0
    %1555 = vmatprep.subr.mxu0 0.0
    %1556 = vmatpush1.msra.mxu0 0.0
    %1557 = vmatprep.subr.mxu0 0.0
    %1558 = vmatpush1.msra.mxu0 0.0
    %1559 = vmatprep.subr.mxu0 0.0
    %1560 = vmatpush1.msra.mxu0 0.0
    %1561 = vmatprep.subr.mxu0 0.0
    %1562 = vmatpush1.msra.mxu0 0.0
    %1563 = vmatprep.subr.mxu0 0.0
    %1564 = vmatpush1.msra.mxu0 0.0
    %1565 = vmatprep.subr.mxu0 0.0
    %1566 = vmatpush1.msra.mxu0 0.0
    %1567 = vmatprep.subr.mxu0 0.0
    %1568 = vmatpush1.msra.mxu0 0.0
    %1569 = vmatprep.subr.mxu0 0.0
    %1570 = vmatpush1.msra.mxu0 0.0
    %1571 = vmatprep.subr.mxu0 0.0
    %1572 = vmatpush1.msra.mxu0 0.0
    %1573 = vmatprep.subr.mxu0 0.0
    %1574 = vmatpush1.msra.mxu0 0.0
    %1575 = vmatprep.subr.mxu0 0.0
    %1576 = vmatpush1.msra.mxu0 0.0
    %1577 = vmatprep.subr.mxu0 0.0
    %1578 = vmatpush1.msra.mxu0 0.0
    %1579 = vmatprep.subr.mxu0 0.0
    %1580 = vmatpush1.msra.mxu0 0.0
    %1581 = vmatprep.subr.mxu0 0.0
    %1582 = vmatpush1.msra.mxu0 0.0
    %1583 = vmatprep.mubr.f32.mxu0 0.0
    %1584 = vmatmul.mubr.f32.gmra.mrb[0].mxu0 %v1084
    %v1585 = vpop.f32.mrb[0].mxu0
    %v1586 = vadd.f32 0.0, %v1585
    %v1587 = vpop.f32.mrb[0].mxu0
    %v1588 = vadd.f32 0.0, %v1587
    %1589 = vdwg.mxu0
    %1590 = vmatprep.subr.mxu0 %v1321
    %1591 = vmatpush1.msra.mxu0 %v1320
    %1592 = vmatprep.subr.mxu0 %v1325
    %1593 = vmatpush1.msra.mxu0 %v1324
    %1594 = vmatprep.subr.mxu0 %v1329
    %1595 = vmatpush1.msra.mxu0 %v1328
    %1596 = vmatprep.subr.mxu0 %v1333
    %1597 = vmatpush1.msra.mxu0 %v1332
    %1598 = vmatprep.subr.mxu0 %v1337
    %1599 = vmatpush1.msra.mxu0 %v1336
    %1600 = vmatprep.subr.mxu0 %v1341
    %1601 = vmatpush1.msra.mxu0 %v1340
    %1602 = vmatprep.subr.mxu0 %v1345
    %1603 = vmatpush1.msra.mxu0 %v1344
    %1604 = vmatprep.subr.mxu0 %v1349
    %1605 = vmatpush1.msra.mxu0 %v1348
    %1606 = vmatprep.subr.mxu0 %v1353
    %1607 = vmatpush1.msra.mxu0 %v1352
    %1608 = vmatprep.subr.mxu0 %v1357
    %1609 = vmatpush1.msra.mxu0 %v1356
    %1610 = vmatprep.subr.mxu0 %v1361
    %1611 = vmatpush1.msra.mxu0 %v1360
    %1612 = vmatprep.subr.mxu0 %v1365
    %1613 = vmatpush1.msra.mxu0 %v1364
    %1614 = vmatprep.subr.mxu0 %v1369
    %1615 = vmatpush1.msra.mxu0 %v1368
    %1616 = vmatprep.subr.mxu0 %v1373
    %1617 = vmatpush1.msra.mxu0 %v1372
    %1618 = vmatprep.subr.mxu0 %v1377
    %1619 = vmatpush1.msra.mxu0 %v1376
    %1620 = vmatprep.subr.mxu0 %v1381
    %1621 = vmatpush1.msra.mxu0 %v1380
    %1622 = vmatprep.subr.mxu0 0.0
    %1623 = vmatpush1.msra.mxu0 0.0
    %1624 = vmatprep.subr.mxu0 0.0
    %1625 = vmatpush1.msra.mxu0 0.0
    %1626 = vmatprep.subr.mxu0 0.0
    %1627 = vmatpush1.msra.mxu0 0.0
    %1628 = vmatprep.subr.mxu0 0.0
    %1629 = vmatpush1.msra.mxu0 0.0
    %1630 = vmatprep.subr.mxu0 0.0
    %1631 = vmatpush1.msra.mxu0 0.0
    %1632 = vmatprep.subr.mxu0 0.0
    %1633 = vmatpush1.msra.mxu0 0.0
    %1634 = vmatprep.subr.mxu0 0.0
    %1635 = vmatpush1.msra.mxu0 0.0
    %1636 = vmatprep.subr.mxu0 0.0
    %1637 = vmatpush1.msra.mxu0 0.0
    %1638 = vmatprep.subr.mxu0 0.0
    %1639 = vmatpush1.msra.mxu0 0.0
    %1640 = vmatprep.subr.mxu0 0.0
    %1641 = vmatpush1.msra.mxu0 0.0
    %1642 = vmatprep.subr.mxu0 0.0
    %1643 = vmatpush1.msra.mxu0 0.0
    %1644 = vmatprep.subr.mxu0 0.0
    %1645 = vmatpush1.msra.mxu0 0.0
    %1646 = vmatprep.subr.mxu0 0.0
    %1647 = vmatpush1.msra.mxu0 0.0
    %1648 = vmatprep.subr.mxu0 0.0
    %1649 = vmatpush1.msra.mxu0 0.0
    %1650 = vmatprep.subr.mxu0 0.0
    %1651 = vmatpush1.msra.mxu0 0.0
    %1652 = vmatprep.subr.mxu0 0.0
    %1653 = vmatpush1.msra.mxu0 0.0
    %1654 = vmatprep.mubr.f32.mxu0 0.0
    %1655 = vmatmul.mubr.f32.gmra.mrb[0].mxu0 %v1319
    %v1656 = vpop.f32.mrb[0].mxu0
    %v1657 = vadd.f32 %v1515, %v1656
    %v1658 = vpop.f32.mrb[0].mxu0
    %v1659 = vadd.f32 %v1517, %v1658
    %1660 = vdwg.mxu0
    %1661 = vmatprep.subr.mxu0 %v1323
    %1662 = vmatpush1.msra.mxu0 %v1322
    %1663 = vmatprep.subr.mxu0 %v1327
    %1664 = vmatpush1.msra.mxu0 %v1326
    %1665 = vmatprep.subr.mxu0 %v1331
    %1666 = vmatpush1.msra.mxu0 %v1330
    %1667 = vmatprep.subr.mxu0 %v1335
    %1668 = vmatpush1.msra.mxu0 %v1334
    %1669 = vmatprep.subr.mxu0 %v1339
    %1670 = vmatpush1.msra.mxu0 %v1338
    %1671 = vmatprep.subr.mxu0 %v1343
    %1672 = vmatpush1.msra.mxu0 %v1342
    %1673 = vmatprep.subr.mxu0 %v1347
    %1674 = vmatpush1.msra.mxu0 %v1346
    %1675 = vmatprep.subr.mxu0 %v1351
    %1676 = vmatpush1.msra.mxu0 %v1350
    %1677 = vmatprep.subr.mxu0 %v1355
    %1678 = vmatpush1.msra.mxu0 %v1354
    %1679 = vmatprep.subr.mxu0 %v1359
    %1680 = vmatpush1.msra.mxu0 %v1358
    %1681 = vmatprep.subr.mxu0 %v1363
    %1682 = vmatpush1.msra.mxu0 %v1362
    %1683 = vmatprep.subr.mxu0 %v1367
    %1684 = vmatpush1.msra.mxu0 %v1366
    %1685 = vmatprep.subr.mxu0 %v1371
    %1686 = vmatpush1.msra.mxu0 %v1370
    %1687 = vmatprep.subr.mxu0 %v1375
    %1688 = vmatpush1.msra.mxu0 %v1374
    %1689 = vmatprep.subr.mxu0 %v1379
    %1690 = vmatpush1.msra.mxu0 %v1378
    %1691 = vmatprep.subr.mxu0 %v1383
    %1692 = vmatpush1.msra.mxu0 %v1382
    %1693 = vmatprep.subr.mxu0 0.0
    %1694 = vmatpush1.msra.mxu0 0.0
    %1695 = vmatprep.subr.mxu0 0.0
    %1696 = vmatpush1.msra.mxu0 0.0
    %1697 = vmatprep.subr.mxu0 0.0
    %1698 = vmatpush1.msra.mxu0 0.0
    %1699 = vmatprep.subr.mxu0 0.0
    %1700 = vmatpush1.msra.mxu0 0.0
    %1701 = vmatprep.subr.mxu0 0.0
    %1702 = vmatpush1.msra.mxu0 0.0
    %1703 = vmatprep.subr.mxu0 0.0
    %1704 = vmatpush1.msra.mxu0 0.0
    %1705 = vmatprep.subr.mxu0 0.0
    %1706 = vmatpush1.msra.mxu0 0.0
    %1707 = vmatprep.subr.mxu0 0.0
    %1708 = vmatpush1.msra.mxu0 0.0
    %1709 = vmatprep.subr.mxu0 0.0
    %1710 = vmatpush1.msra.mxu0 0.0
    %1711 = vmatprep.subr.mxu0 0.0
    %1712 = vmatpush1.msra.mxu0 0.0
    %1713 = vmatprep.subr.mxu0 0.0
    %1714 = vmatpush1.msra.mxu0 0.0
    %1715 = vmatprep.subr.mxu0 0.0
    %1716 = vmatpush1.msra.mxu0 0.0
    %1717 = vmatprep.subr.mxu0 0.0
    %1718 = vmatpush1.msra.mxu0 0.0
    %1719 = vmatprep.subr.mxu0 0.0
    %1720 = vmatpush1.msra.mxu0 0.0
    %1721 = vmatprep.subr.mxu0 0.0
    %1722 = vmatpush1.msra.mxu0 0.0
    %1723 = vmatprep.subr.mxu0 0.0
    %1724 = vmatpush1.msra.mxu0 0.0
    %1725 = vmatprep.mubr.f32.mxu0 0.0
    %1726 = vmatmul.mubr.f32.gmra.mrb[0].mxu0 %v1319
    %v1727 = vpop.f32.mrb[0].mxu0
    %v1728 = vadd.f32 %v1586, %v1727
    %v1729 = vpop.f32.mrb[0].mxu0
    %v1730 = vadd.f32 %v1588, %v1729
    %1731 = vdwg.mxu0
    %v1732 = vld [vmem:[%s6] sm:$0xf]
    %v1734 = vlaneseq
    %v1735 = vshrl.u32 %v1734, 7
    %v1736 = vsub.s32 0, %v1735
    %v1737 = vrot.slane %v1732, %v1736
    %v1738 = vlaneseq
    %v1739 = vshrl.u32 %v1738, 7
    %v1740 = vsub.s32 1, %v1739
    %v1741 = vrot.slane %v1732, %v1740
    %v1742 = vlaneseq
    %v1743 = vshrl.u32 %v1742, 7
    %v1744 = vsub.s32 2, %v1743
    %v1745 = vrot.slane %v1732, %v1744
    %v1746 = vlaneseq
    %v1747 = vshrl.u32 %v1746, 7
    %v1748 = vsub.s32 3, %v1747
    %v1749 = vrot.slane %v1732, %v1748
    %v1754 = vadd.f32 %v1657, %v1737
    %v1755 = vadd.f32 %v1659, %v1741
    %v1756 = vadd.f32 %v1728, %v1745
    %v1757 = vadd.f32 %v1730, %v1749
    %v1758 = vxor.u32 %v1754, 2147483648
    %v1759 = vmul.f32 %v1758, 1.442695
    %v1760 = vpow.pop %v1759
    %v1761 = vadd.f32 %v1760, 1.0
    %v1762 = vrcp.pop %v1761
    %v1763 = vmul.f32 1.0, %v1762
    %v1764 = vxor.u32 %v1755, 2147483648
    %v1765 = vmul.f32 %v1764, 1.442695
    %v1766 = vpow.pop %v1765
    %v1767 = vadd.f32 %v1766, 1.0
    %v1768 = vrcp.pop %v1767
    %v1769 = vmul.f32 1.0, %v1768
    %v1770 = vtanh.pop %v1756
    %v1771 = vxor.u32 %v1757, 2147483648
    %v1772 = vmul.f32 %v1771, 1.442695
    %v1773 = vpow.pop %v1772
    %v1774 = vadd.f32 %v1773, 1.0
    %v1775 = vrcp.pop %v1774
    %v1776 = vmul.f32 1.0, %v1775
    %v1777 = vmul.f32 %v1769, %v1082
    %v1778 = vmul.f32 %v1763, %v1770
    %v1779 = vadd.f32 %v1777, %v1778
    %v1780 = vtanh.pop %v1779
    %v1781 = vmul.f32 %v1776, %v1780
    %1782 = vst [vmem:[#allocation2 + $0x8] sm:$0xff] %v1781
    %v1783 = vld [vmem:[#allocation4] sm:$0xff]
    %v1784 = vld [vmem:[#allocation4 + $0x8] sm:$0xff]
    %v1785 = vld [vmem:[#allocation4 + $0x10] sm:$0xff]
    %v1786 = vld [vmem:[#allocation4 + $0x18] sm:$0xff]
    %v1787 = vld [vmem:[#allocation4 + $0x20] sm:$0xff]
    %v1788 = vld [vmem:[#allocation4 + $0x28] sm:$0xff]
    %v1789 = vld [vmem:[#allocation4 + $0x30] sm:$0xff]
    %v1790 = vld [vmem:[#allocation4 + $0x38] sm:$0xff]
    %v1791 = vld [vmem:[#allocation4 + $0x40] sm:$0xff]
    %v1792 = vld [vmem:[#allocation4 + $0x48] sm:$0xff]
    %v1793 = vld [vmem:[#allocation4 + $0x50] sm:$0xff]
    %v1794 = vld [vmem:[#allocation4 + $0x58] sm:$0xff]
    %v1795 = vld [vmem:[#allocation4 + $0x60] sm:$0xff]
    %v1796 = vld [vmem:[#allocation4 + $0x68] sm:$0xff]
    %v1797 = vld [vmem:[#allocation4 + $0x70] sm:$0xff]
    %v1798 = vld [vmem:[#allocation4 + $0x78] sm:$0xff]
    %v1799 = vld [vmem:[#allocation4 + $0x80] sm:$0xff]
    %v1800 = vld [vmem:[#allocation4 + $0x88] sm:$0xff]
    %v1801 = vld [vmem:[#allocation4 + $0x90] sm:$0xff]
    %v1802 = vld [vmem:[#allocation4 + $0x98] sm:$0xff]
    %v1803 = vld [vmem:[#allocation4 + $0xa0] sm:$0xff]
    %v1804 = vld [vmem:[#allocation4 + $0xa8] sm:$0xff]
    %v1805 = vld [vmem:[#allocation4 + $0xb0] sm:$0xff]
    %v1806 = vld [vmem:[#allocation4 + $0xb8] sm:$0xff]
    %v1807 = vld [vmem:[#allocation4 + $0xc0] sm:$0xff]
    %v1808 = vld [vmem:[#allocation4 + $0xc8] sm:$0xff]
    %v1809 = vld [vmem:[#allocation4 + $0xd0] sm:$0xff]
    %v1810 = vld [vmem:[#allocation4 + $0xd8] sm:$0xff]
    %v1811 = vld [vmem:[#allocation4 + $0xe0] sm:$0xff]
    %v1812 = vld [vmem:[#allocation4 + $0xe8] sm:$0xff]
    %v1813 = vld [vmem:[#allocation4 + $0xf0] sm:$0xff]
    %v1814 = vld [vmem:[#allocation4 + $0xf8] sm:$0xff]
    %v1815 = vld [vmem:[#allocation4 + $0x100] sm:$0xff]
    %v1816 = vld [vmem:[#allocation4 + $0x108] sm:$0xff]
    %v1817 = vld [vmem:[#allocation4 + $0x110] sm:$0xff]
    %v1818 = vld [vmem:[#allocation4 + $0x118] sm:$0xff]
    %v1819 = vld [vmem:[#allocation4 + $0x120] sm:$0xff]
    %v1820 = vld [vmem:[#allocation4 + $0x128] sm:$0xff]
    %v1821 = vld [vmem:[#allocation4 + $0x130] sm:$0xff]
    %v1822 = vld [vmem:[#allocation4 + $0x138] sm:$0xff]
    %v1823 = vld [vmem:[#allocation4 + $0x140] sm:$0xff]
    %v1824 = vld [vmem:[#allocation4 + $0x148] sm:$0xff]
    %v1825 = vld [vmem:[#allocation4 + $0x150] sm:$0xff]
    %v1826 = vld [vmem:[#allocation4 + $0x158] sm:$0xff]
    %v1827 = vld [vmem:[#allocation4 + $0x160] sm:$0xff]
    %v1828 = vld [vmem:[#allocation4 + $0x168] sm:$0xff]
    %v1829 = vld [vmem:[#allocation4 + $0x170] sm:$0xff]
    %v1830 = vld [vmem:[#allocation4 + $0x178] sm:$0xff]
    %v1831 = vld [vmem:[#allocation4 + $0x180] sm:$0xff]
    %v1832 = vld [vmem:[#allocation4 + $0x188] sm:$0xff]
    %v1833 = vld [vmem:[#allocation4 + $0x190] sm:$0xff]
    %v1834 = vld [vmem:[#allocation4 + $0x198] sm:$0xff]
    %v1835 = vld [vmem:[#allocation4 + $0x1a0] sm:$0xff]
    %v1836 = vld [vmem:[#allocation4 + $0x1a8] sm:$0xff]
    %v1837 = vld [vmem:[#allocation4 + $0x1b0] sm:$0xff]
    %v1838 = vld [vmem:[#allocation4 + $0x1b8] sm:$0xff]
    %v1839 = vld [vmem:[#allocation4 + $0x1c0] sm:$0xff]
    %v1840 = vld [vmem:[#allocation4 + $0x1c8] sm:$0xff]
    %v1841 = vld [vmem:[#allocation4 + $0x1d0] sm:$0xff]
    %v1842 = vld [vmem:[#allocation4 + $0x1d8] sm:$0xff]
    %v1843 = vld [vmem:[#allocation4 + $0x1e0] sm:$0xff]
    %v1844 = vld [vmem:[#allocation4 + $0x1e8] sm:$0xff]
    %v1845 = vld [vmem:[#allocation4 + $0x1f0] sm:$0xff]
    %v1846 = vld [vmem:[#allocation4 + $0x1f8] sm:$0xff]
    %1847 = vmatprep.subr.mxu0 %v1784
    %1848 = vmatpush1.msra.mxu0 %v1783
    %1849 = vmatprep.subr.mxu0 %v1788
    %1850 = vmatpush1.msra.mxu0 %v1787
    %1851 = vmatprep.subr.mxu0 %v1792
    %1852 = vmatpush1.msra.mxu0 %v1791
    %1853 = vmatprep.subr.mxu0 %v1796
    %1854 = vmatpush1.msra.mxu0 %v1795
    %1855 = vmatprep.subr.mxu0 %v1800
    %1856 = vmatpush1.msra.mxu0 %v1799
    %1857 = vmatprep.subr.mxu0 %v1804
    %1858 = vmatpush1.msra.mxu0 %v1803
    %1859 = vmatprep.subr.mxu0 %v1808
    %1860 = vmatpush1.msra.mxu0 %v1807
    %1861 = vmatprep.subr.mxu0 %v1812
    %1862 = vmatpush1.msra.mxu0 %v1811
    %1863 = vmatprep.subr.mxu0 %v1816
    %1864 = vmatpush1.msra.mxu0 %v1815
    %1865 = vmatprep.subr.mxu0 %v1820
    %1866 = vmatpush1.msra.mxu0 %v1819
    %1867 = vmatprep.subr.mxu0 %v1824
    %1868 = vmatpush1.msra.mxu0 %v1823
    %1869 = vmatprep.subr.mxu0 %v1828
    %1870 = vmatpush1.msra.mxu0 %v1827
    %1871 = vmatprep.subr.mxu0 %v1832
    %1872 = vmatpush1.msra.mxu0 %v1831
    %1873 = vmatprep.subr.mxu0 %v1836
    %1874 = vmatpush1.msra.mxu0 %v1835
    %1875 = vmatprep.subr.mxu0 %v1840
    %1876 = vmatpush1.msra.mxu0 %v1839
    %1877 = vmatprep.subr.mxu0 %v1844
    %1878 = vmatpush1.msra.mxu0 %v1843
    %1879 = vmatprep.subr.mxu0 0.0
    %1880 = vmatpush1.msra.mxu0 0.0
    %1881 = vmatprep.subr.mxu0 0.0
    %1882 = vmatpush1.msra.mxu0 0.0
    %1883 = vmatprep.subr.mxu0 0.0
    %1884 = vmatpush1.msra.mxu0 0.0
    %1885 = vmatprep.subr.mxu0 0.0
    %1886 = vmatpush1.msra.mxu0 0.0
    %1887 = vmatprep.subr.mxu0 0.0
    %1888 = vmatpush1.msra.mxu0 0.0
    %1889 = vmatprep.subr.mxu0 0.0
    %1890 = vmatpush1.msra.mxu0 0.0
    %1891 = vmatprep.subr.mxu0 0.0
    %1892 = vmatpush1.msra.mxu0 0.0
    %1893 = vmatprep.subr.mxu0 0.0
    %1894 = vmatpush1.msra.mxu0 0.0
    %1895 = vmatprep.subr.mxu0 0.0
    %1896 = vmatpush1.msra.mxu0 0.0
    %1897 = vmatprep.subr.mxu0 0.0
    %1898 = vmatpush1.msra.mxu0 0.0
    %1899 = vmatprep.subr.mxu0 0.0
    %1900 = vmatpush1.msra.mxu0 0.0
    %1901 = vmatprep.subr.mxu0 0.0
    %1902 = vmatpush1.msra.mxu0 0.0
    %1903 = vmatprep.subr.mxu0 0.0
    %1904 = vmatpush1.msra.mxu0 0.0
    %1905 = vmatprep.subr.mxu0 0.0
    %1906 = vmatpush1.msra.mxu0 0.0
    %1907 = vmatprep.subr.mxu0 0.0
    %1908 = vmatpush1.msra.mxu0 0.0
    %1909 = vmatprep.subr.mxu0 0.0
    %1910 = vmatpush1.msra.mxu0 0.0
    %1911 = vmatprep.mubr.f32.mxu0 0.0
    %1912 = vmatmul.mubr.f32.gmra.mrb[0].mxu0 %v1319
    %v1913 = vpop.f32.mrb[0].mxu0
    %v1914 = vadd.f32 0.0, %v1913
    %v1915 = vpop.f32.mrb[0].mxu0
    %v1916 = vadd.f32 0.0, %v1915
    %1917 = vdwg.mxu0
    %1918 = vmatprep.subr.mxu0 %v1786
    %1919 = vmatpush1.msra.mxu0 %v1785
    %1920 = vmatprep.subr.mxu0 %v1790
    %1921 = vmatpush1.msra.mxu0 %v1789
    %1922 = vmatprep.subr.mxu0 %v1794
    %1923 = vmatpush1.msra.mxu0 %v1793
    %1924 = vmatprep.subr.mxu0 %v1798
    %1925 = vmatpush1.msra.mxu0 %v1797
    %1926 = vmatprep.subr.mxu0 %v1802
    %1927 = vmatpush1.msra.mxu0 %v1801
    %1928 = vmatprep.subr.mxu0 %v1806
    %1929 = vmatpush1.msra.mxu0 %v1805
    %1930 = vmatprep.subr.mxu0 %v1810
    %1931 = vmatpush1.msra.mxu0 %v1809
    %1932 = vmatprep.subr.mxu0 %v1814
    %1933 = vmatpush1.msra.mxu0 %v1813
    %1934 = vmatprep.subr.mxu0 %v1818
    %1935 = vmatpush1.msra.mxu0 %v1817
    %1936 = vmatprep.subr.mxu0 %v1822
    %1937 = vmatpush1.msra.mxu0 %v1821
    %1938 = vmatprep.subr.mxu0 %v1826
    %1939 = vmatpush1.msra.mxu0 %v1825
    %1940 = vmatprep.subr.mxu0 %v1830
    %1941 = vmatpush1.msra.mxu0 %v1829
    %1942 = vmatprep.subr.mxu0 %v1834
    %1943 = vmatpush1.msra.mxu0 %v1833
    %1944 = vmatprep.subr.mxu0 %v1838
    %1945 = vmatpush1.msra.mxu0 %v1837
    %1946 = vmatprep.subr.mxu0 %v1842
    %1947 = vmatpush1.msra.mxu0 %v1841
    %1948 = vmatprep.subr.mxu0 %v1846
    %1949 = vmatpush1.msra.mxu0 %v1845
    %1950 = vmatprep.subr.mxu0 0.0
    %1951 = vmatpush1.msra.mxu0 0.0
    %1952 = vmatprep.subr.mxu0 0.0
    %1953 = vmatpush1.msra.mxu0 0.0
    %1954 = vmatprep.subr.mxu0 0.0
    %1955 = vmatpush1.msra.mxu0 0.0
    %1956 = vmatprep.subr.mxu0 0.0
    %1957 = vmatpush1.msra.mxu0 0.0
    %1958 = vmatprep.subr.mxu0 0.0
    %1959 = vmatpush1.msra.mxu0 0.0
    %1960 = vmatprep.subr.mxu0 0.0
    %1961 = vmatpush1.msra.mxu0 0.0
    %1962 = vmatprep.subr.mxu0 0.0
    %1963 = vmatpush1.msra.mxu0 0.0
    %1964 = vmatprep.subr.mxu0 0.0
    %1965 = vmatpush1.msra.mxu0 0.0
    %1966 = vmatprep.subr.mxu0 0.0
    %1967 = vmatpush1.msra.mxu0 0.0
    %1968 = vmatprep.subr.mxu0 0.0
    %1969 = vmatpush1.msra.mxu0 0.0
    %1970 = vmatprep.subr.mxu0 0.0
    %1971 = vmatpush1.msra.mxu0 0.0
    %1972 = vmatprep.subr.mxu0 0.0
    %1973 = vmatpush1.msra.mxu0 0.0
    %1974 = vmatprep.subr.mxu0 0.0
    %1975 = vmatpush1.msra.mxu0 0.0
    %1976 = vmatprep.subr.mxu0 0.0
    %1977 = vmatpush1.msra.mxu0 0.0
    %1978 = vmatprep.subr.mxu0 0.0
    %1979 = vmatpush1.msra.mxu0 0.0
    %1980 = vmatprep.subr.mxu0 0.0
    %1981 = vmatpush1.msra.mxu0 0.0
    %1982 = vmatprep.mubr.f32.mxu0 0.0
    %1983 = vmatmul.mubr.f32.gmra.mrb[0].mxu0 %v1319
    %v1984 = vpop.f32.mrb[0].mxu0
    %v1985 = vadd.f32 0.0, %v1984
    %v1986 = vpop.f32.mrb[0].mxu0
    %v1987 = vadd.f32 0.0, %v1986
    %1988 = vdwg.mxu0
    %v1989 = vadd.f32 %v242, %v1914
    %v1990 = vadd.f32 %v244, %v1916
    %v1991 = vadd.f32 %v355, %v1985
    %v1992 = vadd.f32 %v357, %v1987
    %v1993 = vxor.u32 %v1989, 2147483648
    %v1994 = vmul.f32 %v1993, 1.442695
    %v1995 = vpow.pop %v1994
    %v1996 = vadd.f32 %v1995, 1.0
    %v1997 = vrcp.pop %v1996
    %v1998 = vmul.f32 1.0, %v1997
    %v1999 = vxor.u32 %v1990, 2147483648
    %v2000 = vmul.f32 %v1999, 1.442695
    %v2001 = vpow.pop %v2000
    %v2002 = vadd.f32 %v2001, 1.0
    %v2003 = vrcp.pop %v2002
    %v2004 = vmul.f32 1.0, %v2003
    %v2005 = vtanh.pop %v1991
    %v2006 = vxor.u32 %v1992, 2147483648
    %v2007 = vmul.f32 %v2006, 1.442695
    %v2008 = vpow.pop %v2007
    %v2009 = vadd.f32 %v2008, 1.0
    %v2010 = vrcp.pop %v2009
    %v2011 = vmul.f32 1.0, %v2010
    %v2012 = vmul.f32 %v2004, %v1317
    %v2013 = vmul.f32 %v1998, %v2005
    %v2014 = vadd.f32 %v2012, %v2013
    %v2015 = vtanh.pop %v2014
    %v2016 = vmul.f32 %v2011, %v2015
    %v2017 = vld [vmem:[#allocation6] sm:$0xff]
    %v2018 = vld [vmem:[#allocation6 + $0x8] sm:$0xff]
    %v2019 = vld [vmem:[#allocation6 + $0x10] sm:$0xff]
    %v2020 = vld [vmem:[#allocation6 + $0x18] sm:$0xff]
    %v2021 = vld [vmem:[#allocation6 + $0x20] sm:$0xff]
    %v2022 = vld [vmem:[#allocation6 + $0x28] sm:$0xff]
    %v2023 = vld [vmem:[#allocation6 + $0x30] sm:$0xff]
    %v2024 = vld [vmem:[#allocation6 + $0x38] sm:$0xff]
    %v2025 = vld [vmem:[#allocation6 + $0x40] sm:$0xff]
    %v2026 = vld [vmem:[#allocation6 + $0x48] sm:$0xff]
    %v2027 = vld [vmem:[#allocation6 + $0x50] sm:$0xff]
    %v2028 = vld [vmem:[#allocation6 + $0x58] sm:$0xff]
    %v2029 = vld [vmem:[#allocation6 + $0x60] sm:$0xff]
    %v2030 = vld [vmem:[#allocation6 + $0x68] sm:$0xff]
    %v2031 = vld [vmem:[#allocation6 + $0x70] sm:$0xff]
    %v2032 = vld [vmem:[#allocation6 + $0x78] sm:$0xff]
    %v2033 = vld [vmem:[#allocation6 + $0x80] sm:$0xff]
    %v2034 = vld [vmem:[#allocation6 + $0x88] sm:$0xff]
    %v2035 = vld [vmem:[#allocation6 + $0x90] sm:$0xff]
    %v2036 = vld [vmem:[#allocation6 + $0x98] sm:$0xff]
    %v2037 = vld [vmem:[#allocation6 + $0xa0] sm:$0xff]
    %v2038 = vld [vmem:[#allocation6 + $0xa8] sm:$0xff]
    %v2039 = vld [vmem:[#allocation6 + $0xb0] sm:$0xff]
    %v2040 = vld [vmem:[#allocation6 + $0xb8] sm:$0xff]
    %v2041 = vld [vmem:[#allocation6 + $0xc0] sm:$0xff]
    %v2042 = vld [vmem:[#allocation6 + $0xc8] sm:$0xff]
    %v2043 = vld [vmem:[#allocation6 + $0xd0] sm:$0xff]
    %v2044 = vld [vmem:[#allocation6 + $0xd8] sm:$0xff]
    %v2045 = vld [vmem:[#allocation6 + $0xe0] sm:$0xff]
    %v2046 = vld [vmem:[#allocation6 + $0xe8] sm:$0xff]
    %v2047 = vld [vmem:[#allocation6 + $0xf0] sm:$0xff]
    %v2048 = vld [vmem:[#allocation6 + $0xf8] sm:$0xff]
    %v2049 = vld [vmem:[#allocation6 + $0x100] sm:$0xff]
    %v2050 = vld [vmem:[#allocation6 + $0x108] sm:$0xff]
    %v2051 = vld [vmem:[#allocation6 + $0x110] sm:$0xff]
    %v2052 = vld [vmem:[#allocation6 + $0x118] sm:$0xff]
    %v2053 = vld [vmem:[#allocation6 + $0x120] sm:$0xff]
    %v2054 = vld [vmem:[#allocation6 + $0x128] sm:$0xff]
    %v2055 = vld [vmem:[#allocation6 + $0x130] sm:$0xff]
    %v2056 = vld [vmem:[#allocation6 + $0x138] sm:$0xff]
    %v2057 = vld [vmem:[#allocation6 + $0x140] sm:$0xff]
    %v2058 = vld [vmem:[#allocation6 + $0x148] sm:$0xff]
    %v2059 = vld [vmem:[#allocation6 + $0x150] sm:$0xff]
    %v2060 = vld [vmem:[#allocation6 + $0x158] sm:$0xff]
    %v2061 = vld [vmem:[#allocation6 + $0x160] sm:$0xff]
    %v2062 = vld [vmem:[#allocation6 + $0x168] sm:$0xff]
    %v2063 = vld [vmem:[#allocation6 + $0x170] sm:$0xff]
    %v2064 = vld [vmem:[#allocation6 + $0x178] sm:$0xff]
    %v2065 = vld [vmem:[#allocation6 + $0x180] sm:$0xff]
    %v2066 = vld [vmem:[#allocation6 + $0x188] sm:$0xff]
    %v2067 = vld [vmem:[#allocation6 + $0x190] sm:$0xff]
    %v2068 = vld [vmem:[#allocation6 + $0x198] sm:$0xff]
    %v2069 = vld [vmem:[#allocation6 + $0x1a0] sm:$0xff]
    %v2070 = vld [vmem:[#allocation6 + $0x1a8] sm:$0xff]
    %v2071 = vld [vmem:[#allocation6 + $0x1b0] sm:$0xff]
    %v2072 = vld [vmem:[#allocation6 + $0x1b8] sm:$0xff]
    %v2073 = vld [vmem:[#allocation6 + $0x1c0] sm:$0xff]
    %v2074 = vld [vmem:[#allocation6 + $0x1c8] sm:$0xff]
    %v2075 = vld [vmem:[#allocation6 + $0x1d0] sm:$0xff]
    %v2076 = vld [vmem:[#allocation6 + $0x1d8] sm:$0xff]
    %v2077 = vld [vmem:[#allocation6 + $0x1e0] sm:$0xff]
    %v2078 = vld [vmem:[#allocation6 + $0x1e8] sm:$0xff]
    %v2079 = vld [vmem:[#allocation6 + $0x1f0] sm:$0xff]
    %v2080 = vld [vmem:[#allocation6 + $0x1f8] sm:$0xff]
    %v2081 = vld [vmem:[#allocation8] sm:$0xff]
    %v2082 = vld [vmem:[#allocation8 + $0x8] sm:$0xff]
    %v2083 = vld [vmem:[#allocation8 + $0x10] sm:$0xff]
    %v2084 = vld [vmem:[#allocation8 + $0x18] sm:$0xff]
    %v2085 = vld [vmem:[#allocation8 + $0x20] sm:$0xff]
    %v2086 = vld [vmem:[#allocation8 + $0x28] sm:$0xff]
    %v2087 = vld [vmem:[#allocation8 + $0x30] sm:$0xff]
    %v2088 = vld [vmem:[#allocation8 + $0x38] sm:$0xff]
    %v2089 = vld [vmem:[#allocation8 + $0x40] sm:$0xff]
    %v2090 = vld [vmem:[#allocation8 + $0x48] sm:$0xff]
    %v2091 = vld [vmem:[#allocation8 + $0x50] sm:$0xff]
    %v2092 = vld [vmem:[#allocation8 + $0x58] sm:$0xff]
    %v2093 = vld [vmem:[#allocation8 + $0x60] sm:$0xff]
    %v2094 = vld [vmem:[#allocation8 + $0x68] sm:$0xff]
    %v2095 = vld [vmem:[#allocation8 + $0x70] sm:$0xff]
    %v2096 = vld [vmem:[#allocation8 + $0x78] sm:$0xff]
    %v2097 = vld [vmem:[#allocation8 + $0x80] sm:$0xff]
    %v2098 = vld [vmem:[#allocation8 + $0x88] sm:$0xff]
    %v2099 = vld [vmem:[#allocation8 + $0x90] sm:$0xff]
    %v2100 = vld [vmem:[#allocation8 + $0x98] sm:$0xff]
    %v2101 = vld [vmem:[#allocation8 + $0xa0] sm:$0xff]
    %v2102 = vld [vmem:[#allocation8 + $0xa8] sm:$0xff]
    %v2103 = vld [vmem:[#allocation8 + $0xb0] sm:$0xff]
    %v2104 = vld [vmem:[#allocation8 + $0xb8] sm:$0xff]
    %v2105 = vld [vmem:[#allocation8 + $0xc0] sm:$0xff]
    %v2106 = vld [vmem:[#allocation8 + $0xc8] sm:$0xff]
    %v2107 = vld [vmem:[#allocation8 + $0xd0] sm:$0xff]
    %v2108 = vld [vmem:[#allocation8 + $0xd8] sm:$0xff]
    %v2109 = vld [vmem:[#allocation8 + $0xe0] sm:$0xff]
    %v2110 = vld [vmem:[#allocation8 + $0xe8] sm:$0xff]
    %v2111 = vld [vmem:[#allocation8 + $0xf0] sm:$0xff]
    %v2112 = vld [vmem:[#allocation8 + $0xf8] sm:$0xff]
    %v2113 = vld [vmem:[#allocation8 + $0x100] sm:$0xff]
    %v2114 = vld [vmem:[#allocation8 + $0x108] sm:$0xff]
    %v2115 = vld [vmem:[#allocation8 + $0x110] sm:$0xff]
    %v2116 = vld [vmem:[#allocation8 + $0x118] sm:$0xff]
    %v2117 = vld [vmem:[#allocation8 + $0x120] sm:$0xff]
    %v2118 = vld [vmem:[#allocation8 + $0x128] sm:$0xff]
    %v2119 = vld [vmem:[#allocation8 + $0x130] sm:$0xff]
    %v2120 = vld [vmem:[#allocation8 + $0x138] sm:$0xff]
    %v2121 = vld [vmem:[#allocation8 + $0x140] sm:$0xff]
    %v2122 = vld [vmem:[#allocation8 + $0x148] sm:$0xff]
    %v2123 = vld [vmem:[#allocation8 + $0x150] sm:$0xff]
    %v2124 = vld [vmem:[#allocation8 + $0x158] sm:$0xff]
    %v2125 = vld [vmem:[#allocation8 + $0x160] sm:$0xff]
    %v2126 = vld [vmem:[#allocation8 + $0x168] sm:$0xff]
    %v2127 = vld [vmem:[#allocation8 + $0x170] sm:$0xff]
    %v2128 = vld [vmem:[#allocation8 + $0x178] sm:$0xff]
    %v2129 = vld [vmem:[#allocation8 + $0x180] sm:$0xff]
    %v2130 = vld [vmem:[#allocation8 + $0x188] sm:$0xff]
    %v2131 = vld [vmem:[#allocation8 + $0x190] sm:$0xff]
    %v2132 = vld [vmem:[#allocation8 + $0x198] sm:$0xff]
    %v2133 = vld [vmem:[#allocation8 + $0x1a0] sm:$0xff]
    %v2134 = vld [vmem:[#allocation8 + $0x1a8] sm:$0xff]
    %v2135 = vld [vmem:[#allocation8 + $0x1b0] sm:$0xff]
    %v2136 = vld [vmem:[#allocation8 + $0x1b8] sm:$0xff]
    %v2137 = vld [vmem:[#allocation8 + $0x1c0] sm:$0xff]
    %v2138 = vld [vmem:[#allocation8 + $0x1c8] sm:$0xff]
    %v2139 = vld [vmem:[#allocation8 + $0x1d0] sm:$0xff]
    %v2140 = vld [vmem:[#allocation8 + $0x1d8] sm:$0xff]
    %v2141 = vld [vmem:[#allocation8 + $0x1e0] sm:$0xff]
    %v2142 = vld [vmem:[#allocation8 + $0x1e8] sm:$0xff]
    %v2143 = vld [vmem:[#allocation8 + $0x1f0] sm:$0xff]
    %v2144 = vld [vmem:[#allocation8 + $0x1f8] sm:$0xff]
    %2145 = vmatprep.subr.mxu0 %v2082
    %2146 = vmatpush1.msra.mxu0 %v2081
    %2147 = vmatprep.subr.mxu0 %v2086
    %2148 = vmatpush1.msra.mxu0 %v2085
    %2149 = vmatprep.subr.mxu0 %v2090
    %2150 = vmatpush1.msra.mxu0 %v2089
    %2151 = vmatprep.subr.mxu0 %v2094
    %2152 = vmatpush1.msra.mxu0 %v2093
    %2153 = vmatprep.subr.mxu0 %v2098
    %2154 = vmatpush1.msra.mxu0 %v2097
    %2155 = vmatprep.subr.mxu0 %v2102
    %2156 = vmatpush1.msra.mxu0 %v2101
    %2157 = vmatprep.subr.mxu0 %v2106
    %2158 = vmatpush1.msra.mxu0 %v2105
    %2159 = vmatprep.subr.mxu0 %v2110
    %2160 = vmatpush1.msra.mxu0 %v2109
    %2161 = vmatprep.subr.mxu0 %v2114
    %2162 = vmatpush1.msra.mxu0 %v2113
    %2163 = vmatprep.subr.mxu0 %v2118
    %2164 = vmatpush1.msra.mxu0 %v2117
    %2165 = vmatprep.subr.mxu0 %v2122
    %2166 = vmatpush1.msra.mxu0 %v2121
    %2167 = vmatprep.subr.mxu0 %v2126
    %2168 = vmatpush1.msra.mxu0 %v2125
    %2169 = vmatprep.subr.mxu0 %v2130
    %2170 = vmatpush1.msra.mxu0 %v2129
    %2171 = vmatprep.subr.mxu0 %v2134
    %2172 = vmatpush1.msra.mxu0 %v2133
    %2173 = vmatprep.subr.mxu0 %v2138
    %2174 = vmatpush1.msra.mxu0 %v2137
    %2175 = vmatprep.subr.mxu0 %v2142
    %2176 = vmatpush1.msra.mxu0 %v2141
    %2177 = vmatprep.subr.mxu0 0.0
    %2178 = vmatpush1.msra.mxu0 0.0
    %2179 = vmatprep.subr.mxu0 0.0
    %2180 = vmatpush1.msra.mxu0 0.0
    %2181 = vmatprep.subr.mxu0 0.0
    %2182 = vmatpush1.msra.mxu0 0.0
    %2183 = vmatprep.subr.mxu0 0.0
    %2184 = vmatpush1.msra.mxu0 0.0
    %2185 = vmatprep.subr.mxu0 0.0
    %2186 = vmatpush1.msra.mxu0 0.0
    %2187 = vmatprep.subr.mxu0 0.0
    %2188 = vmatpush1.msra.mxu0 0.0
    %2189 = vmatprep.subr.mxu0 0.0
    %2190 = vmatpush1.msra.mxu0 0.0
    %2191 = vmatprep.subr.mxu0 0.0
    %2192 = vmatpush1.msra.mxu0 0.0
    %2193 = vmatprep.subr.mxu0 0.0
    %2194 = vmatpush1.msra.mxu0 0.0
    %2195 = vmatprep.subr.mxu0 0.0
    %2196 = vmatpush1.msra.mxu0 0.0
    %2197 = vmatprep.subr.mxu0 0.0
    %2198 = vmatpush1.msra.mxu0 0.0
    %2199 = vmatprep.subr.mxu0 0.0
    %2200 = vmatpush1.msra.mxu0 0.0
    %2201 = vmatprep.subr.mxu0 0.0
    %2202 = vmatpush1.msra.mxu0 0.0
    %2203 = vmatprep.subr.mxu0 0.0
    %2204 = vmatpush1.msra.mxu0 0.0
    %2205 = vmatprep.subr.mxu0 0.0
    %2206 = vmatpush1.msra.mxu0 0.0
    %2207 = vmatprep.subr.mxu0 0.0
    %2208 = vmatpush1.msra.mxu0 0.0
    %2209 = vmatprep.mubr.f32.mxu0 0.0
    %2210 = vmatmul.mubr.f32.gmra.mrb[0].mxu0 %v1781
    %v2211 = vpop.f32.mrb[0].mxu0
    %v2212 = vadd.f32 0.0, %v2211
    %v2213 = vpop.f32.mrb[0].mxu0
    %v2214 = vadd.f32 0.0, %v2213
    %2215 = vdwg.mxu0
    %2216 = vmatprep.subr.mxu0 %v2084
    %2217 = vmatpush1.msra.mxu0 %v2083
    %2218 = vmatprep.subr.mxu0 %v2088
    %2219 = vmatpush1.msra.mxu0 %v2087
    %2220 = vmatprep.subr.mxu0 %v2092
    %2221 = vmatpush1.msra.mxu0 %v2091
    %2222 = vmatprep.subr.mxu0 %v2096
    %2223 = vmatpush1.msra.mxu0 %v2095
    %2224 = vmatprep.subr.mxu0 %v2100
    %2225 = vmatpush1.msra.mxu0 %v2099
    %2226 = vmatprep.subr.mxu0 %v2104
    %2227 = vmatpush1.msra.mxu0 %v2103
    %2228 = vmatprep.subr.mxu0 %v2108
    %2229 = vmatpush1.msra.mxu0 %v2107
    %2230 = vmatprep.subr.mxu0 %v2112
    %2231 = vmatpush1.msra.mxu0 %v2111
    %2232 = vmatprep.subr.mxu0 %v2116
    %2233 = vmatpush1.msra.mxu0 %v2115
    %2234 = vmatprep.subr.mxu0 %v2120
    %2235 = vmatpush1.msra.mxu0 %v2119
    %2236 = vmatprep.subr.mxu0 %v2124
    %2237 = vmatpush1.msra.mxu0 %v2123
    %2238 = vmatprep.subr.mxu0 %v2128
    %2239 = vmatpush1.msra.mxu0 %v2127
    %2240 = vmatprep.subr.mxu0 %v2132
    %2241 = vmatpush1.msra.mxu0 %v2131
    %2242 = vmatprep.subr.mxu0 %v2136
    %2243 = vmatpush1.msra.mxu0 %v2135
    %2244 = vmatprep.subr.mxu0 %v2140
    %2245 = vmatpush1.msra.mxu0 %v2139
    %2246 = vmatprep.subr.mxu0 %v2144
    %2247 = vmatpush1.msra.mxu0 %v2143
    %2248 = vmatprep.subr.mxu0 0.0
    %2249 = vmatpush1.msra.mxu0 0.0
    %2250 = vmatprep.subr.mxu0 0.0
    %2251 = vmatpush1.msra.mxu0 0.0
    %2252 = vmatprep.subr.mxu0 0.0
    %2253 = vmatpush1.msra.mxu0 0.0
    %2254 = vmatprep.subr.mxu0 0.0
    %2255 = vmatpush1.msra.mxu0 0.0
    %2256 = vmatprep.subr.mxu0 0.0
    %2257 = vmatpush1.msra.mxu0 0.0
    %2258 = vmatprep.subr.mxu0 0.0
    %2259 = vmatpush1.msra.mxu0 0.0
    %2260 = vmatprep.subr.mxu0 0.0
    %2261 = vmatpush1.msra.mxu0 0.0
    %2262 = vmatprep.subr.mxu0 0.0
    %2263 = vmatpush1.msra.mxu0 0.0
    %2264 = vmatprep.subr.mxu0 0.0
    %2265 = vmatpush1.msra.mxu0 0.0
    %2266 = vmatprep.subr.mxu0 0.0
    %2267 = vmatpush1.msra.mxu0 0.0
    %2268 = vmatprep.subr.mxu0 0.0
    %2269 = vmatpush1.msra.mxu0 0.0
    %2270 = vmatprep.subr.mxu0 0.0
    %2271 = vmatpush1.msra.mxu0 0.0
    %2272 = vmatprep.subr.mxu0 0.0
    %2273 = vmatpush1.msra.mxu0 0.0
    %2274 = vmatprep.subr.mxu0 0.0
    %2275 = vmatpush1.msra.mxu0 0.0
    %2276 = vmatprep.subr.mxu0 0.0
    %2277 = vmatpush1.msra.mxu0 0.0
    %2278 = vmatprep.subr.mxu0 0.0
    %2279 = vmatpush1.msra.mxu0 0.0
    %2280 = vmatprep.mubr.f32.mxu0 0.0
    %2281 = vmatmul.mubr.f32.gmra.mrb[0].mxu0 %v1781
    %v2282 = vpop.f32.mrb[0].mxu0
    %v2283 = vadd.f32 0.0, %v2282
    %v2284 = vpop.f32.mrb[0].mxu0
    %v2285 = vadd.f32 0.0, %v2284
    %2286 = vdwg.mxu0
    %2287 = vmatprep.subr.mxu0 %v2018
    %2288 = vmatpush1.msra.mxu0 %v2017
    %2289 = vmatprep.subr.mxu0 %v2022
    %2290 = vmatpush1.msra.mxu0 %v2021
    %2291 = vmatprep.subr.mxu0 %v2026
    %2292 = vmatpush1.msra.mxu0 %v2025
    %2293 = vmatprep.subr.mxu0 %v2030
    %2294 = vmatpush1.msra.mxu0 %v2029
    %2295 = vmatprep.subr.mxu0 %v2034
    %2296 = vmatpush1.msra.mxu0 %v2033
    %2297 = vmatprep.subr.mxu0 %v2038
    %2298 = vmatpush1.msra.mxu0 %v2037
    %2299 = vmatprep.subr.mxu0 %v2042
    %2300 = vmatpush1.msra.mxu0 %v2041
    %2301 = vmatprep.subr.mxu0 %v2046
    %2302 = vmatpush1.msra.mxu0 %v2045
    %2303 = vmatprep.subr.mxu0 %v2050
    %2304 = vmatpush1.msra.mxu0 %v2049
    %2305 = vmatprep.subr.mxu0 %v2054
    %2306 = vmatpush1.msra.mxu0 %v2053
    %2307 = vmatprep.subr.mxu0 %v2058
    %2308 = vmatpush1.msra.mxu0 %v2057
    %2309 = vmatprep.subr.mxu0 %v2062
    %2310 = vmatpush1.msra.mxu0 %v2061
    %2311 = vmatprep.subr.mxu0 %v2066
    %2312 = vmatpush1.msra.mxu0 %v2065
    %2313 = vmatprep.subr.mxu0 %v2070
    %2314 = vmatpush1.msra.mxu0 %v2069
    %2315 = vmatprep.subr.mxu0 %v2074
    %2316 = vmatpush1.msra.mxu0 %v2073
    %2317 = vmatprep.subr.mxu0 %v2078
    %2318 = vmatpush1.msra.mxu0 %v2077
    %2319 = vmatprep.subr.mxu0 0.0
    %2320 = vmatpush1.msra.mxu0 0.0
    %2321 = vmatprep.subr.mxu0 0.0
    %2322 = vmatpush1.msra.mxu0 0.0
    %2323 = vmatprep.subr.mxu0 0.0
    %2324 = vmatpush1.msra.mxu0 0.0
    %2325 = vmatprep.subr.mxu0 0.0
    %2326 = vmatpush1.msra.mxu0 0.0
    %2327 = vmatprep.subr.mxu0 0.0
    %2328 = vmatpush1.msra.mxu0 0.0
    %2329 = vmatprep.subr.mxu0 0.0
    %2330 = vmatpush1.msra.mxu0 0.0
    %2331 = vmatprep.subr.mxu0 0.0
    %2332 = vmatpush1.msra.mxu0 0.0
    %2333 = vmatprep.subr.mxu0 0.0
    %2334 = vmatpush1.msra.mxu0 0.0
    %2335 = vmatprep.subr.mxu0 0.0
    %2336 = vmatpush1.msra.mxu0 0.0
    %2337 = vmatprep.subr.mxu0 0.0
    %2338 = vmatpush1.msra.mxu0 0.0
    %2339 = vmatprep.subr.mxu0 0.0
    %2340 = vmatpush1.msra.mxu0 0.0
    %2341 = vmatprep.subr.mxu0 0.0
    %2342 = vmatpush1.msra.mxu0 0.0
    %2343 = vmatprep.subr.mxu0 0.0
    %2344 = vmatpush1.msra.mxu0 0.0
    %2345 = vmatprep.subr.mxu0 0.0
    %2346 = vmatpush1.msra.mxu0 0.0
    %2347 = vmatprep.subr.mxu0 0.0
    %2348 = vmatpush1.msra.mxu0 0.0
    %2349 = vmatprep.subr.mxu0 0.0
    %2350 = vmatpush1.msra.mxu0 0.0
    %2351 = vmatprep.mubr.f32.mxu0 0.0
    %2352 = vmatmul.mubr.f32.gmra.mrb[0].mxu0 %v2016
    %v2353 = vpop.f32.mrb[0].mxu0
    %v2354 = vadd.f32 %v2212, %v2353
    %v2355 = vpop.f32.mrb[0].mxu0
    %v2356 = vadd.f32 %v2214, %v2355
    %2357 = vdwg.mxu0
    %2358 = vmatprep.subr.mxu0 %v2020
    %2359 = vmatpush1.msra.mxu0 %v2019
    %2360 = vmatprep.subr.mxu0 %v2024
    %2361 = vmatpush1.msra.mxu0 %v2023
    %2362 = vmatprep.subr.mxu0 %v2028
    %2363 = vmatpush1.msra.mxu0 %v2027
    %2364 = vmatprep.subr.mxu0 %v2032
    %2365 = vmatpush1.msra.mxu0 %v2031
    %2366 = vmatprep.subr.mxu0 %v2036
    %2367 = vmatpush1.msra.mxu0 %v2035
    %2368 = vmatprep.subr.mxu0 %v2040
    %2369 = vmatpush1.msra.mxu0 %v2039
    %2370 = vmatprep.subr.mxu0 %v2044
    %2371 = vmatpush1.msra.mxu0 %v2043
    %2372 = vmatprep.subr.mxu0 %v2048
    %2373 = vmatpush1.msra.mxu0 %v2047
    %2374 = vmatprep.subr.mxu0 %v2052
    %2375 = vmatpush1.msra.mxu0 %v2051
    %2376 = vmatprep.subr.mxu0 %v2056
    %2377 = vmatpush1.msra.mxu0 %v2055
    %2378 = vmatprep.subr.mxu0 %v2060
    %2379 = vmatpush1.msra.mxu0 %v2059
    %2380 = vmatprep.subr.mxu0 %v2064
    %2381 = vmatpush1.msra.mxu0 %v2063
    %2382 = vmatprep.subr.mxu0 %v2068
    %2383 = vmatpush1.msra.mxu0 %v2067
    %2384 = vmatprep.subr.mxu0 %v2072
    %2385 = vmatpush1.msra.mxu0 %v2071
    %2386 = vmatprep.subr.mxu0 %v2076
    %2387 = vmatpush1.msra.mxu0 %v2075
    %2388 = vmatprep.subr.mxu0 %v2080
    %2389 = vmatpush1.msra.mxu0 %v2079
    %2390 = vmatprep.subr.mxu0 0.0
    %2391 = vmatpush1.msra.mxu0 0.0
    %2392 = vmatprep.subr.mxu0 0.0
    %2393 = vmatpush1.msra.mxu0 0.0
    %2394 = vmatprep.subr.mxu0 0.0
    %2395 = vmatpush1.msra.mxu0 0.0
    %2396 = vmatprep.subr.mxu0 0.0
    %2397 = vmatpush1.msra.mxu0 0.0
    %2398 = vmatprep.subr.mxu0 0.0
    %2399 = vmatpush1.msra.mxu0 0.0
    %2400 = vmatprep.subr.mxu0 0.0
    %2401 = vmatpush1.msra.mxu0 0.0
    %2402 = vmatprep.subr.mxu0 0.0
    %2403 = vmatpush1.msra.mxu0 0.0
    %2404 = vmatprep.subr.mxu0 0.0
    %2405 = vmatpush1.msra.mxu0 0.0
    %2406 = vmatprep.subr.mxu0 0.0
    %2407 = vmatpush1.msra.mxu0 0.0
    %2408 = vmatprep.subr.mxu0 0.0
    %2409 = vmatpush1.msra.mxu0 0.0
    %2410 = vmatprep.subr.mxu0 0.0
    %2411 = vmatpush1.msra.mxu0 0.0
    %2412 = vmatprep.subr.mxu0 0.0
    %2413 = vmatpush1.msra.mxu0 0.0
    %2414 = vmatprep.subr.mxu0 0.0
    %2415 = vmatpush1.msra.mxu0 0.0
    %2416 = vmatprep.subr.mxu0 0.0
    %2417 = vmatpush1.msra.mxu0 0.0
    %2418 = vmatprep.subr.mxu0 0.0
    %2419 = vmatpush1.msra.mxu0 0.0
    %2420 = vmatprep.subr.mxu0 0.0
    %2421 = vmatpush1.msra.mxu0 0.0
    %2422 = vmatprep.mubr.f32.mxu0 0.0
    %2423 = vmatmul.mubr.f32.gmra.mrb[0].mxu0 %v2016
    %v2424 = vpop.f32.mrb[0].mxu0
    %v2425 = vadd.f32 %v2283, %v2424
    %v2426 = vpop.f32.mrb[0].mxu0
    %v2427 = vadd.f32 %v2285, %v2426
    %2428 = vdwg.mxu0
    %v2429 = vld [vmem:[%s6] sm:$0xf]
    %v2431 = vlaneseq
    %v2432 = vshrl.u32 %v2431, 7
    %v2433 = vsub.s32 0, %v2432
    %v2434 = vrot.slane %v2429, %v2433
    %v2435 = vlaneseq
    %v2436 = vshrl.u32 %v2435, 7
    %v2437 = vsub.s32 1, %v2436
    %v2438 = vrot.slane %v2429, %v2437
    %v2439 = vlaneseq
    %v2440 = vshrl.u32 %v2439, 7
    %v2441 = vsub.s32 2, %v2440
    %v2442 = vrot.slane %v2429, %v2441
    %v2443 = vlaneseq
    %v2444 = vshrl.u32 %v2443, 7
    %v2445 = vsub.s32 3, %v2444
    %v2446 = vrot.slane %v2429, %v2445
    %v2451 = vadd.f32 %v2354, %v2434
    %v2452 = vadd.f32 %v2356, %v2438
    %v2453 = vadd.f32 %v2425, %v2442
    %v2454 = vadd.f32 %v2427, %v2446
    %v2455 = vxor.u32 %v2451, 2147483648
    %v2456 = vmul.f32 %v2455, 1.442695
    %v2457 = vpow.pop %v2456
    %v2458 = vadd.f32 %v2457, 1.0
    %v2459 = vrcp.pop %v2458
    %v2460 = vmul.f32 1.0, %v2459
    %v2461 = vxor.u32 %v2452, 2147483648
    %v2462 = vmul.f32 %v2461, 1.442695
    %v2463 = vpow.pop %v2462
    %v2464 = vadd.f32 %v2463, 1.0
    %v2465 = vrcp.pop %v2464
    %v2466 = vmul.f32 1.0, %v2465
    %v2467 = vtanh.pop %v2453
    %v2468 = vxor.u32 %v2454, 2147483648
    %v2469 = vmul.f32 %v2468, 1.442695
    %v2470 = vpow.pop %v2469
    %v2471 = vadd.f32 %v2470, 1.0
    %v2472 = vrcp.pop %v2471
    %v2473 = vmul.f32 1.0, %v2472
    %v2474 = vmul.f32 %v2466, %v1779
    %v2475 = vmul.f32 %v2460, %v2467
    %v2476 = vadd.f32 %v2474, %v2475
    %v2477 = vtanh.pop %v2476
    %v2478 = vmul.f32 %v2473, %v2477
    %2479 = vst [vmem:[#allocation2 + $0x10] sm:$0xff] %v2478
    %v2480 = vld [vmem:[#allocation4] sm:$0xff]
    %v2481 = vld [vmem:[#allocation4 + $0x8] sm:$0xff]
    %v2482 = vld [vmem:[#allocation4 + $0x10] sm:$0xff]
    %v2483 = vld [vmem:[#allocation4 + $0x18] sm:$0xff]
    %v2484 = vld [vmem:[#allocation4 + $0x20] sm:$0xff]
    %v2485 = vld [vmem:[#allocation4 + $0x28] sm:$0xff]
    %v2486 = vld [vmem:[#allocation4 + $0x30] sm:$0xff]
    %v2487 = vld [vmem:[#allocation4 + $0x38] sm:$0xff]
    %v2488 = vld [vmem:[#allocation4 + $0x40] sm:$0xff]
    %v2489 = vld [vmem:[#allocation4 + $0x48] sm:$0xff]
    %v2490 = vld [vmem:[#allocation4 + $0x50] sm:$0xff]
    %v2491 = vld [vmem:[#allocation4 + $0x58] sm:$0xff]
    %v2492 = vld [vmem:[#allocation4 + $0x60] sm:$0xff]
    %v2493 = vld [vmem:[#allocation4 + $0x68] sm:$0xff]
    %v2494 = vld [vmem:[#allocation4 + $0x70] sm:$0xff]
    %v2495 = vld [vmem:[#allocation4 + $0x78] sm:$0xff]
    %v2496 = vld [vmem:[#allocation4 + $0x80] sm:$0xff]
    %v2497 = vld [vmem:[#allocation4 + $0x88] sm:$0xff]
    %v2498 = vld [vmem:[#allocation4 + $0x90] sm:$0xff]
    %v2499 = vld [vmem:[#allocation4 + $0x98] sm:$0xff]
    %v2500 = vld [vmem:[#allocation4 + $0xa0] sm:$0xff]
    %v2501 = vld [vmem:[#allocation4 + $0xa8] sm:$0xff]
    %v2502 = vld [vmem:[#allocation4 + $0xb0] sm:$0xff]
    %v2503 = vld [vmem:[#allocation4 + $0xb8] sm:$0xff]
    %v2504 = vld [vmem:[#allocation4 + $0xc0] sm:$0xff]
    %v2505 = vld [vmem:[#allocation4 + $0xc8] sm:$0xff]
    %v2506 = vld [vmem:[#allocation4 + $0xd0] sm:$0xff]
    %v2507 = vld [vmem:[#allocation4 + $0xd8] sm:$0xff]
    %v2508 = vld [vmem:[#allocation4 + $0xe0] sm:$0xff]
    %v2509 = vld [vmem:[#allocation4 + $0xe8] sm:$0xff]
    %v2510 = vld [vmem:[#allocation4 + $0xf0] sm:$0xff]
    %v2511 = vld [vmem:[#allocation4 + $0xf8] sm:$0xff]
    %v2512 = vld [vmem:[#allocation4 + $0x100] sm:$0xff]
    %v2513 = vld [vmem:[#allocation4 + $0x108] sm:$0xff]
    %v2514 = vld [vmem:[#allocation4 + $0x110] sm:$0xff]
    %v2515 = vld [vmem:[#allocation4 + $0x118] sm:$0xff]
    %v2516 = vld [vmem:[#allocation4 + $0x120] sm:$0xff]
    %v2517 = vld [vmem:[#allocation4 + $0x128] sm:$0xff]
    %v2518 = vld [vmem:[#allocation4 + $0x130] sm:$0xff]
    %v2519 = vld [vmem:[#allocation4 + $0x138] sm:$0xff]
    %v2520 = vld [vmem:[#allocation4 + $0x140] sm:$0xff]
    %v2521 = vld [vmem:[#allocation4 + $0x148] sm:$0xff]
    %v2522 = vld [vmem:[#allocation4 + $0x150] sm:$0xff]
    %v2523 = vld [vmem:[#allocation4 + $0x158] sm:$0xff]
    %v2524 = vld [vmem:[#allocation4 + $0x160] sm:$0xff]
    %v2525 = vld [vmem:[#allocation4 + $0x168] sm:$0xff]
    %v2526 = vld [vmem:[#allocation4 + $0x170] sm:$0xff]
    %v2527 = vld [vmem:[#allocation4 + $0x178] sm:$0xff]
    %v2528 = vld [vmem:[#allocation4 + $0x180] sm:$0xff]
    %v2529 = vld [vmem:[#allocation4 + $0x188] sm:$0xff]
    %v2530 = vld [vmem:[#allocation4 + $0x190] sm:$0xff]
    %v2531 = vld [vmem:[#allocation4 + $0x198] sm:$0xff]
    %v2532 = vld [vmem:[#allocation4 + $0x1a0] sm:$0xff]
    %v2533 = vld [vmem:[#allocation4 + $0x1a8] sm:$0xff]
    %v2534 = vld [vmem:[#allocation4 + $0x1b0] sm:$0xff]
    %v2535 = vld [vmem:[#allocation4 + $0x1b8] sm:$0xff]
    %v2536 = vld [vmem:[#allocation4 + $0x1c0] sm:$0xff]
    %v2537 = vld [vmem:[#allocation4 + $0x1c8] sm:$0xff]
    %v2538 = vld [vmem:[#allocation4 + $0x1d0] sm:$0xff]
    %v2539 = vld [vmem:[#allocation4 + $0x1d8] sm:$0xff]
    %v2540 = vld [vmem:[#allocation4 + $0x1e0] sm:$0xff]
    %v2541 = vld [vmem:[#allocation4 + $0x1e8] sm:$0xff]
    %v2542 = vld [vmem:[#allocation4 + $0x1f0] sm:$0xff]
    %v2543 = vld [vmem:[#allocation4 + $0x1f8] sm:$0xff]
    %2544 = vmatprep.subr.mxu0 %v2481
    %2545 = vmatpush1.msra.mxu0 %v2480
    %2546 = vmatprep.subr.mxu0 %v2485
    %2547 = vmatpush1.msra.mxu0 %v2484
    %2548 = vmatprep.subr.mxu0 %v2489
    %2549 = vmatpush1.msra.mxu0 %v2488
    %2550 = vmatprep.subr.mxu0 %v2493
    %2551 = vmatpush1.msra.mxu0 %v2492
    %2552 = vmatprep.subr.mxu0 %v2497
    %2553 = vmatpush1.msra.mxu0 %v2496
    %2554 = vmatprep.subr.mxu0 %v2501
    %2555 = vmatpush1.msra.mxu0 %v2500
    %2556 = vmatprep.subr.mxu0 %v2505
    %2557 = vmatpush1.msra.mxu0 %v2504
    %2558 = vmatprep.subr.mxu0 %v2509
    %2559 = vmatpush1.msra.mxu0 %v2508
    %2560 = vmatprep.subr.mxu0 %v2513
    %2561 = vmatpush1.msra.mxu0 %v2512
    %2562 = vmatprep.subr.mxu0 %v2517
    %2563 = vmatpush1.msra.mxu0 %v2516
    %2564 = vmatprep.subr.mxu0 %v2521
    %2565 = vmatpush1.msra.mxu0 %v2520
    %2566 = vmatprep.subr.mxu0 %v2525
    %2567 = vmatpush1.msra.mxu0 %v2524
    %2568 = vmatprep.subr.mxu0 %v2529
    %2569 = vmatpush1.msra.mxu0 %v2528
    %2570 = vmatprep.subr.mxu0 %v2533
    %2571 = vmatpush1.msra.mxu0 %v2532
    %2572 = vmatprep.subr.mxu0 %v2537
    %2573 = vmatpush1.msra.mxu0 %v2536
    %2574 = vmatprep.subr.mxu0 %v2541
    %2575 = vmatpush1.msra.mxu0 %v2540
    %2576 = vmatprep.subr.mxu0 0.0
    %2577 = vmatpush1.msra.mxu0 0.0
    %2578 = vmatprep.subr.mxu0 0.0
    %2579 = vmatpush1.msra.mxu0 0.0
    %2580 = vmatprep.subr.mxu0 0.0
    %2581 = vmatpush1.msra.mxu0 0.0
    %2582 = vmatprep.subr.mxu0 0.0
    %2583 = vmatpush1.msra.mxu0 0.0
    %2584 = vmatprep.subr.mxu0 0.0
    %2585 = vmatpush1.msra.mxu0 0.0
    %2586 = vmatprep.subr.mxu0 0.0
    %2587 = vmatpush1.msra.mxu0 0.0
    %2588 = vmatprep.subr.mxu0 0.0
    %2589 = vmatpush1.msra.mxu0 0.0
    %2590 = vmatprep.subr.mxu0 0.0
    %2591 = vmatpush1.msra.mxu0 0.0
    %2592 = vmatprep.subr.mxu0 0.0
    %2593 = vmatpush1.msra.mxu0 0.0
    %2594 = vmatprep.subr.mxu0 0.0
    %2595 = vmatpush1.msra.mxu0 0.0
    %2596 = vmatprep.subr.mxu0 0.0
    %2597 = vmatpush1.msra.mxu0 0.0
    %2598 = vmatprep.subr.mxu0 0.0
    %2599 = vmatpush1.msra.mxu0 0.0
    %2600 = vmatprep.subr.mxu0 0.0
    %2601 = vmatpush1.msra.mxu0 0.0
    %2602 = vmatprep.subr.mxu0 0.0
    %2603 = vmatpush1.msra.mxu0 0.0
    %2604 = vmatprep.subr.mxu0 0.0
    %2605 = vmatpush1.msra.mxu0 0.0
    %2606 = vmatprep.subr.mxu0 0.0
    %2607 = vmatpush1.msra.mxu0 0.0
    %2608 = vmatprep.mubr.f32.mxu0 0.0
    %2609 = vmatmul.mubr.f32.gmra.mrb[0].mxu0 %v2016
    %v2610 = vpop.f32.mrb[0].mxu0
    %v2611 = vadd.f32 0.0, %v2610
    %v2612 = vpop.f32.mrb[0].mxu0
    %v2613 = vadd.f32 0.0, %v2612
    %2614 = vdwg.mxu0
    %2615 = vmatprep.subr.mxu0 %v2483
    %2616 = vmatpush1.msra.mxu0 %v2482
    %2617 = vmatprep.subr.mxu0 %v2487
    %2618 = vmatpush1.msra.mxu0 %v2486
    %2619 = vmatprep.subr.mxu0 %v2491
    %2620 = vmatpush1.msra.mxu0 %v2490
    %2621 = vmatprep.subr.mxu0 %v2495
    %2622 = vmatpush1.msra.mxu0 %v2494
    %2623 = vmatprep.subr.mxu0 %v2499
    %2624 = vmatpush1.msra.mxu0 %v2498
    %2625 = vmatprep.subr.mxu0 %v2503
    %2626 = vmatpush1.msra.mxu0 %v2502
    %2627 = vmatprep.subr.mxu0 %v2507
    %2628 = vmatpush1.msra.mxu0 %v2506
    %2629 = vmatprep.subr.mxu0 %v2511
    %2630 = vmatpush1.msra.mxu0 %v2510
    %2631 = vmatprep.subr.mxu0 %v2515
    %2632 = vmatpush1.msra.mxu0 %v2514
    %2633 = vmatprep.subr.mxu0 %v2519
    %2634 = vmatpush1.msra.mxu0 %v2518
    %2635 = vmatprep.subr.mxu0 %v2523
    %2636 = vmatpush1.msra.mxu0 %v2522
    %2637 = vmatprep.subr.mxu0 %v2527
    %2638 = vmatpush1.msra.mxu0 %v2526
    %2639 = vmatprep.subr.mxu0 %v2531
    %2640 = vmatpush1.msra.mxu0 %v2530
    %2641 = vmatprep.subr.mxu0 %v2535
    %2642 = vmatpush1.msra.mxu0 %v2534
    %2643 = vmatprep.subr.mxu0 %v2539
    %2644 = vmatpush1.msra.mxu0 %v2538
    %2645 = vmatprep.subr.mxu0 %v2543
    %2646 = vmatpush1.msra.mxu0 %v2542
    %2647 = vmatprep.subr.mxu0 0.0
    %2648 = vmatpush1.msra.mxu0 0.0
    %2649 = vmatprep.subr.mxu0 0.0
    %2650 = vmatpush1.msra.mxu0 0.0
    %2651 = vmatprep.subr.mxu0 0.0
    %2652 = vmatpush1.msra.mxu0 0.0
    %2653 = vmatprep.subr.mxu0 0.0
    %2654 = vmatpush1.msra.mxu0 0.0
    %2655 = vmatprep.subr.mxu0 0.0
    %2656 = vmatpush1.msra.mxu0 0.0
    %2657 = vmatprep.subr.mxu0 0.0
    %2658 = vmatpush1.msra.mxu0 0.0
    %2659 = vmatprep.subr.mxu0 0.0
    %2660 = vmatpush1.msra.mxu0 0.0
    %2661 = vmatprep.subr.mxu0 0.0
    %2662 = vmatpush1.msra.mxu0 0.0
    %2663 = vmatprep.subr.mxu0 0.0
    %2664 = vmatpush1.msra.mxu0 0.0
    %2665 = vmatprep.subr.mxu0 0.0
    %2666 = vmatpush1.msra.mxu0 0.0
    %2667 = vmatprep.subr.mxu0 0.0
    %2668 = vmatpush1.msra.mxu0 0.0
    %2669 = vmatprep.subr.mxu0 0.0
    %2670 = vmatpush1.msra.mxu0 0.0
    %2671 = vmatprep.subr.mxu0 0.0
    %2672 = vmatpush1.msra.mxu0 0.0
    %2673 = vmatprep.subr.mxu0 0.0
    %2674 = vmatpush1.msra.mxu0 0.0
    %2675 = vmatprep.subr.mxu0 0.0
    %2676 = vmatpush1.msra.mxu0 0.0
    %2677 = vmatprep.subr.mxu0 0.0
    %2678 = vmatpush1.msra.mxu0 0.0
    %2679 = vmatprep.mubr.f32.mxu0 0.0
    %2680 = vmatmul.mubr.f32.gmra.mrb[0].mxu0 %v2016
    %v2681 = vpop.f32.mrb[0].mxu0
    %v2682 = vadd.f32 0.0, %v2681
    %v2683 = vpop.f32.mrb[0].mxu0
    %v2684 = vadd.f32 0.0, %v2683
    %2685 = vdwg.mxu0
    %v2686 = vadd.f32 %v248, %v2611
    %v2687 = vadd.f32 %v250, %v2613
    %v2688 = vadd.f32 %v361, %v2682
    %v2689 = vadd.f32 %v363, %v2684
    %v2690 = vxor.u32 %v2686, 2147483648
    %v2691 = vmul.f32 %v2690, 1.442695
    %v2692 = vpow.pop %v2691
    %v2693 = vadd.f32 %v2692, 1.0
    %v2694 = vrcp.pop %v2693
    %v2695 = vmul.f32 1.0, %v2694
    %v2696 = vxor.u32 %v2687, 2147483648
    %v2697 = vmul.f32 %v2696, 1.442695
    %v2698 = vpow.pop %v2697
    %v2699 = vadd.f32 %v2698, 1.0
    %v2700 = vrcp.pop %v2699
    %v2701 = vmul.f32 1.0, %v2700
    %v2702 = vtanh.pop %v2688
    %v2703 = vxor.u32 %v2689, 2147483648
    %v2704 = vmul.f32 %v2703, 1.442695
    %v2705 = vpow.pop %v2704
    %v2706 = vadd.f32 %v2705, 1.0
    %v2707 = vrcp.pop %v2706
    %v2708 = vmul.f32 1.0, %v2707
    %v2709 = vmul.f32 %v2701, %v2014
    %v2710 = vmul.f32 %v2695, %v2702
    %v2711 = vadd.f32 %v2709, %v2710
    %v2712 = vtanh.pop %v2711
    %v2713 = vmul.f32 %v2708, %v2712
    %v2714 = vld [vmem:[#allocation6] sm:$0xff]
    %v2715 = vld [vmem:[#allocation6 + $0x8] sm:$0xff]
    %v2716 = vld [vmem:[#allocation6 + $0x10] sm:$0xff]
    %v2717 = vld [vmem:[#allocation6 + $0x18] sm:$0xff]
    %v2718 = vld [vmem:[#allocation6 + $0x20] sm:$0xff]
    %v2719 = vld [vmem:[#allocation6 + $0x28] sm:$0xff]
    %v2720 = vld [vmem:[#allocation6 + $0x30] sm:$0xff]
    %v2721 = vld [vmem:[#allocation6 + $0x38] sm:$0xff]
    %v2722 = vld [vmem:[#allocation6 + $0x40] sm:$0xff]
    %v2723 = vld [vmem:[#allocation6 + $0x48] sm:$0xff]
    %v2724 = vld [vmem:[#allocation6 + $0x50] sm:$0xff]
    %v2725 = vld [vmem:[#allocation6 + $0x58] sm:$0xff]
    %v2726 = vld [vmem:[#allocation6 + $0x60] sm:$0xff]
    %v2727 = vld [vmem:[#allocation6 + $0x68] sm:$0xff]
    %v2728 = vld [vmem:[#allocation6 + $0x70] sm:$0xff]
    %v2729 = vld [vmem:[#allocation6 + $0x78] sm:$0xff]
    %v2730 = vld [vmem:[#allocation6 + $0x80] sm:$0xff]
    %v2731 = vld [vmem:[#allocation6 + $0x88] sm:$0xff]
    %v2732 = vld [vmem:[#allocation6 + $0x90] sm:$0xff]
    %v2733 = vld [vmem:[#allocation6 + $0x98] sm:$0xff]
    %v2734 = vld [vmem:[#allocation6 + $0xa0] sm:$0xff]
    %v2735 = vld [vmem:[#allocation6 + $0xa8] sm:$0xff]
    %v2736 = vld [vmem:[#allocation6 + $0xb0] sm:$0xff]
    %v2737 = vld [vmem:[#allocation6 + $0xb8] sm:$0xff]
    %v2738 = vld [vmem:[#allocation6 + $0xc0] sm:$0xff]
    %v2739 = vld [vmem:[#allocation6 + $0xc8] sm:$0xff]
    %v2740 = vld [vmem:[#allocation6 + $0xd0] sm:$0xff]
    %v2741 = vld [vmem:[#allocation6 + $0xd8] sm:$0xff]
    %v2742 = vld [vmem:[#allocation6 + $0xe0] sm:$0xff]
    %v2743 = vld [vmem:[#allocation6 + $0xe8] sm:$0xff]
    %v2744 = vld [vmem:[#allocation6 + $0xf0] sm:$0xff]
    %v2745 = vld [vmem:[#allocation6 + $0xf8] sm:$0xff]
    %v2746 = vld [vmem:[#allocation6 + $0x100] sm:$0xff]
    %v2747 = vld [vmem:[#allocation6 + $0x108] sm:$0xff]
    %v2748 = vld [vmem:[#allocation6 + $0x110] sm:$0xff]
    %v2749 = vld [vmem:[#allocation6 + $0x118] sm:$0xff]
    %v2750 = vld [vmem:[#allocation6 + $0x120] sm:$0xff]
    %v2751 = vld [vmem:[#allocation6 + $0x128] sm:$0xff]
    %v2752 = vld [vmem:[#allocation6 + $0x130] sm:$0xff]
    %v2753 = vld [vmem:[#allocation6 + $0x138] sm:$0xff]
    %v2754 = vld [vmem:[#allocation6 + $0x140] sm:$0xff]
    %v2755 = vld [vmem:[#allocation6 + $0x148] sm:$0xff]
    %v2756 = vld [vmem:[#allocation6 + $0x150] sm:$0xff]
    %v2757 = vld [vmem:[#allocation6 + $0x158] sm:$0xff]
    %v2758 = vld [vmem:[#allocation6 + $0x160] sm:$0xff]
    %v2759 = vld [vmem:[#allocation6 + $0x168] sm:$0xff]
    %v2760 = vld [vmem:[#allocation6 + $0x170] sm:$0xff]
    %v2761 = vld [vmem:[#allocation6 + $0x178] sm:$0xff]
    %v2762 = vld [vmem:[#allocation6 + $0x180] sm:$0xff]
    %v2763 = vld [vmem:[#allocation6 + $0x188] sm:$0xff]
    %v2764 = vld [vmem:[#allocation6 + $0x190] sm:$0xff]
    %v2765 = vld [vmem:[#allocation6 + $0x198] sm:$0xff]
    %v2766 = vld [vmem:[#allocation6 + $0x1a0] sm:$0xff]
    %v2767 = vld [vmem:[#allocation6 + $0x1a8] sm:$0xff]
    %v2768 = vld [vmem:[#allocation6 + $0x1b0] sm:$0xff]
    %v2769 = vld [vmem:[#allocation6 + $0x1b8] sm:$0xff]
    %v2770 = vld [vmem:[#allocation6 + $0x1c0] sm:$0xff]
    %v2771 = vld [vmem:[#allocation6 + $0x1c8] sm:$0xff]
    %v2772 = vld [vmem:[#allocation6 + $0x1d0] sm:$0xff]
    %v2773 = vld [vmem:[#allocation6 + $0x1d8] sm:$0xff]
    %v2774 = vld [vmem:[#allocation6 + $0x1e0] sm:$0xff]
    %v2775 = vld [vmem:[#allocation6 + $0x1e8] sm:$0xff]
    %v2776 = vld [vmem:[#allocation6 + $0x1f0] sm:$0xff]
    %v2777 = vld [vmem:[#allocation6 + $0x1f8] sm:$0xff]
    %v2778 = vld [vmem:[#allocation8] sm:$0xff]
    %v2779 = vld [vmem:[#allocation8 + $0x8] sm:$0xff]
    %v2780 = vld [vmem:[#allocation8 + $0x10] sm:$0xff]
    %v2781 = vld [vmem:[#allocation8 + $0x18] sm:$0xff]
    %v2782 = vld [vmem:[#allocation8 + $0x20] sm:$0xff]
    %v2783 = vld [vmem:[#allocation8 + $0x28] sm:$0xff]
    %v2784 = vld [vmem:[#allocation8 + $0x30] sm:$0xff]
    %v2785 = vld [vmem:[#allocation8 + $0x38] sm:$0xff]
    %v2786 = vld [vmem:[#allocation8 + $0x40] sm:$0xff]
    %v2787 = vld [vmem:[#allocation8 + $0x48] sm:$0xff]
    %v2788 = vld [vmem:[#allocation8 + $0x50] sm:$0xff]
    %v2789 = vld [vmem:[#allocation8 + $0x58] sm:$0xff]
    %v2790 = vld [vmem:[#allocation8 + $0x60] sm:$0xff]
    %v2791 = vld [vmem:[#allocation8 + $0x68] sm:$0xff]
    %v2792 = vld [vmem:[#allocation8 + $0x70] sm:$0xff]
    %v2793 = vld [vmem:[#allocation8 + $0x78] sm:$0xff]
    %v2794 = vld [vmem:[#allocation8 + $0x80] sm:$0xff]
    %v2795 = vld [vmem:[#allocation8 + $0x88] sm:$0xff]
    %v2796 = vld [vmem:[#allocation8 + $0x90] sm:$0xff]
    %v2797 = vld [vmem:[#allocation8 + $0x98] sm:$0xff]
    %v2798 = vld [vmem:[#allocation8 + $0xa0] sm:$0xff]
    %v2799 = vld [vmem:[#allocation8 + $0xa8] sm:$0xff]
    %v2800 = vld [vmem:[#allocation8 + $0xb0] sm:$0xff]
    %v2801 = vld [vmem:[#allocation8 + $0xb8] sm:$0xff]
    %v2802 = vld [vmem:[#allocation8 + $0xc0] sm:$0xff]
    %v2803 = vld [vmem:[#allocation8 + $0xc8] sm:$0xff]
    %v2804 = vld [vmem:[#allocation8 + $0xd0] sm:$0xff]
    %v2805 = vld [vmem:[#allocation8 + $0xd8] sm:$0xff]
    %v2806 = vld [vmem:[#allocation8 + $0xe0] sm:$0xff]
    %v2807 = vld [vmem:[#allocation8 + $0xe8] sm:$0xff]
    %v2808 = vld [vmem:[#allocation8 + $0xf0] sm:$0xff]
    %v2809 = vld [vmem:[#allocation8 + $0xf8] sm:$0xff]
    %v2810 = vld [vmem:[#allocation8 + $0x100] sm:$0xff]
    %v2811 = vld [vmem:[#allocation8 + $0x108] sm:$0xff]
    %v2812 = vld [vmem:[#allocation8 + $0x110] sm:$0xff]
    %v2813 = vld [vmem:[#allocation8 + $0x118] sm:$0xff]
    %v2814 = vld [vmem:[#allocation8 + $0x120] sm:$0xff]
    %v2815 = vld [vmem:[#allocation8 + $0x128] sm:$0xff]
    %v2816 = vld [vmem:[#allocation8 + $0x130] sm:$0xff]
    %v2817 = vld [vmem:[#allocation8 + $0x138] sm:$0xff]
    %v2818 = vld [vmem:[#allocation8 + $0x140] sm:$0xff]
    %v2819 = vld [vmem:[#allocation8 + $0x148] sm:$0xff]
    %v2820 = vld [vmem:[#allocation8 + $0x150] sm:$0xff]
    %v2821 = vld [vmem:[#allocation8 + $0x158] sm:$0xff]
    %v2822 = vld [vmem:[#allocation8 + $0x160] sm:$0xff]
    %v2823 = vld [vmem:[#allocation8 + $0x168] sm:$0xff]
    %v2824 = vld [vmem:[#allocation8 + $0x170] sm:$0xff]
    %v2825 = vld [vmem:[#allocation8 + $0x178] sm:$0xff]
    %v2826 = vld [vmem:[#allocation8 + $0x180] sm:$0xff]
    %v2827 = vld [vmem:[#allocation8 + $0x188] sm:$0xff]
    %v2828 = vld [vmem:[#allocation8 + $0x190] sm:$0xff]
    %v2829 = vld [vmem:[#allocation8 + $0x198] sm:$0xff]
    %v2830 = vld [vmem:[#allocation8 + $0x1a0] sm:$0xff]
    %v2831 = vld [vmem:[#allocation8 + $0x1a8] sm:$0xff]
    %v2832 = vld [vmem:[#allocation8 + $0x1b0] sm:$0xff]
    %v2833 = vld [vmem:[#allocation8 + $0x1b8] sm:$0xff]
    %v2834 = vld [vmem:[#allocation8 + $0x1c0] sm:$0xff]
    %v2835 = vld [vmem:[#allocation8 + $0x1c8] sm:$0xff]
    %v2836 = vld [vmem:[#allocation8 + $0x1d0] sm:$0xff]
    %v2837 = vld [vmem:[#allocation8 + $0x1d8] sm:$0xff]
    %v2838 = vld [vmem:[#allocation8 + $0x1e0] sm:$0xff]
    %v2839 = vld [vmem:[#allocation8 + $0x1e8] sm:$0xff]
    %v2840 = vld [vmem:[#allocation8 + $0x1f0] sm:$0xff]
    %v2841 = vld [vmem:[#allocation8 + $0x1f8] sm:$0xff]
    %2842 = vmatprep.subr.mxu0 %v2779
    %2843 = vmatpush1.msra.mxu0 %v2778
    %2844 = vmatprep.subr.mxu0 %v2783
    %2845 = vmatpush1.msra.mxu0 %v2782
    %2846 = vmatprep.subr.mxu0 %v2787
    %2847 = vmatpush1.msra.mxu0 %v2786
    %2848 = vmatprep.subr.mxu0 %v2791
    %2849 = vmatpush1.msra.mxu0 %v2790
    %2850 = vmatprep.subr.mxu0 %v2795
    %2851 = vmatpush1.msra.mxu0 %v2794
    %2852 = vmatprep.subr.mxu0 %v2799
    %2853 = vmatpush1.msra.mxu0 %v2798
    %2854 = vmatprep.subr.mxu0 %v2803
    %2855 = vmatpush1.msra.mxu0 %v2802
    %2856 = vmatprep.subr.mxu0 %v2807
    %2857 = vmatpush1.msra.mxu0 %v2806
    %2858 = vmatprep.subr.mxu0 %v2811
    %2859 = vmatpush1.msra.mxu0 %v2810
    %2860 = vmatprep.subr.mxu0 %v2815
    %2861 = vmatpush1.msra.mxu0 %v2814
    %2862 = vmatprep.subr.mxu0 %v2819
    %2863 = vmatpush1.msra.mxu0 %v2818
    %2864 = vmatprep.subr.mxu0 %v2823
    %2865 = vmatpush1.msra.mxu0 %v2822
    %2866 = vmatprep.subr.mxu0 %v2827
    %2867 = vmatpush1.msra.mxu0 %v2826
    %2868 = vmatprep.subr.mxu0 %v2831
    %2869 = vmatpush1.msra.mxu0 %v2830
    %2870 = vmatprep.subr.mxu0 %v2835
    %2871 = vmatpush1.msra.mxu0 %v2834
    %2872 = vmatprep.subr.mxu0 %v2839
    %2873 = vmatpush1.msra.mxu0 %v2838
    %2874 = vmatprep.subr.mxu0 0.0
    %2875 = vmatpush1.msra.mxu0 0.0
    %2876 = vmatprep.subr.mxu0 0.0
    %2877 = vmatpush1.msra.mxu0 0.0
    %2878 = vmatprep.subr.mxu0 0.0
    %2879 = vmatpush1.msra.mxu0 0.0
    %2880 = vmatprep.subr.mxu0 0.0
    %2881 = vmatpush1.msra.mxu0 0.0
    %2882 = vmatprep.subr.mxu0 0.0
    %2883 = vmatpush1.msra.mxu0 0.0
    %2884 = vmatprep.subr.mxu0 0.0
    %2885 = vmatpush1.msra.mxu0 0.0
    %2886 = vmatprep.subr.mxu0 0.0
    %2887 = vmatpush1.msra.mxu0 0.0
    %2888 = vmatprep.subr.mxu0 0.0
    %2889 = vmatpush1.msra.mxu0 0.0
    %2890 = vmatprep.subr.mxu0 0.0
    %2891 = vmatpush1.msra.mxu0 0.0
    %2892 = vmatprep.subr.mxu0 0.0
    %2893 = vmatpush1.msra.mxu0 0.0
    %2894 = vmatprep.subr.mxu0 0.0
    %2895 = vmatpush1.msra.mxu0 0.0
    %2896 = vmatprep.subr.mxu0 0.0
    %2897 = vmatpush1.msra.mxu0 0.0
    %2898 = vmatprep.subr.mxu0 0.0
    %2899 = vmatpush1.msra.mxu0 0.0
    %2900 = vmatprep.subr.mxu0 0.0
    %2901 = vmatpush1.msra.mxu0 0.0
    %2902 = vmatprep.subr.mxu0 0.0
    %2903 = vmatpush1.msra.mxu0 0.0
    %2904 = vmatprep.subr.mxu0 0.0
    %2905 = vmatpush1.msra.mxu0 0.0
    %2906 = vmatprep.mubr.f32.mxu0 0.0
    %2907 = vmatmul.mubr.f32.gmra.mrb[0].mxu0 %v2478
    %v2908 = vpop.f32.mrb[0].mxu0
    %v2909 = vadd.f32 0.0, %v2908
    %v2910 = vpop.f32.mrb[0].mxu0
    %v2911 = vadd.f32 0.0, %v2910
    %2912 = vdwg.mxu0
    %2913 = vmatprep.subr.mxu0 %v2781
    %2914 = vmatpush1.msra.mxu0 %v2780
    %2915 = vmatprep.subr.mxu0 %v2785
    %2916 = vmatpush1.msra.mxu0 %v2784
    %2917 = vmatprep.subr.mxu0 %v2789
    %2918 = vmatpush1.msra.mxu0 %v2788
    %2919 = vmatprep.subr.mxu0 %v2793
    %2920 = vmatpush1.msra.mxu0 %v2792
    %2921 = vmatprep.subr.mxu0 %v2797
    %2922 = vmatpush1.msra.mxu0 %v2796
    %2923 = vmatprep.subr.mxu0 %v2801
    %2924 = vmatpush1.msra.mxu0 %v2800
    %2925 = vmatprep.subr.mxu0 %v2805
    %2926 = vmatpush1.msra.mxu0 %v2804
    %2927 = vmatprep.subr.mxu0 %v2809
    %2928 = vmatpush1.msra.mxu0 %v2808
    %2929 = vmatprep.subr.mxu0 %v2813
    %2930 = vmatpush1.msra.mxu0 %v2812
    %2931 = vmatprep.subr.mxu0 %v2817
    %2932 = vmatpush1.msra.mxu0 %v2816
    %2933 = vmatprep.subr.mxu0 %v2821
    %2934 = vmatpush1.msra.mxu0 %v2820
    %2935 = vmatprep.subr.mxu0 %v2825
    %2936 = vmatpush1.msra.mxu0 %v2824
    %2937 = vmatprep.subr.mxu0 %v2829
    %2938 = vmatpush1.msra.mxu0 %v2828
    %2939 = vmatprep.subr.mxu0 %v2833
    %2940 = vmatpush1.msra.mxu0 %v2832
    %2941 = vmatprep.subr.mxu0 %v2837
    %2942 = vmatpush1.msra.mxu0 %v2836
    %2943 = vmatprep.subr.mxu0 %v2841
    %2944 = vmatpush1.msra.mxu0 %v2840
    %2945 = vmatprep.subr.mxu0 0.0
    %2946 = vmatpush1.msra.mxu0 0.0
    %2947 = vmatprep.subr.mxu0 0.0
    %2948 = vmatpush1.msra.mxu0 0.0
    %2949 = vmatprep.subr.mxu0 0.0
    %2950 = vmatpush1.msra.mxu0 0.0
    %2951 = vmatprep.subr.mxu0 0.0
    %2952 = vmatpush1.msra.mxu0 0.0
    %2953 = vmatprep.subr.mxu0 0.0
    %2954 = vmatpush1.msra.mxu0 0.0
    %2955 = vmatprep.subr.mxu0 0.0
    %2956 = vmatpush1.msra.mxu0 0.0
    %2957 = vmatprep.subr.mxu0 0.0
    %2958 = vmatpush1.msra.mxu0 0.0
    %2959 = vmatprep.subr.mxu0 0.0
    %2960 = vmatpush1.msra.mxu0 0.0
    %2961 = vmatprep.subr.mxu0 0.0
    %2962 = vmatpush1.msra.mxu0 0.0
    %2963 = vmatprep.subr.mxu0 0.0
    %2964 = vmatpush1.msra.mxu0 0.0
    %2965 = vmatprep.subr.mxu0 0.0
    %2966 = vmatpush1.msra.mxu0 0.0
    %2967 = vmatprep.subr.mxu0 0.0
    %2968 = vmatpush1.msra.mxu0 0.0
    %2969 = vmatprep.subr.mxu0 0.0
    %2970 = vmatpush1.msra.mxu0 0.0
    %2971 = vmatprep.subr.mxu0 0.0
    %2972 = vmatpush1.msra.mxu0 0.0
    %2973 = vmatprep.subr.mxu0 0.0
    %2974 = vmatpush1.msra.mxu0 0.0
    %2975 = vmatprep.subr.mxu0 0.0
    %2976 = vmatpush1.msra.mxu0 0.0
    %2977 = vmatprep.mubr.f32.mxu0 0.0
    %2978 = vmatmul.mubr.f32.gmra.mrb[0].mxu0 %v2478
    %v2979 = vpop.f32.mrb[0].mxu0
    %v2980 = vadd.f32 0.0, %v2979
    %v2981 = vpop.f32.mrb[0].mxu0
    %v2982 = vadd.f32 0.0, %v2981
    %2983 = vdwg.mxu0
    %2984 = vmatprep.subr.mxu0 %v2715
    %2985 = vmatpush1.msra.mxu0 %v2714
    %2986 = vmatprep.subr.mxu0 %v2719
    %2987 = vmatpush1.msra.mxu0 %v2718
    %2988 = vmatprep.subr.mxu0 %v2723
    %2989 = vmatpush1.msra.mxu0 %v2722
    %2990 = vmatprep.subr.mxu0 %v2727
    %2991 = vmatpush1.msra.mxu0 %v2726
    %2992 = vmatprep.subr.mxu0 %v2731
    %2993 = vmatpush1.msra.mxu0 %v2730
    %2994 = vmatprep.subr.mxu0 %v2735
    %2995 = vmatpush1.msra.mxu0 %v2734
    %2996 = vmatprep.subr.mxu0 %v2739
    %2997 = vmatpush1.msra.mxu0 %v2738
    %2998 = vmatprep.subr.mxu0 %v2743
    %2999 = vmatpush1.msra.mxu0 %v2742
    %3000 = vmatprep.subr.mxu0 %v2747
    %3001 = vmatpush1.msra.mxu0 %v2746
    %3002 = vmatprep.subr.mxu0 %v2751
    %3003 = vmatpush1.msra.mxu0 %v2750
    %3004 = vmatprep.subr.mxu0 %v2755
    %3005 = vmatpush1.msra.mxu0 %v2754
    %3006 = vmatprep.subr.mxu0 %v2759
    %3007 = vmatpush1.msra.mxu0 %v2758
    %3008 = vmatprep.subr.mxu0 %v2763
    %3009 = vmatpush1.msra.mxu0 %v2762
    %3010 = vmatprep.subr.mxu0 %v2767
    %3011 = vmatpush1.msra.mxu0 %v2766
    %3012 = vmatprep.subr.mxu0 %v2771
    %3013 = vmatpush1.msra.mxu0 %v2770
    %3014 = vmatprep.subr.mxu0 %v2775
    %3015 = vmatpush1.msra.mxu0 %v2774
    %3016 = vmatprep.subr.mxu0 0.0
    %3017 = vmatpush1.msra.mxu0 0.0
    %3018 = vmatprep.subr.mxu0 0.0
    %3019 = vmatpush1.msra.mxu0 0.0
    %3020 = vmatprep.subr.mxu0 0.0
    %3021 = vmatpush1.msra.mxu0 0.0
    %3022 = vmatprep.subr.mxu0 0.0
    %3023 = vmatpush1.msra.mxu0 0.0
    %3024 = vmatprep.subr.mxu0 0.0
    %3025 = vmatpush1.msra.mxu0 0.0
    %3026 = vmatprep.subr.mxu0 0.0
    %3027 = vmatpush1.msra.mxu0 0.0
    %3028 = vmatprep.subr.mxu0 0.0
    %3029 = vmatpush1.msra.mxu0 0.0
    %3030 = vmatprep.subr.mxu0 0.0
    %3031 = vmatpush1.msra.mxu0 0.0
    %3032 = vmatprep.subr.mxu0 0.0
    %3033 = vmatpush1.msra.mxu0 0.0
    %3034 = vmatprep.subr.mxu0 0.0
    %3035 = vmatpush1.msra.mxu0 0.0
    %3036 = vmatprep.subr.mxu0 0.0
    %3037 = vmatpush1.msra.mxu0 0.0
    %3038 = vmatprep.subr.mxu0 0.0
    %3039 = vmatpush1.msra.mxu0 0.0
    %3040 = vmatprep.subr.mxu0 0.0
    %3041 = vmatpush1.msra.mxu0 0.0
    %3042 = vmatprep.subr.mxu0 0.0
    %3043 = vmatpush1.msra.mxu0 0.0
    %3044 = vmatprep.subr.mxu0 0.0
    %3045 = vmatpush1.msra.mxu0 0.0
    %3046 = vmatprep.subr.mxu0 0.0
    %3047 = vmatpush1.msra.mxu0 0.0
    %3048 = vmatprep.mubr.f32.mxu0 0.0
    %3049 = vmatmul.mubr.f32.gmra.mrb[0].mxu0 %v2713
    %v3050 = vpop.f32.mrb[0].mxu0
    %v3051 = vadd.f32 %v2909, %v3050
    %v3052 = vpop.f32.mrb[0].mxu0
    %v3053 = vadd.f32 %v2911, %v3052
    %3054 = vdwg.mxu0
    %3055 = vmatprep.subr.mxu0 %v2717
    %3056 = vmatpush1.msra.mxu0 %v2716
    %3057 = vmatprep.subr.mxu0 %v2721
    %3058 = vmatpush1.msra.mxu0 %v2720
    %3059 = vmatprep.subr.mxu0 %v2725
    %3060 = vmatpush1.msra.mxu0 %v2724
    %3061 = vmatprep.subr.mxu0 %v2729
    %3062 = vmatpush1.msra.mxu0 %v2728
    %3063 = vmatprep.subr.mxu0 %v2733
    %3064 = vmatpush1.msra.mxu0 %v2732
    %3065 = vmatprep.subr.mxu0 %v2737
    %3066 = vmatpush1.msra.mxu0 %v2736
    %3067 = vmatprep.subr.mxu0 %v2741
    %3068 = vmatpush1.msra.mxu0 %v2740
    %3069 = vmatprep.subr.mxu0 %v2745
    %3070 = vmatpush1.msra.mxu0 %v2744
    %3071 = vmatprep.subr.mxu0 %v2749
    %3072 = vmatpush1.msra.mxu0 %v2748
    %3073 = vmatprep.subr.mxu0 %v2753
    %3074 = vmatpush1.msra.mxu0 %v2752
    %3075 = vmatprep.subr.mxu0 %v2757
    %3076 = vmatpush1.msra.mxu0 %v2756
    %3077 = vmatprep.subr.mxu0 %v2761
    %3078 = vmatpush1.msra.mxu0 %v2760
    %3079 = vmatprep.subr.mxu0 %v2765
    %3080 = vmatpush1.msra.mxu0 %v2764
    %3081 = vmatprep.subr.mxu0 %v2769
    %3082 = vmatpush1.msra.mxu0 %v2768
    %3083 = vmatprep.subr.mxu0 %v2773
    %3084 = vmatpush1.msra.mxu0 %v2772
    %3085 = vmatprep.subr.mxu0 %v2777
    %3086 = vmatpush1.msra.mxu0 %v2776
    %3087 = vmatprep.subr.mxu0 0.0
    %3088 = vmatpush1.msra.mxu0 0.0
    %3089 = vmatprep.subr.mxu0 0.0
    %3090 = vmatpush1.msra.mxu0 0.0
    %3091 = vmatprep.subr.mxu0 0.0
    %3092 = vmatpush1.msra.mxu0 0.0
    %3093 = vmatprep.subr.mxu0 0.0
    %3094 = vmatpush1.msra.mxu0 0.0
    %3095 = vmatprep.subr.mxu0 0.0
    %3096 = vmatpush1.msra.mxu0 0.0
    %3097 = vmatprep.subr.mxu0 0.0
    %3098 = vmatpush1.msra.mxu0 0.0
    %3099 = vmatprep.subr.mxu0 0.0
    %3100 = vmatpush1.msra.mxu0 0.0
    %3101 = vmatprep.subr.mxu0 0.0
    %3102 = vmatpush1.msra.mxu0 0.0
    %3103 = vmatprep.subr.mxu0 0.0
    %3104 = vmatpush1.msra.mxu0 0.0
    %3105 = vmatprep.subr.mxu0 0.0
    %3106 = vmatpush1.msra.mxu0 0.0
    %3107 = vmatprep.subr.mxu0 0.0
    %3108 = vmatpush1.msra.mxu0 0.0
    %3109 = vmatprep.subr.mxu0 0.0
    %3110 = vmatpush1.msra.mxu0 0.0
    %3111 = vmatprep.subr.mxu0 0.0
    %3112 = vmatpush1.msra.mxu0 0.0
    %3113 = vmatprep.subr.mxu0 0.0
    %3114 = vmatpush1.msra.mxu0 0.0
    %3115 = vmatprep.subr.mxu0 0.0
    %3116 = vmatpush1.msra.mxu0 0.0
    %3117 = vmatprep.subr.mxu0 0.0
    %3118 = vmatpush1.msra.mxu0 0.0
    %3119 = vmatprep.mubr.f32.mxu0 0.0
    %3120 = vmatmul.mubr.f32.gmra.mrb[0].mxu0 %v2713
    %v3121 = vpop.f32.mrb[0].mxu0
    %v3122 = vadd.f32 %v2980, %v3121
    %v3123 = vpop.f32.mrb[0].mxu0
    %v3124 = vadd.f32 %v2982, %v3123
    %3125 = vdwg.mxu0
    %v3126 = vld [vmem:[%s6] sm:$0xf]
    %v3128 = vlaneseq
    %v3129 = vshrl.u32 %v3128, 7
    %v3130 = vsub.s32 0, %v3129
    %v3131 = vrot.slane %v3126, %v3130
    %v3132 = vlaneseq
    %v3133 = vshrl.u32 %v3132, 7
    %v3134 = vsub.s32 1, %v3133
    %v3135 = vrot.slane %v3126, %v3134
    %v3136 = vlaneseq
    %v3137 = vshrl.u32 %v3136, 7
    %v3138 = vsub.s32 2, %v3137
    %v3139 = vrot.slane %v3126, %v3138
    %v3140 = vlaneseq
    %v3141 = vshrl.u32 %v3140, 7
    %v3142 = vsub.s32 3, %v3141
    %v3143 = vrot.slane %v3126, %v3142
    %v3148 = vadd.f32 %v3051, %v3131
    %v3149 = vadd.f32 %v3053, %v3135
    %v3150 = vadd.f32 %v3122, %v3139
    %v3151 = vadd.f32 %v3124, %v3143
    %v3152 = vxor.u32 %v3148, 2147483648
    %v3153 = vmul.f32 %v3152, 1.442695
    %v3154 = vpow.pop %v3153
    %v3155 = vadd.f32 %v3154, 1.0
    %v3156 = vrcp.pop %v3155
    %v3157 = vmul.f32 1.0, %v3156
    %v3158 = vxor.u32 %v3149, 2147483648
    %v3159 = vmul.f32 %v3158, 1.442695
    %v3160 = vpow.pop %v3159
    %v3161 = vadd.f32 %v3160, 1.0
    %v3162 = vrcp.pop %v3161
    %v3163 = vmul.f32 1.0, %v3162
    %v3164 = vtanh.pop %v3150
    %v3165 = vxor.u32 %v3151, 2147483648
    %v3166 = vmul.f32 %v3165, 1.442695
    %v3167 = vpow.pop %v3166
    %v3168 = vadd.f32 %v3167, 1.0
    %v3169 = vrcp.pop %v3168
    %v3170 = vmul.f32 1.0, %v3169
    %v3171 = vmul.f32 %v3163, %v2476
    %v3172 = vmul.f32 %v3157, %v3164
    %v3173 = vadd.f32 %v3171, %v3172
    %v3174 = vtanh.pop %v3173
    %v3175 = vmul.f32 %v3170, %v3174
    %3176 = vst [vmem:[#allocation2 + $0x18] sm:$0xff] %v3175
    %v3177 = vld [vmem:[#allocation4] sm:$0xff]
    %v3178 = vld [vmem:[#allocation4 + $0x8] sm:$0xff]
    %v3179 = vld [vmem:[#allocation4 + $0x10] sm:$0xff]
    %v3180 = vld [vmem:[#allocation4 + $0x18] sm:$0xff]
    %v3181 = vld [vmem:[#allocation4 + $0x20] sm:$0xff]
    %v3182 = vld [vmem:[#allocation4 + $0x28] sm:$0xff]
    %v3183 = vld [vmem:[#allocation4 + $0x30] sm:$0xff]
    %v3184 = vld [vmem:[#allocation4 + $0x38] sm:$0xff]
    %v3185 = vld [vmem:[#allocation4 + $0x40] sm:$0xff]
    %v3186 = vld [vmem:[#allocation4 + $0x48] sm:$0xff]
    %v3187 = vld [vmem:[#allocation4 + $0x50] sm:$0xff]
    %v3188 = vld [vmem:[#allocation4 + $0x58] sm:$0xff]
    %v3189 = vld [vmem:[#allocation4 + $0x60] sm:$0xff]
    %v3190 = vld [vmem:[#allocation4 + $0x68] sm:$0xff]
    %v3191 = vld [vmem:[#allocation4 + $0x70] sm:$0xff]
    %v3192 = vld [vmem:[#allocation4 + $0x78] sm:$0xff]
    %v3193 = vld [vmem:[#allocation4 + $0x80] sm:$0xff]
    %v3194 = vld [vmem:[#allocation4 + $0x88] sm:$0xff]
    %v3195 = vld [vmem:[#allocation4 + $0x90] sm:$0xff]
    %v3196 = vld [vmem:[#allocation4 + $0x98] sm:$0xff]
    %v3197 = vld [vmem:[#allocation4 + $0xa0] sm:$0xff]
    %v3198 = vld [vmem:[#allocation4 + $0xa8] sm:$0xff]
    %v3199 = vld [vmem:[#allocation4 + $0xb0] sm:$0xff]
    %v3200 = vld [vmem:[#allocation4 + $0xb8] sm:$0xff]
    %v3201 = vld [vmem:[#allocation4 + $0xc0] sm:$0xff]
    %v3202 = vld [vmem:[#allocation4 + $0xc8] sm:$0xff]
    %v3203 = vld [vmem:[#allocation4 + $0xd0] sm:$0xff]
    %v3204 = vld [vmem:[#allocation4 + $0xd8] sm:$0xff]
    %v3205 = vld [vmem:[#allocation4 + $0xe0] sm:$0xff]
    %v3206 = vld [vmem:[#allocation4 + $0xe8] sm:$0xff]
    %v3207 = vld [vmem:[#allocation4 + $0xf0] sm:$0xff]
    %v3208 = vld [vmem:[#allocation4 + $0xf8] sm:$0xff]
    %v3209 = vld [vmem:[#allocation4 + $0x100] sm:$0xff]
    %v3210 = vld [vmem:[#allocation4 + $0x108] sm:$0xff]
    %v3211 = vld [vmem:[#allocation4 + $0x110] sm:$0xff]
    %v3212 = vld [vmem:[#allocation4 + $0x118] sm:$0xff]
    %v3213 = vld [vmem:[#allocation4 + $0x120] sm:$0xff]
    %v3214 = vld [vmem:[#allocation4 + $0x128] sm:$0xff]
    %v3215 = vld [vmem:[#allocation4 + $0x130] sm:$0xff]
    %v3216 = vld [vmem:[#allocation4 + $0x138] sm:$0xff]
    %v3217 = vld [vmem:[#allocation4 + $0x140] sm:$0xff]
    %v3218 = vld [vmem:[#allocation4 + $0x148] sm:$0xff]
    %v3219 = vld [vmem:[#allocation4 + $0x150] sm:$0xff]
    %v3220 = vld [vmem:[#allocation4 + $0x158] sm:$0xff]
    %v3221 = vld [vmem:[#allocation4 + $0x160] sm:$0xff]
    %v3222 = vld [vmem:[#allocation4 + $0x168] sm:$0xff]
    %v3223 = vld [vmem:[#allocation4 + $0x170] sm:$0xff]
    %v3224 = vld [vmem:[#allocation4 + $0x178] sm:$0xff]
    %v3225 = vld [vmem:[#allocation4 + $0x180] sm:$0xff]
    %v3226 = vld [vmem:[#allocation4 + $0x188] sm:$0xff]
    %v3227 = vld [vmem:[#allocation4 + $0x190] sm:$0xff]
    %v3228 = vld [vmem:[#allocation4 + $0x198] sm:$0xff]
    %v3229 = vld [vmem:[#allocation4 + $0x1a0] sm:$0xff]
    %v3230 = vld [vmem:[#allocation4 + $0x1a8] sm:$0xff]
    %v3231 = vld [vmem:[#allocation4 + $0x1b0] sm:$0xff]
    %v3232 = vld [vmem:[#allocation4 + $0x1b8] sm:$0xff]
    %v3233 = vld [vmem:[#allocation4 + $0x1c0] sm:$0xff]
    %v3234 = vld [vmem:[#allocation4 + $0x1c8] sm:$0xff]
    %v3235 = vld [vmem:[#allocation4 + $0x1d0] sm:$0xff]
    %v3236 = vld [vmem:[#allocation4 + $0x1d8] sm:$0xff]
    %v3237 = vld [vmem:[#allocation4 + $0x1e0] sm:$0xff]
    %v3238 = vld [vmem:[#allocation4 + $0x1e8] sm:$0xff]
    %v3239 = vld [vmem:[#allocation4 + $0x1f0] sm:$0xff]
    %v3240 = vld [vmem:[#allocation4 + $0x1f8] sm:$0xff]
    %3241 = vmatprep.subr.mxu0 %v3178
    %3242 = vmatpush1.msra.mxu0 %v3177
    %3243 = vmatprep.subr.mxu0 %v3182
    %3244 = vmatpush1.msra.mxu0 %v3181
    %3245 = vmatprep.subr.mxu0 %v3186
    %3246 = vmatpush1.msra.mxu0 %v3185
    %3247 = vmatprep.subr.mxu0 %v3190
    %3248 = vmatpush1.msra.mxu0 %v3189
    %3249 = vmatprep.subr.mxu0 %v3194
    %3250 = vmatpush1.msra.mxu0 %v3193
    %3251 = vmatprep.subr.mxu0 %v3198
    %3252 = vmatpush1.msra.mxu0 %v3197
    %3253 = vmatprep.subr.mxu0 %v3202
    %3254 = vmatpush1.msra.mxu0 %v3201
    %3255 = vmatprep.subr.mxu0 %v3206
    %3256 = vmatpush1.msra.mxu0 %v3205
    %3257 = vmatprep.subr.mxu0 %v3210
    %3258 = vmatpush1.msra.mxu0 %v3209
    %3259 = vmatprep.subr.mxu0 %v3214
    %3260 = vmatpush1.msra.mxu0 %v3213
    %3261 = vmatprep.subr.mxu0 %v3218
    %3262 = vmatpush1.msra.mxu0 %v3217
    %3263 = vmatprep.subr.mxu0 %v3222
    %3264 = vmatpush1.msra.mxu0 %v3221
    %3265 = vmatprep.subr.mxu0 %v3226
    %3266 = vmatpush1.msra.mxu0 %v3225
    %3267 = vmatprep.subr.mxu0 %v3230
    %3268 = vmatpush1.msra.mxu0 %v3229
    %3269 = vmatprep.subr.mxu0 %v3234
    %3270 = vmatpush1.msra.mxu0 %v3233
    %3271 = vmatprep.subr.mxu0 %v3238
    %3272 = vmatpush1.msra.mxu0 %v3237
    %3273 = vmatprep.subr.mxu0 0.0
    %3274 = vmatpush1.msra.mxu0 0.0
    %3275 = vmatprep.subr.mxu0 0.0
    %3276 = vmatpush1.msra.mxu0 0.0
    %3277 = vmatprep.subr.mxu0 0.0
    %3278 = vmatpush1.msra.mxu0 0.0
    %3279 = vmatprep.subr.mxu0 0.0
    %3280 = vmatpush1.msra.mxu0 0.0
    %3281 = vmatprep.subr.mxu0 0.0
    %3282 = vmatpush1.msra.mxu0 0.0
    %3283 = vmatprep.subr.mxu0 0.0
    %3284 = vmatpush1.msra.mxu0 0.0
    %3285 = vmatprep.subr.mxu0 0.0
    %3286 = vmatpush1.msra.mxu0 0.0
    %3287 = vmatprep.subr.mxu0 0.0
    %3288 = vmatpush1.msra.mxu0 0.0
    %3289 = vmatprep.subr.mxu0 0.0
    %3290 = vmatpush1.msra.mxu0 0.0
    %3291 = vmatprep.subr.mxu0 0.0
    %3292 = vmatpush1.msra.mxu0 0.0
    %3293 = vmatprep.subr.mxu0 0.0
    %3294 = vmatpush1.msra.mxu0 0.0
    %3295 = vmatprep.subr.mxu0 0.0
    %3296 = vmatpush1.msra.mxu0 0.0
    %3297 = vmatprep.subr.mxu0 0.0
    %3298 = vmatpush1.msra.mxu0 0.0
    %3299 = vmatprep.subr.mxu0 0.0
    %3300 = vmatpush1.msra.mxu0 0.0
    %3301 = vmatprep.subr.mxu0 0.0
    %3302 = vmatpush1.msra.mxu0 0.0
    %3303 = vmatprep.subr.mxu0 0.0
    %3304 = vmatpush1.msra.mxu0 0.0
    %3305 = vmatprep.mubr.f32.mxu0 0.0
    %3306 = vmatmul.mubr.f32.gmra.mrb[0].mxu0 %v2713
    %v3307 = vpop.f32.mrb[0].mxu0
    %v3308 = vadd.f32 0.0, %v3307
    %v3309 = vpop.f32.mrb[0].mxu0
    %v3310 = vadd.f32 0.0, %v3309
    %3311 = vdwg.mxu0
    %3312 = vmatprep.subr.mxu0 %v3180
    %3313 = vmatpush1.msra.mxu0 %v3179
    %3314 = vmatprep.subr.mxu0 %v3184
    %3315 = vmatpush1.msra.mxu0 %v3183
    %3316 = vmatprep.subr.mxu0 %v3188
    %3317 = vmatpush1.msra.mxu0 %v3187
    %3318 = vmatprep.subr.mxu0 %v3192
    %3319 = vmatpush1.msra.mxu0 %v3191
    %3320 = vmatprep.subr.mxu0 %v3196
    %3321 = vmatpush1.msra.mxu0 %v3195
    %3322 = vmatprep.subr.mxu0 %v3200
    %3323 = vmatpush1.msra.mxu0 %v3199
    %3324 = vmatprep.subr.mxu0 %v3204
    %3325 = vmatpush1.msra.mxu0 %v3203
    %3326 = vmatprep.subr.mxu0 %v3208
    %3327 = vmatpush1.msra.mxu0 %v3207
    %3328 = vmatprep.subr.mxu0 %v3212
    %3329 = vmatpush1.msra.mxu0 %v3211
    %3330 = vmatprep.subr.mxu0 %v3216
    %3331 = vmatpush1.msra.mxu0 %v3215
    %3332 = vmatprep.subr.mxu0 %v3220
    %3333 = vmatpush1.msra.mxu0 %v3219
    %3334 = vmatprep.subr.mxu0 %v3224
    %3335 = vmatpush1.msra.mxu0 %v3223
    %3336 = vmatprep.subr.mxu0 %v3228
    %3337 = vmatpush1.msra.mxu0 %v3227
    %3338 = vmatprep.subr.mxu0 %v3232
    %3339 = vmatpush1.msra.mxu0 %v3231
    %3340 = vmatprep.subr.mxu0 %v3236
    %3341 = vmatpush1.msra.mxu0 %v3235
    %3342 = vmatprep.subr.mxu0 %v3240
    %3343 = vmatpush1.msra.mxu0 %v3239
    %3344 = vmatprep.subr.mxu0 0.0
    %3345 = vmatpush1.msra.mxu0 0.0
    %3346 = vmatprep.subr.mxu0 0.0
    %3347 = vmatpush1.msra.mxu0 0.0
    %3348 = vmatprep.subr.mxu0 0.0
    %3349 = vmatpush1.msra.mxu0 0.0
    %3350 = vmatprep.subr.mxu0 0.0
    %3351 = vmatpush1.msra.mxu0 0.0
    %3352 = vmatprep.subr.mxu0 0.0
    %3353 = vmatpush1.msra.mxu0 0.0
    %3354 = vmatprep.subr.mxu0 0.0
    %3355 = vmatpush1.msra.mxu0 0.0
    %3356 = vmatprep.subr.mxu0 0.0
    %3357 = vmatpush1.msra.mxu0 0.0
    %3358 = vmatprep.subr.mxu0 0.0
    %3359 = vmatpush1.msra.mxu0 0.0
    %3360 = vmatprep.subr.mxu0 0.0
    %3361 = vmatpush1.msra.mxu0 0.0
    %3362 = vmatprep.subr.mxu0 0.0
    %3363 = vmatpush1.msra.mxu0 0.0
    %3364 = vmatprep.subr.mxu0 0.0
    %3365 = vmatpush1.msra.mxu0 0.0
    %3366 = vmatprep.subr.mxu0 0.0
    %3367 = vmatpush1.msra.mxu0 0.0
    %3368 = vmatprep.subr.mxu0 0.0
    %3369 = vmatpush1.msra.mxu0 0.0
    %3370 = vmatprep.subr.mxu0 0.0
    %3371 = vmatpush1.msra.mxu0 0.0
    %3372 = vmatprep.subr.mxu0 0.0
    %3373 = vmatpush1.msra.mxu0 0.0
    %3374 = vmatprep.subr.mxu0 0.0
    %3375 = vmatpush1.msra.mxu0 0.0
    %3376 = vmatprep.mubr.f32.mxu0 0.0
    %3377 = vmatmul.mubr.f32.gmra.mrb[0].mxu0 %v2713
    %v3378 = vpop.f32.mrb[0].mxu0
    %v3379 = vadd.f32 0.0, %v3378
    %v3380 = vpop.f32.mrb[0].mxu0
    %v3381 = vadd.f32 0.0, %v3380
    %3382 = vdwg.mxu0
    %v3383 = vadd.f32 %v254, %v3308
    %v3384 = vadd.f32 %v256, %v3310
    %v3385 = vadd.f32 %v367, %v3379
    %v3386 = vadd.f32 %v369, %v3381
    %v3387 = vxor.u32 %v3383, 2147483648
    %v3388 = vmul.f32 %v3387, 1.442695
    %v3389 = vpow.pop %v3388
    %v3390 = vadd.f32 %v3389, 1.0
    %v3391 = vrcp.pop %v3390
    %v3392 = vmul.f32 1.0, %v3391
    %v3393 = vxor.u32 %v3384, 2147483648
    %v3394 = vmul.f32 %v3393, 1.442695
    %v3395 = vpow.pop %v3394
    %v3396 = vadd.f32 %v3395, 1.0
    %v3397 = vrcp.pop %v3396
    %v3398 = vmul.f32 1.0, %v3397
    %v3399 = vtanh.pop %v3385
    %v3400 = vxor.u32 %v3386, 2147483648
    %v3401 = vmul.f32 %v3400, 1.442695
    %v3402 = vpow.pop %v3401
    %v3403 = vadd.f32 %v3402, 1.0
    %v3404 = vrcp.pop %v3403
    %v3405 = vmul.f32 1.0, %v3404
    %v3406 = vmul.f32 %v3398, %v2711
    %v3407 = vmul.f32 %v3392, %v3399
    %v3408 = vadd.f32 %v3406, %v3407
    %v3409 = vtanh.pop %v3408
    %v3410 = vmul.f32 %v3405, %v3409
    %v3411 = vld [vmem:[#allocation6] sm:$0xff]
    %v3412 = vld [vmem:[#allocation6 + $0x8] sm:$0xff]
    %v3413 = vld [vmem:[#allocation6 + $0x10] sm:$0xff]
    %v3414 = vld [vmem:[#allocation6 + $0x18] sm:$0xff]
    %v3415 = vld [vmem:[#allocation6 + $0x20] sm:$0xff]
    %v3416 = vld [vmem:[#allocation6 + $0x28] sm:$0xff]
    %v3417 = vld [vmem:[#allocation6 + $0x30] sm:$0xff]
    %v3418 = vld [vmem:[#allocation6 + $0x38] sm:$0xff]
    %v3419 = vld [vmem:[#allocation6 + $0x40] sm:$0xff]
    %v3420 = vld [vmem:[#allocation6 + $0x48] sm:$0xff]
    %v3421 = vld [vmem:[#allocation6 + $0x50] sm:$0xff]
    %v3422 = vld [vmem:[#allocation6 + $0x58] sm:$0xff]
    %v3423 = vld [vmem:[#allocation6 + $0x60] sm:$0xff]
    %v3424 = vld [vmem:[#allocation6 + $0x68] sm:$0xff]
    %v3425 = vld [vmem:[#allocation6 + $0x70] sm:$0xff]
    %v3426 = vld [vmem:[#allocation6 + $0x78] sm:$0xff]
    %v3427 = vld [vmem:[#allocation6 + $0x80] sm:$0xff]
    %v3428 = vld [vmem:[#allocation6 + $0x88] sm:$0xff]
    %v3429 = vld [vmem:[#allocation6 + $0x90] sm:$0xff]
    %v3430 = vld [vmem:[#allocation6 + $0x98] sm:$0xff]
    %v3431 = vld [vmem:[#allocation6 + $0xa0] sm:$0xff]
    %v3432 = vld [vmem:[#allocation6 + $0xa8] sm:$0xff]
    %v3433 = vld [vmem:[#allocation6 + $0xb0] sm:$0xff]
    %v3434 = vld [vmem:[#allocation6 + $0xb8] sm:$0xff]
    %v3435 = vld [vmem:[#allocation6 + $0xc0] sm:$0xff]
    %v3436 = vld [vmem:[#allocation6 + $0xc8] sm:$0xff]
    %v3437 = vld [vmem:[#allocation6 + $0xd0] sm:$0xff]
    %v3438 = vld [vmem:[#allocation6 + $0xd8] sm:$0xff]
    %v3439 = vld [vmem:[#allocation6 + $0xe0] sm:$0xff]
    %v3440 = vld [vmem:[#allocation6 + $0xe8] sm:$0xff]
    %v3441 = vld [vmem:[#allocation6 + $0xf0] sm:$0xff]
    %v3442 = vld [vmem:[#allocation6 + $0xf8] sm:$0xff]
    %v3443 = vld [vmem:[#allocation6 + $0x100] sm:$0xff]
    %v3444 = vld [vmem:[#allocation6 + $0x108] sm:$0xff]
    %v3445 = vld [vmem:[#allocation6 + $0x110] sm:$0xff]
    %v3446 = vld [vmem:[#allocation6 + $0x118] sm:$0xff]
    %v3447 = vld [vmem:[#allocation6 + $0x120] sm:$0xff]
    %v3448 = vld [vmem:[#allocation6 + $0x128] sm:$0xff]
    %v3449 = vld [vmem:[#allocation6 + $0x130] sm:$0xff]
    %v3450 = vld [vmem:[#allocation6 + $0x138] sm:$0xff]
    %v3451 = vld [vmem:[#allocation6 + $0x140] sm:$0xff]
    %v3452 = vld [vmem:[#allocation6 + $0x148] sm:$0xff]
    %v3453 = vld [vmem:[#allocation6 + $0x150] sm:$0xff]
    %v3454 = vld [vmem:[#allocation6 + $0x158] sm:$0xff]
    %v3455 = vld [vmem:[#allocation6 + $0x160] sm:$0xff]
    %v3456 = vld [vmem:[#allocation6 + $0x168] sm:$0xff]
    %v3457 = vld [vmem:[#allocation6 + $0x170] sm:$0xff]
    %v3458 = vld [vmem:[#allocation6 + $0x178] sm:$0xff]
    %v3459 = vld [vmem:[#allocation6 + $0x180] sm:$0xff]
    %v3460 = vld [vmem:[#allocation6 + $0x188] sm:$0xff]
    %v3461 = vld [vmem:[#allocation6 + $0x190] sm:$0xff]
    %v3462 = vld [vmem:[#allocation6 + $0x198] sm:$0xff]
    %v3463 = vld [vmem:[#allocation6 + $0x1a0] sm:$0xff]
    %v3464 = vld [vmem:[#allocation6 + $0x1a8] sm:$0xff]
    %v3465 = vld [vmem:[#allocation6 + $0x1b0] sm:$0xff]
    %v3466 = vld [vmem:[#allocation6 + $0x1b8] sm:$0xff]
    %v3467 = vld [vmem:[#allocation6 + $0x1c0] sm:$0xff]
    %v3468 = vld [vmem:[#allocation6 + $0x1c8] sm:$0xff]
    %v3469 = vld [vmem:[#allocation6 + $0x1d0] sm:$0xff]
    %v3470 = vld [vmem:[#allocation6 + $0x1d8] sm:$0xff]
    %v3471 = vld [vmem:[#allocation6 + $0x1e0] sm:$0xff]
    %v3472 = vld [vmem:[#allocation6 + $0x1e8] sm:$0xff]
    %v3473 = vld [vmem:[#allocation6 + $0x1f0] sm:$0xff]
    %v3474 = vld [vmem:[#allocation6 + $0x1f8] sm:$0xff]
    %v3475 = vld [vmem:[#allocation8] sm:$0xff]
    %v3476 = vld [vmem:[#allocation8 + $0x8] sm:$0xff]
    %v3477 = vld [vmem:[#allocation8 + $0x10] sm:$0xff]
    %v3478 = vld [vmem:[#allocation8 + $0x18] sm:$0xff]
    %v3479 = vld [vmem:[#allocation8 + $0x20] sm:$0xff]
    %v3480 = vld [vmem:[#allocation8 + $0x28] sm:$0xff]
    %v3481 = vld [vmem:[#allocation8 + $0x30] sm:$0xff]
    %v3482 = vld [vmem:[#allocation8 + $0x38] sm:$0xff]
    %v3483 = vld [vmem:[#allocation8 + $0x40] sm:$0xff]
    %v3484 = vld [vmem:[#allocation8 + $0x48] sm:$0xff]
    %v3485 = vld [vmem:[#allocation8 + $0x50] sm:$0xff]
    %v3486 = vld [vmem:[#allocation8 + $0x58] sm:$0xff]
    %v3487 = vld [vmem:[#allocation8 + $0x60] sm:$0xff]
    %v3488 = vld [vmem:[#allocation8 + $0x68] sm:$0xff]
    %v3489 = vld [vmem:[#allocation8 + $0x70] sm:$0xff]
    %v3490 = vld [vmem:[#allocation8 + $0x78] sm:$0xff]
    %v3491 = vld [vmem:[#allocation8 + $0x80] sm:$0xff]
    %v3492 = vld [vmem:[#allocation8 + $0x88] sm:$0xff]
    %v3493 = vld [vmem:[#allocation8 + $0x90] sm:$0xff]
    %v3494 = vld [vmem:[#allocation8 + $0x98] sm:$0xff]
    %v3495 = vld [vmem:[#allocation8 + $0xa0] sm:$0xff]
    %v3496 = vld [vmem:[#allocation8 + $0xa8] sm:$0xff]
    %v3497 = vld [vmem:[#allocation8 + $0xb0] sm:$0xff]
    %v3498 = vld [vmem:[#allocation8 + $0xb8] sm:$0xff]
    %v3499 = vld [vmem:[#allocation8 + $0xc0] sm:$0xff]
    %v3500 = vld [vmem:[#allocation8 + $0xc8] sm:$0xff]
    %v3501 = vld [vmem:[#allocation8 + $0xd0] sm:$0xff]
    %v3502 = vld [vmem:[#allocation8 + $0xd8] sm:$0xff]
    %v3503 = vld [vmem:[#allocation8 + $0xe0] sm:$0xff]
    %v3504 = vld [vmem:[#allocation8 + $0xe8] sm:$0xff]
    %v3505 = vld [vmem:[#allocation8 + $0xf0] sm:$0xff]
    %v3506 = vld [vmem:[#allocation8 + $0xf8] sm:$0xff]
    %v3507 = vld [vmem:[#allocation8 + $0x100] sm:$0xff]
    %v3508 = vld [vmem:[#allocation8 + $0x108] sm:$0xff]
    %v3509 = vld [vmem:[#allocation8 + $0x110] sm:$0xff]
    %v3510 = vld [vmem:[#allocation8 + $0x118] sm:$0xff]
    %v3511 = vld [vmem:[#allocation8 + $0x120] sm:$0xff]
    %v3512 = vld [vmem:[#allocation8 + $0x128] sm:$0xff]
    %v3513 = vld [vmem:[#allocation8 + $0x130] sm:$0xff]
    %v3514 = vld [vmem:[#allocation8 + $0x138] sm:$0xff]
    %v3515 = vld [vmem:[#allocation8 + $0x140] sm:$0xff]
    %v3516 = vld [vmem:[#allocation8 + $0x148] sm:$0xff]
    %v3517 = vld [vmem:[#allocation8 + $0x150] sm:$0xff]
    %v3518 = vld [vmem:[#allocation8 + $0x158] sm:$0xff]
    %v3519 = vld [vmem:[#allocation8 + $0x160] sm:$0xff]
    %v3520 = vld [vmem:[#allocation8 + $0x168] sm:$0xff]
    %v3521 = vld [vmem:[#allocation8 + $0x170] sm:$0xff]
    %v3522 = vld [vmem:[#allocation8 + $0x178] sm:$0xff]
    %v3523 = vld [vmem:[#allocation8 + $0x180] sm:$0xff]
    %v3524 = vld [vmem:[#allocation8 + $0x188] sm:$0xff]
    %v3525 = vld [vmem:[#allocation8 + $0x190] sm:$0xff]
    %v3526 = vld [vmem:[#allocation8 + $0x198] sm:$0xff]
    %v3527 = vld [vmem:[#allocation8 + $0x1a0] sm:$0xff]
    %v3528 = vld [vmem:[#allocation8 + $0x1a8] sm:$0xff]
    %v3529 = vld [vmem:[#allocation8 + $0x1b0] sm:$0xff]
    %v3530 = vld [vmem:[#allocation8 + $0x1b8] sm:$0xff]
    %v3531 = vld [vmem:[#allocation8 + $0x1c0] sm:$0xff]
    %v3532 = vld [vmem:[#allocation8 + $0x1c8] sm:$0xff]
    %v3533 = vld [vmem:[#allocation8 + $0x1d0] sm:$0xff]
    %v3534 = vld [vmem:[#allocation8 + $0x1d8] sm:$0xff]
    %v3535 = vld [vmem:[#allocation8 + $0x1e0] sm:$0xff]
    %v3536 = vld [vmem:[#allocation8 + $0x1e8] sm:$0xff]
    %v3537 = vld [vmem:[#allocation8 + $0x1f0] sm:$0xff]
    %v3538 = vld [vmem:[#allocation8 + $0x1f8] sm:$0xff]
    %3539 = vmatprep.subr.mxu0 %v3476
    %3540 = vmatpush1.msra.mxu0 %v3475
    %3541 = vmatprep.subr.mxu0 %v3480
    %3542 = vmatpush1.msra.mxu0 %v3479
    %3543 = vmatprep.subr.mxu0 %v3484
    %3544 = vmatpush1.msra.mxu0 %v3483
    %3545 = vmatprep.subr.mxu0 %v3488
    %3546 = vmatpush1.msra.mxu0 %v3487
    %3547 = vmatprep.subr.mxu0 %v3492
    %3548 = vmatpush1.msra.mxu0 %v3491
    %3549 = vmatprep.subr.mxu0 %v3496
    %3550 = vmatpush1.msra.mxu0 %v3495
    %3551 = vmatprep.subr.mxu0 %v3500
    %3552 = vmatpush1.msra.mxu0 %v3499
    %3553 = vmatprep.subr.mxu0 %v3504
    %3554 = vmatpush1.msra.mxu0 %v3503
    %3555 = vmatprep.subr.mxu0 %v3508
    %3556 = vmatpush1.msra.mxu0 %v3507
    %3557 = vmatprep.subr.mxu0 %v3512
    %3558 = vmatpush1.msra.mxu0 %v3511
    %3559 = vmatprep.subr.mxu0 %v3516
    %3560 = vmatpush1.msra.mxu0 %v3515
    %3561 = vmatprep.subr.mxu0 %v3520
    %3562 = vmatpush1.msra.mxu0 %v3519
    %3563 = vmatprep.subr.mxu0 %v3524
    %3564 = vmatpush1.msra.mxu0 %v3523
    %3565 = vmatprep.subr.mxu0 %v3528
    %3566 = vmatpush1.msra.mxu0 %v3527
    %3567 = vmatprep.subr.mxu0 %v3532
    %3568 = vmatpush1.msra.mxu0 %v3531
    %3569 = vmatprep.subr.mxu0 %v3536
    %3570 = vmatpush1.msra.mxu0 %v3535
    %3571 = vmatprep.subr.mxu0 0.0
    %3572 = vmatpush1.msra.mxu0 0.0
    %3573 = vmatprep.subr.mxu0 0.0
    %3574 = vmatpush1.msra.mxu0 0.0
    %3575 = vmatprep.subr.mxu0 0.0
    %3576 = vmatpush1.msra.mxu0 0.0
    %3577 = vmatprep.subr.mxu0 0.0
    %3578 = vmatpush1.msra.mxu0 0.0
    %3579 = vmatprep.subr.mxu0 0.0
    %3580 = vmatpush1.msra.mxu0 0.0
    %3581 = vmatprep.subr.mxu0 0.0
    %3582 = vmatpush1.msra.mxu0 0.0
    %3583 = vmatprep.subr.mxu0 0.0
    %3584 = vmatpush1.msra.mxu0 0.0
    %3585 = vmatprep.subr.mxu0 0.0
    %3586 = vmatpush1.msra.mxu0 0.0
    %3587 = vmatprep.subr.mxu0 0.0
    %3588 = vmatpush1.msra.mxu0 0.0
    %3589 = vmatprep.subr.mxu0 0.0
    %3590 = vmatpush1.msra.mxu0 0.0
    %3591 = vmatprep.subr.mxu0 0.0
    %3592 = vmatpush1.msra.mxu0 0.0
    %3593 = vmatprep.subr.mxu0 0.0
    %3594 = vmatpush1.msra.mxu0 0.0
    %3595 = vmatprep.subr.mxu0 0.0
    %3596 = vmatpush1.msra.mxu0 0.0
    %3597 = vmatprep.subr.mxu0 0.0
    %3598 = vmatpush1.msra.mxu0 0.0
    %3599 = vmatprep.subr.mxu0 0.0
    %3600 = vmatpush1.msra.mxu0 0.0
    %3601 = vmatprep.subr.mxu0 0.0
    %3602 = vmatpush1.msra.mxu0 0.0
    %3603 = vmatprep.mubr.f32.mxu0 0.0
    %3604 = vmatmul.mubr.f32.gmra.mrb[0].mxu0 %v3175
    %v3605 = vpop.f32.mrb[0].mxu0
    %v3606 = vadd.f32 0.0, %v3605
    %v3607 = vpop.f32.mrb[0].mxu0
    %v3608 = vadd.f32 0.0, %v3607
    %3609 = vdwg.mxu0
    %3610 = vmatprep.subr.mxu0 %v3478
    %3611 = vmatpush1.msra.mxu0 %v3477
    %3612 = vmatprep.subr.mxu0 %v3482
    %3613 = vmatpush1.msra.mxu0 %v3481
    %3614 = vmatprep.subr.mxu0 %v3486
    %3615 = vmatpush1.msra.mxu0 %v3485
    %3616 = vmatprep.subr.mxu0 %v3490
    %3617 = vmatpush1.msra.mxu0 %v3489
    %3618 = vmatprep.subr.mxu0 %v3494
    %3619 = vmatpush1.msra.mxu0 %v3493
    %3620 = vmatprep.subr.mxu0 %v3498
    %3621 = vmatpush1.msra.mxu0 %v3497
    %3622 = vmatprep.subr.mxu0 %v3502
    %3623 = vmatpush1.msra.mxu0 %v3501
    %3624 = vmatprep.subr.mxu0 %v3506
    %3625 = vmatpush1.msra.mxu0 %v3505
    %3626 = vmatprep.subr.mxu0 %v3510
    %3627 = vmatpush1.msra.mxu0 %v3509
    %3628 = vmatprep.subr.mxu0 %v3514
    %3629 = vmatpush1.msra.mxu0 %v3513
    %3630 = vmatprep.subr.mxu0 %v3518
    %3631 = vmatpush1.msra.mxu0 %v3517
    %3632 = vmatprep.subr.mxu0 %v3522
    %3633 = vmatpush1.msra.mxu0 %v3521
    %3634 = vmatprep.subr.mxu0 %v3526
    %3635 = vmatpush1.msra.mxu0 %v3525
    %3636 = vmatprep.subr.mxu0 %v3530
    %3637 = vmatpush1.msra.mxu0 %v3529
    %3638 = vmatprep.subr.mxu0 %v3534
    %3639 = vmatpush1.msra.mxu0 %v3533
    %3640 = vmatprep.subr.mxu0 %v3538
    %3641 = vmatpush1.msra.mxu0 %v3537
    %3642 = vmatprep.subr.mxu0 0.0
    %3643 = vmatpush1.msra.mxu0 0.0
    %3644 = vmatprep.subr.mxu0 0.0
    %3645 = vmatpush1.msra.mxu0 0.0
    %3646 = vmatprep.subr.mxu0 0.0
    %3647 = vmatpush1.msra.mxu0 0.0
    %3648 = vmatprep.subr.mxu0 0.0
    %3649 = vmatpush1.msra.mxu0 0.0
    %3650 = vmatprep.subr.mxu0 0.0
    %3651 = vmatpush1.msra.mxu0 0.0
    %3652 = vmatprep.subr.mxu0 0.0
    %3653 = vmatpush1.msra.mxu0 0.0
    %3654 = vmatprep.subr.mxu0 0.0
    %3655 = vmatpush1.msra.mxu0 0.0
    %3656 = vmatprep.subr.mxu0 0.0
    %3657 = vmatpush1.msra.mxu0 0.0
    %3658 = vmatprep.subr.mxu0 0.0
    %3659 = vmatpush1.msra.mxu0 0.0
    %3660 = vmatprep.subr.mxu0 0.0
    %3661 = vmatpush1.msra.mxu0 0.0
    %3662 = vmatprep.subr.mxu0 0.0
    %3663 = vmatpush1.msra.mxu0 0.0
    %3664 = vmatprep.subr.mxu0 0.0
    %3665 = vmatpush1.msra.mxu0 0.0
    %3666 = vmatprep.subr.mxu0 0.0
    %3667 = vmatpush1.msra.mxu0 0.0
    %3668 = vmatprep.subr.mxu0 0.0
    %3669 = vmatpush1.msra.mxu0 0.0
    %3670 = vmatprep.subr.mxu0 0.0
    %3671 = vmatpush1.msra.mxu0 0.0
    %3672 = vmatprep.subr.mxu0 0.0
    %3673 = vmatpush1.msra.mxu0 0.0
    %3674 = vmatprep.mubr.f32.mxu0 0.0
    %3675 = vmatmul.mubr.f32.gmra.mrb[0].mxu0 %v3175
    %v3676 = vpop.f32.mrb[0].mxu0
    %v3677 = vadd.f32 0.0, %v3676
    %v3678 = vpop.f32.mrb[0].mxu0
    %v3679 = vadd.f32 0.0, %v3678
    %3680 = vdwg.mxu0
    %3681 = vmatprep.subr.mxu0 %v3412
    %3682 = vmatpush1.msra.mxu0 %v3411
    %3683 = vmatprep.subr.mxu0 %v3416
    %3684 = vmatpush1.msra.mxu0 %v3415
    %3685 = vmatprep.subr.mxu0 %v3420
    %3686 = vmatpush1.msra.mxu0 %v3419
    %3687 = vmatprep.subr.mxu0 %v3424
    %3688 = vmatpush1.msra.mxu0 %v3423
    %3689 = vmatprep.subr.mxu0 %v3428
    %3690 = vmatpush1.msra.mxu0 %v3427
    %3691 = vmatprep.subr.mxu0 %v3432
    %3692 = vmatpush1.msra.mxu0 %v3431
    %3693 = vmatprep.subr.mxu0 %v3436
    %3694 = vmatpush1.msra.mxu0 %v3435
    %3695 = vmatprep.subr.mxu0 %v3440
    %3696 = vmatpush1.msra.mxu0 %v3439
    %3697 = vmatprep.subr.mxu0 %v3444
    %3698 = vmatpush1.msra.mxu0 %v3443
    %3699 = vmatprep.subr.mxu0 %v3448
    %3700 = vmatpush1.msra.mxu0 %v3447
    %3701 = vmatprep.subr.mxu0 %v3452
    %3702 = vmatpush1.msra.mxu0 %v3451
    %3703 = vmatprep.subr.mxu0 %v3456
    %3704 = vmatpush1.msra.mxu0 %v3455
    %3705 = vmatprep.subr.mxu0 %v3460
    %3706 = vmatpush1.msra.mxu0 %v3459
    %3707 = vmatprep.subr.mxu0 %v3464
    %3708 = vmatpush1.msra.mxu0 %v3463
    %3709 = vmatprep.subr.mxu0 %v3468
    %3710 = vmatpush1.msra.mxu0 %v3467
    %3711 = vmatprep.subr.mxu0 %v3472
    %3712 = vmatpush1.msra.mxu0 %v3471
    %3713 = vmatprep.subr.mxu0 0.0
    %3714 = vmatpush1.msra.mxu0 0.0
    %3715 = vmatprep.subr.mxu0 0.0
    %3716 = vmatpush1.msra.mxu0 0.0
    %3717 = vmatprep.subr.mxu0 0.0
    %3718 = vmatpush1.msra.mxu0 0.0
    %3719 = vmatprep.subr.mxu0 0.0
    %3720 = vmatpush1.msra.mxu0 0.0
    %3721 = vmatprep.subr.mxu0 0.0
    %3722 = vmatpush1.msra.mxu0 0.0
    %3723 = vmatprep.subr.mxu0 0.0
    %3724 = vmatpush1.msra.mxu0 0.0
    %3725 = vmatprep.subr.mxu0 0.0
    %3726 = vmatpush1.msra.mxu0 0.0
    %3727 = vmatprep.subr.mxu0 0.0
    %3728 = vmatpush1.msra.mxu0 0.0
    %3729 = vmatprep.subr.mxu0 0.0
    %3730 = vmatpush1.msra.mxu0 0.0
    %3731 = vmatprep.subr.mxu0 0.0
    %3732 = vmatpush1.msra.mxu0 0.0
    %3733 = vmatprep.subr.mxu0 0.0
    %3734 = vmatpush1.msra.mxu0 0.0
    %3735 = vmatprep.subr.mxu0 0.0
    %3736 = vmatpush1.msra.mxu0 0.0
    %3737 = vmatprep.subr.mxu0 0.0
    %3738 = vmatpush1.msra.mxu0 0.0
    %3739 = vmatprep.subr.mxu0 0.0
    %3740 = vmatpush1.msra.mxu0 0.0
    %3741 = vmatprep.subr.mxu0 0.0
    %3742 = vmatpush1.msra.mxu0 0.0
    %3743 = vmatprep.subr.mxu0 0.0
    %3744 = vmatpush1.msra.mxu0 0.0
    %3745 = vmatprep.mubr.f32.mxu0 0.0
    %3746 = vmatmul.mubr.f32.gmra.mrb[0].mxu0 %v3410
    %v3747 = vpop.f32.mrb[0].mxu0
    %v3748 = vadd.f32 %v3606, %v3747
    %v3749 = vpop.f32.mrb[0].mxu0
    %v3750 = vadd.f32 %v3608, %v3749
    %3751 = vdwg.mxu0
    %3752 = vmatprep.subr.mxu0 %v3414
    %3753 = vmatpush1.msra.mxu0 %v3413
    %3754 = vmatprep.subr.mxu0 %v3418
    %3755 = vmatpush1.msra.mxu0 %v3417
    %3756 = vmatprep.subr.mxu0 %v3422
    %3757 = vmatpush1.msra.mxu0 %v3421
    %3758 = vmatprep.subr.mxu0 %v3426
    %3759 = vmatpush1.msra.mxu0 %v3425
    %3760 = vmatprep.subr.mxu0 %v3430
    %3761 = vmatpush1.msra.mxu0 %v3429
    %3762 = vmatprep.subr.mxu0 %v3434
    %3763 = vmatpush1.msra.mxu0 %v3433
    %3764 = vmatprep.subr.mxu0 %v3438
    %3765 = vmatpush1.msra.mxu0 %v3437
    %3766 = vmatprep.subr.mxu0 %v3442
    %3767 = vmatpush1.msra.mxu0 %v3441
    %3768 = vmatprep.subr.mxu0 %v3446
    %3769 = vmatpush1.msra.mxu0 %v3445
    %3770 = vmatprep.subr.mxu0 %v3450
    %3771 = vmatpush1.msra.mxu0 %v3449
    %3772 = vmatprep.subr.mxu0 %v3454
    %3773 = vmatpush1.msra.mxu0 %v3453
    %3774 = vmatprep.subr.mxu0 %v3458
    %3775 = vmatpush1.msra.mxu0 %v3457
    %3776 = vmatprep.subr.mxu0 %v3462
    %3777 = vmatpush1.msra.mxu0 %v3461
    %3778 = vmatprep.subr.mxu0 %v3466
    %3779 = vmatpush1.msra.mxu0 %v3465
    %3780 = vmatprep.subr.mxu0 %v3470
    %3781 = vmatpush1.msra.mxu0 %v3469
    %3782 = vmatprep.subr.mxu0 %v3474
    %3783 = vmatpush1.msra.mxu0 %v3473
    %3784 = vmatprep.subr.mxu0 0.0
    %3785 = vmatpush1.msra.mxu0 0.0
    %3786 = vmatprep.subr.mxu0 0.0
    %3787 = vmatpush1.msra.mxu0 0.0
    %3788 = vmatprep.subr.mxu0 0.0
    %3789 = vmatpush1.msra.mxu0 0.0
    %3790 = vmatprep.subr.mxu0 0.0
    %3791 = vmatpush1.msra.mxu0 0.0
    %3792 = vmatprep.subr.mxu0 0.0
    %3793 = vmatpush1.msra.mxu0 0.0
    %3794 = vmatprep.subr.mxu0 0.0
    %3795 = vmatpush1.msra.mxu0 0.0
    %3796 = vmatprep.subr.mxu0 0.0
    %3797 = vmatpush1.msra.mxu0 0.0
    %3798 = vmatprep.subr.mxu0 0.0
    %3799 = vmatpush1.msra.mxu0 0.0
    %3800 = vmatprep.subr.mxu0 0.0
    %3801 = vmatpush1.msra.mxu0 0.0
    %3802 = vmatprep.subr.mxu0 0.0
    %3803 = vmatpush1.msra.mxu0 0.0
    %3804 = vmatprep.subr.mxu0 0.0
    %3805 = vmatpush1.msra.mxu0 0.0
    %3806 = vmatprep.subr.mxu0 0.0
    %3807 = vmatpush1.msra.mxu0 0.0
    %3808 = vmatprep.subr.mxu0 0.0
    %3809 = vmatpush1.msra.mxu0 0.0
    %3810 = vmatprep.subr.mxu0 0.0
    %3811 = vmatpush1.msra.mxu0 0.0
    %3812 = vmatprep.subr.mxu0 0.0
    %3813 = vmatpush1.msra.mxu0 0.0
    %3814 = vmatprep.subr.mxu0 0.0
    %3815 = vmatpush1.msra.mxu0 0.0
    %3816 = vmatprep.mubr.f32.mxu0 0.0
    %3817 = vmatmul.mubr.f32.gmra.mrb[0].mxu0 %v3410
    %v3818 = vpop.f32.mrb[0].mxu0
    %v3819 = vadd.f32 %v3677, %v3818
    %v3820 = vpop.f32.mrb[0].mxu0
    %v3821 = vadd.f32 %v3679, %v3820
    %3822 = vdwg.mxu0
    %v3823 = vld [vmem:[%s6] sm:$0xf]
    %v3825 = vlaneseq
    %v3826 = vshrl.u32 %v3825, 7
    %v3827 = vsub.s32 0, %v3826
    %v3828 = vrot.slane %v3823, %v3827
    %v3829 = vlaneseq
    %v3830 = vshrl.u32 %v3829, 7
    %v3831 = vsub.s32 1, %v3830
    %v3832 = vrot.slane %v3823, %v3831
    %v3833 = vlaneseq
    %v3834 = vshrl.u32 %v3833, 7
    %v3835 = vsub.s32 2, %v3834
    %v3836 = vrot.slane %v3823, %v3835
    %v3837 = vlaneseq
    %v3838 = vshrl.u32 %v3837, 7
    %v3839 = vsub.s32 3, %v3838
    %v3840 = vrot.slane %v3823, %v3839
    %v3845 = vadd.f32 %v3748, %v3828
    %v3846 = vadd.f32 %v3750, %v3832
    %v3847 = vadd.f32 %v3819, %v3836
    %v3848 = vadd.f32 %v3821, %v3840
    %v3849 = vxor.u32 %v3845, 2147483648
    %v3850 = vmul.f32 %v3849, 1.442695
    %v3851 = vpow.pop %v3850
    %v3852 = vadd.f32 %v3851, 1.0
    %v3853 = vrcp.pop %v3852
    %v3854 = vmul.f32 1.0, %v3853
    %v3855 = vxor.u32 %v3846, 2147483648
    %v3856 = vmul.f32 %v3855, 1.442695
    %v3857 = vpow.pop %v3856
    %v3858 = vadd.f32 %v3857, 1.0
    %v3859 = vrcp.pop %v3858
    %v3860 = vmul.f32 1.0, %v3859
    %v3861 = vtanh.pop %v3847
    %v3862 = vxor.u32 %v3848, 2147483648
    %v3863 = vmul.f32 %v3862, 1.442695
    %v3864 = vpow.pop %v3863
    %v3865 = vadd.f32 %v3864, 1.0
    %v3866 = vrcp.pop %v3865
    %v3867 = vmul.f32 1.0, %v3866
    %v3868 = vmul.f32 %v3860, %v3173
    %v3869 = vmul.f32 %v3854, %v3861
    %v3870 = vadd.f32 %v3868, %v3869
    %v3871 = vtanh.pop %v3870
    %v3872 = vmul.f32 %v3867, %v3871
    %3873 = vst [vmem:[#allocation2 + $0x20] sm:$0xff] %v3872
    %v3874 = vld [vmem:[#allocation4] sm:$0xff]
    %v3875 = vld [vmem:[#allocation4 + $0x8] sm:$0xff]
    %v3876 = vld [vmem:[#allocation4 + $0x10] sm:$0xff]
    %v3877 = vld [vmem:[#allocation4 + $0x18] sm:$0xff]
    %v3878 = vld [vmem:[#allocation4 + $0x20] sm:$0xff]
    %v3879 = vld [vmem:[#allocation4 + $0x28] sm:$0xff]
    %v3880 = vld [vmem:[#allocation4 + $0x30] sm:$0xff]
    %v3881 = vld [vmem:[#allocation4 + $0x38] sm:$0xff]
    %v3882 = vld [vmem:[#allocation4 + $0x40] sm:$0xff]
    %v3883 = vld [vmem:[#allocation4 + $0x48] sm:$0xff]
    %v3884 = vld [vmem:[#allocation4 + $0x50] sm:$0xff]
    %v3885 = vld [vmem:[#allocation4 + $0x58] sm:$0xff]
    %v3886 = vld [vmem:[#allocation4 + $0x60] sm:$0xff]
    %v3887 = vld [vmem:[#allocation4 + $0x68] sm:$0xff]
    %v3888 = vld [vmem:[#allocation4 + $0x70] sm:$0xff]
    %v3889 = vld [vmem:[#allocation4 + $0x78] sm:$0xff]
    %v3890 = vld [vmem:[#allocation4 + $0x80] sm:$0xff]
    %v3891 = vld [vmem:[#allocation4 + $0x88] sm:$0xff]
    %v3892 = vld [vmem:[#allocation4 + $0x90] sm:$0xff]
    %v3893 = vld [vmem:[#allocation4 + $0x98] sm:$0xff]
    %v3894 = vld [vmem:[#allocation4 + $0xa0] sm:$0xff]
    %v3895 = vld [vmem:[#allocation4 + $0xa8] sm:$0xff]
    %v3896 = vld [vmem:[#allocation4 + $0xb0] sm:$0xff]
    %v3897 = vld [vmem:[#allocation4 + $0xb8] sm:$0xff]
    %v3898 = vld [vmem:[#allocation4 + $0xc0] sm:$0xff]
    %v3899 = vld [vmem:[#allocation4 + $0xc8] sm:$0xff]
    %v3900 = vld [vmem:[#allocation4 + $0xd0] sm:$0xff]
    %v3901 = vld [vmem:[#allocation4 + $0xd8] sm:$0xff]
    %v3902 = vld [vmem:[#allocation4 + $0xe0] sm:$0xff]
    %v3903 = vld [vmem:[#allocation4 + $0xe8] sm:$0xff]
    %v3904 = vld [vmem:[#allocation4 + $0xf0] sm:$0xff]
    %v3905 = vld [vmem:[#allocation4 + $0xf8] sm:$0xff]
    %v3906 = vld [vmem:[#allocation4 + $0x100] sm:$0xff]
    %v3907 = vld [vmem:[#allocation4 + $0x108] sm:$0xff]
    %v3908 = vld [vmem:[#allocation4 + $0x110] sm:$0xff]
    %v3909 = vld [vmem:[#allocation4 + $0x118] sm:$0xff]
    %v3910 = vld [vmem:[#allocation4 + $0x120] sm:$0xff]
    %v3911 = vld [vmem:[#allocation4 + $0x128] sm:$0xff]
    %v3912 = vld [vmem:[#allocation4 + $0x130] sm:$0xff]
    %v3913 = vld [vmem:[#allocation4 + $0x138] sm:$0xff]
    %v3914 = vld [vmem:[#allocation4 + $0x140] sm:$0xff]
    %v3915 = vld [vmem:[#allocation4 + $0x148] sm:$0xff]
    %v3916 = vld [vmem:[#allocation4 + $0x150] sm:$0xff]
    %v3917 = vld [vmem:[#allocation4 + $0x158] sm:$0xff]
    %v3918 = vld [vmem:[#allocation4 + $0x160] sm:$0xff]
    %v3919 = vld [vmem:[#allocation4 + $0x168] sm:$0xff]
    %v3920 = vld [vmem:[#allocation4 + $0x170] sm:$0xff]
    %v3921 = vld [vmem:[#allocation4 + $0x178] sm:$0xff]
    %v3922 = vld [vmem:[#allocation4 + $0x180] sm:$0xff]
    %v3923 = vld [vmem:[#allocation4 + $0x188] sm:$0xff]
    %v3924 = vld [vmem:[#allocation4 + $0x190] sm:$0xff]
    %v3925 = vld [vmem:[#allocation4 + $0x198] sm:$0xff]
    %v3926 = vld [vmem:[#allocation4 + $0x1a0] sm:$0xff]
    %v3927 = vld [vmem:[#allocation4 + $0x1a8] sm:$0xff]
    %v3928 = vld [vmem:[#allocation4 + $0x1b0] sm:$0xff]
    %v3929 = vld [vmem:[#allocation4 + $0x1b8] sm:$0xff]
    %v3930 = vld [vmem:[#allocation4 + $0x1c0] sm:$0xff]
    %v3931 = vld [vmem:[#allocation4 + $0x1c8] sm:$0xff]
    %v3932 = vld [vmem:[#allocation4 + $0x1d0] sm:$0xff]
    %v3933 = vld [vmem:[#allocation4 + $0x1d8] sm:$0xff]
    %v3934 = vld [vmem:[#allocation4 + $0x1e0] sm:$0xff]
    %v3935 = vld [vmem:[#allocation4 + $0x1e8] sm:$0xff]
    %v3936 = vld [vmem:[#allocation4 + $0x1f0] sm:$0xff]
    %v3937 = vld [vmem:[#allocation4 + $0x1f8] sm:$0xff]
    %3938 = vmatprep.subr.mxu0 %v3875
    %3939 = vmatpush1.msra.mxu0 %v3874
    %3940 = vmatprep.subr.mxu0 %v3879
    %3941 = vmatpush1.msra.mxu0 %v3878
    %3942 = vmatprep.subr.mxu0 %v3883
    %3943 = vmatpush1.msra.mxu0 %v3882
    %3944 = vmatprep.subr.mxu0 %v3887
    %3945 = vmatpush1.msra.mxu0 %v3886
    %3946 = vmatprep.subr.mxu0 %v3891
    %3947 = vmatpush1.msra.mxu0 %v3890
    %3948 = vmatprep.subr.mxu0 %v3895
    %3949 = vmatpush1.msra.mxu0 %v3894
    %3950 = vmatprep.subr.mxu0 %v3899
    %3951 = vmatpush1.msra.mxu0 %v3898
    %3952 = vmatprep.subr.mxu0 %v3903
    %3953 = vmatpush1.msra.mxu0 %v3902
    %3954 = vmatprep.subr.mxu0 %v3907
    %3955 = vmatpush1.msra.mxu0 %v3906
    %3956 = vmatprep.subr.mxu0 %v3911
    %3957 = vmatpush1.msra.mxu0 %v3910
    %3958 = vmatprep.subr.mxu0 %v3915
    %3959 = vmatpush1.msra.mxu0 %v3914
    %3960 = vmatprep.subr.mxu0 %v3919
    %3961 = vmatpush1.msra.mxu0 %v3918
    %3962 = vmatprep.subr.mxu0 %v3923
    %3963 = vmatpush1.msra.mxu0 %v3922
    %3964 = vmatprep.subr.mxu0 %v3927
    %3965 = vmatpush1.msra.mxu0 %v3926
    %3966 = vmatprep.subr.mxu0 %v3931
    %3967 = vmatpush1.msra.mxu0 %v3930
    %3968 = vmatprep.subr.mxu0 %v3935
    %3969 = vmatpush1.msra.mxu0 %v3934
    %3970 = vmatprep.subr.mxu0 0.0
    %3971 = vmatpush1.msra.mxu0 0.0
    %3972 = vmatprep.subr.mxu0 0.0
    %3973 = vmatpush1.msra.mxu0 0.0
    %3974 = vmatprep.subr.mxu0 0.0
    %3975 = vmatpush1.msra.mxu0 0.0
    %3976 = vmatprep.subr.mxu0 0.0
    %3977 = vmatpush1.msra.mxu0 0.0
    %3978 = vmatprep.subr.mxu0 0.0
    %3979 = vmatpush1.msra.mxu0 0.0
    %3980 = vmatprep.subr.mxu0 0.0
    %3981 = vmatpush1.msra.mxu0 0.0
    %3982 = vmatprep.subr.mxu0 0.0
    %3983 = vmatpush1.msra.mxu0 0.0
    %3984 = vmatprep.subr.mxu0 0.0
    %3985 = vmatpush1.msra.mxu0 0.0
    %3986 = vmatprep.subr.mxu0 0.0
    %3987 = vmatpush1.msra.mxu0 0.0
    %3988 = vmatprep.subr.mxu0 0.0
    %3989 = vmatpush1.msra.mxu0 0.0
    %3990 = vmatprep.subr.mxu0 0.0
    %3991 = vmatpush1.msra.mxu0 0.0
    %3992 = vmatprep.subr.mxu0 0.0
    %3993 = vmatpush1.msra.mxu0 0.0
    %3994 = vmatprep.subr.mxu0 0.0
    %3995 = vmatpush1.msra.mxu0 0.0
    %3996 = vmatprep.subr.mxu0 0.0
    %3997 = vmatpush1.msra.mxu0 0.0
    %3998 = vmatprep.subr.mxu0 0.0
    %3999 = vmatpush1.msra.mxu0 0.0
    %4000 = vmatprep.subr.mxu0 0.0
    %4001 = vmatpush1.msra.mxu0 0.0
    %4002 = vmatprep.mubr.f32.mxu0 0.0
    %4003 = vmatmul.mubr.f32.gmra.mrb[0].mxu0 %v3410
    %v4004 = vpop.f32.mrb[0].mxu0
    %v4005 = vadd.f32 0.0, %v4004
    %v4006 = vpop.f32.mrb[0].mxu0
    %v4007 = vadd.f32 0.0, %v4006
    %4008 = vdwg.mxu0
    %4009 = vmatprep.subr.mxu0 %v3877
    %4010 = vmatpush1.msra.mxu0 %v3876
    %4011 = vmatprep.subr.mxu0 %v3881
    %4012 = vmatpush1.msra.mxu0 %v3880
    %4013 = vmatprep.subr.mxu0 %v3885
    %4014 = vmatpush1.msra.mxu0 %v3884
    %4015 = vmatprep.subr.mxu0 %v3889
    %4016 = vmatpush1.msra.mxu0 %v3888
    %4017 = vmatprep.subr.mxu0 %v3893
    %4018 = vmatpush1.msra.mxu0 %v3892
    %4019 = vmatprep.subr.mxu0 %v3897
    %4020 = vmatpush1.msra.mxu0 %v3896
    %4021 = vmatprep.subr.mxu0 %v3901
    %4022 = vmatpush1.msra.mxu0 %v3900
    %4023 = vmatprep.subr.mxu0 %v3905
    %4024 = vmatpush1.msra.mxu0 %v3904
    %4025 = vmatprep.subr.mxu0 %v3909
    %4026 = vmatpush1.msra.mxu0 %v3908
    %4027 = vmatprep.subr.mxu0 %v3913
    %4028 = vmatpush1.msra.mxu0 %v3912
    %4029 = vmatprep.subr.mxu0 %v3917
    %4030 = vmatpush1.msra.mxu0 %v3916
    %4031 = vmatprep.subr.mxu0 %v3921
    %4032 = vmatpush1.msra.mxu0 %v3920
    %4033 = vmatprep.subr.mxu0 %v3925
    %4034 = vmatpush1.msra.mxu0 %v3924
    %4035 = vmatprep.subr.mxu0 %v3929
    %4036 = vmatpush1.msra.mxu0 %v3928
    %4037 = vmatprep.subr.mxu0 %v3933
    %4038 = vmatpush1.msra.mxu0 %v3932
    %4039 = vmatprep.subr.mxu0 %v3937
    %4040 = vmatpush1.msra.mxu0 %v3936
    %4041 = vmatprep.subr.mxu0 0.0
    %4042 = vmatpush1.msra.mxu0 0.0
    %4043 = vmatprep.subr.mxu0 0.0
    %4044 = vmatpush1.msra.mxu0 0.0
    %4045 = vmatprep.subr.mxu0 0.0
    %4046 = vmatpush1.msra.mxu0 0.0
    %4047 = vmatprep.subr.mxu0 0.0
    %4048 = vmatpush1.msra.mxu0 0.0
    %4049 = vmatprep.subr.mxu0 0.0
    %4050 = vmatpush1.msra.mxu0 0.0
    %4051 = vmatprep.subr.mxu0 0.0
    %4052 = vmatpush1.msra.mxu0 0.0
    %4053 = vmatprep.subr.mxu0 0.0
    %4054 = vmatpush1.msra.mxu0 0.0
    %4055 = vmatprep.subr.mxu0 0.0
    %4056 = vmatpush1.msra.mxu0 0.0
    %4057 = vmatprep.subr.mxu0 0.0
    %4058 = vmatpush1.msra.mxu0 0.0
    %4059 = vmatprep.subr.mxu0 0.0
    %4060 = vmatpush1.msra.mxu0 0.0
    %4061 = vmatprep.subr.mxu0 0.0
    %4062 = vmatpush1.msra.mxu0 0.0
    %4063 = vmatprep.subr.mxu0 0.0
    %4064 = vmatpush1.msra.mxu0 0.0
    %4065 = vmatprep.subr.mxu0 0.0
    %4066 = vmatpush1.msra.mxu0 0.0
    %4067 = vmatprep.subr.mxu0 0.0
    %4068 = vmatpush1.msra.mxu0 0.0
    %4069 = vmatprep.subr.mxu0 0.0
    %4070 = vmatpush1.msra.mxu0 0.0
    %4071 = vmatprep.subr.mxu0 0.0
    %4072 = vmatpush1.msra.mxu0 0.0
    %4073 = vmatprep.mubr.f32.mxu0 0.0
    %4074 = vmatmul.mubr.f32.gmra.mrb[0].mxu0 %v3410
    %v4075 = vpop.f32.mrb[0].mxu0
    %v4076 = vadd.f32 0.0, %v4075
    %v4077 = vpop.f32.mrb[0].mxu0
    %v4078 = vadd.f32 0.0, %v4077
    %4079 = vdwg.mxu0
    %v4080 = vadd.f32 %v260, %v4005
    %v4081 = vadd.f32 %v262, %v4007
    %v4082 = vadd.f32 %v373, %v4076
    %v4083 = vadd.f32 %v375, %v4078
    %v4084 = vxor.u32 %v4080, 2147483648
    %v4085 = vmul.f32 %v4084, 1.442695
    %v4086 = vpow.pop %v4085
    %v4087 = vadd.f32 %v4086, 1.0
    %v4088 = vrcp.pop %v4087
    %v4089 = vmul.f32 1.0, %v4088
    %v4090 = vxor.u32 %v4081, 2147483648
    %v4091 = vmul.f32 %v4090, 1.442695
    %v4092 = vpow.pop %v4091
    %v4093 = vadd.f32 %v4092, 1.0
    %v4094 = vrcp.pop %v4093
    %v4095 = vmul.f32 1.0, %v4094
    %v4096 = vtanh.pop %v4082
    %v4097 = vxor.u32 %v4083, 2147483648
    %v4098 = vmul.f32 %v4097, 1.442695
    %v4099 = vpow.pop %v4098
    %v4100 = vadd.f32 %v4099, 1.0
    %v4101 = vrcp.pop %v4100
    %v4102 = vmul.f32 1.0, %v4101
    %v4103 = vmul.f32 %v4095, %v3408
    %v4104 = vmul.f32 %v4089, %v4096
    %v4105 = vadd.f32 %v4103, %v4104
    %v4106 = vtanh.pop %v4105
    %v4107 = vmul.f32 %v4102, %v4106
    %v4108 = vld [vmem:[#allocation6] sm:$0xff]
    %v4109 = vld [vmem:[#allocation6 + $0x8] sm:$0xff]
    %v4110 = vld [vmem:[#allocation6 + $0x10] sm:$0xff]
    %v4111 = vld [vmem:[#allocation6 + $0x18] sm:$0xff]
    %v4112 = vld [vmem:[#allocation6 + $0x20] sm:$0xff]
    %v4113 = vld [vmem:[#allocation6 + $0x28] sm:$0xff]
    %v4114 = vld [vmem:[#allocation6 + $0x30] sm:$0xff]
    %v4115 = vld [vmem:[#allocation6 + $0x38] sm:$0xff]
    %v4116 = vld [vmem:[#allocation6 + $0x40] sm:$0xff]
    %v4117 = vld [vmem:[#allocation6 + $0x48] sm:$0xff]
    %v4118 = vld [vmem:[#allocation6 + $0x50] sm:$0xff]
    %v4119 = vld [vmem:[#allocation6 + $0x58] sm:$0xff]
    %v4120 = vld [vmem:[#allocation6 + $0x60] sm:$0xff]
    %v4121 = vld [vmem:[#allocation6 + $0x68] sm:$0xff]
    %v4122 = vld [vmem:[#allocation6 + $0x70] sm:$0xff]
    %v4123 = vld [vmem:[#allocation6 + $0x78] sm:$0xff]
    %v4124 = vld [vmem:[#allocation6 + $0x80] sm:$0xff]
    %v4125 = vld [vmem:[#allocation6 + $0x88] sm:$0xff]
    %v4126 = vld [vmem:[#allocation6 + $0x90] sm:$0xff]
    %v4127 = vld [vmem:[#allocation6 + $0x98] sm:$0xff]
    %v4128 = vld [vmem:[#allocation6 + $0xa0] sm:$0xff]
    %v4129 = vld [vmem:[#allocation6 + $0xa8] sm:$0xff]
    %v4130 = vld [vmem:[#allocation6 + $0xb0] sm:$0xff]
    %v4131 = vld [vmem:[#allocation6 + $0xb8] sm:$0xff]
    %v4132 = vld [vmem:[#allocation6 + $0xc0] sm:$0xff]
    %v4133 = vld [vmem:[#allocation6 + $0xc8] sm:$0xff]
    %v4134 = vld [vmem:[#allocation6 + $0xd0] sm:$0xff]
    %v4135 = vld [vmem:[#allocation6 + $0xd8] sm:$0xff]
    %v4136 = vld [vmem:[#allocation6 + $0xe0] sm:$0xff]
    %v4137 = vld [vmem:[#allocation6 + $0xe8] sm:$0xff]
    %v4138 = vld [vmem:[#allocation6 + $0xf0] sm:$0xff]
    %v4139 = vld [vmem:[#allocation6 + $0xf8] sm:$0xff]
    %v4140 = vld [vmem:[#allocation6 + $0x100] sm:$0xff]
    %v4141 = vld [vmem:[#allocation6 + $0x108] sm:$0xff]
    %v4142 = vld [vmem:[#allocation6 + $0x110] sm:$0xff]
    %v4143 = vld [vmem:[#allocation6 + $0x118] sm:$0xff]
    %v4144 = vld [vmem:[#allocation6 + $0x120] sm:$0xff]
    %v4145 = vld [vmem:[#allocation6 + $0x128] sm:$0xff]
    %v4146 = vld [vmem:[#allocation6 + $0x130] sm:$0xff]
    %v4147 = vld [vmem:[#allocation6 + $0x138] sm:$0xff]
    %v4148 = vld [vmem:[#allocation6 + $0x140] sm:$0xff]
    %v4149 = vld [vmem:[#allocation6 + $0x148] sm:$0xff]
    %v4150 = vld [vmem:[#allocation6 + $0x150] sm:$0xff]
    %v4151 = vld [vmem:[#allocation6 + $0x158] sm:$0xff]
    %v4152 = vld [vmem:[#allocation6 + $0x160] sm:$0xff]
    %v4153 = vld [vmem:[#allocation6 + $0x168] sm:$0xff]
    %v4154 = vld [vmem:[#allocation6 + $0x170] sm:$0xff]
    %v4155 = vld [vmem:[#allocation6 + $0x178] sm:$0xff]
    %v4156 = vld [vmem:[#allocation6 + $0x180] sm:$0xff]
    %v4157 = vld [vmem:[#allocation6 + $0x188] sm:$0xff]
    %v4158 = vld [vmem:[#allocation6 + $0x190] sm:$0xff]
    %v4159 = vld [vmem:[#allocation6 + $0x198] sm:$0xff]
    %v4160 = vld [vmem:[#allocation6 + $0x1a0] sm:$0xff]
    %v4161 = vld [vmem:[#allocation6 + $0x1a8] sm:$0xff]
    %v4162 = vld [vmem:[#allocation6 + $0x1b0] sm:$0xff]
    %v4163 = vld [vmem:[#allocation6 + $0x1b8] sm:$0xff]
    %v4164 = vld [vmem:[#allocation6 + $0x1c0] sm:$0xff]
    %v4165 = vld [vmem:[#allocation6 + $0x1c8] sm:$0xff]
    %v4166 = vld [vmem:[#allocation6 + $0x1d0] sm:$0xff]
    %v4167 = vld [vmem:[#allocation6 + $0x1d8] sm:$0xff]
    %v4168 = vld [vmem:[#allocation6 + $0x1e0] sm:$0xff]
    %v4169 = vld [vmem:[#allocation6 + $0x1e8] sm:$0xff]
    %v4170 = vld [vmem:[#allocation6 + $0x1f0] sm:$0xff]
    %v4171 = vld [vmem:[#allocation6 + $0x1f8] sm:$0xff]
    %v4172 = vld [vmem:[#allocation8] sm:$0xff]
    %v4173 = vld [vmem:[#allocation8 + $0x8] sm:$0xff]
    %v4174 = vld [vmem:[#allocation8 + $0x10] sm:$0xff]
    %v4175 = vld [vmem:[#allocation8 + $0x18] sm:$0xff]
    %v4176 = vld [vmem:[#allocation8 + $0x20] sm:$0xff]
    %v4177 = vld [vmem:[#allocation8 + $0x28] sm:$0xff]
    %v4178 = vld [vmem:[#allocation8 + $0x30] sm:$0xff]
    %v4179 = vld [vmem:[#allocation8 + $0x38] sm:$0xff]
    %v4180 = vld [vmem:[#allocation8 + $0x40] sm:$0xff]
    %v4181 = vld [vmem:[#allocation8 + $0x48] sm:$0xff]
    %v4182 = vld [vmem:[#allocation8 + $0x50] sm:$0xff]
    %v4183 = vld [vmem:[#allocation8 + $0x58] sm:$0xff]
    %v4184 = vld [vmem:[#allocation8 + $0x60] sm:$0xff]
    %v4185 = vld [vmem:[#allocation8 + $0x68] sm:$0xff]
    %v4186 = vld [vmem:[#allocation8 + $0x70] sm:$0xff]
    %v4187 = vld [vmem:[#allocation8 + $0x78] sm:$0xff]
    %v4188 = vld [vmem:[#allocation8 + $0x80] sm:$0xff]
    %v4189 = vld [vmem:[#allocation8 + $0x88] sm:$0xff]
    %v4190 = vld [vmem:[#allocation8 + $0x90] sm:$0xff]
    %v4191 = vld [vmem:[#allocation8 + $0x98] sm:$0xff]
    %v4192 = vld [vmem:[#allocation8 + $0xa0] sm:$0xff]
    %v4193 = vld [vmem:[#allocation8 + $0xa8] sm:$0xff]
    %v4194 = vld [vmem:[#allocation8 + $0xb0] sm:$0xff]
    %v4195 = vld [vmem:[#allocation8 + $0xb8] sm:$0xff]
    %v4196 = vld [vmem:[#allocation8 + $0xc0] sm:$0xff]
    %v4197 = vld [vmem:[#allocation8 + $0xc8] sm:$0xff]
    %v4198 = vld [vmem:[#allocation8 + $0xd0] sm:$0xff]
    %v4199 = vld [vmem:[#allocation8 + $0xd8] sm:$0xff]
    %v4200 = vld [vmem:[#allocation8 + $0xe0] sm:$0xff]
    %v4201 = vld [vmem:[#allocation8 + $0xe8] sm:$0xff]
    %v4202 = vld [vmem:[#allocation8 + $0xf0] sm:$0xff]
    %v4203 = vld [vmem:[#allocation8 + $0xf8] sm:$0xff]
    %v4204 = vld [vmem:[#allocation8 + $0x100] sm:$0xff]
    %v4205 = vld [vmem:[#allocation8 + $0x108] sm:$0xff]
    %v4206 = vld [vmem:[#allocation8 + $0x110] sm:$0xff]
    %v4207 = vld [vmem:[#allocation8 + $0x118] sm:$0xff]
    %v4208 = vld [vmem:[#allocation8 + $0x120] sm:$0xff]
    %v4209 = vld [vmem:[#allocation8 + $0x128] sm:$0xff]
    %v4210 = vld [vmem:[#allocation8 + $0x130] sm:$0xff]
    %v4211 = vld [vmem:[#allocation8 + $0x138] sm:$0xff]
    %v4212 = vld [vmem:[#allocation8 + $0x140] sm:$0xff]
    %v4213 = vld [vmem:[#allocation8 + $0x148] sm:$0xff]
    %v4214 = vld [vmem:[#allocation8 + $0x150] sm:$0xff]
    %v4215 = vld [vmem:[#allocation8 + $0x158] sm:$0xff]
    %v4216 = vld [vmem:[#allocation8 + $0x160] sm:$0xff]
    %v4217 = vld [vmem:[#allocation8 + $0x168] sm:$0xff]
    %v4218 = vld [vmem:[#allocation8 + $0x170] sm:$0xff]
    %v4219 = vld [vmem:[#allocation8 + $0x178] sm:$0xff]
    %v4220 = vld [vmem:[#allocation8 + $0x180] sm:$0xff]
    %v4221 = vld [vmem:[#allocation8 + $0x188] sm:$0xff]
    %v4222 = vld [vmem:[#allocation8 + $0x190] sm:$0xff]
    %v4223 = vld [vmem:[#allocation8 + $0x198] sm:$0xff]
    %v4224 = vld [vmem:[#allocation8 + $0x1a0] sm:$0xff]
    %v4225 = vld [vmem:[#allocation8 + $0x1a8] sm:$0xff]
    %v4226 = vld [vmem:[#allocation8 + $0x1b0] sm:$0xff]
    %v4227 = vld [vmem:[#allocation8 + $0x1b8] sm:$0xff]
    %v4228 = vld [vmem:[#allocation8 + $0x1c0] sm:$0xff]
    %v4229 = vld [vmem:[#allocation8 + $0x1c8] sm:$0xff]
    %v4230 = vld [vmem:[#allocation8 + $0x1d0] sm:$0xff]
    %v4231 = vld [vmem:[#allocation8 + $0x1d8] sm:$0xff]
    %v4232 = vld [vmem:[#allocation8 + $0x1e0] sm:$0xff]
    %v4233 = vld [vmem:[#allocation8 + $0x1e8] sm:$0xff]
    %v4234 = vld [vmem:[#allocation8 + $0x1f0] sm:$0xff]
    %v4235 = vld [vmem:[#allocation8 + $0x1f8] sm:$0xff]
    %4236 = vmatprep.subr.mxu0 %v4173
    %4237 = vmatpush1.msra.mxu0 %v4172
    %4238 = vmatprep.subr.mxu0 %v4177
    %4239 = vmatpush1.msra.mxu0 %v4176
    %4240 = vmatprep.subr.mxu0 %v4181
    %4241 = vmatpush1.msra.mxu0 %v4180
    %4242 = vmatprep.subr.mxu0 %v4185
    %4243 = vmatpush1.msra.mxu0 %v4184
    %4244 = vmatprep.subr.mxu0 %v4189
    %4245 = vmatpush1.msra.mxu0 %v4188
    %4246 = vmatprep.subr.mxu0 %v4193
    %4247 = vmatpush1.msra.mxu0 %v4192
    %4248 = vmatprep.subr.mxu0 %v4197
    %4249 = vmatpush1.msra.mxu0 %v4196
    %4250 = vmatprep.subr.mxu0 %v4201
    %4251 = vmatpush1.msra.mxu0 %v4200
    %4252 = vmatprep.subr.mxu0 %v4205
    %4253 = vmatpush1.msra.mxu0 %v4204
    %4254 = vmatprep.subr.mxu0 %v4209
    %4255 = vmatpush1.msra.mxu0 %v4208
    %4256 = vmatprep.subr.mxu0 %v4213
    %4257 = vmatpush1.msra.mxu0 %v4212
    %4258 = vmatprep.subr.mxu0 %v4217
    %4259 = vmatpush1.msra.mxu0 %v4216
    %4260 = vmatprep.subr.mxu0 %v4221
    %4261 = vmatpush1.msra.mxu0 %v4220
    %4262 = vmatprep.subr.mxu0 %v4225
    %4263 = vmatpush1.msra.mxu0 %v4224
    %4264 = vmatprep.subr.mxu0 %v4229
    %4265 = vmatpush1.msra.mxu0 %v4228
    %4266 = vmatprep.subr.mxu0 %v4233
    %4267 = vmatpush1.msra.mxu0 %v4232
    %4268 = vmatprep.subr.mxu0 0.0
    %4269 = vmatpush1.msra.mxu0 0.0
    %4270 = vmatprep.subr.mxu0 0.0
    %4271 = vmatpush1.msra.mxu0 0.0
    %4272 = vmatprep.subr.mxu0 0.0
    %4273 = vmatpush1.msra.mxu0 0.0
    %4274 = vmatprep.subr.mxu0 0.0
    %4275 = vmatpush1.msra.mxu0 0.0
    %4276 = vmatprep.subr.mxu0 0.0
    %4277 = vmatpush1.msra.mxu0 0.0
    %4278 = vmatprep.subr.mxu0 0.0
    %4279 = vmatpush1.msra.mxu0 0.0
    %4280 = vmatprep.subr.mxu0 0.0
    %4281 = vmatpush1.msra.mxu0 0.0
    %4282 = vmatprep.subr.mxu0 0.0
    %4283 = vmatpush1.msra.mxu0 0.0
    %4284 = vmatprep.subr.mxu0 0.0
    %4285 = vmatpush1.msra.mxu0 0.0
    %4286 = vmatprep.subr.mxu0 0.0
    %4287 = vmatpush1.msra.mxu0 0.0
    %4288 = vmatprep.subr.mxu0 0.0
    %4289 = vmatpush1.msra.mxu0 0.0
    %4290 = vmatprep.subr.mxu0 0.0
    %4291 = vmatpush1.msra.mxu0 0.0
    %4292 = vmatprep.subr.mxu0 0.0
    %4293 = vmatpush1.msra.mxu0 0.0
    %4294 = vmatprep.subr.mxu0 0.0
    %4295 = vmatpush1.msra.mxu0 0.0
    %4296 = vmatprep.subr.mxu0 0.0
    %4297 = vmatpush1.msra.mxu0 0.0
    %4298 = vmatprep.subr.mxu0 0.0
    %4299 = vmatpush1.msra.mxu0 0.0
    %4300 = vmatprep.mubr.f32.mxu0 0.0
    %4301 = vmatmul.mubr.f32.gmra.mrb[0].mxu0 %v3872
    %v4302 = vpop.f32.mrb[0].mxu0
    %v4303 = vadd.f32 0.0, %v4302
    %v4304 = vpop.f32.mrb[0].mxu0
    %v4305 = vadd.f32 0.0, %v4304
    %4306 = vdwg.mxu0
    %4307 = vmatprep.subr.mxu0 %v4175
    %4308 = vmatpush1.msra.mxu0 %v4174
    %4309 = vmatprep.subr.mxu0 %v4179
    %4310 = vmatpush1.msra.mxu0 %v4178
    %4311 = vmatprep.subr.mxu0 %v4183
    %4312 = vmatpush1.msra.mxu0 %v4182
    %4313 = vmatprep.subr.mxu0 %v4187
    %4314 = vmatpush1.msra.mxu0 %v4186
    %4315 = vmatprep.subr.mxu0 %v4191
    %4316 = vmatpush1.msra.mxu0 %v4190
    %4317 = vmatprep.subr.mxu0 %v4195
    %4318 = vmatpush1.msra.mxu0 %v4194
    %4319 = vmatprep.subr.mxu0 %v4199
    %4320 = vmatpush1.msra.mxu0 %v4198
    %4321 = vmatprep.subr.mxu0 %v4203
    %4322 = vmatpush1.msra.mxu0 %v4202
    %4323 = vmatprep.subr.mxu0 %v4207
    %4324 = vmatpush1.msra.mxu0 %v4206
    %4325 = vmatprep.subr.mxu0 %v4211
    %4326 = vmatpush1.msra.mxu0 %v4210
    %4327 = vmatprep.subr.mxu0 %v4215
    %4328 = vmatpush1.msra.mxu0 %v4214
    %4329 = vmatprep.subr.mxu0 %v4219
    %4330 = vmatpush1.msra.mxu0 %v4218
    %4331 = vmatprep.subr.mxu0 %v4223
    %4332 = vmatpush1.msra.mxu0 %v4222
    %4333 = vmatprep.subr.mxu0 %v4227
    %4334 = vmatpush1.msra.mxu0 %v4226
    %4335 = vmatprep.subr.mxu0 %v4231
    %4336 = vmatpush1.msra.mxu0 %v4230
    %4337 = vmatprep.subr.mxu0 %v4235
    %4338 = vmatpush1.msra.mxu0 %v4234
    %4339 = vmatprep.subr.mxu0 0.0
    %4340 = vmatpush1.msra.mxu0 0.0
    %4341 = vmatprep.subr.mxu0 0.0
    %4342 = vmatpush1.msra.mxu0 0.0
    %4343 = vmatprep.subr.mxu0 0.0
    %4344 = vmatpush1.msra.mxu0 0.0
    %4345 = vmatprep.subr.mxu0 0.0
    %4346 = vmatpush1.msra.mxu0 0.0
    %4347 = vmatprep.subr.mxu0 0.0
    %4348 = vmatpush1.msra.mxu0 0.0
    %4349 = vmatprep.subr.mxu0 0.0
    %4350 = vmatpush1.msra.mxu0 0.0
    %4351 = vmatprep.subr.mxu0 0.0
    %4352 = vmatpush1.msra.mxu0 0.0
    %4353 = vmatprep.subr.mxu0 0.0
    %4354 = vmatpush1.msra.mxu0 0.0
    %4355 = vmatprep.subr.mxu0 0.0
    %4356 = vmatpush1.msra.mxu0 0.0
    %4357 = vmatprep.subr.mxu0 0.0
    %4358 = vmatpush1.msra.mxu0 0.0
    %4359 = vmatprep.subr.mxu0 0.0
    %4360 = vmatpush1.msra.mxu0 0.0
    %4361 = vmatprep.subr.mxu0 0.0
    %4362 = vmatpush1.msra.mxu0 0.0
    %4363 = vmatprep.subr.mxu0 0.0
    %4364 = vmatpush1.msra.mxu0 0.0
    %4365 = vmatprep.subr.mxu0 0.0
    %4366 = vmatpush1.msra.mxu0 0.0
    %4367 = vmatprep.subr.mxu0 0.0
    %4368 = vmatpush1.msra.mxu0 0.0
    %4369 = vmatprep.subr.mxu0 0.0
    %4370 = vmatpush1.msra.mxu0 0.0
    %4371 = vmatprep.mubr.f32.mxu0 0.0
    %4372 = vmatmul.mubr.f32.gmra.mrb[0].mxu0 %v3872
    %v4373 = vpop.f32.mrb[0].mxu0
    %v4374 = vadd.f32 0.0, %v4373
    %v4375 = vpop.f32.mrb[0].mxu0
    %v4376 = vadd.f32 0.0, %v4375
    %4377 = vdwg.mxu0
    %4378 = vmatprep.subr.mxu0 %v4109
    %4379 = vmatpush1.msra.mxu0 %v4108
    %4380 = vmatprep.subr.mxu0 %v4113
    %4381 = vmatpush1.msra.mxu0 %v4112
    %4382 = vmatprep.subr.mxu0 %v4117
    %4383 = vmatpush1.msra.mxu0 %v4116
    %4384 = vmatprep.subr.mxu0 %v4121
    %4385 = vmatpush1.msra.mxu0 %v4120
    %4386 = vmatprep.subr.mxu0 %v4125
    %4387 = vmatpush1.msra.mxu0 %v4124
    %4388 = vmatprep.subr.mxu0 %v4129
    %4389 = vmatpush1.msra.mxu0 %v4128
    %4390 = vmatprep.subr.mxu0 %v4133
    %4391 = vmatpush1.msra.mxu0 %v4132
    %4392 = vmatprep.subr.mxu0 %v4137
    %4393 = vmatpush1.msra.mxu0 %v4136
    %4394 = vmatprep.subr.mxu0 %v4141
    %4395 = vmatpush1.msra.mxu0 %v4140
    %4396 = vmatprep.subr.mxu0 %v4145
    %4397 = vmatpush1.msra.mxu0 %v4144
    %4398 = vmatprep.subr.mxu0 %v4149
    %4399 = vmatpush1.msra.mxu0 %v4148
    %4400 = vmatprep.subr.mxu0 %v4153
    %4401 = vmatpush1.msra.mxu0 %v4152
    %4402 = vmatprep.subr.mxu0 %v4157
    %4403 = vmatpush1.msra.mxu0 %v4156
    %4404 = vmatprep.subr.mxu0 %v4161
    %4405 = vmatpush1.msra.mxu0 %v4160
    %4406 = vmatprep.subr.mxu0 %v4165
    %4407 = vmatpush1.msra.mxu0 %v4164
    %4408 = vmatprep.subr.mxu0 %v4169
    %4409 = vmatpush1.msra.mxu0 %v4168
    %4410 = vmatprep.subr.mxu0 0.0
    %4411 = vmatpush1.msra.mxu0 0.0
    %4412 = vmatprep.subr.mxu0 0.0
    %4413 = vmatpush1.msra.mxu0 0.0
    %4414 = vmatprep.subr.mxu0 0.0
    %4415 = vmatpush1.msra.mxu0 0.0
    %4416 = vmatprep.subr.mxu0 0.0
    %4417 = vmatpush1.msra.mxu0 0.0
    %4418 = vmatprep.subr.mxu0 0.0
    %4419 = vmatpush1.msra.mxu0 0.0
    %4420 = vmatprep.subr.mxu0 0.0
    %4421 = vmatpush1.msra.mxu0 0.0
    %4422 = vmatprep.subr.mxu0 0.0
    %4423 = vmatpush1.msra.mxu0 0.0
    %4424 = vmatprep.subr.mxu0 0.0
    %4425 = vmatpush1.msra.mxu0 0.0
    %4426 = vmatprep.subr.mxu0 0.0
    %4427 = vmatpush1.msra.mxu0 0.0
    %4428 = vmatprep.subr.mxu0 0.0
    %4429 = vmatpush1.msra.mxu0 0.0
    %4430 = vmatprep.subr.mxu0 0.0
    %4431 = vmatpush1.msra.mxu0 0.0
    %4432 = vmatprep.subr.mxu0 0.0
    %4433 = vmatpush1.msra.mxu0 0.0
    %4434 = vmatprep.subr.mxu0 0.0
    %4435 = vmatpush1.msra.mxu0 0.0
    %4436 = vmatprep.subr.mxu0 0.0
    %4437 = vmatpush1.msra.mxu0 0.0
    %4438 = vmatprep.subr.mxu0 0.0
    %4439 = vmatpush1.msra.mxu0 0.0
    %4440 = vmatprep.subr.mxu0 0.0
    %4441 = vmatpush1.msra.mxu0 0.0
    %4442 = vmatprep.mubr.f32.mxu0 0.0
    %4443 = vmatmul.mubr.f32.gmra.mrb[0].mxu0 %v4107
    %v4444 = vpop.f32.mrb[0].mxu0
    %v4445 = vadd.f32 %v4303, %v4444
    %v4446 = vpop.f32.mrb[0].mxu0
    %v4447 = vadd.f32 %v4305, %v4446
    %4448 = vdwg.mxu0
    %4449 = vmatprep.subr.mxu0 %v4111
    %4450 = vmatpush1.msra.mxu0 %v4110
    %4451 = vmatprep.subr.mxu0 %v4115
    %4452 = vmatpush1.msra.mxu0 %v4114
    %4453 = vmatprep.subr.mxu0 %v4119
    %4454 = vmatpush1.msra.mxu0 %v4118
    %4455 = vmatprep.subr.mxu0 %v4123
    %4456 = vmatpush1.msra.mxu0 %v4122
    %4457 = vmatprep.subr.mxu0 %v4127
    %4458 = vmatpush1.msra.mxu0 %v4126
    %4459 = vmatprep.subr.mxu0 %v4131
    %4460 = vmatpush1.msra.mxu0 %v4130
    %4461 = vmatprep.subr.mxu0 %v4135
    %4462 = vmatpush1.msra.mxu0 %v4134
    %4463 = vmatprep.subr.mxu0 %v4139
    %4464 = vmatpush1.msra.mxu0 %v4138
    %4465 = vmatprep.subr.mxu0 %v4143
    %4466 = vmatpush1.msra.mxu0 %v4142
    %4467 = vmatprep.subr.mxu0 %v4147
    %4468 = vmatpush1.msra.mxu0 %v4146
    %4469 = vmatprep.subr.mxu0 %v4151
    %4470 = vmatpush1.msra.mxu0 %v4150
    %4471 = vmatprep.subr.mxu0 %v4155
    %4472 = vmatpush1.msra.mxu0 %v4154
    %4473 = vmatprep.subr.mxu0 %v4159
    %4474 = vmatpush1.msra.mxu0 %v4158
    %4475 = vmatprep.subr.mxu0 %v4163
    %4476 = vmatpush1.msra.mxu0 %v4162
    %4477 = vmatprep.subr.mxu0 %v4167
    %4478 = vmatpush1.msra.mxu0 %v4166
    %4479 = vmatprep.subr.mxu0 %v4171
    %4480 = vmatpush1.msra.mxu0 %v4170
    %4481 = vmatprep.subr.mxu0 0.0
    %4482 = vmatpush1.msra.mxu0 0.0
    %4483 = vmatprep.subr.mxu0 0.0
    %4484 = vmatpush1.msra.mxu0 0.0
    %4485 = vmatprep.subr.mxu0 0.0
    %4486 = vmatpush1.msra.mxu0 0.0
    %4487 = vmatprep.subr.mxu0 0.0
    %4488 = vmatpush1.msra.mxu0 0.0
    %4489 = vmatprep.subr.mxu0 0.0
    %4490 = vmatpush1.msra.mxu0 0.0
    %4491 = vmatprep.subr.mxu0 0.0
    %4492 = vmatpush1.msra.mxu0 0.0
    %4493 = vmatprep.subr.mxu0 0.0
    %4494 = vmatpush1.msra.mxu0 0.0
    %4495 = vmatprep.subr.mxu0 0.0
    %4496 = vmatpush1.msra.mxu0 0.0
    %4497 = vmatprep.subr.mxu0 0.0
    %4498 = vmatpush1.msra.mxu0 0.0
    %4499 = vmatprep.subr.mxu0 0.0
    %4500 = vmatpush1.msra.mxu0 0.0
    %4501 = vmatprep.subr.mxu0 0.0
    %4502 = vmatpush1.msra.mxu0 0.0
    %4503 = vmatprep.subr.mxu0 0.0
    %4504 = vmatpush1.msra.mxu0 0.0
    %4505 = vmatprep.subr.mxu0 0.0
    %4506 = vmatpush1.msra.mxu0 0.0
    %4507 = vmatprep.subr.mxu0 0.0
    %4508 = vmatpush1.msra.mxu0 0.0
    %4509 = vmatprep.subr.mxu0 0.0
    %4510 = vmatpush1.msra.mxu0 0.0
    %4511 = vmatprep.subr.mxu0 0.0
    %4512 = vmatpush1.msra.mxu0 0.0
    %4513 = vmatprep.mubr.f32.mxu0 0.0
    %4514 = vmatmul.mubr.f32.gmra.mrb[0].mxu0 %v4107
    %v4515 = vpop.f32.mrb[0].mxu0
    %v4516 = vadd.f32 %v4374, %v4515
    %v4517 = vpop.f32.mrb[0].mxu0
    %v4518 = vadd.f32 %v4376, %v4517
    %4519 = vdwg.mxu0
    %v4520 = vld [vmem:[%s6] sm:$0xf]
    %v4522 = vlaneseq
    %v4523 = vshrl.u32 %v4522, 7
    %v4524 = vsub.s32 0, %v4523
    %v4525 = vrot.slane %v4520, %v4524
    %v4526 = vlaneseq
    %v4527 = vshrl.u32 %v4526, 7
    %v4528 = vsub.s32 1, %v4527
    %v4529 = vrot.slane %v4520, %v4528
    %v4530 = vlaneseq
    %v4531 = vshrl.u32 %v4530, 7
    %v4532 = vsub.s32 2, %v4531
    %v4533 = vrot.slane %v4520, %v4532
    %v4534 = vlaneseq
    %v4535 = vshrl.u32 %v4534, 7
    %v4536 = vsub.s32 3, %v4535
    %v4537 = vrot.slane %v4520, %v4536
    %v4542 = vadd.f32 %v4445, %v4525
    %v4543 = vadd.f32 %v4447, %v4529
    %v4544 = vadd.f32 %v4516, %v4533
    %v4545 = vadd.f32 %v4518, %v4537
    %v4546 = vxor.u32 %v4542, 2147483648
    %v4547 = vmul.f32 %v4546, 1.442695
    %v4548 = vpow.pop %v4547
    %v4549 = vadd.f32 %v4548, 1.0
    %v4550 = vrcp.pop %v4549
    %v4551 = vmul.f32 1.0, %v4550
    %v4552 = vxor.u32 %v4543, 2147483648
    %v4553 = vmul.f32 %v4552, 1.442695
    %v4554 = vpow.pop %v4553
    %v4555 = vadd.f32 %v4554, 1.0
    %v4556 = vrcp.pop %v4555
    %v4557 = vmul.f32 1.0, %v4556
    %v4558 = vtanh.pop %v4544
    %v4559 = vxor.u32 %v4545, 2147483648
    %v4560 = vmul.f32 %v4559, 1.442695
    %v4561 = vpow.pop %v4560
    %v4562 = vadd.f32 %v4561, 1.0
    %v4563 = vrcp.pop %v4562
    %v4564 = vmul.f32 1.0, %v4563
    %v4565 = vmul.f32 %v4557, %v3870
    %v4566 = vmul.f32 %v4551, %v4558
    %v4567 = vadd.f32 %v4565, %v4566
    %v4568 = vtanh.pop %v4567
    %v4569 = vmul.f32 %v4564, %v4568
    %4570 = vst [vmem:[#allocation2 + $0x28] sm:$0xff] %v4569
    %v4571 = vld [vmem:[#allocation4] sm:$0xff]
    %v4572 = vld [vmem:[#allocation4 + $0x8] sm:$0xff]
    %v4573 = vld [vmem:[#allocation4 + $0x10] sm:$0xff]
    %v4574 = vld [vmem:[#allocation4 + $0x18] sm:$0xff]
    %v4575 = vld [vmem:[#allocation4 + $0x20] sm:$0xff]
    %v4576 = vld [vmem:[#allocation4 + $0x28] sm:$0xff]
    %v4577 = vld [vmem:[#allocation4 + $0x30] sm:$0xff]
    %v4578 = vld [vmem:[#allocation4 + $0x38] sm:$0xff]
    %v4579 = vld [vmem:[#allocation4 + $0x40] sm:$0xff]
    %v4580 = vld [vmem:[#allocation4 + $0x48] sm:$0xff]
    %v4581 = vld [vmem:[#allocation4 + $0x50] sm:$0xff]
    %v4582 = vld [vmem:[#allocation4 + $0x58] sm:$0xff]
    %v4583 = vld [vmem:[#allocation4 + $0x60] sm:$0xff]
    %v4584 = vld [vmem:[#allocation4 + $0x68] sm:$0xff]
    %v4585 = vld [vmem:[#allocation4 + $0x70] sm:$0xff]
    %v4586 = vld [vmem:[#allocation4 + $0x78] sm:$0xff]
    %v4587 = vld [vmem:[#allocation4 + $0x80] sm:$0xff]
    %v4588 = vld [vmem:[#allocation4 + $0x88] sm:$0xff]
    %v4589 = vld [vmem:[#allocation4 + $0x90] sm:$0xff]
    %v4590 = vld [vmem:[#allocation4 + $0x98] sm:$0xff]
    %v4591 = vld [vmem:[#allocation4 + $0xa0] sm:$0xff]
    %v4592 = vld [vmem:[#allocation4 + $0xa8] sm:$0xff]
    %v4593 = vld [vmem:[#allocation4 + $0xb0] sm:$0xff]
    %v4594 = vld [vmem:[#allocation4 + $0xb8] sm:$0xff]
    %v4595 = vld [vmem:[#allocation4 + $0xc0] sm:$0xff]
    %v4596 = vld [vmem:[#allocation4 + $0xc8] sm:$0xff]
    %v4597 = vld [vmem:[#allocation4 + $0xd0] sm:$0xff]
    %v4598 = vld [vmem:[#allocation4 + $0xd8] sm:$0xff]
    %v4599 = vld [vmem:[#allocation4 + $0xe0] sm:$0xff]
    %v4600 = vld [vmem:[#allocation4 + $0xe8] sm:$0xff]
    %v4601 = vld [vmem:[#allocation4 + $0xf0] sm:$0xff]
    %v4602 = vld [vmem:[#allocation4 + $0xf8] sm:$0xff]
    %v4603 = vld [vmem:[#allocation4 + $0x100] sm:$0xff]
    %v4604 = vld [vmem:[#allocation4 + $0x108] sm:$0xff]
    %v4605 = vld [vmem:[#allocation4 + $0x110] sm:$0xff]
    %v4606 = vld [vmem:[#allocation4 + $0x118] sm:$0xff]
    %v4607 = vld [vmem:[#allocation4 + $0x120] sm:$0xff]
    %v4608 = vld [vmem:[#allocation4 + $0x128] sm:$0xff]
    %v4609 = vld [vmem:[#allocation4 + $0x130] sm:$0xff]
    %v4610 = vld [vmem:[#allocation4 + $0x138] sm:$0xff]
    %v4611 = vld [vmem:[#allocation4 + $0x140] sm:$0xff]
    %v4612 = vld [vmem:[#allocation4 + $0x148] sm:$0xff]
    %v4613 = vld [vmem:[#allocation4 + $0x150] sm:$0xff]
    %v4614 = vld [vmem:[#allocation4 + $0x158] sm:$0xff]
    %v4615 = vld [vmem:[#allocation4 + $0x160] sm:$0xff]
    %v4616 = vld [vmem:[#allocation4 + $0x168] sm:$0xff]
    %v4617 = vld [vmem:[#allocation4 + $0x170] sm:$0xff]
    %v4618 = vld [vmem:[#allocation4 + $0x178] sm:$0xff]
    %v4619 = vld [vmem:[#allocation4 + $0x180] sm:$0xff]
    %v4620 = vld [vmem:[#allocation4 + $0x188] sm:$0xff]
    %v4621 = vld [vmem:[#allocation4 + $0x190] sm:$0xff]
    %v4622 = vld [vmem:[#allocation4 + $0x198] sm:$0xff]
    %v4623 = vld [vmem:[#allocation4 + $0x1a0] sm:$0xff]
    %v4624 = vld [vmem:[#allocation4 + $0x1a8] sm:$0xff]
    %v4625 = vld [vmem:[#allocation4 + $0x1b0] sm:$0xff]
    %v4626 = vld [vmem:[#allocation4 + $0x1b8] sm:$0xff]
    %v4627 = vld [vmem:[#allocation4 + $0x1c0] sm:$0xff]
    %v4628 = vld [vmem:[#allocation4 + $0x1c8] sm:$0xff]
    %v4629 = vld [vmem:[#allocation4 + $0x1d0] sm:$0xff]
    %v4630 = vld [vmem:[#allocation4 + $0x1d8] sm:$0xff]
    %v4631 = vld [vmem:[#allocation4 + $0x1e0] sm:$0xff]
    %v4632 = vld [vmem:[#allocation4 + $0x1e8] sm:$0xff]
    %v4633 = vld [vmem:[#allocation4 + $0x1f0] sm:$0xff]
    %v4634 = vld [vmem:[#allocation4 + $0x1f8] sm:$0xff]
    %4635 = vmatprep.subr.mxu0 %v4572
    %4636 = vmatpush1.msra.mxu0 %v4571
    %4637 = vmatprep.subr.mxu0 %v4576
    %4638 = vmatpush1.msra.mxu0 %v4575
    %4639 = vmatprep.subr.mxu0 %v4580
    %4640 = vmatpush1.msra.mxu0 %v4579
    %4641 = vmatprep.subr.mxu0 %v4584
    %4642 = vmatpush1.msra.mxu0 %v4583
    %4643 = vmatprep.subr.mxu0 %v4588
    %4644 = vmatpush1.msra.mxu0 %v4587
    %4645 = vmatprep.subr.mxu0 %v4592
    %4646 = vmatpush1.msra.mxu0 %v4591
    %4647 = vmatprep.subr.mxu0 %v4596
    %4648 = vmatpush1.msra.mxu0 %v4595
    %4649 = vmatprep.subr.mxu0 %v4600
    %4650 = vmatpush1.msra.mxu0 %v4599
    %4651 = vmatprep.subr.mxu0 %v4604
    %4652 = vmatpush1.msra.mxu0 %v4603
    %4653 = vmatprep.subr.mxu0 %v4608
    %4654 = vmatpush1.msra.mxu0 %v4607
    %4655 = vmatprep.subr.mxu0 %v4612
    %4656 = vmatpush1.msra.mxu0 %v4611
    %4657 = vmatprep.subr.mxu0 %v4616
    %4658 = vmatpush1.msra.mxu0 %v4615
    %4659 = vmatprep.subr.mxu0 %v4620
    %4660 = vmatpush1.msra.mxu0 %v4619
    %4661 = vmatprep.subr.mxu0 %v4624
    %4662 = vmatpush1.msra.mxu0 %v4623
    %4663 = vmatprep.subr.mxu0 %v4628
    %4664 = vmatpush1.msra.mxu0 %v4627
    %4665 = vmatprep.subr.mxu0 %v4632
    %4666 = vmatpush1.msra.mxu0 %v4631
    %4667 = vmatprep.subr.mxu0 0.0
    %4668 = vmatpush1.msra.mxu0 0.0
    %4669 = vmatprep.subr.mxu0 0.0
    %4670 = vmatpush1.msra.mxu0 0.0
    %4671 = vmatprep.subr.mxu0 0.0
    %4672 = vmatpush1.msra.mxu0 0.0
    %4673 = vmatprep.subr.mxu0 0.0
    %4674 = vmatpush1.msra.mxu0 0.0
    %4675 = vmatprep.subr.mxu0 0.0
    %4676 = vmatpush1.msra.mxu0 0.0
    %4677 = vmatprep.subr.mxu0 0.0
    %4678 = vmatpush1.msra.mxu0 0.0
    %4679 = vmatprep.subr.mxu0 0.0
    %4680 = vmatpush1.msra.mxu0 0.0
    %4681 = vmatprep.subr.mxu0 0.0
    %4682 = vmatpush1.msra.mxu0 0.0
    %4683 = vmatprep.subr.mxu0 0.0
    %4684 = vmatpush1.msra.mxu0 0.0
    %4685 = vmatprep.subr.mxu0 0.0
    %4686 = vmatpush1.msra.mxu0 0.0
    %4687 = vmatprep.subr.mxu0 0.0
    %4688 = vmatpush1.msra.mxu0 0.0
    %4689 = vmatprep.subr.mxu0 0.0
    %4690 = vmatpush1.msra.mxu0 0.0
    %4691 = vmatprep.subr.mxu0 0.0
    %4692 = vmatpush1.msra.mxu0 0.0
    %4693 = vmatprep.subr.mxu0 0.0
    %4694 = vmatpush1.msra.mxu0 0.0
    %4695 = vmatprep.subr.mxu0 0.0
    %4696 = vmatpush1.msra.mxu0 0.0
    %4697 = vmatprep.subr.mxu0 0.0
    %4698 = vmatpush1.msra.mxu0 0.0
    %4699 = vmatprep.mubr.f32.mxu0 0.0
    %4700 = vmatmul.mubr.f32.gmra.mrb[0].mxu0 %v4107
    %v4701 = vpop.f32.mrb[0].mxu0
    %v4702 = vadd.f32 0.0, %v4701
    %v4703 = vpop.f32.mrb[0].mxu0
    %v4704 = vadd.f32 0.0, %v4703
    %4705 = vdwg.mxu0
    %4706 = vmatprep.subr.mxu0 %v4574
    %4707 = vmatpush1.msra.mxu0 %v4573
    %4708 = vmatprep.subr.mxu0 %v4578
    %4709 = vmatpush1.msra.mxu0 %v4577
    %4710 = vmatprep.subr.mxu0 %v4582
    %4711 = vmatpush1.msra.mxu0 %v4581
    %4712 = vmatprep.subr.mxu0 %v4586
    %4713 = vmatpush1.msra.mxu0 %v4585
    %4714 = vmatprep.subr.mxu0 %v4590
    %4715 = vmatpush1.msra.mxu0 %v4589
    %4716 = vmatprep.subr.mxu0 %v4594
    %4717 = vmatpush1.msra.mxu0 %v4593
    %4718 = vmatprep.subr.mxu0 %v4598
    %4719 = vmatpush1.msra.mxu0 %v4597
    %4720 = vmatprep.subr.mxu0 %v4602
    %4721 = vmatpush1.msra.mxu0 %v4601
    %4722 = vmatprep.subr.mxu0 %v4606
    %4723 = vmatpush1.msra.mxu0 %v4605
    %4724 = vmatprep.subr.mxu0 %v4610
    %4725 = vmatpush1.msra.mxu0 %v4609
    %4726 = vmatprep.subr.mxu0 %v4614
    %4727 = vmatpush1.msra.mxu0 %v4613
    %4728 = vmatprep.subr.mxu0 %v4618
    %4729 = vmatpush1.msra.mxu0 %v4617
    %4730 = vmatprep.subr.mxu0 %v4622
    %4731 = vmatpush1.msra.mxu0 %v4621
    %4732 = vmatprep.subr.mxu0 %v4626
    %4733 = vmatpush1.msra.mxu0 %v4625
    %4734 = vmatprep.subr.mxu0 %v4630
    %4735 = vmatpush1.msra.mxu0 %v4629
    %4736 = vmatprep.subr.mxu0 %v4634
    %4737 = vmatpush1.msra.mxu0 %v4633
    %4738 = vmatprep.subr.mxu0 0.0
    %4739 = vmatpush1.msra.mxu0 0.0
    %4740 = vmatprep.subr.mxu0 0.0
    %4741 = vmatpush1.msra.mxu0 0.0
    %4742 = vmatprep.subr.mxu0 0.0
    %4743 = vmatpush1.msra.mxu0 0.0
    %4744 = vmatprep.subr.mxu0 0.0
    %4745 = vmatpush1.msra.mxu0 0.0
    %4746 = vmatprep.subr.mxu0 0.0
    %4747 = vmatpush1.msra.mxu0 0.0
    %4748 = vmatprep.subr.mxu0 0.0
    %4749 = vmatpush1.msra.mxu0 0.0
    %4750 = vmatprep.subr.mxu0 0.0
    %4751 = vmatpush1.msra.mxu0 0.0
    %4752 = vmatprep.subr.mxu0 0.0
    %4753 = vmatpush1.msra.mxu0 0.0
    %4754 = vmatprep.subr.mxu0 0.0
    %4755 = vmatpush1.msra.mxu0 0.0
    %4756 = vmatprep.subr.mxu0 0.0
    %4757 = vmatpush1.msra.mxu0 0.0
    %4758 = vmatprep.subr.mxu0 0.0
    %4759 = vmatpush1.msra.mxu0 0.0
    %4760 = vmatprep.subr.mxu0 0.0
    %4761 = vmatpush1.msra.mxu0 0.0
    %4762 = vmatprep.subr.mxu0 0.0
    %4763 = vmatpush1.msra.mxu0 0.0
    %4764 = vmatprep.subr.mxu0 0.0
    %4765 = vmatpush1.msra.mxu0 0.0
    %4766 = vmatprep.subr.mxu0 0.0
    %4767 = vmatpush1.msra.mxu0 0.0
    %4768 = vmatprep.subr.mxu0 0.0
    %4769 = vmatpush1.msra.mxu0 0.0
    %4770 = vmatprep.mubr.f32.mxu0 0.0
    %4771 = vmatmul.mubr.f32.gmra.mrb[0].mxu0 %v4107
    %v4772 = vpop.f32.mrb[0].mxu0
    %v4773 = vadd.f32 0.0, %v4772
    %v4774 = vpop.f32.mrb[0].mxu0
    %v4775 = vadd.f32 0.0, %v4774
    %4776 = vdwg.mxu0
    %v4777 = vadd.f32 %v266, %v4702
    %v4778 = vadd.f32 %v268, %v4704
    %v4779 = vadd.f32 %v379, %v4773
    %v4780 = vadd.f32 %v381, %v4775
    %v4781 = vxor.u32 %v4777, 2147483648
    %v4782 = vmul.f32 %v4781, 1.442695
    %v4783 = vpow.pop %v4782
    %v4784 = vadd.f32 %v4783, 1.0
    %v4785 = vrcp.pop %v4784
    %v4786 = vmul.f32 1.0, %v4785
    %v4787 = vxor.u32 %v4778, 2147483648
    %v4788 = vmul.f32 %v4787, 1.442695
    %v4789 = vpow.pop %v4788
    %v4790 = vadd.f32 %v4789, 1.0
    %v4791 = vrcp.pop %v4790
    %v4792 = vmul.f32 1.0, %v4791
    %v4793 = vtanh.pop %v4779
    %v4794 = vxor.u32 %v4780, 2147483648
    %v4795 = vmul.f32 %v4794, 1.442695
    %v4796 = vpow.pop %v4795
    %v4797 = vadd.f32 %v4796, 1.0
    %v4798 = vrcp.pop %v4797
    %v4799 = vmul.f32 1.0, %v4798
    %v4800 = vmul.f32 %v4792, %v4105
    %v4801 = vmul.f32 %v4786, %v4793
    %v4802 = vadd.f32 %v4800, %v4801
    %v4803 = vtanh.pop %v4802
    %v4804 = vmul.f32 %v4799, %v4803
    %v4805 = vld [vmem:[#allocation6] sm:$0xff]
    %v4806 = vld [vmem:[#allocation6 + $0x8] sm:$0xff]
    %v4807 = vld [vmem:[#allocation6 + $0x10] sm:$0xff]
    %v4808 = vld [vmem:[#allocation6 + $0x18] sm:$0xff]
    %v4809 = vld [vmem:[#allocation6 + $0x20] sm:$0xff]
    %v4810 = vld [vmem:[#allocation6 + $0x28] sm:$0xff]
    %v4811 = vld [vmem:[#allocation6 + $0x30] sm:$0xff]
    %v4812 = vld [vmem:[#allocation6 + $0x38] sm:$0xff]
    %v4813 = vld [vmem:[#allocation6 + $0x40] sm:$0xff]
    %v4814 = vld [vmem:[#allocation6 + $0x48] sm:$0xff]
    %v4815 = vld [vmem:[#allocation6 + $0x50] sm:$0xff]
    %v4816 = vld [vmem:[#allocation6 + $0x58] sm:$0xff]
    %v4817 = vld [vmem:[#allocation6 + $0x60] sm:$0xff]
    %v4818 = vld [vmem:[#allocation6 + $0x68] sm:$0xff]
    %v4819 = vld [vmem:[#allocation6 + $0x70] sm:$0xff]
    %v4820 = vld [vmem:[#allocation6 + $0x78] sm:$0xff]
    %v4821 = vld [vmem:[#allocation6 + $0x80] sm:$0xff]
    %v4822 = vld [vmem:[#allocation6 + $0x88] sm:$0xff]
    %v4823 = vld [vmem:[#allocation6 + $0x90] sm:$0xff]
    %v4824 = vld [vmem:[#allocation6 + $0x98] sm:$0xff]
    %v4825 = vld [vmem:[#allocation6 + $0xa0] sm:$0xff]
    %v4826 = vld [vmem:[#allocation6 + $0xa8] sm:$0xff]
    %v4827 = vld [vmem:[#allocation6 + $0xb0] sm:$0xff]
    %v4828 = vld [vmem:[#allocation6 + $0xb8] sm:$0xff]
    %v4829 = vld [vmem:[#allocation6 + $0xc0] sm:$0xff]
    %v4830 = vld [vmem:[#allocation6 + $0xc8] sm:$0xff]
    %v4831 = vld [vmem:[#allocation6 + $0xd0] sm:$0xff]
    %v4832 = vld [vmem:[#allocation6 + $0xd8] sm:$0xff]
    %v4833 = vld [vmem:[#allocation6 + $0xe0] sm:$0xff]
    %v4834 = vld [vmem:[#allocation6 + $0xe8] sm:$0xff]
    %v4835 = vld [vmem:[#allocation6 + $0xf0] sm:$0xff]
    %v4836 = vld [vmem:[#allocation6 + $0xf8] sm:$0xff]
    %v4837 = vld [vmem:[#allocation6 + $0x100] sm:$0xff]
    %v4838 = vld [vmem:[#allocation6 + $0x108] sm:$0xff]
    %v4839 = vld [vmem:[#allocation6 + $0x110] sm:$0xff]
    %v4840 = vld [vmem:[#allocation6 + $0x118] sm:$0xff]
    %v4841 = vld [vmem:[#allocation6 + $0x120] sm:$0xff]
    %v4842 = vld [vmem:[#allocation6 + $0x128] sm:$0xff]
    %v4843 = vld [vmem:[#allocation6 + $0x130] sm:$0xff]
    %v4844 = vld [vmem:[#allocation6 + $0x138] sm:$0xff]
    %v4845 = vld [vmem:[#allocation6 + $0x140] sm:$0xff]
    %v4846 = vld [vmem:[#allocation6 + $0x148] sm:$0xff]
    %v4847 = vld [vmem:[#allocation6 + $0x150] sm:$0xff]
    %v4848 = vld [vmem:[#allocation6 + $0x158] sm:$0xff]
    %v4849 = vld [vmem:[#allocation6 + $0x160] sm:$0xff]
    %v4850 = vld [vmem:[#allocation6 + $0x168] sm:$0xff]
    %v4851 = vld [vmem:[#allocation6 + $0x170] sm:$0xff]
    %v4852 = vld [vmem:[#allocation6 + $0x178] sm:$0xff]
    %v4853 = vld [vmem:[#allocation6 + $0x180] sm:$0xff]
    %v4854 = vld [vmem:[#allocation6 + $0x188] sm:$0xff]
    %v4855 = vld [vmem:[#allocation6 + $0x190] sm:$0xff]
    %v4856 = vld [vmem:[#allocation6 + $0x198] sm:$0xff]
    %v4857 = vld [vmem:[#allocation6 + $0x1a0] sm:$0xff]
    %v4858 = vld [vmem:[#allocation6 + $0x1a8] sm:$0xff]
    %v4859 = vld [vmem:[#allocation6 + $0x1b0] sm:$0xff]
    %v4860 = vld [vmem:[#allocation6 + $0x1b8] sm:$0xff]
    %v4861 = vld [vmem:[#allocation6 + $0x1c0] sm:$0xff]
    %v4862 = vld [vmem:[#allocation6 + $0x1c8] sm:$0xff]
    %v4863 = vld [vmem:[#allocation6 + $0x1d0] sm:$0xff]
    %v4864 = vld [vmem:[#allocation6 + $0x1d8] sm:$0xff]
    %v4865 = vld [vmem:[#allocation6 + $0x1e0] sm:$0xff]
    %v4866 = vld [vmem:[#allocation6 + $0x1e8] sm:$0xff]
    %v4867 = vld [vmem:[#allocation6 + $0x1f0] sm:$0xff]
    %v4868 = vld [vmem:[#allocation6 + $0x1f8] sm:$0xff]
    %v4869 = vld [vmem:[#allocation8] sm:$0xff]
    %v4870 = vld [vmem:[#allocation8 + $0x8] sm:$0xff]
    %v4871 = vld [vmem:[#allocation8 + $0x10] sm:$0xff]
    %v4872 = vld [vmem:[#allocation8 + $0x18] sm:$0xff]
    %v4873 = vld [vmem:[#allocation8 + $0x20] sm:$0xff]
    %v4874 = vld [vmem:[#allocation8 + $0x28] sm:$0xff]
    %v4875 = vld [vmem:[#allocation8 + $0x30] sm:$0xff]
    %v4876 = vld [vmem:[#allocation8 + $0x38] sm:$0xff]
    %v4877 = vld [vmem:[#allocation8 + $0x40] sm:$0xff]
    %v4878 = vld [vmem:[#allocation8 + $0x48] sm:$0xff]
    %v4879 = vld [vmem:[#allocation8 + $0x50] sm:$0xff]
    %v4880 = vld [vmem:[#allocation8 + $0x58] sm:$0xff]
    %v4881 = vld [vmem:[#allocation8 + $0x60] sm:$0xff]
    %v4882 = vld [vmem:[#allocation8 + $0x68] sm:$0xff]
    %v4883 = vld [vmem:[#allocation8 + $0x70] sm:$0xff]
    %v4884 = vld [vmem:[#allocation8 + $0x78] sm:$0xff]
    %v4885 = vld [vmem:[#allocation8 + $0x80] sm:$0xff]
    %v4886 = vld [vmem:[#allocation8 + $0x88] sm:$0xff]
    %v4887 = vld [vmem:[#allocation8 + $0x90] sm:$0xff]
    %v4888 = vld [vmem:[#allocation8 + $0x98] sm:$0xff]
    %v4889 = vld [vmem:[#allocation8 + $0xa0] sm:$0xff]
    %v4890 = vld [vmem:[#allocation8 + $0xa8] sm:$0xff]
    %v4891 = vld [vmem:[#allocation8 + $0xb0] sm:$0xff]
    %v4892 = vld [vmem:[#allocation8 + $0xb8] sm:$0xff]
    %v4893 = vld [vmem:[#allocation8 + $0xc0] sm:$0xff]
    %v4894 = vld [vmem:[#allocation8 + $0xc8] sm:$0xff]
    %v4895 = vld [vmem:[#allocation8 + $0xd0] sm:$0xff]
    %v4896 = vld [vmem:[#allocation8 + $0xd8] sm:$0xff]
    %v4897 = vld [vmem:[#allocation8 + $0xe0] sm:$0xff]
    %v4898 = vld [vmem:[#allocation8 + $0xe8] sm:$0xff]
    %v4899 = vld [vmem:[#allocation8 + $0xf0] sm:$0xff]
    %v4900 = vld [vmem:[#allocation8 + $0xf8] sm:$0xff]
    %v4901 = vld [vmem:[#allocation8 + $0x100] sm:$0xff]
    %v4902 = vld [vmem:[#allocation8 + $0x108] sm:$0xff]
    %v4903 = vld [vmem:[#allocation8 + $0x110] sm:$0xff]
    %v4904 = vld [vmem:[#allocation8 + $0x118] sm:$0xff]
    %v4905 = vld [vmem:[#allocation8 + $0x120] sm:$0xff]
    %v4906 = vld [vmem:[#allocation8 + $0x128] sm:$0xff]
    %v4907 = vld [vmem:[#allocation8 + $0x130] sm:$0xff]
    %v4908 = vld [vmem:[#allocation8 + $0x138] sm:$0xff]
    %v4909 = vld [vmem:[#allocation8 + $0x140] sm:$0xff]
    %v4910 = vld [vmem:[#allocation8 + $0x148] sm:$0xff]
    %v4911 = vld [vmem:[#allocation8 + $0x150] sm:$0xff]
    %v4912 = vld [vmem:[#allocation8 + $0x158] sm:$0xff]
    %v4913 = vld [vmem:[#allocation8 + $0x160] sm:$0xff]
    %v4914 = vld [vmem:[#allocation8 + $0x168] sm:$0xff]
    %v4915 = vld [vmem:[#allocation8 + $0x170] sm:$0xff]
    %v4916 = vld [vmem:[#allocation8 + $0x178] sm:$0xff]
    %v4917 = vld [vmem:[#allocation8 + $0x180] sm:$0xff]
    %v4918 = vld [vmem:[#allocation8 + $0x188] sm:$0xff]
    %v4919 = vld [vmem:[#allocation8 + $0x190] sm:$0xff]
    %v4920 = vld [vmem:[#allocation8 + $0x198] sm:$0xff]
    %v4921 = vld [vmem:[#allocation8 + $0x1a0] sm:$0xff]
    %v4922 = vld [vmem:[#allocation8 + $0x1a8] sm:$0xff]
    %v4923 = vld [vmem:[#allocation8 + $0x1b0] sm:$0xff]
    %v4924 = vld [vmem:[#allocation8 + $0x1b8] sm:$0xff]
    %v4925 = vld [vmem:[#allocation8 + $0x1c0] sm:$0xff]
    %v4926 = vld [vmem:[#allocation8 + $0x1c8] sm:$0xff]
    %v4927 = vld [vmem:[#allocation8 + $0x1d0] sm:$0xff]
    %v4928 = vld [vmem:[#allocation8 + $0x1d8] sm:$0xff]
    %v4929 = vld [vmem:[#allocation8 + $0x1e0] sm:$0xff]
    %v4930 = vld [vmem:[#allocation8 + $0x1e8] sm:$0xff]
    %v4931 = vld [vmem:[#allocation8 + $0x1f0] sm:$0xff]
    %v4932 = vld [vmem:[#allocation8 + $0x1f8] sm:$0xff]
    %4933 = vmatprep.subr.mxu0 %v4870
    %4934 = vmatpush1.msra.mxu0 %v4869
    %4935 = vmatprep.subr.mxu0 %v4874
    %4936 = vmatpush1.msra.mxu0 %v4873
    %4937 = vmatprep.subr.mxu0 %v4878
    %4938 = vmatpush1.msra.mxu0 %v4877
    %4939 = vmatprep.subr.mxu0 %v4882
    %4940 = vmatpush1.msra.mxu0 %v4881
    %4941 = vmatprep.subr.mxu0 %v4886
    %4942 = vmatpush1.msra.mxu0 %v4885
    %4943 = vmatprep.subr.mxu0 %v4890
    %4944 = vmatpush1.msra.mxu0 %v4889
    %4945 = vmatprep.subr.mxu0 %v4894
    %4946 = vmatpush1.msra.mxu0 %v4893
    %4947 = vmatprep.subr.mxu0 %v4898
    %4948 = vmatpush1.msra.mxu0 %v4897
    %4949 = vmatprep.subr.mxu0 %v4902
    %4950 = vmatpush1.msra.mxu0 %v4901
    %4951 = vmatprep.subr.mxu0 %v4906
    %4952 = vmatpush1.msra.mxu0 %v4905
    %4953 = vmatprep.subr.mxu0 %v4910
    %4954 = vmatpush1.msra.mxu0 %v4909
    %4955 = vmatprep.subr.mxu0 %v4914
    %4956 = vmatpush1.msra.mxu0 %v4913
    %4957 = vmatprep.subr.mxu0 %v4918
    %4958 = vmatpush1.msra.mxu0 %v4917
    %4959 = vmatprep.subr.mxu0 %v4922
    %4960 = vmatpush1.msra.mxu0 %v4921
    %4961 = vmatprep.subr.mxu0 %v4926
    %4962 = vmatpush1.msra.mxu0 %v4925
    %4963 = vmatprep.subr.mxu0 %v4930
    %4964 = vmatpush1.msra.mxu0 %v4929
    %4965 = vmatprep.subr.mxu0 0.0
    %4966 = vmatpush1.msra.mxu0 0.0
    %4967 = vmatprep.subr.mxu0 0.0
    %4968 = vmatpush1.msra.mxu0 0.0
    %4969 = vmatprep.subr.mxu0 0.0
    %4970 = vmatpush1.msra.mxu0 0.0
    %4971 = vmatprep.subr.mxu0 0.0
    %4972 = vmatpush1.msra.mxu0 0.0
    %4973 = vmatprep.subr.mxu0 0.0
    %4974 = vmatpush1.msra.mxu0 0.0
    %4975 = vmatprep.subr.mxu0 0.0
    %4976 = vmatpush1.msra.mxu0 0.0
    %4977 = vmatprep.subr.mxu0 0.0
    %4978 = vmatpush1.msra.mxu0 0.0
    %4979 = vmatprep.subr.mxu0 0.0
    %4980 = vmatpush1.msra.mxu0 0.0
    %4981 = vmatprep.subr.mxu0 0.0
    %4982 = vmatpush1.msra.mxu0 0.0
    %4983 = vmatprep.subr.mxu0 0.0
    %4984 = vmatpush1.msra.mxu0 0.0
    %4985 = vmatprep.subr.mxu0 0.0
    %4986 = vmatpush1.msra.mxu0 0.0
    %4987 = vmatprep.subr.mxu0 0.0
    %4988 = vmatpush1.msra.mxu0 0.0
    %4989 = vmatprep.subr.mxu0 0.0
    %4990 = vmatpush1.msra.mxu0 0.0
    %4991 = vmatprep.subr.mxu0 0.0
    %4992 = vmatpush1.msra.mxu0 0.0
    %4993 = vmatprep.subr.mxu0 0.0
    %4994 = vmatpush1.msra.mxu0 0.0
    %4995 = vmatprep.subr.mxu0 0.0
    %4996 = vmatpush1.msra.mxu0 0.0
    %4997 = vmatprep.mubr.f32.mxu0 0.0
    %4998 = vmatmul.mubr.f32.gmra.mrb[0].mxu0 %v4569
    %v4999 = vpop.f32.mrb[0].mxu0
    %v5000 = vadd.f32 0.0, %v4999
    %v5001 = vpop.f32.mrb[0].mxu0
    %v5002 = vadd.f32 0.0, %v5001
    %5003 = vdwg.mxu0
    %5004 = vmatprep.subr.mxu0 %v4872
    %5005 = vmatpush1.msra.mxu0 %v4871
    %5006 = vmatprep.subr.mxu0 %v4876
    %5007 = vmatpush1.msra.mxu0 %v4875
    %5008 = vmatprep.subr.mxu0 %v4880
    %5009 = vmatpush1.msra.mxu0 %v4879
    %5010 = vmatprep.subr.mxu0 %v4884
    %5011 = vmatpush1.msra.mxu0 %v4883
    %5012 = vmatprep.subr.mxu0 %v4888
    %5013 = vmatpush1.msra.mxu0 %v4887
    %5014 = vmatprep.subr.mxu0 %v4892
    %5015 = vmatpush1.msra.mxu0 %v4891
    %5016 = vmatprep.subr.mxu0 %v4896
    %5017 = vmatpush1.msra.mxu0 %v4895
    %5018 = vmatprep.subr.mxu0 %v4900
    %5019 = vmatpush1.msra.mxu0 %v4899
    %5020 = vmatprep.subr.mxu0 %v4904
    %5021 = vmatpush1.msra.mxu0 %v4903
    %5022 = vmatprep.subr.mxu0 %v4908
    %5023 = vmatpush1.msra.mxu0 %v4907
    %5024 = vmatprep.subr.mxu0 %v4912
    %5025 = vmatpush1.msra.mxu0 %v4911
    %5026 = vmatprep.subr.mxu0 %v4916
    %5027 = vmatpush1.msra.mxu0 %v4915
    %5028 = vmatprep.subr.mxu0 %v4920
    %5029 = vmatpush1.msra.mxu0 %v4919
    %5030 = vmatprep.subr.mxu0 %v4924
    %5031 = vmatpush1.msra.mxu0 %v4923
    %5032 = vmatprep.subr.mxu0 %v4928
    %5033 = vmatpush1.msra.mxu0 %v4927
    %5034 = vmatprep.subr.mxu0 %v4932
    %5035 = vmatpush1.msra.mxu0 %v4931
    %5036 = vmatprep.subr.mxu0 0.0
    %5037 = vmatpush1.msra.mxu0 0.0
    %5038 = vmatprep.subr.mxu0 0.0
    %5039 = vmatpush1.msra.mxu0 0.0
    %5040 = vmatprep.subr.mxu0 0.0
    %5041 = vmatpush1.msra.mxu0 0.0
    %5042 = vmatprep.subr.mxu0 0.0
    %5043 = vmatpush1.msra.mxu0 0.0
    %5044 = vmatprep.subr.mxu0 0.0
    %5045 = vmatpush1.msra.mxu0 0.0
    %5046 = vmatprep.subr.mxu0 0.0
    %5047 = vmatpush1.msra.mxu0 0.0
    %5048 = vmatprep.subr.mxu0 0.0
    %5049 = vmatpush1.msra.mxu0 0.0
    %5050 = vmatprep.subr.mxu0 0.0
    %5051 = vmatpush1.msra.mxu0 0.0
    %5052 = vmatprep.subr.mxu0 0.0
    %5053 = vmatpush1.msra.mxu0 0.0
    %5054 = vmatprep.subr.mxu0 0.0
    %5055 = vmatpush1.msra.mxu0 0.0
    %5056 = vmatprep.subr.mxu0 0.0
    %5057 = vmatpush1.msra.mxu0 0.0
    %5058 = vmatprep.subr.mxu0 0.0
    %5059 = vmatpush1.msra.mxu0 0.0
    %5060 = vmatprep.subr.mxu0 0.0
    %5061 = vmatpush1.msra.mxu0 0.0
    %5062 = vmatprep.subr.mxu0 0.0
    %5063 = vmatpush1.msra.mxu0 0.0
    %5064 = vmatprep.subr.mxu0 0.0
    %5065 = vmatpush1.msra.mxu0 0.0
    %5066 = vmatprep.subr.mxu0 0.0
    %5067 = vmatpush1.msra.mxu0 0.0
    %5068 = vmatprep.mubr.f32.mxu0 0.0
    %5069 = vmatmul.mubr.f32.gmra.mrb[0].mxu0 %v4569
    %v5070 = vpop.f32.mrb[0].mxu0
    %v5071 = vadd.f32 0.0, %v5070
    %v5072 = vpop.f32.mrb[0].mxu0
    %v5073 = vadd.f32 0.0, %v5072
    %5074 = vdwg.mxu0
    %5075 = vmatprep.subr.mxu0 %v4806
    %5076 = vmatpush1.msra.mxu0 %v4805
    %5077 = vmatprep.subr.mxu0 %v4810
    %5078 = vmatpush1.msra.mxu0 %v4809
    %5079 = vmatprep.subr.mxu0 %v4814
    %5080 = vmatpush1.msra.mxu0 %v4813
    %5081 = vmatprep.subr.mxu0 %v4818
    %5082 = vmatpush1.msra.mxu0 %v4817
    %5083 = vmatprep.subr.mxu0 %v4822
    %5084 = vmatpush1.msra.mxu0 %v4821
    %5085 = vmatprep.subr.mxu0 %v4826
    %5086 = vmatpush1.msra.mxu0 %v4825
    %5087 = vmatprep.subr.mxu0 %v4830
    %5088 = vmatpush1.msra.mxu0 %v4829
    %5089 = vmatprep.subr.mxu0 %v4834
    %5090 = vmatpush1.msra.mxu0 %v4833
    %5091 = vmatprep.subr.mxu0 %v4838
    %5092 = vmatpush1.msra.mxu0 %v4837
    %5093 = vmatprep.subr.mxu0 %v4842
    %5094 = vmatpush1.msra.mxu0 %v4841
    %5095 = vmatprep.subr.mxu0 %v4846
    %5096 = vmatpush1.msra.mxu0 %v4845
    %5097 = vmatprep.subr.mxu0 %v4850
    %5098 = vmatpush1.msra.mxu0 %v4849
    %5099 = vmatprep.subr.mxu0 %v4854
    %5100 = vmatpush1.msra.mxu0 %v4853
    %5101 = vmatprep.subr.mxu0 %v4858
    %5102 = vmatpush1.msra.mxu0 %v4857
    %5103 = vmatprep.subr.mxu0 %v4862
    %5104 = vmatpush1.msra.mxu0 %v4861
    %5105 = vmatprep.subr.mxu0 %v4866
    %5106 = vmatpush1.msra.mxu0 %v4865
    %5107 = vmatprep.subr.mxu0 0.0
    %5108 = vmatpush1.msra.mxu0 0.0
    %5109 = vmatprep.subr.mxu0 0.0
    %5110 = vmatpush1.msra.mxu0 0.0
    %5111 = vmatprep.subr.mxu0 0.0
    %5112 = vmatpush1.msra.mxu0 0.0
    %5113 = vmatprep.subr.mxu0 0.0
    %5114 = vmatpush1.msra.mxu0 0.0
    %5115 = vmatprep.subr.mxu0 0.0
    %5116 = vmatpush1.msra.mxu0 0.0
    %5117 = vmatprep.subr.mxu0 0.0
    %5118 = vmatpush1.msra.mxu0 0.0
    %5119 = vmatprep.subr.mxu0 0.0
    %5120 = vmatpush1.msra.mxu0 0.0
    %5121 = vmatprep.subr.mxu0 0.0
    %5122 = vmatpush1.msra.mxu0 0.0
    %5123 = vmatprep.subr.mxu0 0.0
    %5124 = vmatpush1.msra.mxu0 0.0
    %5125 = vmatprep.subr.mxu0 0.0
    %5126 = vmatpush1.msra.mxu0 0.0
    %5127 = vmatprep.subr.mxu0 0.0
    %5128 = vmatpush1.msra.mxu0 0.0
    %5129 = vmatprep.subr.mxu0 0.0
    %5130 = vmatpush1.msra.mxu0 0.0
    %5131 = vmatprep.subr.mxu0 0.0
    %5132 = vmatpush1.msra.mxu0 0.0
    %5133 = vmatprep.subr.mxu0 0.0
    %5134 = vmatpush1.msra.mxu0 0.0
    %5135 = vmatprep.subr.mxu0 0.0
    %5136 = vmatpush1.msra.mxu0 0.0
    %5137 = vmatprep.subr.mxu0 0.0
    %5138 = vmatpush1.msra.mxu0 0.0
    %5139 = vmatprep.mubr.f32.mxu0 0.0
    %5140 = vmatmul.mubr.f32.gmra.mrb[0].mxu0 %v4804
    %v5141 = vpop.f32.mrb[0].mxu0
    %v5142 = vadd.f32 %v5000, %v5141
    %v5143 = vpop.f32.mrb[0].mxu0
    %v5144 = vadd.f32 %v5002, %v5143
    %5145 = vdwg.mxu0
    %5146 = vmatprep.subr.mxu0 %v4808
    %5147 = vmatpush1.msra.mxu0 %v4807
    %5148 = vmatprep.subr.mxu0 %v4812
    %5149 = vmatpush1.msra.mxu0 %v4811
    %5150 = vmatprep.subr.mxu0 %v4816
    %5151 = vmatpush1.msra.mxu0 %v4815
    %5152 = vmatprep.subr.mxu0 %v4820
    %5153 = vmatpush1.msra.mxu0 %v4819
    %5154 = vmatprep.subr.mxu0 %v4824
    %5155 = vmatpush1.msra.mxu0 %v4823
    %5156 = vmatprep.subr.mxu0 %v4828
    %5157 = vmatpush1.msra.mxu0 %v4827
    %5158 = vmatprep.subr.mxu0 %v4832
    %5159 = vmatpush1.msra.mxu0 %v4831
    %5160 = vmatprep.subr.mxu0 %v4836
    %5161 = vmatpush1.msra.mxu0 %v4835
    %5162 = vmatprep.subr.mxu0 %v4840
    %5163 = vmatpush1.msra.mxu0 %v4839
    %5164 = vmatprep.subr.mxu0 %v4844
    %5165 = vmatpush1.msra.mxu0 %v4843
    %5166 = vmatprep.subr.mxu0 %v4848
    %5167 = vmatpush1.msra.mxu0 %v4847
    %5168 = vmatprep.subr.mxu0 %v4852
    %5169 = vmatpush1.msra.mxu0 %v4851
    %5170 = vmatprep.subr.mxu0 %v4856
    %5171 = vmatpush1.msra.mxu0 %v4855
    %5172 = vmatprep.subr.mxu0 %v4860
    %5173 = vmatpush1.msra.mxu0 %v4859
    %5174 = vmatprep.subr.mxu0 %v4864
    %5175 = vmatpush1.msra.mxu0 %v4863
    %5176 = vmatprep.subr.mxu0 %v4868
    %5177 = vmatpush1.msra.mxu0 %v4867
    %5178 = vmatprep.subr.mxu0 0.0
    %5179 = vmatpush1.msra.mxu0 0.0
    %5180 = vmatprep.subr.mxu0 0.0
    %5181 = vmatpush1.msra.mxu0 0.0
    %5182 = vmatprep.subr.mxu0 0.0
    %5183 = vmatpush1.msra.mxu0 0.0
    %5184 = vmatprep.subr.mxu0 0.0
    %5185 = vmatpush1.msra.mxu0 0.0
    %5186 = vmatprep.subr.mxu0 0.0
    %5187 = vmatpush1.msra.mxu0 0.0
    %5188 = vmatprep.subr.mxu0 0.0
    %5189 = vmatpush1.msra.mxu0 0.0
    %5190 = vmatprep.subr.mxu0 0.0
    %5191 = vmatpush1.msra.mxu0 0.0
    %5192 = vmatprep.subr.mxu0 0.0
    %5193 = vmatpush1.msra.mxu0 0.0
    %5194 = vmatprep.subr.mxu0 0.0
    %5195 = vmatpush1.msra.mxu0 0.0
    %5196 = vmatprep.subr.mxu0 0.0
    %5197 = vmatpush1.msra.mxu0 0.0
    %5198 = vmatprep.subr.mxu0 0.0
    %5199 = vmatpush1.msra.mxu0 0.0
    %5200 = vmatprep.subr.mxu0 0.0
    %5201 = vmatpush1.msra.mxu0 0.0
    %5202 = vmatprep.subr.mxu0 0.0
    %5203 = vmatpush1.msra.mxu0 0.0
    %5204 = vmatprep.subr.mxu0 0.0
    %5205 = vmatpush1.msra.mxu0 0.0
    %5206 = vmatprep.subr.mxu0 0.0
    %5207 = vmatpush1.msra.mxu0 0.0
    %5208 = vmatprep.subr.mxu0 0.0
    %5209 = vmatpush1.msra.mxu0 0.0
    %5210 = vmatprep.mubr.f32.mxu0 0.0
    %5211 = vmatmul.mubr.f32.gmra.mrb[0].mxu0 %v4804
    %v5212 = vpop.f32.mrb[0].mxu0
    %v5213 = vadd.f32 %v5071, %v5212
    %v5214 = vpop.f32.mrb[0].mxu0
    %v5215 = vadd.f32 %v5073, %v5214
    %5216 = vdwg.mxu0
    %v5217 = vld [vmem:[%s6] sm:$0xf]
    %v5219 = vlaneseq
    %v5220 = vshrl.u32 %v5219, 7
    %v5221 = vsub.s32 0, %v5220
    %v5222 = vrot.slane %v5217, %v5221
    %v5223 = vlaneseq
    %v5224 = vshrl.u32 %v5223, 7
    %v5225 = vsub.s32 1, %v5224
    %v5226 = vrot.slane %v5217, %v5225
    %v5227 = vlaneseq
    %v5228 = vshrl.u32 %v5227, 7
    %v5229 = vsub.s32 2, %v5228
    %v5230 = vrot.slane %v5217, %v5229
    %v5231 = vlaneseq
    %v5232 = vshrl.u32 %v5231, 7
    %v5233 = vsub.s32 3, %v5232
    %v5234 = vrot.slane %v5217, %v5233
    %v5239 = vadd.f32 %v5142, %v5222
    %v5240 = vadd.f32 %v5144, %v5226
    %v5241 = vadd.f32 %v5213, %v5230
    %v5242 = vadd.f32 %v5215, %v5234
    %v5243 = vxor.u32 %v5239, 2147483648
    %v5244 = vmul.f32 %v5243, 1.442695
    %v5245 = vpow.pop %v5244
    %v5246 = vadd.f32 %v5245, 1.0
    %v5247 = vrcp.pop %v5246
    %v5248 = vmul.f32 1.0, %v5247
    %v5249 = vxor.u32 %v5240, 2147483648
    %v5250 = vmul.f32 %v5249, 1.442695
    %v5251 = vpow.pop %v5250
    %v5252 = vadd.f32 %v5251, 1.0
    %v5253 = vrcp.pop %v5252
    %v5254 = vmul.f32 1.0, %v5253
    %v5255 = vtanh.pop %v5241
    %v5256 = vxor.u32 %v5242, 2147483648
    %v5257 = vmul.f32 %v5256, 1.442695
    %v5258 = vpow.pop %v5257
    %v5259 = vadd.f32 %v5258, 1.0
    %v5260 = vrcp.pop %v5259
    %v5261 = vmul.f32 1.0, %v5260
    %v5262 = vmul.f32 %v5254, %v4567
    %v5263 = vmul.f32 %v5248, %v5255
    %v5264 = vadd.f32 %v5262, %v5263
    %v5265 = vtanh.pop %v5264
    %v5266 = vmul.f32 %v5261, %v5265
    %5267 = vst [vmem:[#allocation2 + $0x30] sm:$0xff] %v5266
    %v5268 = vld [vmem:[#allocation4] sm:$0xff]
    %v5269 = vld [vmem:[#allocation4 + $0x8] sm:$0xff]
    %v5270 = vld [vmem:[#allocation4 + $0x10] sm:$0xff]
    %v5271 = vld [vmem:[#allocation4 + $0x18] sm:$0xff]
    %v5272 = vld [vmem:[#allocation4 + $0x20] sm:$0xff]
    %v5273 = vld [vmem:[#allocation4 + $0x28] sm:$0xff]
    %v5274 = vld [vmem:[#allocation4 + $0x30] sm:$0xff]
    %v5275 = vld [vmem:[#allocation4 + $0x38] sm:$0xff]
    %v5276 = vld [vmem:[#allocation4 + $0x40] sm:$0xff]
    %v5277 = vld [vmem:[#allocation4 + $0x48] sm:$0xff]
    %v5278 = vld [vmem:[#allocation4 + $0x50] sm:$0xff]
    %v5279 = vld [vmem:[#allocation4 + $0x58] sm:$0xff]
    %v5280 = vld [vmem:[#allocation4 + $0x60] sm:$0xff]
    %v5281 = vld [vmem:[#allocation4 + $0x68] sm:$0xff]
    %v5282 = vld [vmem:[#allocation4 + $0x70] sm:$0xff]
    %v5283 = vld [vmem:[#allocation4 + $0x78] sm:$0xff]
    %v5284 = vld [vmem:[#allocation4 + $0x80] sm:$0xff]
    %v5285 = vld [vmem:[#allocation4 + $0x88] sm:$0xff]
    %v5286 = vld [vmem:[#allocation4 + $0x90] sm:$0xff]
    %v5287 = vld [vmem:[#allocation4 + $0x98] sm:$0xff]
    %v5288 = vld [vmem:[#allocation4 + $0xa0] sm:$0xff]
    %v5289 = vld [vmem:[#allocation4 + $0xa8] sm:$0xff]
    %v5290 = vld [vmem:[#allocation4 + $0xb0] sm:$0xff]
    %v5291 = vld [vmem:[#allocation4 + $0xb8] sm:$0xff]
    %v5292 = vld [vmem:[#allocation4 + $0xc0] sm:$0xff]
    %v5293 = vld [vmem:[#allocation4 + $0xc8] sm:$0xff]
    %v5294 = vld [vmem:[#allocation4 + $0xd0] sm:$0xff]
    %v5295 = vld [vmem:[#allocation4 + $0xd8] sm:$0xff]
    %v5296 = vld [vmem:[#allocation4 + $0xe0] sm:$0xff]
    %v5297 = vld [vmem:[#allocation4 + $0xe8] sm:$0xff]
    %v5298 = vld [vmem:[#allocation4 + $0xf0] sm:$0xff]
    %v5299 = vld [vmem:[#allocation4 + $0xf8] sm:$0xff]
    %v5300 = vld [vmem:[#allocation4 + $0x100] sm:$0xff]
    %v5301 = vld [vmem:[#allocation4 + $0x108] sm:$0xff]
    %v5302 = vld [vmem:[#allocation4 + $0x110] sm:$0xff]
    %v5303 = vld [vmem:[#allocation4 + $0x118] sm:$0xff]
    %v5304 = vld [vmem:[#allocation4 + $0x120] sm:$0xff]
    %v5305 = vld [vmem:[#allocation4 + $0x128] sm:$0xff]
    %v5306 = vld [vmem:[#allocation4 + $0x130] sm:$0xff]
    %v5307 = vld [vmem:[#allocation4 + $0x138] sm:$0xff]
    %v5308 = vld [vmem:[#allocation4 + $0x140] sm:$0xff]
    %v5309 = vld [vmem:[#allocation4 + $0x148] sm:$0xff]
    %v5310 = vld [vmem:[#allocation4 + $0x150] sm:$0xff]
    %v5311 = vld [vmem:[#allocation4 + $0x158] sm:$0xff]
    %v5312 = vld [vmem:[#allocation4 + $0x160] sm:$0xff]
    %v5313 = vld [vmem:[#allocation4 + $0x168] sm:$0xff]
    %v5314 = vld [vmem:[#allocation4 + $0x170] sm:$0xff]
    %v5315 = vld [vmem:[#allocation4 + $0x178] sm:$0xff]
    %v5316 = vld [vmem:[#allocation4 + $0x180] sm:$0xff]
    %v5317 = vld [vmem:[#allocation4 + $0x188] sm:$0xff]
    %v5318 = vld [vmem:[#allocation4 + $0x190] sm:$0xff]
    %v5319 = vld [vmem:[#allocation4 + $0x198] sm:$0xff]
    %v5320 = vld [vmem:[#allocation4 + $0x1a0] sm:$0xff]
    %v5321 = vld [vmem:[#allocation4 + $0x1a8] sm:$0xff]
    %v5322 = vld [vmem:[#allocation4 + $0x1b0] sm:$0xff]
    %v5323 = vld [vmem:[#allocation4 + $0x1b8] sm:$0xff]
    %v5324 = vld [vmem:[#allocation4 + $0x1c0] sm:$0xff]
    %v5325 = vld [vmem:[#allocation4 + $0x1c8] sm:$0xff]
    %v5326 = vld [vmem:[#allocation4 + $0x1d0] sm:$0xff]
    %v5327 = vld [vmem:[#allocation4 + $0x1d8] sm:$0xff]
    %v5328 = vld [vmem:[#allocation4 + $0x1e0] sm:$0xff]
    %v5329 = vld [vmem:[#allocation4 + $0x1e8] sm:$0xff]
    %v5330 = vld [vmem:[#allocation4 + $0x1f0] sm:$0xff]
    %v5331 = vld [vmem:[#allocation4 + $0x1f8] sm:$0xff]
    %5332 = vmatprep.subr.mxu0 %v5269
    %5333 = vmatpush1.msra.mxu0 %v5268
    %5334 = vmatprep.subr.mxu0 %v5273
    %5335 = vmatpush1.msra.mxu0 %v5272
    %5336 = vmatprep.subr.mxu0 %v5277
    %5337 = vmatpush1.msra.mxu0 %v5276
    %5338 = vmatprep.subr.mxu0 %v5281
    %5339 = vmatpush1.msra.mxu0 %v5280
    %5340 = vmatprep.subr.mxu0 %v5285
    %5341 = vmatpush1.msra.mxu0 %v5284
    %5342 = vmatprep.subr.mxu0 %v5289
    %5343 = vmatpush1.msra.mxu0 %v5288
    %5344 = vmatprep.subr.mxu0 %v5293
    %5345 = vmatpush1.msra.mxu0 %v5292
    %5346 = vmatprep.subr.mxu0 %v5297
    %5347 = vmatpush1.msra.mxu0 %v5296
    %5348 = vmatprep.subr.mxu0 %v5301
    %5349 = vmatpush1.msra.mxu0 %v5300
    %5350 = vmatprep.subr.mxu0 %v5305
    %5351 = vmatpush1.msra.mxu0 %v5304
    %5352 = vmatprep.subr.mxu0 %v5309
    %5353 = vmatpush1.msra.mxu0 %v5308
    %5354 = vmatprep.subr.mxu0 %v5313
    %5355 = vmatpush1.msra.mxu0 %v5312
    %5356 = vmatprep.subr.mxu0 %v5317
    %5357 = vmatpush1.msra.mxu0 %v5316
    %5358 = vmatprep.subr.mxu0 %v5321
    %5359 = vmatpush1.msra.mxu0 %v5320
    %5360 = vmatprep.subr.mxu0 %v5325
    %5361 = vmatpush1.msra.mxu0 %v5324
    %5362 = vmatprep.subr.mxu0 %v5329
    %5363 = vmatpush1.msra.mxu0 %v5328
    %5364 = vmatprep.subr.mxu0 0.0
    %5365 = vmatpush1.msra.mxu0 0.0
    %5366 = vmatprep.subr.mxu0 0.0
    %5367 = vmatpush1.msra.mxu0 0.0
    %5368 = vmatprep.subr.mxu0 0.0
    %5369 = vmatpush1.msra.mxu0 0.0
    %5370 = vmatprep.subr.mxu0 0.0
    %5371 = vmatpush1.msra.mxu0 0.0
    %5372 = vmatprep.subr.mxu0 0.0
    %5373 = vmatpush1.msra.mxu0 0.0
    %5374 = vmatprep.subr.mxu0 0.0
    %5375 = vmatpush1.msra.mxu0 0.0
    %5376 = vmatprep.subr.mxu0 0.0
    %5377 = vmatpush1.msra.mxu0 0.0
    %5378 = vmatprep.subr.mxu0 0.0
    %5379 = vmatpush1.msra.mxu0 0.0
    %5380 = vmatprep.subr.mxu0 0.0
    %5381 = vmatpush1.msra.mxu0 0.0
    %5382 = vmatprep.subr.mxu0 0.0
    %5383 = vmatpush1.msra.mxu0 0.0
    %5384 = vmatprep.subr.mxu0 0.0
    %5385 = vmatpush1.msra.mxu0 0.0
    %5386 = vmatprep.subr.mxu0 0.0
    %5387 = vmatpush1.msra.mxu0 0.0
    %5388 = vmatprep.subr.mxu0 0.0
    %5389 = vmatpush1.msra.mxu0 0.0
    %5390 = vmatprep.subr.mxu0 0.0
    %5391 = vmatpush1.msra.mxu0 0.0
    %5392 = vmatprep.subr.mxu0 0.0
    %5393 = vmatpush1.msra.mxu0 0.0
    %5394 = vmatprep.subr.mxu0 0.0
    %5395 = vmatpush1.msra.mxu0 0.0
    %5396 = vmatprep.mubr.f32.mxu0 0.0
    %5397 = vmatmul.mubr.f32.gmra.mrb[0].mxu0 %v4804
    %v5398 = vpop.f32.mrb[0].mxu0
    %v5399 = vadd.f32 0.0, %v5398
    %v5400 = vpop.f32.mrb[0].mxu0
    %v5401 = vadd.f32 0.0, %v5400
    %5402 = vdwg.mxu0
    %5403 = vmatprep.subr.mxu0 %v5271
    %5404 = vmatpush1.msra.mxu0 %v5270
    %5405 = vmatprep.subr.mxu0 %v5275
    %5406 = vmatpush1.msra.mxu0 %v5274
    %5407 = vmatprep.subr.mxu0 %v5279
    %5408 = vmatpush1.msra.mxu0 %v5278
    %5409 = vmatprep.subr.mxu0 %v5283
    %5410 = vmatpush1.msra.mxu0 %v5282
    %5411 = vmatprep.subr.mxu0 %v5287
    %5412 = vmatpush1.msra.mxu0 %v5286
    %5413 = vmatprep.subr.mxu0 %v5291
    %5414 = vmatpush1.msra.mxu0 %v5290
    %5415 = vmatprep.subr.mxu0 %v5295
    %5416 = vmatpush1.msra.mxu0 %v5294
    %5417 = vmatprep.subr.mxu0 %v5299
    %5418 = vmatpush1.msra.mxu0 %v5298
    %5419 = vmatprep.subr.mxu0 %v5303
    %5420 = vmatpush1.msra.mxu0 %v5302
    %5421 = vmatprep.subr.mxu0 %v5307
    %5422 = vmatpush1.msra.mxu0 %v5306
    %5423 = vmatprep.subr.mxu0 %v5311
    %5424 = vmatpush1.msra.mxu0 %v5310
    %5425 = vmatprep.subr.mxu0 %v5315
    %5426 = vmatpush1.msra.mxu0 %v5314
    %5427 = vmatprep.subr.mxu0 %v5319
    %5428 = vmatpush1.msra.mxu0 %v5318
    %5429 = vmatprep.subr.mxu0 %v5323
    %5430 = vmatpush1.msra.mxu0 %v5322
    %5431 = vmatprep.subr.mxu0 %v5327
    %5432 = vmatpush1.msra.mxu0 %v5326
    %5433 = vmatprep.subr.mxu0 %v5331
    %5434 = vmatpush1.msra.mxu0 %v5330
    %5435 = vmatprep.subr.mxu0 0.0
    %5436 = vmatpush1.msra.mxu0 0.0
    %5437 = vmatprep.subr.mxu0 0.0
    %5438 = vmatpush1.msra.mxu0 0.0
    %5439 = vmatprep.subr.mxu0 0.0
    %5440 = vmatpush1.msra.mxu0 0.0
    %5441 = vmatprep.subr.mxu0 0.0
    %5442 = vmatpush1.msra.mxu0 0.0
    %5443 = vmatprep.subr.mxu0 0.0
    %5444 = vmatpush1.msra.mxu0 0.0
    %5445 = vmatprep.subr.mxu0 0.0
    %5446 = vmatpush1.msra.mxu0 0.0
    %5447 = vmatprep.subr.mxu0 0.0
    %5448 = vmatpush1.msra.mxu0 0.0
    %5449 = vmatprep.subr.mxu0 0.0
    %5450 = vmatpush1.msra.mxu0 0.0
    %5451 = vmatprep.subr.mxu0 0.0
    %5452 = vmatpush1.msra.mxu0 0.0
    %5453 = vmatprep.subr.mxu0 0.0
    %5454 = vmatpush1.msra.mxu0 0.0
    %5455 = vmatprep.subr.mxu0 0.0
    %5456 = vmatpush1.msra.mxu0 0.0
    %5457 = vmatprep.subr.mxu0 0.0
    %5458 = vmatpush1.msra.mxu0 0.0
    %5459 = vmatprep.subr.mxu0 0.0
    %5460 = vmatpush1.msra.mxu0 0.0
    %5461 = vmatprep.subr.mxu0 0.0
    %5462 = vmatpush1.msra.mxu0 0.0
    %5463 = vmatprep.subr.mxu0 0.0
    %5464 = vmatpush1.msra.mxu0 0.0
    %5465 = vmatprep.subr.mxu0 0.0
    %5466 = vmatpush1.msra.mxu0 0.0
    %5467 = vmatprep.mubr.f32.mxu0 0.0
    %5468 = vmatmul.mubr.f32.gmra.mrb[0].mxu0 %v4804
    %v5469 = vpop.f32.mrb[0].mxu0
    %v5470 = vadd.f32 0.0, %v5469
    %v5471 = vpop.f32.mrb[0].mxu0
    %v5472 = vadd.f32 0.0, %v5471
    %5473 = vdwg.mxu0
    %v5474 = vadd.f32 %v272, %v5399
    %v5475 = vadd.f32 %v274, %v5401
    %v5476 = vadd.f32 %v385, %v5470
    %v5477 = vadd.f32 %v387, %v5472
    %v5478 = vxor.u32 %v5474, 2147483648
    %v5479 = vmul.f32 %v5478, 1.442695
    %v5480 = vpow.pop %v5479
    %v5481 = vadd.f32 %v5480, 1.0
    %v5482 = vrcp.pop %v5481
    %v5483 = vmul.f32 1.0, %v5482
    %v5484 = vxor.u32 %v5475, 2147483648
    %v5485 = vmul.f32 %v5484, 1.442695
    %v5486 = vpow.pop %v5485
    %v5487 = vadd.f32 %v5486, 1.0
    %v5488 = vrcp.pop %v5487
    %v5489 = vmul.f32 1.0, %v5488
    %v5490 = vtanh.pop %v5476
    %v5491 = vxor.u32 %v5477, 2147483648
    %v5492 = vmul.f32 %v5491, 1.442695
    %v5493 = vpow.pop %v5492
    %v5494 = vadd.f32 %v5493, 1.0
    %v5495 = vrcp.pop %v5494
    %v5496 = vmul.f32 1.0, %v5495
    %v5497 = vmul.f32 %v5489, %v4802
    %v5498 = vmul.f32 %v5483, %v5490
    %v5499 = vadd.f32 %v5497, %v5498
    %v5500 = vtanh.pop %v5499
    %v5501 = vmul.f32 %v5496, %v5500
    %v5502 = vld [vmem:[#allocation6] sm:$0xff]
    %v5503 = vld [vmem:[#allocation6 + $0x8] sm:$0xff]
    %v5504 = vld [vmem:[#allocation6 + $0x10] sm:$0xff]
    %v5505 = vld [vmem:[#allocation6 + $0x18] sm:$0xff]
    %v5506 = vld [vmem:[#allocation6 + $0x20] sm:$0xff]
    %v5507 = vld [vmem:[#allocation6 + $0x28] sm:$0xff]
    %v5508 = vld [vmem:[#allocation6 + $0x30] sm:$0xff]
    %v5509 = vld [vmem:[#allocation6 + $0x38] sm:$0xff]
    %v5510 = vld [vmem:[#allocation6 + $0x40] sm:$0xff]
    %v5511 = vld [vmem:[#allocation6 + $0x48] sm:$0xff]
    %v5512 = vld [vmem:[#allocation6 + $0x50] sm:$0xff]
    %v5513 = vld [vmem:[#allocation6 + $0x58] sm:$0xff]
    %v5514 = vld [vmem:[#allocation6 + $0x60] sm:$0xff]
    %v5515 = vld [vmem:[#allocation6 + $0x68] sm:$0xff]
    %v5516 = vld [vmem:[#allocation6 + $0x70] sm:$0xff]
    %v5517 = vld [vmem:[#allocation6 + $0x78] sm:$0xff]
    %v5518 = vld [vmem:[#allocation6 + $0x80] sm:$0xff]
    %v5519 = vld [vmem:[#allocation6 + $0x88] sm:$0xff]
    %v5520 = vld [vmem:[#allocation6 + $0x90] sm:$0xff]
    %v5521 = vld [vmem:[#allocation6 + $0x98] sm:$0xff]
    %v5522 = vld [vmem:[#allocation6 + $0xa0] sm:$0xff]
    %v5523 = vld [vmem:[#allocation6 + $0xa8] sm:$0xff]
    %v5524 = vld [vmem:[#allocation6 + $0xb0] sm:$0xff]
    %v5525 = vld [vmem:[#allocation6 + $0xb8] sm:$0xff]
    %v5526 = vld [vmem:[#allocation6 + $0xc0] sm:$0xff]
    %v5527 = vld [vmem:[#allocation6 + $0xc8] sm:$0xff]
    %v5528 = vld [vmem:[#allocation6 + $0xd0] sm:$0xff]
    %v5529 = vld [vmem:[#allocation6 + $0xd8] sm:$0xff]
    %v5530 = vld [vmem:[#allocation6 + $0xe0] sm:$0xff]
    %v5531 = vld [vmem:[#allocation6 + $0xe8] sm:$0xff]
    %v5532 = vld [vmem:[#allocation6 + $0xf0] sm:$0xff]
    %v5533 = vld [vmem:[#allocation6 + $0xf8] sm:$0xff]
    %v5534 = vld [vmem:[#allocation6 + $0x100] sm:$0xff]
    %v5535 = vld [vmem:[#allocation6 + $0x108] sm:$0xff]
    %v5536 = vld [vmem:[#allocation6 + $0x110] sm:$0xff]
    %v5537 = vld [vmem:[#allocation6 + $0x118] sm:$0xff]
    %v5538 = vld [vmem:[#allocation6 + $0x120] sm:$0xff]
    %v5539 = vld [vmem:[#allocation6 + $0x128] sm:$0xff]
    %v5540 = vld [vmem:[#allocation6 + $0x130] sm:$0xff]
    %v5541 = vld [vmem:[#allocation6 + $0x138] sm:$0xff]
    %v5542 = vld [vmem:[#allocation6 + $0x140] sm:$0xff]
    %v5543 = vld [vmem:[#allocation6 + $0x148] sm:$0xff]
    %v5544 = vld [vmem:[#allocation6 + $0x150] sm:$0xff]
    %v5545 = vld [vmem:[#allocation6 + $0x158] sm:$0xff]
    %v5546 = vld [vmem:[#allocation6 + $0x160] sm:$0xff]
    %v5547 = vld [vmem:[#allocation6 + $0x168] sm:$0xff]
    %v5548 = vld [vmem:[#allocation6 + $0x170] sm:$0xff]
    %v5549 = vld [vmem:[#allocation6 + $0x178] sm:$0xff]
    %v5550 = vld [vmem:[#allocation6 + $0x180] sm:$0xff]
    %v5551 = vld [vmem:[#allocation6 + $0x188] sm:$0xff]
    %v5552 = vld [vmem:[#allocation6 + $0x190] sm:$0xff]
    %v5553 = vld [vmem:[#allocation6 + $0x198] sm:$0xff]
    %v5554 = vld [vmem:[#allocation6 + $0x1a0] sm:$0xff]
    %v5555 = vld [vmem:[#allocation6 + $0x1a8] sm:$0xff]
    %v5556 = vld [vmem:[#allocation6 + $0x1b0] sm:$0xff]
    %v5557 = vld [vmem:[#allocation6 + $0x1b8] sm:$0xff]
    %v5558 = vld [vmem:[#allocation6 + $0x1c0] sm:$0xff]
    %v5559 = vld [vmem:[#allocation6 + $0x1c8] sm:$0xff]
    %v5560 = vld [vmem:[#allocation6 + $0x1d0] sm:$0xff]
    %v5561 = vld [vmem:[#allocation6 + $0x1d8] sm:$0xff]
    %v5562 = vld [vmem:[#allocation6 + $0x1e0] sm:$0xff]
    %v5563 = vld [vmem:[#allocation6 + $0x1e8] sm:$0xff]
    %v5564 = vld [vmem:[#allocation6 + $0x1f0] sm:$0xff]
    %v5565 = vld [vmem:[#allocation6 + $0x1f8] sm:$0xff]
    %v5566 = vld [vmem:[#allocation8] sm:$0xff]
    %v5567 = vld [vmem:[#allocation8 + $0x8] sm:$0xff]
    %v5568 = vld [vmem:[#allocation8 + $0x10] sm:$0xff]
    %v5569 = vld [vmem:[#allocation8 + $0x18] sm:$0xff]
    %v5570 = vld [vmem:[#allocation8 + $0x20] sm:$0xff]
    %v5571 = vld [vmem:[#allocation8 + $0x28] sm:$0xff]
    %v5572 = vld [vmem:[#allocation8 + $0x30] sm:$0xff]
    %v5573 = vld [vmem:[#allocation8 + $0x38] sm:$0xff]
    %v5574 = vld [vmem:[#allocation8 + $0x40] sm:$0xff]
    %v5575 = vld [vmem:[#allocation8 + $0x48] sm:$0xff]
    %v5576 = vld [vmem:[#allocation8 + $0x50] sm:$0xff]
    %v5577 = vld [vmem:[#allocation8 + $0x58] sm:$0xff]
    %v5578 = vld [vmem:[#allocation8 + $0x60] sm:$0xff]
    %v5579 = vld [vmem:[#allocation8 + $0x68] sm:$0xff]
    %v5580 = vld [vmem:[#allocation8 + $0x70] sm:$0xff]
    %v5581 = vld [vmem:[#allocation8 + $0x78] sm:$0xff]
    %v5582 = vld [vmem:[#allocation8 + $0x80] sm:$0xff]
    %v5583 = vld [vmem:[#allocation8 + $0x88] sm:$0xff]
    %v5584 = vld [vmem:[#allocation8 + $0x90] sm:$0xff]
    %v5585 = vld [vmem:[#allocation8 + $0x98] sm:$0xff]
    %v5586 = vld [vmem:[#allocation8 + $0xa0] sm:$0xff]
    %v5587 = vld [vmem:[#allocation8 + $0xa8] sm:$0xff]
    %v5588 = vld [vmem:[#allocation8 + $0xb0] sm:$0xff]
    %v5589 = vld [vmem:[#allocation8 + $0xb8] sm:$0xff]
    %v5590 = vld [vmem:[#allocation8 + $0xc0] sm:$0xff]
    %v5591 = vld [vmem:[#allocation8 + $0xc8] sm:$0xff]
    %v5592 = vld [vmem:[#allocation8 + $0xd0] sm:$0xff]
    %v5593 = vld [vmem:[#allocation8 + $0xd8] sm:$0xff]
    %v5594 = vld [vmem:[#allocation8 + $0xe0] sm:$0xff]
    %v5595 = vld [vmem:[#allocation8 + $0xe8] sm:$0xff]
    %v5596 = vld [vmem:[#allocation8 + $0xf0] sm:$0xff]
    %v5597 = vld [vmem:[#allocation8 + $0xf8] sm:$0xff]
    %v5598 = vld [vmem:[#allocation8 + $0x100] sm:$0xff]
    %v5599 = vld [vmem:[#allocation8 + $0x108] sm:$0xff]
    %v5600 = vld [vmem:[#allocation8 + $0x110] sm:$0xff]
    %v5601 = vld [vmem:[#allocation8 + $0x118] sm:$0xff]
    %v5602 = vld [vmem:[#allocation8 + $0x120] sm:$0xff]
    %v5603 = vld [vmem:[#allocation8 + $0x128] sm:$0xff]
    %v5604 = vld [vmem:[#allocation8 + $0x130] sm:$0xff]
    %v5605 = vld [vmem:[#allocation8 + $0x138] sm:$0xff]
    %v5606 = vld [vmem:[#allocation8 + $0x140] sm:$0xff]
    %v5607 = vld [vmem:[#allocation8 + $0x148] sm:$0xff]
    %v5608 = vld [vmem:[#allocation8 + $0x150] sm:$0xff]
    %v5609 = vld [vmem:[#allocation8 + $0x158] sm:$0xff]
    %v5610 = vld [vmem:[#allocation8 + $0x160] sm:$0xff]
    %v5611 = vld [vmem:[#allocation8 + $0x168] sm:$0xff]
    %v5612 = vld [vmem:[#allocation8 + $0x170] sm:$0xff]
    %v5613 = vld [vmem:[#allocation8 + $0x178] sm:$0xff]
    %v5614 = vld [vmem:[#allocation8 + $0x180] sm:$0xff]
    %v5615 = vld [vmem:[#allocation8 + $0x188] sm:$0xff]
    %v5616 = vld [vmem:[#allocation8 + $0x190] sm:$0xff]
    %v5617 = vld [vmem:[#allocation8 + $0x198] sm:$0xff]
    %v5618 = vld [vmem:[#allocation8 + $0x1a0] sm:$0xff]
    %v5619 = vld [vmem:[#allocation8 + $0x1a8] sm:$0xff]
    %v5620 = vld [vmem:[#allocation8 + $0x1b0] sm:$0xff]
    %v5621 = vld [vmem:[#allocation8 + $0x1b8] sm:$0xff]
    %v5622 = vld [vmem:[#allocation8 + $0x1c0] sm:$0xff]
    %v5623 = vld [vmem:[#allocation8 + $0x1c8] sm:$0xff]
    %v5624 = vld [vmem:[#allocation8 + $0x1d0] sm:$0xff]
    %v5625 = vld [vmem:[#allocation8 + $0x1d8] sm:$0xff]
    %v5626 = vld [vmem:[#allocation8 + $0x1e0] sm:$0xff]
    %v5627 = vld [vmem:[#allocation8 + $0x1e8] sm:$0xff]
    %v5628 = vld [vmem:[#allocation8 + $0x1f0] sm:$0xff]
    %v5629 = vld [vmem:[#allocation8 + $0x1f8] sm:$0xff]
    %5630 = vmatprep.subr.mxu0 %v5567
    %5631 = vmatpush1.msra.mxu0 %v5566
    %5632 = vmatprep.subr.mxu0 %v5571
    %5633 = vmatpush1.msra.mxu0 %v5570
    %5634 = vmatprep.subr.mxu0 %v5575
    %5635 = vmatpush1.msra.mxu0 %v5574
    %5636 = vmatprep.subr.mxu0 %v5579
    %5637 = vmatpush1.msra.mxu0 %v5578
    %5638 = vmatprep.subr.mxu0 %v5583
    %5639 = vmatpush1.msra.mxu0 %v5582
    %5640 = vmatprep.subr.mxu0 %v5587
    %5641 = vmatpush1.msra.mxu0 %v5586
    %5642 = vmatprep.subr.mxu0 %v5591
    %5643 = vmatpush1.msra.mxu0 %v5590
    %5644 = vmatprep.subr.mxu0 %v5595
    %5645 = vmatpush1.msra.mxu0 %v5594
    %5646 = vmatprep.subr.mxu0 %v5599
    %5647 = vmatpush1.msra.mxu0 %v5598
    %5648 = vmatprep.subr.mxu0 %v5603
    %5649 = vmatpush1.msra.mxu0 %v5602
    %5650 = vmatprep.subr.mxu0 %v5607
    %5651 = vmatpush1.msra.mxu0 %v5606
    %5652 = vmatprep.subr.mxu0 %v5611
    %5653 = vmatpush1.msra.mxu0 %v5610
    %5654 = vmatprep.subr.mxu0 %v5615
    %5655 = vmatpush1.msra.mxu0 %v5614
    %5656 = vmatprep.subr.mxu0 %v5619
    %5657 = vmatpush1.msra.mxu0 %v5618
    %5658 = vmatprep.subr.mxu0 %v5623
    %5659 = vmatpush1.msra.mxu0 %v5622
    %5660 = vmatprep.subr.mxu0 %v5627
    %5661 = vmatpush1.msra.mxu0 %v5626
    %5662 = vmatprep.subr.mxu0 0.0
    %5663 = vmatpush1.msra.mxu0 0.0
    %5664 = vmatprep.subr.mxu0 0.0
    %5665 = vmatpush1.msra.mxu0 0.0
    %5666 = vmatprep.subr.mxu0 0.0
    %5667 = vmatpush1.msra.mxu0 0.0
    %5668 = vmatprep.subr.mxu0 0.0
    %5669 = vmatpush1.msra.mxu0 0.0
    %5670 = vmatprep.subr.mxu0 0.0
    %5671 = vmatpush1.msra.mxu0 0.0
    %5672 = vmatprep.subr.mxu0 0.0
    %5673 = vmatpush1.msra.mxu0 0.0
    %5674 = vmatprep.subr.mxu0 0.0
    %5675 = vmatpush1.msra.mxu0 0.0
    %5676 = vmatprep.subr.mxu0 0.0
    %5677 = vmatpush1.msra.mxu0 0.0
    %5678 = vmatprep.subr.mxu0 0.0
    %5679 = vmatpush1.msra.mxu0 0.0
    %5680 = vmatprep.subr.mxu0 0.0
    %5681 = vmatpush1.msra.mxu0 0.0
    %5682 = vmatprep.subr.mxu0 0.0
    %5683 = vmatpush1.msra.mxu0 0.0
    %5684 = vmatprep.subr.mxu0 0.0
    %5685 = vmatpush1.msra.mxu0 0.0
    %5686 = vmatprep.subr.mxu0 0.0
    %5687 = vmatpush1.msra.mxu0 0.0
    %5688 = vmatprep.subr.mxu0 0.0
    %5689 = vmatpush1.msra.mxu0 0.0
    %5690 = vmatprep.subr.mxu0 0.0
    %5691 = vmatpush1.msra.mxu0 0.0
    %5692 = vmatprep.subr.mxu0 0.0
    %5693 = vmatpush1.msra.mxu0 0.0
    %5694 = vmatprep.mubr.f32.mxu0 0.0
    %5695 = vmatmul.mubr.f32.gmra.mrb[0].mxu0 %v5266
    %v5696 = vpop.f32.mrb[0].mxu0
    %v5697 = vadd.f32 0.0, %v5696
    %v5698 = vpop.f32.mrb[0].mxu0
    %v5699 = vadd.f32 0.0, %v5698
    %5700 = vdwg.mxu0
    %5701 = vmatprep.subr.mxu0 %v5569
    %5702 = vmatpush1.msra.mxu0 %v5568
    %5703 = vmatprep.subr.mxu0 %v5573
    %5704 = vmatpush1.msra.mxu0 %v5572
    %5705 = vmatprep.subr.mxu0 %v5577
    %5706 = vmatpush1.msra.mxu0 %v5576
    %5707 = vmatprep.subr.mxu0 %v5581
    %5708 = vmatpush1.msra.mxu0 %v5580
    %5709 = vmatprep.subr.mxu0 %v5585
    %5710 = vmatpush1.msra.mxu0 %v5584
    %5711 = vmatprep.subr.mxu0 %v5589
    %5712 = vmatpush1.msra.mxu0 %v5588
    %5713 = vmatprep.subr.mxu0 %v5593
    %5714 = vmatpush1.msra.mxu0 %v5592
    %5715 = vmatprep.subr.mxu0 %v5597
    %5716 = vmatpush1.msra.mxu0 %v5596
    %5717 = vmatprep.subr.mxu0 %v5601
    %5718 = vmatpush1.msra.mxu0 %v5600
    %5719 = vmatprep.subr.mxu0 %v5605
    %5720 = vmatpush1.msra.mxu0 %v5604
    %5721 = vmatprep.subr.mxu0 %v5609
    %5722 = vmatpush1.msra.mxu0 %v5608
    %5723 = vmatprep.subr.mxu0 %v5613
    %5724 = vmatpush1.msra.mxu0 %v5612
    %5725 = vmatprep.subr.mxu0 %v5617
    %5726 = vmatpush1.msra.mxu0 %v5616
    %5727 = vmatprep.subr.mxu0 %v5621
    %5728 = vmatpush1.msra.mxu0 %v5620
    %5729 = vmatprep.subr.mxu0 %v5625
    %5730 = vmatpush1.msra.mxu0 %v5624
    %5731 = vmatprep.subr.mxu0 %v5629
    %5732 = vmatpush1.msra.mxu0 %v5628
    %5733 = vmatprep.subr.mxu0 0.0
    %5734 = vmatpush1.msra.mxu0 0.0
    %5735 = vmatprep.subr.mxu0 0.0
    %5736 = vmatpush1.msra.mxu0 0.0
    %5737 = vmatprep.subr.mxu0 0.0
    %5738 = vmatpush1.msra.mxu0 0.0
    %5739 = vmatprep.subr.mxu0 0.0
    %5740 = vmatpush1.msra.mxu0 0.0
    %5741 = vmatprep.subr.mxu0 0.0
    %5742 = vmatpush1.msra.mxu0 0.0
    %5743 = vmatprep.subr.mxu0 0.0
    %5744 = vmatpush1.msra.mxu0 0.0
    %5745 = vmatprep.subr.mxu0 0.0
    %5746 = vmatpush1.msra.mxu0 0.0
    %5747 = vmatprep.subr.mxu0 0.0
    %5748 = vmatpush1.msra.mxu0 0.0
    %5749 = vmatprep.subr.mxu0 0.0
    %5750 = vmatpush1.msra.mxu0 0.0
    %5751 = vmatprep.subr.mxu0 0.0
    %5752 = vmatpush1.msra.mxu0 0.0
    %5753 = vmatprep.subr.mxu0 0.0
    %5754 = vmatpush1.msra.mxu0 0.0
    %5755 = vmatprep.subr.mxu0 0.0
    %5756 = vmatpush1.msra.mxu0 0.0
    %5757 = vmatprep.subr.mxu0 0.0
    %5758 = vmatpush1.msra.mxu0 0.0
    %5759 = vmatprep.subr.mxu0 0.0
    %5760 = vmatpush1.msra.mxu0 0.0
    %5761 = vmatprep.subr.mxu0 0.0
    %5762 = vmatpush1.msra.mxu0 0.0
    %5763 = vmatprep.subr.mxu0 0.0
    %5764 = vmatpush1.msra.mxu0 0.0
    %5765 = vmatprep.mubr.f32.mxu0 0.0
    %5766 = vmatmul.mubr.f32.gmra.mrb[0].mxu0 %v5266
    %v5767 = vpop.f32.mrb[0].mxu0
    %v5768 = vadd.f32 0.0, %v5767
    %v5769 = vpop.f32.mrb[0].mxu0
    %v5770 = vadd.f32 0.0, %v5769
    %5771 = vdwg.mxu0
    %5772 = vmatprep.subr.mxu0 %v5503
    %5773 = vmatpush1.msra.mxu0 %v5502
    %5774 = vmatprep.subr.mxu0 %v5507
    %5775 = vmatpush1.msra.mxu0 %v5506
    %5776 = vmatprep.subr.mxu0 %v5511
    %5777 = vmatpush1.msra.mxu0 %v5510
    %5778 = vmatprep.subr.mxu0 %v5515
    %5779 = vmatpush1.msra.mxu0 %v5514
    %5780 = vmatprep.subr.mxu0 %v5519
    %5781 = vmatpush1.msra.mxu0 %v5518
    %5782 = vmatprep.subr.mxu0 %v5523
    %5783 = vmatpush1.msra.mxu0 %v5522
    %5784 = vmatprep.subr.mxu0 %v5527
    %5785 = vmatpush1.msra.mxu0 %v5526
    %5786 = vmatprep.subr.mxu0 %v5531
    %5787 = vmatpush1.msra.mxu0 %v5530
    %5788 = vmatprep.subr.mxu0 %v5535
    %5789 = vmatpush1.msra.mxu0 %v5534
    %5790 = vmatprep.subr.mxu0 %v5539
    %5791 = vmatpush1.msra.mxu0 %v5538
    %5792 = vmatprep.subr.mxu0 %v5543
    %5793 = vmatpush1.msra.mxu0 %v5542
    %5794 = vmatprep.subr.mxu0 %v5547
    %5795 = vmatpush1.msra.mxu0 %v5546
    %5796 = vmatprep.subr.mxu0 %v5551
    %5797 = vmatpush1.msra.mxu0 %v5550
    %5798 = vmatprep.subr.mxu0 %v5555
    %5799 = vmatpush1.msra.mxu0 %v5554
    %5800 = vmatprep.subr.mxu0 %v5559
    %5801 = vmatpush1.msra.mxu0 %v5558
    %5802 = vmatprep.subr.mxu0 %v5563
    %5803 = vmatpush1.msra.mxu0 %v5562
    %5804 = vmatprep.subr.mxu0 0.0
    %5805 = vmatpush1.msra.mxu0 0.0
    %5806 = vmatprep.subr.mxu0 0.0
    %5807 = vmatpush1.msra.mxu0 0.0
    %5808 = vmatprep.subr.mxu0 0.0
    %5809 = vmatpush1.msra.mxu0 0.0
    %5810 = vmatprep.subr.mxu0 0.0
    %5811 = vmatpush1.msra.mxu0 0.0
    %5812 = vmatprep.subr.mxu0 0.0
    %5813 = vmatpush1.msra.mxu0 0.0
    %5814 = vmatprep.subr.mxu0 0.0
    %5815 = vmatpush1.msra.mxu0 0.0
    %5816 = vmatprep.subr.mxu0 0.0
    %5817 = vmatpush1.msra.mxu0 0.0
    %5818 = vmatprep.subr.mxu0 0.0
    %5819 = vmatpush1.msra.mxu0 0.0
    %5820 = vmatprep.subr.mxu0 0.0
    %5821 = vmatpush1.msra.mxu0 0.0
    %5822 = vmatprep.subr.mxu0 0.0
    %5823 = vmatpush1.msra.mxu0 0.0
    %5824 = vmatprep.subr.mxu0 0.0
    %5825 = vmatpush1.msra.mxu0 0.0
    %5826 = vmatprep.subr.mxu0 0.0
    %5827 = vmatpush1.msra.mxu0 0.0
    %5828 = vmatprep.subr.mxu0 0.0
    %5829 = vmatpush1.msra.mxu0 0.0
    %5830 = vmatprep.subr.mxu0 0.0
    %5831 = vmatpush1.msra.mxu0 0.0
    %5832 = vmatprep.subr.mxu0 0.0
    %5833 = vmatpush1.msra.mxu0 0.0
    %5834 = vmatprep.subr.mxu0 0.0
    %5835 = vmatpush1.msra.mxu0 0.0
    %5836 = vmatprep.mubr.f32.mxu0 0.0
    %5837 = vmatmul.mubr.f32.gmra.mrb[0].mxu0 %v5501
    %v5838 = vpop.f32.mrb[0].mxu0
    %v5839 = vadd.f32 %v5697, %v5838
    %v5840 = vpop.f32.mrb[0].mxu0
    %v5841 = vadd.f32 %v5699, %v5840
    %5842 = vdwg.mxu0
    %5843 = vmatprep.subr.mxu0 %v5505
    %5844 = vmatpush1.msra.mxu0 %v5504
    %5845 = vmatprep.subr.mxu0 %v5509
    %5846 = vmatpush1.msra.mxu0 %v5508
    %5847 = vmatprep.subr.mxu0 %v5513
    %5848 = vmatpush1.msra.mxu0 %v5512
    %5849 = vmatprep.subr.mxu0 %v5517
    %5850 = vmatpush1.msra.mxu0 %v5516
    %5851 = vmatprep.subr.mxu0 %v5521
    %5852 = vmatpush1.msra.mxu0 %v5520
    %5853 = vmatprep.subr.mxu0 %v5525
    %5854 = vmatpush1.msra.mxu0 %v5524
    %5855 = vmatprep.subr.mxu0 %v5529
    %5856 = vmatpush1.msra.mxu0 %v5528
    %5857 = vmatprep.subr.mxu0 %v5533
    %5858 = vmatpush1.msra.mxu0 %v5532
    %5859 = vmatprep.subr.mxu0 %v5537
    %5860 = vmatpush1.msra.mxu0 %v5536
    %5861 = vmatprep.subr.mxu0 %v5541
    %5862 = vmatpush1.msra.mxu0 %v5540
    %5863 = vmatprep.subr.mxu0 %v5545
    %5864 = vmatpush1.msra.mxu0 %v5544
    %5865 = vmatprep.subr.mxu0 %v5549
    %5866 = vmatpush1.msra.mxu0 %v5548
    %5867 = vmatprep.subr.mxu0 %v5553
    %5868 = vmatpush1.msra.mxu0 %v5552
    %5869 = vmatprep.subr.mxu0 %v5557
    %5870 = vmatpush1.msra.mxu0 %v5556
    %5871 = vmatprep.subr.mxu0 %v5561
    %5872 = vmatpush1.msra.mxu0 %v5560
    %5873 = vmatprep.subr.mxu0 %v5565
    %5874 = vmatpush1.msra.mxu0 %v5564
    %5875 = vmatprep.subr.mxu0 0.0
    %5876 = vmatpush1.msra.mxu0 0.0
    %5877 = vmatprep.subr.mxu0 0.0
    %5878 = vmatpush1.msra.mxu0 0.0
    %5879 = vmatprep.subr.mxu0 0.0
    %5880 = vmatpush1.msra.mxu0 0.0
    %5881 = vmatprep.subr.mxu0 0.0
    %5882 = vmatpush1.msra.mxu0 0.0
    %5883 = vmatprep.subr.mxu0 0.0
    %5884 = vmatpush1.msra.mxu0 0.0
    %5885 = vmatprep.subr.mxu0 0.0
    %5886 = vmatpush1.msra.mxu0 0.0
    %5887 = vmatprep.subr.mxu0 0.0
    %5888 = vmatpush1.msra.mxu0 0.0
    %5889 = vmatprep.subr.mxu0 0.0
    %5890 = vmatpush1.msra.mxu0 0.0
    %5891 = vmatprep.subr.mxu0 0.0
    %5892 = vmatpush1.msra.mxu0 0.0
    %5893 = vmatprep.subr.mxu0 0.0
    %5894 = vmatpush1.msra.mxu0 0.0
    %5895 = vmatprep.subr.mxu0 0.0
    %5896 = vmatpush1.msra.mxu0 0.0
    %5897 = vmatprep.subr.mxu0 0.0
    %5898 = vmatpush1.msra.mxu0 0.0
    %5899 = vmatprep.subr.mxu0 0.0
    %5900 = vmatpush1.msra.mxu0 0.0
    %5901 = vmatprep.subr.mxu0 0.0
    %5902 = vmatpush1.msra.mxu0 0.0
    %5903 = vmatprep.subr.mxu0 0.0
    %5904 = vmatpush1.msra.mxu0 0.0
    %5905 = vmatprep.subr.mxu0 0.0
    %5906 = vmatpush1.msra.mxu0 0.0
    %5907 = vmatprep.mubr.f32.mxu0 0.0
    %5908 = vmatmul.mubr.f32.gmra.mrb[0].mxu0 %v5501
    %v5909 = vpop.f32.mrb[0].mxu0
    %v5910 = vadd.f32 %v5768, %v5909
    %v5911 = vpop.f32.mrb[0].mxu0
    %v5912 = vadd.f32 %v5770, %v5911
    %5913 = vdwg.mxu0
    %v5914 = vld [vmem:[%s6] sm:$0xf]
    %v5916 = vlaneseq
    %v5917 = vshrl.u32 %v5916, 7
    %v5918 = vsub.s32 0, %v5917
    %v5919 = vrot.slane %v5914, %v5918
    %v5920 = vlaneseq
    %v5921 = vshrl.u32 %v5920, 7
    %v5922 = vsub.s32 1, %v5921
    %v5923 = vrot.slane %v5914, %v5922
    %v5924 = vlaneseq
    %v5925 = vshrl.u32 %v5924, 7
    %v5926 = vsub.s32 2, %v5925
    %v5927 = vrot.slane %v5914, %v5926
    %v5928 = vlaneseq
    %v5929 = vshrl.u32 %v5928, 7
    %v5930 = vsub.s32 3, %v5929
    %v5931 = vrot.slane %v5914, %v5930
    %v5936 = vadd.f32 %v5839, %v5919
    %v5937 = vadd.f32 %v5841, %v5923
    %v5938 = vadd.f32 %v5910, %v5927
    %v5939 = vadd.f32 %v5912, %v5931
    %v5940 = vxor.u32 %v5936, 2147483648
    %v5941 = vmul.f32 %v5940, 1.442695
    %v5942 = vpow.pop %v5941
    %v5943 = vadd.f32 %v5942, 1.0
    %v5944 = vrcp.pop %v5943
    %v5945 = vmul.f32 1.0, %v5944
    %v5946 = vxor.u32 %v5937, 2147483648
    %v5947 = vmul.f32 %v5946, 1.442695
    %v5948 = vpow.pop %v5947
    %v5949 = vadd.f32 %v5948, 1.0
    %v5950 = vrcp.pop %v5949
    %v5951 = vmul.f32 1.0, %v5950
    %v5952 = vtanh.pop %v5938
    %v5953 = vxor.u32 %v5939, 2147483648
    %v5954 = vmul.f32 %v5953, 1.442695
    %v5955 = vpow.pop %v5954
    %v5956 = vadd.f32 %v5955, 1.0
    %v5957 = vrcp.pop %v5956
    %v5958 = vmul.f32 1.0, %v5957
    %v5959 = vmul.f32 %v5951, %v5264
    %v5960 = vmul.f32 %v5945, %v5952
    %v5961 = vadd.f32 %v5959, %v5960
    %v5962 = vtanh.pop %v5961
    %v5963 = vmul.f32 %v5958, %v5962
    %5964 = vst [vmem:[#allocation2 + $0x38] sm:$0xff] %v5963
    %v5965 = vld [vmem:[#allocation2] sm:$0xff]
    %v5966 = vld [vmem:[#allocation2 + $0x8] sm:$0xff]
    %v5967 = vld [vmem:[#allocation2 + $0x10] sm:$0xff]
    %v5968 = vld [vmem:[#allocation2 + $0x18] sm:$0xff]
    %v5969 = vld [vmem:[#allocation2 + $0x20] sm:$0xff]
    %v5970 = vld [vmem:[#allocation2 + $0x28] sm:$0xff]
    %v5971 = vld [vmem:[#allocation2 + $0x30] sm:$0xff]
    %v5972 = vld [vmem:[#allocation2 + $0x38] sm:$0xff]
    %v5973 = vld [vmem:[%s7] sm:$0xff]
    %v5974 = vld [vmem:[%s7 + $0x8] sm:$0xff]
    %v5975 = vld [vmem:[%s7 + $0x10] sm:$0xff]
    %v5976 = vld [vmem:[%s7 + $0x18] sm:$0xff]
    %v5977 = vld [vmem:[%s7 + $0x20] sm:$0xff]
    %v5978 = vld [vmem:[%s7 + $0x28] sm:$0xff]
    %v5979 = vld [vmem:[%s7 + $0x30] sm:$0xff]
    %v5980 = vld [vmem:[%s7 + $0x38] sm:$0xff]
    %v5981 = vld [vmem:[%s7 + $0x40] sm:$0xff]
    %v5982 = vld [vmem:[%s7 + $0x48] sm:$0xff]
    %v5983 = vld [vmem:[%s7 + $0x50] sm:$0xff]
    %v5984 = vld [vmem:[%s7 + $0x58] sm:$0xff]
    %v5985 = vld [vmem:[%s7 + $0x60] sm:$0xff]
    %v5986 = vld [vmem:[%s7 + $0x68] sm:$0xff]
    %v5987 = vld [vmem:[%s7 + $0x70] sm:$0xff]
    %v5988 = vld [vmem:[%s7 + $0x78] sm:$0xff]
    %v5989 = vld [vmem:[#allocation3] sm:$0x1]
    %v5991 = vlaneseq
    %v5992 = vshrl.u32 %v5991, 7
    %v5993 = vsub.s32 0, %v5992
    %v5994 = vrot.slane %v5989, %v5993
    %5996 = vmatprep.subr.mxu0 0.0
    %5997 = vmatpush1.msra.mxu0 %v5973
    %5998 = vmatprep.subr.mxu0 0.0
    %5999 = vmatpush1.msra.mxu0 %v5974
    %6000 = vmatprep.subr.mxu0 0.0
    %6001 = vmatpush1.msra.mxu0 %v5975
    %6002 = vmatprep.subr.mxu0 0.0
    %6003 = vmatpush1.msra.mxu0 %v5976
    %6004 = vmatprep.subr.mxu0 0.0
    %6005 = vmatpush1.msra.mxu0 %v5977
    %6006 = vmatprep.subr.mxu0 0.0
    %6007 = vmatpush1.msra.mxu0 %v5978
    %6008 = vmatprep.subr.mxu0 0.0
    %6009 = vmatpush1.msra.mxu0 %v5979
    %6010 = vmatprep.subr.mxu0 0.0
    %6011 = vmatpush1.msra.mxu0 %v5980
    %6012 = vmatprep.subr.mxu0 0.0
    %6013 = vmatpush1.msra.mxu0 %v5981
    %6014 = vmatprep.subr.mxu0 0.0
    %6015 = vmatpush1.msra.mxu0 %v5982
    %6016 = vmatprep.subr.mxu0 0.0
    %6017 = vmatpush1.msra.mxu0 %v5983
    %6018 = vmatprep.subr.mxu0 0.0
    %6019 = vmatpush1.msra.mxu0 %v5984
    %6020 = vmatprep.subr.mxu0 0.0
    %6021 = vmatpush1.msra.mxu0 %v5985
    %6022 = vmatprep.subr.mxu0 0.0
    %6023 = vmatpush1.msra.mxu0 %v5986
    %6024 = vmatprep.subr.mxu0 0.0
    %6025 = vmatpush1.msra.mxu0 %v5987
    %6026 = vmatprep.subr.mxu0 0.0
    %6027 = vmatpush1.msra.mxu0 %v5988
    %6028 = vmatprep.subr.mxu0 0.0
    %6029 = vmatpush1.msra.mxu0 0.0
    %6030 = vmatprep.subr.mxu0 0.0
    %6031 = vmatpush1.msra.mxu0 0.0
    %6032 = vmatprep.subr.mxu0 0.0
    %6033 = vmatpush1.msra.mxu0 0.0
    %6034 = vmatprep.subr.mxu0 0.0
    %6035 = vmatpush1.msra.mxu0 0.0
    %6036 = vmatprep.subr.mxu0 0.0
    %6037 = vmatpush1.msra.mxu0 0.0
    %6038 = vmatprep.subr.mxu0 0.0
    %6039 = vmatpush1.msra.mxu0 0.0
    %6040 = vmatprep.subr.mxu0 0.0
    %6041 = vmatpush1.msra.mxu0 0.0
    %6042 = vmatprep.subr.mxu0 0.0
    %6043 = vmatpush1.msra.mxu0 0.0
    %6044 = vmatprep.subr.mxu0 0.0
    %6045 = vmatpush1.msra.mxu0 0.0
    %6046 = vmatprep.subr.mxu0 0.0
    %6047 = vmatpush1.msra.mxu0 0.0
    %6048 = vmatprep.subr.mxu0 0.0
    %6049 = vmatpush1.msra.mxu0 0.0
    %6050 = vmatprep.subr.mxu0 0.0
    %6051 = vmatpush1.msra.mxu0 0.0
    %6052 = vmatprep.subr.mxu0 0.0
    %6053 = vmatpush1.msra.mxu0 0.0
    %6054 = vmatprep.subr.mxu0 0.0
    %6055 = vmatpush1.msra.mxu0 0.0
    %6056 = vmatprep.subr.mxu0 0.0
    %6057 = vmatpush1.msra.mxu0 0.0
    %6058 = vmatprep.subr.mxu0 0.0
    %6059 = vmatpush1.msra.mxu0 0.0
    %6060 = vmatprep.mubr.f32.mxu0 0.0
    %6061 = vmatmul.mubr.f32.gmra.mrb[0].mxu0 %v5965
    %v6062 = vpop.f32.mrb[0].mxu0
    %v6063 = vadd.f32 %v5994, %v6062
    %v6064 = vpop.f32.mrb[0].mxu0
    %6065 = vmatprep.mubr.f32.mxu0 0.0
    %6066 = vmatmul.mubr.f32.gmra.mrb[0].mxu0 %v5966
    %v6067 = vpop.f32.mrb[0].mxu0
    %v6068 = vadd.f32 %v5994, %v6067
    %v6069 = vpop.f32.mrb[0].mxu0
    %6070 = vmatprep.mubr.f32.mxu0 0.0
    %6071 = vmatmul.mubr.f32.gmra.mrb[0].mxu0 %v5967
    %v6072 = vpop.f32.mrb[0].mxu0
    %v6073 = vadd.f32 %v5994, %v6072
    %v6074 = vpop.f32.mrb[0].mxu0
    %6075 = vmatprep.mubr.f32.mxu0 0.0
    %6076 = vmatmul.mubr.f32.gmra.mrb[0].mxu0 %v5968
    %v6077 = vpop.f32.mrb[0].mxu0
    %v6078 = vadd.f32 %v5994, %v6077
    %v6079 = vpop.f32.mrb[0].mxu0
    %6080 = vmatprep.mubr.f32.mxu0 0.0
    %6081 = vmatmul.mubr.f32.gmra.mrb[0].mxu0 %v5969
    %v6082 = vpop.f32.mrb[0].mxu0
    %v6083 = vadd.f32 %v5994, %v6082
    %v6084 = vpop.f32.mrb[0].mxu0
    %6085 = vmatprep.mubr.f32.mxu0 0.0
    %6086 = vmatmul.mubr.f32.gmra.mrb[0].mxu0 %v5970
    %v6087 = vpop.f32.mrb[0].mxu0
    %v6088 = vadd.f32 %v5994, %v6087
    %v6089 = vpop.f32.mrb[0].mxu0
    %6090 = vmatprep.mubr.f32.mxu0 0.0
    %6091 = vmatmul.mubr.f32.gmra.mrb[0].mxu0 %v5971
    %v6092 = vpop.f32.mrb[0].mxu0
    %v6093 = vadd.f32 %v5994, %v6092
    %v6094 = vpop.f32.mrb[0].mxu0
    %6095 = vmatprep.mubr.f32.mxu0 0.0
    %6096 = vmatmul.mubr.f32.gmra.mrb[0].mxu0 %v5972
    %v6097 = vpop.f32.mrb[0].mxu0
    %v6098 = vadd.f32 %v5994, %v6097
    %v6099 = vpop.f32.mrb[0].mxu0
    %6100 = vdwg.mxu0
    %vm6101 = vcmask 7168
    %6102 = vst.msk [vmem:[%s9] sm:$0xff] %vm6101, %v6063
    %6103 = vst.msk [vmem:[%s9 + $0x8] sm:$0xff] %vm6101, %v6068
    %6104 = vst.msk [vmem:[%s9 + $0x10] sm:$0xff] %vm6101, %v6073
    %6105 = vst.msk [vmem:[%s9 + $0x18] sm:$0xff] %vm6101, %v6078
    %6106 = vst.msk [vmem:[%s9 + $0x20] sm:$0xff] %vm6101, %v6083
    %6107 = vst.msk [vmem:[%s9 + $0x28] sm:$0xff] %vm6101, %v6088
    %6108 = vst.msk [vmem:[%s9 + $0x30] sm:$0xff] %vm6101, %v6093
    %6109 = vst.msk [vmem:[%s9 + $0x38] sm:$0xff] %vm6101, %v6098
    // Predicated region
    $region50: #{tpu_custom_call.1} parent=1 // pred_check
      _
    $region51: #{tpu_custom_call.1} parent=1 // pred_check_branch
      %6111 = sbr.rel (0) target = $region53
    $region52: #{tpu_custom_call.1} parent=1 // pred_region
      _
    $region53: #{tpu_custom_call.1} parent=1 // pred_fallthru
      _
    // Predicated region
    $region54: #{tpu_custom_call.1} parent=1 // pred_check
      _
    $region55: #{tpu_custom_call.1} parent=1 // pred_check_branch
      %6113 = sbr.rel (0) target = $region57
    $region56: #{tpu_custom_call.1} parent=1 // pred_region
      _
    $region57: #{tpu_custom_call.1} parent=1 // pred_fallthru
      _
    %6114 = vsyncpa [#allocation5], 1
    %6115 = vsyncpa [#allocation7], 1

</llo_original>
